<compile_context>
chip_gen: v7x
topology: tpu7x:2x2x1
jax: 0.10.0
libtpu: 0.0.40
codegen_flags: <defaults>
</compile_context>

<pallas_src>
import jax
import jax.numpy as jnp
from jax.experimental import pallas as pl
from jax.experimental.pallas import tpu as pltpu


# --------------------------------------------------------------------------
# Pallas kernel: 5-layer shared MLP + running max-pool for one (TB, TN) tile
# --------------------------------------------------------------------------
def pointnet_features_kernel(
    x_ref,                       # (TB, TN, 3)  f32
    w1_ref, b1_ref,              # (3, 64)  f32, (1, 64)  f32
    w2_ref, b2_ref,              # (64, 64) bf16
    w3_ref, b3_ref,              # (64, 64) bf16
    w4_ref, b4_ref,              # (64, 128) bf16
    w5_ref, b5_ref,              # (128, K) bf16, (1, K) f32
    out_ref,                     # (TB, K)  f32 -- resident across the N axis
):
    n = pl.program_id(1)
    tb, tn, cin = x_ref.shape
    rows = tb * tn

    # Merge (batch-block, point-tile) into one MXU row dimension.  tn is a
    # multiple of 8 (or the full point count), so this leading-dim merge is
    # layout-preserving (no relayout copy).
    x = x_ref[...].reshape(rows, cin)

    def layer(h, w_ref, b_ref):
        # MXU matmul with f32 accumulation; folded BN shift + ReLU in f32 on
        # the VPU, then carry the activation in bf16 to the next layer.
        y = jnp.dot(h, w_ref[...], preferred_element_type=jnp.float32)
        return jnp.maximum(y + b_ref[...], 0.0).astype(jnp.bfloat16)

    h = layer(x, w1_ref, b1_ref)     # (rows, 64)
    h = layer(h, w2_ref, b2_ref)     # (rows, 64)   -- end of h1
    h = layer(h, w3_ref, b3_ref)     # (rows, 64)
    h = layer(h, w4_ref, b4_ref)     # (rows, 128)

    # symfn_max: running max over point tiles (the 'arbitrary' grid axis).
    @pl.when(n == 0)
    def _():
        out_ref[...] = jnp.full(out_ref.shape, -jnp.inf, out_ref.dtype)

    # Layer 5 (128 -> K) chunked over output channels with the max-pool
    # folded per chunk: caps the largest f32 temp at rows*KC*4 bytes.
    k = w5_ref.shape[1]
    kc = 256 if k % 256 == 0 else k
    for c0 in range(0, k, kc):                              # static chunks
        y = jnp.dot(h, w5_ref[:, c0:c0 + kc],
                    preferred_element_type=jnp.float32)      # (rows, kc)
        y = jnp.maximum(y + b5_ref[:, c0:c0 + kc], 0.0)      # end of h2
        tile_max = jnp.max(y.reshape(tb, tn, kc), axis=1)    # (tb, kc)
        out_ref[:, c0:c0 + kc] = jnp.maximum(out_ref[:, c0:c0 + kc], tile_max)


# --------------------------------------------------------------------------
# Tile-size helpers
# --------------------------------------------------------------------------
def _largest_divisor_le(n, cap):
    cap = max(1, min(cap, n))
    for d in range(cap, 0, -1):
        if n % d == 0:
            return d
    return 1


def _pick_point_tile(n_points, requested):
    """Full extent if small; otherwise the largest divisor of N <= requested,
    preferring multiples of 128 (lane-dense), then multiples of 8."""
    if n_points <= requested:
        return n_points
    best8 = None
    for d in range(requested, 7, -1):
        if n_points % d == 0 and d % 8 == 0:
            if d % 128 == 0:
                return d
            if best8 is None:
                best8 = d
    return best8 if best8 is not None else n_points


# --------------------------------------------------------------------------
# Wrapper: BlockSpecs / grid construction
# --------------------------------------------------------------------------
def pointnet_features(points, folded_params, *, tb=4, tn=1024,
                      vmem_limit_bytes=40 * 1024 * 1024):
    """points: [B, N, 3] f32;  folded_params: list of 5 (W, shift_f32)."""
    B, N, C = points.shape
    K = folded_params[-1][0].shape[1]

    # Keep the leading "parallel" grid axis >= 2 when possible so both v7x
    # TensorCores get work; tb must divide B.
    tb = _largest_divisor_le(B, min(tb, max(B // 2, 1)))
    tn = _pick_point_tile(N, tn)
    grid = (B // tb, N // tn)                 # reduction (N) axis last

    in_specs = [pl.BlockSpec((tb, tn, C), lambda b, n: (b, n, 0))]
    flat_params = []
    for (w, s) in folded_params:
        # Constant index maps across both grid axes -> weights stay resident.
        in_specs.append(pl.BlockSpec(w.shape, lambda b, n: (0, 0)))
        in_specs.append(pl.BlockSpec(s.shape, lambda b, n: (0, 0)))
        flat_params += [w, s]

    out = pl.pallas_call(
        pointnet_features_kernel,
        out_shape=jax.ShapeDtypeStruct((B // tb, tb, K), jnp.float32),
        grid_spec=pltpu.PrefetchScalarGridSpec(
            num_scalar_prefetch=0,
            grid=grid,
            in_specs=in_specs,
            # 3-D output keeps the tb-sized block full-extent (legal for any
            # tb, including tb < 8); the reshape back to (B, K) is free.
            out_specs=pl.BlockSpec((None, tb, K), lambda b, n: (b, 0, 0)),
        ),
        compiler_params=pltpu.CompilerParams(
            dimension_semantics=("parallel", "arbitrary"),
            vmem_limit_bytes=vmem_limit_bytes,
        ),
    )(points.astype(jnp.float32), *flat_params)
    return out.reshape(B, K)


# --------------------------------------------------------------------------
# Parameter construction (raw Conv1d + BatchNorm1d) and folding
# --------------------------------------------------------------------------
def build_raw_params(key, dim_k=1024, scale=1):
    mlp_h1 = [int(64 / scale), int(64 / scale)]
    mlp_h2 = [int(64 / scale), int(128 / scale), int(dim_k / scale)]
    dims = [3] + mlp_h1 + mlp_h2
    raw = []
    for cin, cout in zip(dims[:-1], dims[1:]):
        key, kw, kb, kg, kbe, km, kv = jax.random.split(key, 7)
        bound = 1.0 / jnp.sqrt(cin)
        w = jax.random.uniform(kw, (cin, cout), jnp.float32, -bound, bound)
        b = jax.random.uniform(kb, (cout,), jnp.float32, -bound, bound)
        gamma = 1.0 + 0.1 * jax.random.normal(kg, (cout,), jnp.float32)
        beta = 0.1 * jax.random.normal(kbe, (cout,), jnp.float32)
        rmean = 0.1 * jax.random.normal(km, (cout,), jnp.float32)
        rvar = 1.0 + 0.1 * jax.random.uniform(kv, (cout,), jnp.float32)
        raw.append((w, b, gamma, beta, rmean, rvar))
    return raw


def fold_params(raw, eps=1e-5):
    """Fold eval-mode BN into the conv:  y = x @ (W*scale) + shift.
    Layer-1 weight stays f32 (3-row contraction, negligible cost); the rest
    are bf16 for MXU throughput and halved VMEM footprint."""
    folded = []
    for i, (w, b, gamma, beta, rmean, rvar) in enumerate(raw):
        scale = gamma / jnp.sqrt(rvar + eps)
        wf = w * scale[None, :]                       # BN scale into weights
        shift = (b - rmean) * scale + beta            # conv-bias + BN shift
        wdt = jnp.float32 if i == 0 else jnp.bfloat16
        folded.append((wf.astype(wdt),
                       shift.reshape(1, -1).astype(jnp.float32)))
    return folded


# Plain-JAX f32 reference with the *unfolded* conv + eval-mode BN math.
def reference_forward(points, raw, eps=1e-5):
    x = points.astype(jnp.float32)
    for (w, b, gamma, beta, rmean, rvar) in raw:
        y = jnp.einsum("bnc,ck->bnk", x, w) + b
        y = (y - rmean) / jnp.sqrt(rvar + eps) * gamma + beta
        x = jnp.maximum(y, 0.0)
    return jnp.max(x, axis=1)


if __name__ == "__main__":
    key = jax.random.PRNGKey(0)
    kpts, kparams = jax.random.split(key)

    B, N = 8, 256           # 8 clouds x 256 points x 3 coords (small test)
    DIM_K, SCALE = 1024, 1  # module defaults -> feature size K = 1024

    points = jax.random.normal(kpts, (B, N, 3), jnp.float32)
    raw_params = build_raw_params(kparams, dim_k=DIM_K, scale=SCALE)
    folded_params = fold_params(raw_params)

    feats = pointnet_features(points, folded_params)
    feats = jax.block_until_ready(feats)

    ref = reference_forward(points, raw_params)
    assert feats.shape == (B, int(DIM_K / SCALE))
    # bf16 matmul operands/activations -> loosen tolerance vs f32 reference.
    assert jnp.allclose(feats, ref, atol=1e-1, rtol=5e-2), \
        float(jnp.max(jnp.abs(feats - ref)))

    print("KERNEL_OK")
</pallas_src>

<mosaic_0001>
module attributes {stable_mosaic.version = 11 : i64} {
  func.func @pointnet_features_kernel(%arg0: i32, %arg1: i32, %arg2: memref<4x256x3xf32, #tpu.memory_space<vmem>>, %arg3: memref<3x64xf32, #tpu.memory_space<vmem>>, %arg4: memref<1x64xf32, #tpu.memory_space<vmem>>, %arg5: memref<64x64xbf16, #tpu.memory_space<vmem>>, %arg6: memref<1x64xf32, #tpu.memory_space<vmem>>, %arg7: memref<64x64xbf16, #tpu.memory_space<vmem>>, %arg8: memref<1x64xf32, #tpu.memory_space<vmem>>, %arg9: memref<64x128xbf16, #tpu.memory_space<vmem>>, %arg10: memref<1x128xf32, #tpu.memory_space<vmem>>, %arg11: memref<128x1024xbf16, #tpu.memory_space<vmem>>, %arg12: memref<1x1024xf32, #tpu.memory_space<vmem>>, %arg13: memref<1x4x1024xf32, #tpu.memory_space<vmem>>) attributes {dimension_semantics = [#tpu.dimension_semantics<parallel>, #tpu.dimension_semantics<arbitrary>], iteration_bounds = array<i64: 2, 1>, scalar_prefetch = 0 : i64, scratch_operands = 0 : i64, tpu.core_type = #tpu.core_type<tc>, window_params = [{transform_indices = @transform_0, window_bounds = array<i64: 4, 256, 3>}, {pipeline_mode = #tpu.pipeline_mode<synchronous>, transform_indices = @transform_1, window_bounds = array<i64: 3, 64>}, {pipeline_mode = #tpu.pipeline_mode<synchronous>, transform_indices = @transform_2, window_bounds = array<i64: 1, 64>}, {pipeline_mode = #tpu.pipeline_mode<synchronous>, transform_indices = @transform_3, window_bounds = array<i64: 64, 64>}, {pipeline_mode = #tpu.pipeline_mode<synchronous>, transform_indices = @transform_4, window_bounds = array<i64: 1, 64>}, {pipeline_mode = #tpu.pipeline_mode<synchronous>, transform_indices = @transform_5, window_bounds = array<i64: 64, 64>}, {pipeline_mode = #tpu.pipeline_mode<synchronous>, transform_indices = @transform_6, window_bounds = array<i64: 1, 64>}, {pipeline_mode = #tpu.pipeline_mode<synchronous>, transform_indices = @transform_7, window_bounds = array<i64: 64, 128>}, {pipeline_mode = #tpu.pipeline_mode<synchronous>, transform_indices = @transform_8, window_bounds = array<i64: 1, 128>}, {pipeline_mode = #tpu.pipeline_mode<synchronous>, transform_indices = @transform_9, window_bounds = array<i64: 128, 1024>}, {pipeline_mode = #tpu.pipeline_mode<synchronous>, transform_indices = @transform_10, window_bounds = array<i64: 1, 1024>}, {transform_indices = @transform_11, window_bounds = array<i64: 1, 4, 1024>}]} {
    %c0 = arith.constant 0 : index
    %c0_0 = arith.constant 0 : index
    %c0_1 = arith.constant 0 : index
    %0 = vector.load %arg2[%c0, %c0_0, %c0_1] : memref<4x256x3xf32, #tpu.memory_space<vmem>>, vector<4x256x3xf32>
    %1 = vector.shape_cast %0 : vector<4x256x3xf32> to vector<1024x3xf32>
    %c0_2 = arith.constant 0 : index
    %c0_3 = arith.constant 0 : index
    %2 = vector.load %arg3[%c0_2, %c0_3] : memref<3x64xf32, #tpu.memory_space<vmem>>, vector<3x64xf32>
    %cst = arith.constant dense<0.000000e+00> : vector<1024x64xf32>
    %3 = tpu.matmul %1, %2, %cst {dimension_numbers = #tpu.dot_dimension_numbers<[1], [0], [0], [1], [0, 0, 1, 1], [], []>} : vector<1024x3xf32>, vector<3x64xf32>, vector<1024x64xf32> -> vector<1024x64xf32>
    %c0_4 = arith.constant 0 : index
    %c0_5 = arith.constant 0 : index
    %4 = vector.load %arg4[%c0_4, %c0_5] : memref<1x64xf32, #tpu.memory_space<vmem>>, vector<1x64xf32>
    %5 = vector.broadcast %4 : vector<1x64xf32> to vector<1024x64xf32>
    %6 = arith.addf %3, %5 : vector<1024x64xf32>
    %cst_6 = arith.constant 0.000000e+00 : f32
    %7 = vector.broadcast %cst_6 : f32 to vector<1024x64xf32>
    %8 = arith.maximumf %6, %7 : vector<1024x64xf32>
    %9 = arith.truncf %8 : vector<1024x64xf32> to vector<1024x64xbf16>
    %c0_7 = arith.constant 0 : index
    %c0_8 = arith.constant 0 : index
    %10 = vector.load %arg5[%c0_7, %c0_8] : memref<64x64xbf16, #tpu.memory_space<vmem>>, vector<64x64xbf16>
    %cst_9 = arith.constant dense<0.000000e+00> : vector<1024x64xf32>
    %11 = tpu.matmul %9, %10, %cst_9 {dimension_numbers = #tpu.dot_dimension_numbers<[1], [0], [0], [1], [0, 0, 1, 1], [], []>} : vector<1024x64xbf16>, vector<64x64xbf16>, vector<1024x64xf32> -> vector<1024x64xf32>
    %c0_10 = arith.constant 0 : index
    %c0_11 = arith.constant 0 : index
    %12 = vector.load %arg6[%c0_10, %c0_11] : memref<1x64xf32, #tpu.memory_space<vmem>>, vector<1x64xf32>
    %13 = vector.broadcast %12 : vector<1x64xf32> to vector<1024x64xf32>
    %14 = arith.addf %11, %13 : vector<1024x64xf32>
    %cst_12 = arith.constant 0.000000e+00 : f32
    %15 = vector.broadcast %cst_12 : f32 to vector<1024x64xf32>
    %16 = arith.maximumf %14, %15 : vector<1024x64xf32>
    %17 = arith.truncf %16 : vector<1024x64xf32> to vector<1024x64xbf16>
    %c0_13 = arith.constant 0 : index
    %c0_14 = arith.constant 0 : index
    %18 = vector.load %arg7[%c0_13, %c0_14] : memref<64x64xbf16, #tpu.memory_space<vmem>>, vector<64x64xbf16>
    %cst_15 = arith.constant dense<0.000000e+00> : vector<1024x64xf32>
    %19 = tpu.matmul %17, %18, %cst_15 {dimension_numbers = #tpu.dot_dimension_numbers<[1], [0], [0], [1], [0, 0, 1, 1], [], []>} : vector<1024x64xbf16>, vector<64x64xbf16>, vector<1024x64xf32> -> vector<1024x64xf32>
    %c0_16 = arith.constant 0 : index
    %c0_17 = arith.constant 0 : index
    %20 = vector.load %arg8[%c0_16, %c0_17] : memref<1x64xf32, #tpu.memory_space<vmem>>, vector<1x64xf32>
    %21 = vector.broadcast %20 : vector<1x64xf32> to vector<1024x64xf32>
    %22 = arith.addf %19, %21 : vector<1024x64xf32>
    %cst_18 = arith.constant 0.000000e+00 : f32
    %23 = vector.broadcast %cst_18 : f32 to vector<1024x64xf32>
    %24 = arith.maximumf %22, %23 : vector<1024x64xf32>
    %25 = arith.truncf %24 : vector<1024x64xf32> to vector<1024x64xbf16>
    %c0_19 = arith.constant 0 : index
    %c0_20 = arith.constant 0 : index
    %26 = vector.load %arg9[%c0_19, %c0_20] : memref<64x128xbf16, #tpu.memory_space<vmem>>, vector<64x128xbf16>
    %cst_21 = arith.constant dense<0.000000e+00> : vector<1024x128xf32>
    %27 = tpu.matmul %25, %26, %cst_21 {dimension_numbers = #tpu.dot_dimension_numbers<[1], [0], [0], [1], [0, 0, 1, 1], [], []>} : vector<1024x64xbf16>, vector<64x128xbf16>, vector<1024x128xf32> -> vector<1024x128xf32>
    %c0_22 = arith.constant 0 : index
    %c0_23 = arith.constant 0 : index
    %28 = vector.load %arg10[%c0_22, %c0_23] : memref<1x128xf32, #tpu.memory_space<vmem>>, vector<1x128xf32>
    %29 = vector.broadcast %28 : vector<1x128xf32> to vector<1024x128xf32>
    %30 = arith.addf %27, %29 : vector<1024x128xf32>
    %cst_24 = arith.constant 0.000000e+00 : f32
    %31 = vector.broadcast %cst_24 : f32 to vector<1024x128xf32>
    %32 = arith.maximumf %30, %31 : vector<1024x128xf32>
    %33 = arith.truncf %32 : vector<1024x128xf32> to vector<1024x128xbf16>
    %c0_i32 = arith.constant 0 : i32
    %34 = arith.cmpi eq, %arg1, %c0_i32 : i32
    %35 = arith.extui %34 : i1 to i32
    %c0_i32_25 = arith.constant 0 : i32
    %36 = arith.cmpi ne, %35, %c0_i32_25 : i32
    scf.if %36 {
      %cst_75 = arith.constant 0xFF800000 : f32
      %97 = vector.broadcast %cst_75 : f32 to vector<4x1024xf32>
      %c0_76 = arith.constant 0 : index
      %c0_77 = arith.constant 0 : index
      %c0_78 = arith.constant 0 : index
      %98 = vector.load %arg13[%c0_76, %c0_77, %c0_78] : memref<1x4x1024xf32, #tpu.memory_space<vmem>>, vector<1x4x1024xf32>
      %99 = vector.shape_cast %98 : vector<1x4x1024xf32> to vector<4x1024xf32>
      %100 = vector.shape_cast %97 : vector<4x1024xf32> to vector<1x4x1024xf32>
      tpu.vector_store %arg13[%c0_76, %c0_77, %c0_78], %100 {strides = array<i32>} : memref<1x4x1024xf32, #tpu.memory_space<vmem>>, vector<1x4x1024xf32>,
    } else {
    }
    %c0_26 = arith.constant 0 : index
    %c0_27 = arith.constant 0 : index
    %37 = vector.load %arg11[%c0_26, %c0_27] : memref<128x1024xbf16, #tpu.memory_space<vmem>>, vector<128x256xbf16>
    %cst_28 = arith.constant dense<0.000000e+00> : vector<1024x256xf32>
    %38 = tpu.matmul %33, %37, %cst_28 {dimension_numbers = #tpu.dot_dimension_numbers<[1], [0], [0], [1], [0, 0, 1, 1], [], []>} : vector<1024x128xbf16>, vector<128x256xbf16>, vector<1024x256xf32> -> vector<1024x256xf32>
    %c0_29 = arith.constant 0 : index
    %c0_30 = arith.constant 0 : index
    %39 = vector.load %arg12[%c0_29, %c0_30] : memref<1x1024xf32, #tpu.memory_space<vmem>>, vector<1x256xf32>
    %40 = vector.broadcast %39 : vector<1x256xf32> to vector<1024x256xf32>
    %41 = arith.addf %38, %40 : vector<1024x256xf32>
    %cst_31 = arith.constant 0.000000e+00 : f32
    %42 = vector.broadcast %cst_31 : f32 to vector<1024x256xf32>
    %43 = arith.maximumf %41, %42 : vector<1024x256xf32>
    %44 = vector.shape_cast %43 : vector<1024x256xf32> to vector<4x256x256xf32>
    %cst_32 = arith.constant dense<0xFF800000> : vector<4x256xf32>
    %45 = vector.multi_reduction <maximumf>, %44, %cst_32 [1] : vector<4x256x256xf32> to vector<4x256xf32>
    %c0_33 = arith.constant 0 : index
    %c0_34 = arith.constant 0 : index
    %c0_35 = arith.constant 0 : index
    %46 = vector.load %arg13[%c0_33, %c0_34, %c0_35] : memref<1x4x1024xf32, #tpu.memory_space<vmem>>, vector<1x4x256xf32>
    %47 = vector.shape_cast %46 : vector<1x4x256xf32> to vector<4x256xf32>
    %48 = arith.maximumf %47, %45 : vector<4x256xf32>
    %c0_36 = arith.constant 0 : index
    %c0_37 = arith.constant 0 : index
    %c0_38 = arith.constant 0 : index
    %49 = vector.load %arg13[%c0_36, %c0_37, %c0_38] : memref<1x4x1024xf32, #tpu.memory_space<vmem>>, vector<1x4x256xf32>
    %50 = vector.shape_cast %49 : vector<1x4x256xf32> to vector<4x256xf32>
    %51 = vector.shape_cast %48 : vector<4x256xf32> to vector<1x4x256xf32>
    tpu.vector_store %arg13[%c0_36, %c0_37, %c0_38], %51 {strides = array<i32>} : memref<1x4x1024xf32, #tpu.memory_space<vmem>>, vector<1x4x256xf32>,
    %c0_39 = arith.constant 0 : index
    %c256 = arith.constant 256 : index
    %52 = vector.load %arg11[%c0_39, %c256] : memref<128x1024xbf16, #tpu.memory_space<vmem>>, vector<128x256xbf16>
    %cst_40 = arith.constant dense<0.000000e+00> : vector<1024x256xf32>
    %53 = tpu.matmul %33, %52, %cst_40 {dimension_numbers = #tpu.dot_dimension_numbers<[1], [0], [0], [1], [0, 0, 1, 1], [], []>} : vector<1024x128xbf16>, vector<128x256xbf16>, vector<1024x256xf32> -> vector<1024x256xf32>
    %c0_41 = arith.constant 0 : index
    %c256_42 = arith.constant 256 : index
    %54 = vector.load %arg12[%c0_41, %c256_42] : memref<1x1024xf32, #tpu.memory_space<vmem>>, vector<1x256xf32>
    %55 = vector.broadcast %54 : vector<1x256xf32> to vector<1024x256xf32>
    %56 = arith.addf %53, %55 : vector<1024x256xf32>
    %cst_43 = arith.constant 0.000000e+00 : f32
    %57 = vector.broadcast %cst_43 : f32 to vector<1024x256xf32>
    %58 = arith.maximumf %56, %57 : vector<1024x256xf32>
    %59 = vector.shape_cast %58 : vector<1024x256xf32> to vector<4x256x256xf32>
    %cst_44 = arith.constant dense<0xFF800000> : vector<4x256xf32>
    %60 = vector.multi_reduction <maximumf>, %59, %cst_44 [1] : vector<4x256x256xf32> to vector<4x256xf32>
    %c0_45 = arith.constant 0 : index
    %c0_46 = arith.constant 0 : index
    %c256_47 = arith.constant 256 : index
    %61 = vector.load %arg13[%c0_45, %c0_46, %c256_47] : memref<1x4x1024xf32, #tpu.memory_space<vmem>>, vector<1x4x256xf32>
    %62 = vector.shape_cast %61 : vector<1x4x256xf32> to vector<4x256xf32>
    %63 = arith.maximumf %62, %60 : vector<4x256xf32>
    %c0_48 = arith.constant 0 : index
    %c0_49 = arith.constant 0 : index
    %c256_50 = arith.constant 256 : index
    %64 = vector.load %arg13[%c0_48, %c0_49, %c256_50] : memref<1x4x1024xf32, #tpu.memory_space<vmem>>, vector<1x4x256xf32>
    %65 = vector.shape_cast %64 : vector<1x4x256xf32> to vector<4x256xf32>
    %66 = vector.shape_cast %63 : vector<4x256xf32> to vector<1x4x256xf32>
    tpu.vector_store %arg13[%c0_48, %c0_49, %c256_50], %66 {strides = array<i32>} : memref<1x4x1024xf32, #tpu.memory_space<vmem>>, vector<1x4x256xf32>,
    %c0_51 = arith.constant 0 : index
    %c512 = arith.constant 512 : index
    %67 = vector.load %arg11[%c0_51, %c512] : memref<128x1024xbf16, #tpu.memory_space<vmem>>, vector<128x256xbf16>
    %cst_52 = arith.constant dense<0.000000e+00> : vector<1024x256xf32>
    %68 = tpu.matmul %33, %67, %cst_52 {dimension_numbers = #tpu.dot_dimension_numbers<[1], [0], [0], [1], [0, 0, 1, 1], [], []>} : vector<1024x128xbf16>, vector<128x256xbf16>, vector<1024x256xf32> -> vector<1024x256xf32>
    %c0_53 = arith.constant 0 : index
    %c512_54 = arith.constant 512 : index
    %69 = vector.load %arg12[%c0_53, %c512_54] : memref<1x1024xf32, #tpu.memory_space<vmem>>, vector<1x256xf32>
    %70 = vector.broadcast %69 : vector<1x256xf32> to vector<1024x256xf32>
    %71 = arith.addf %68, %70 : vector<1024x256xf32>
    %cst_55 = arith.constant 0.000000e+00 : f32
    %72 = vector.broadcast %cst_55 : f32 to vector<1024x256xf32>
    %73 = arith.maximumf %71, %72 : vector<1024x256xf32>
    %74 = vector.shape_cast %73 : vector<1024x256xf32> to vector<4x256x256xf32>
    %cst_56 = arith.constant dense<0xFF800000> : vector<4x256xf32>
    %75 = vector.multi_reduction <maximumf>, %74, %cst_56 [1] : vector<4x256x256xf32> to vector<4x256xf32>
    %c0_57 = arith.constant 0 : index
    %c0_58 = arith.constant 0 : index
    %c512_59 = arith.constant 512 : index
    %76 = vector.load %arg13[%c0_57, %c0_58, %c512_59] : memref<1x4x1024xf32, #tpu.memory_space<vmem>>, vector<1x4x256xf32>
    %77 = vector.shape_cast %76 : vector<1x4x256xf32> to vector<4x256xf32>
    %78 = arith.maximumf %77, %75 : vector<4x256xf32>
    %c0_60 = arith.constant 0 : index
    %c0_61 = arith.constant 0 : index
    %c512_62 = arith.constant 512 : index
    %79 = vector.load %arg13[%c0_60, %c0_61, %c512_62] : memref<1x4x1024xf32, #tpu.memory_space<vmem>>, vector<1x4x256xf32>
    %80 = vector.shape_cast %79 : vector<1x4x256xf32> to vector<4x256xf32>
    %81 = vector.shape_cast %78 : vector<4x256xf32> to vector<1x4x256xf32>
    tpu.vector_store %arg13[%c0_60, %c0_61, %c512_62], %81 {strides = array<i32>} : memref<1x4x1024xf32, #tpu.memory_space<vmem>>, vector<1x4x256xf32>,
    %c0_63 = arith.constant 0 : index
    %c768 = arith.constant 768 : index
    %82 = vector.load %arg11[%c0_63, %c768] : memref<128x1024xbf16, #tpu.memory_space<vmem>>, vector<128x256xbf16>
    %cst_64 = arith.constant dense<0.000000e+00> : vector<1024x256xf32>
    %83 = tpu.matmul %33, %82, %cst_64 {dimension_numbers = #tpu.dot_dimension_numbers<[1], [0], [0], [1], [0, 0, 1, 1], [], []>} : vector<1024x128xbf16>, vector<128x256xbf16>, vector<1024x256xf32> -> vector<1024x256xf32>
    %c0_65 = arith.constant 0 : index
    %c768_66 = arith.constant 768 : index
    %84 = vector.load %arg12[%c0_65, %c768_66] : memref<1x1024xf32, #tpu.memory_space<vmem>>, vector<1x256xf32>
    %85 = vector.broadcast %84 : vector<1x256xf32> to vector<1024x256xf32>
    %86 = arith.addf %83, %85 : vector<1024x256xf32>
    %cst_67 = arith.constant 0.000000e+00 : f32
    %87 = vector.broadcast %cst_67 : f32 to vector<1024x256xf32>
    %88 = arith.maximumf %86, %87 : vector<1024x256xf32>
    %89 = vector.shape_cast %88 : vector<1024x256xf32> to vector<4x256x256xf32>
    %cst_68 = arith.constant dense<0xFF800000> : vector<4x256xf32>
    %90 = vector.multi_reduction <maximumf>, %89, %cst_68 [1] : vector<4x256x256xf32> to vector<4x256xf32>
    %c0_69 = arith.constant 0 : index
    %c0_70 = arith.constant 0 : index
    %c768_71 = arith.constant 768 : index
    %91 = vector.load %arg13[%c0_69, %c0_70, %c768_71] : memref<1x4x1024xf32, #tpu.memory_space<vmem>>, vector<1x4x256xf32>
    %92 = vector.shape_cast %91 : vector<1x4x256xf32> to vector<4x256xf32>
    %93 = arith.maximumf %92, %90 : vector<4x256xf32>
    %c0_72 = arith.constant 0 : index
    %c0_73 = arith.constant 0 : index
    %c768_74 = arith.constant 768 : index
    %94 = vector.load %arg13[%c0_72, %c0_73, %c768_74] : memref<1x4x1024xf32, #tpu.memory_space<vmem>>, vector<1x4x256xf32>
    %95 = vector.shape_cast %94 : vector<1x4x256xf32> to vector<4x256xf32>
    %96 = vector.shape_cast %93 : vector<4x256xf32> to vector<1x4x256xf32>
    tpu.vector_store %arg13[%c0_72, %c0_73, %c768_74], %96 {strides = array<i32>} : memref<1x4x1024xf32, #tpu.memory_space<vmem>>, vector<1x4x256xf32>,
    return
  }
  func.func @transform_0(%arg0: i32, %arg1: i32) -> (i32, i32, i32) {
    %c0_i32 = arith.constant 0 : i32
    %c0_i32_0 = arith.constant 0 : i32
    return %arg0, %arg1, %c0_i32 : i32, i32, i32
  }
  func.func @transform_1(%arg0: i32, %arg1: i32) -> (i32, i32) {
    %c0_i32 = arith.constant 0 : i32
    %c0_i32_0 = arith.constant 0 : i32
    %c0_i32_1 = arith.constant 0 : i32
    return %c0_i32, %c0_i32_0 : i32, i32
  }
  func.func @transform_2(%arg0: i32, %arg1: i32) -> (i32, i32) {
    %c0_i32 = arith.constant 0 : i32
    %c0_i32_0 = arith.constant 0 : i32
    %c0_i32_1 = arith.constant 0 : i32
    return %c0_i32, %c0_i32_0 : i32, i32
  }
  func.func @transform_3(%arg0: i32, %arg1: i32) -> (i32, i32) {
    %c0_i32 = arith.constant 0 : i32
    %c0_i32_0 = arith.constant 0 : i32
    %c0_i32_1 = arith.constant 0 : i32
    return %c0_i32, %c0_i32_0 : i32, i32
  }
  func.func @transform_4(%arg0: i32, %arg1: i32) -> (i32, i32) {
    %c0_i32 = arith.constant 0 : i32
    %c0_i32_0 = arith.constant 0 : i32
    %c0_i32_1 = arith.constant 0 : i32
    return %c0_i32, %c0_i32_0 : i32, i32
  }
  func.func @transform_5(%arg0: i32, %arg1: i32) -> (i32, i32) {
    %c0_i32 = arith.constant 0 : i32
    %c0_i32_0 = arith.constant 0 : i32
    %c0_i32_1 = arith.constant 0 : i32
    return %c0_i32, %c0_i32_0 : i32, i32
  }
  func.func @transform_6(%arg0: i32, %arg1: i32) -> (i32, i32) {
    %c0_i32 = arith.constant 0 : i32
    %c0_i32_0 = arith.constant 0 : i32
    %c0_i32_1 = arith.constant 0 : i32
    return %c0_i32, %c0_i32_0 : i32, i32
  }
  func.func @transform_7(%arg0: i32, %arg1: i32) -> (i32, i32) {
    %c0_i32 = arith.constant 0 : i32
    %c0_i32_0 = arith.constant 0 : i32
    %c0_i32_1 = arith.constant 0 : i32
    return %c0_i32, %c0_i32_0 : i32, i32
  }
  func.func @transform_8(%arg0: i32, %arg1: i32) -> (i32, i32) {
    %c0_i32 = arith.constant 0 : i32
    %c0_i32_0 = arith.constant 0 : i32
    %c0_i32_1 = arith.constant 0 : i32
    return %c0_i32, %c0_i32_0 : i32, i32
  }
  func.func @transform_9(%arg0: i32, %arg1: i32) -> (i32, i32) {
    %c0_i32 = arith.constant 0 : i32
    %c0_i32_0 = arith.constant 0 : i32
    %c0_i32_1 = arith.constant 0 : i32
    return %c0_i32, %c0_i32_0 : i32, i32
  }
  func.func @transform_10(%arg0: i32, %arg1: i32) -> (i32, i32) {
    %c0_i32 = arith.constant 0 : i32
    %c0_i32_0 = arith.constant 0 : i32
    %c0_i32_1 = arith.constant 0 : i32
    return %c0_i32, %c0_i32_0 : i32, i32
  }
  func.func @transform_11(%arg0: i32, %arg1: i32) -> (i32, i32, i32) {
    %c0_i32 = arith.constant 0 : i32
    %c0_i32_0 = arith.constant 0 : i32
    %c0_i32_1 = arith.constant 0 : i32
    return %arg0, %c0_i32, %c0_i32_0 : i32, i32, i32
  }
}

</mosaic_0001>

<llo_original>
// kernel: tpu_custom_call.1
$region0: #{tpu_custom_call.1}
  #allocation0 [shape = 'u32[]', space=smem, size = 0x4, offset = 0x4, fixed_abs, tag = 'smem constant byte address 0x4 - core index']
  #allocation1 [shape = 'u32[144,128]{1,0:T(1,128)}', space=vmem, size = 0x12000, scoped, tag = 'internal scratch']
  %s0 = inlined_call_operand.vmem [shape: f32[8,256,3], index: 0, kind: input, shape index: {}]
  %s1 = inlined_call_operand.vmem [shape: f32[3,64], index: 1, kind: input, shape index: {}]
  %s2 = inlined_call_operand.vmem [shape: f32[1,64], index: 2, kind: input, shape index: {}]
  %s3 = inlined_call_operand.vmem [shape: bf16[64,64], index: 3, kind: input, shape index: {}]
  %s4 = inlined_call_operand.vmem [shape: f32[1,64], index: 4, kind: input, shape index: {}]
  %s5 = inlined_call_operand.vmem [shape: bf16[64,64], index: 5, kind: input, shape index: {}]
  %s6 = inlined_call_operand.vmem [shape: f32[1,64], index: 6, kind: input, shape index: {}]
  %s7 = inlined_call_operand.vmem [shape: bf16[64,128], index: 7, kind: input, shape index: {}]
  %s8 = inlined_call_operand.vmem [shape: f32[1,128], index: 8, kind: input, shape index: {}]
  %s9 = inlined_call_operand.vmem [shape: bf16[128,1024], index: 9, kind: input, shape index: {}]
  %s10 = inlined_call_operand.vmem [shape: f32[1,1024], index: 10, kind: input, shape index: {}]
  %s11 = inlined_call_operand.hbm [shape: f32[2,4,1024], index: 11, kind: output, shape index: {}]
  %s12 = sld [smem:[#allocation0]]
  $region81: #{tpu_custom_call.1} parent=0
    _
  %s14 = ssub.s32 1, %s12
  %s15 = scalar_select 0, %s14, %s12
  $region1: #{tpu_custom_call.1} parent=0
    #allocation2 [shape = 'u8[32768]{0}', space=vmem, size = 0x8000, scoped, tag = 'output window, operand 0']
    #allocation3 [shape = 's32[2]{0}', space=sflag, size = 0x8, scoped, tag = 'scoped memory for tpu_custom_call.1']
    %16 = vsyncpa [#allocation3], 0
    %s17 = scalar_lea.sflag [#allocation3], 1
    %18 = vsyncpa %s17, 0
    loop: start=0, step=1, limit=4
    $region2: #{tpu_custom_call.1} parent=1 // loop_pre_header
      _
    $region3: #{tpu_custom_call.1} parent=1 // loop_header
      %s20 = sphi 0, %s24
      %p21 = scmp.ge.s32.totalorder %s20, 4
      %s27 = sphi 0, %s39
      %s28 = sphi 0, %s35
      %s29 = sphi 0, %s27
      %s30 = sphi 0, %s28
      %s31 = sphi 0, %s29
      %s32 = sphi 0, %s30
      %s44 = sphi 0, %s46
      %s47 = sphi 0, %s44
      %s48 = sphi 0, %s47
      %s64 = sphi 0, %s48
      %s68 = sphi 0, %s68
      %s70 = sphi 0, %s68
      %s71 = sphi 0, %s70
      %s85 = sphi 0, %s71
      %s89 = sphi 0, %s89
      %s91 = sphi 0, %s89
      %s92 = sphi 0, %s91
      %s106 = sphi 0, %s92
      %s110 = sphi 0, %s110
      %s112 = sphi 0, %s110
      %s113 = sphi 0, %s112
      %s127 = sphi 0, %s113
      %s131 = sphi 0, %s131
      %s133 = sphi 0, %s131
      %s134 = sphi 0, %s133
      %s148 = sphi 0, %s134
      %s152 = sphi 0, %s152
      %s154 = sphi 0, %s152
      %s155 = sphi 0, %s154
      %s169 = sphi 0, %s155
      %s173 = sphi 0, %s173
      %s175 = sphi 0, %s173
      %s176 = sphi 0, %s175
      %s190 = sphi 0, %s176
      %s194 = sphi 0, %s194
      %s196 = sphi 0, %s194
      %s197 = sphi 0, %s196
      %s211 = sphi 0, %s197
      %s215 = sphi 0, %s215
      %s217 = sphi 0, %s215
      %s218 = sphi 0, %s217
      %s232 = sphi 0, %s218
      %s236 = sphi 0, %s236
      %s238 = sphi 0, %s236
      %s239 = sphi 0, %s238
      %s253 = sphi 0, %s239
      %s257 = sphi 0, %s257
      %s259 = sphi 0, %s257
      %s260 = sphi 0, %s259
      %s274 = sphi 0, %s260
      %s280 = sphi 0, %s282
      %s283 = sphi 0, %s280
      %s284 = sphi 0, %s283
      %s300 = sphi 0, %s284
    $region4: #{tpu_custom_call.1} parent=1 // loop_header_branch
      %23 = sbr.rel (%p21) target = $region8
    $region5: #{tpu_custom_call.1} parent=1 // loop_body
      %s25 = ssub.s32 %s20, 1
      %s26 = ssub.s32 %s20, 2
      %s33 = sadd.s32 1, %s28
      %p34 = scmp.ge.s32.totalorder %s33, 1
      %s35 = scalar_select %p34, 0, %s33
      %s36 = sadd.s32 1, %s27
      %s37 = scalar_select %p34, %s36, %s27
      %p38 = scmp.ge.s32.totalorder %s37, 2
      %s39 = scalar_select %p38, 0, %s37
      %s40 = ssub.s32 %s27, %s39
      %s41 = ssub.s32 %s28, %s35
      %s42 = sor.u32 %s40, %s41
      %p43 = scmp.eq.s32.totalorder %s42, 0
      %s45 = sadd.s32 %s44, 1
      %s46 = scalar_select %p43, %s44, %s45
      %p49 = pneg %p43
      %p50 = scmp.eq.s32.totalorder %s20, 1
      %p51 = por %p49, %p50
      %p52 = scmp.ne.s32.totalorder %s44, %s47
      %p53 = scmp.eq.s32.totalorder %s20, 0
      %p54 = por %p52, %p53
      %p55 = scmp.ne.s32.totalorder %s44, %s47
      %p56 = scmp.eq.s32.totalorder %s25, 1
      %p57 = por %p55, %p56
      %p58 = scmp.ne.s32.totalorder %s47, %s48
      %p59 = scmp.eq.s32.totalorder %s25, 0
      %p60 = por %p58, %p59
      %p61 = scmp.ne.s32.totalorder %s47, %s48
      %p62 = scmp.eq.s32.totalorder %s26, 1
      %p63 = por %p61, %p62
      %p65 = scmp.ne.s32.totalorder %s48, %s64
      %p66 = scmp.eq.s32.totalorder %s26, 0
      %p67 = por %p65, %p66
      %s69 = sadd.s32 %s68, 1
      %p72 = scmp.eq.s32.totalorder %s20, 1
      %p73 = scmp.ne.s32.totalorder %s68, %s70
      %p74 = scmp.eq.s32.totalorder %s20, 0
      %p75 = por %p73, %p74
      %p76 = scmp.ne.s32.totalorder %s68, %s70
      %p77 = scmp.eq.s32.totalorder %s25, 1
      %p78 = por %p76, %p77
      %p79 = scmp.ne.s32.totalorder %s70, %s71
      %p80 = scmp.eq.s32.totalorder %s25, 0
      %p81 = por %p79, %p80
      %p82 = scmp.ne.s32.totalorder %s70, %s71
      %p83 = scmp.eq.s32.totalorder %s26, 1
      %p84 = por %p82, %p83
      %p86 = scmp.ne.s32.totalorder %s71, %s85
      %p87 = scmp.eq.s32.totalorder %s26, 0
      %p88 = por %p86, %p87
      %s90 = sadd.s32 %s89, 1
      %p93 = scmp.eq.s32.totalorder %s20, 1
      %p94 = scmp.ne.s32.totalorder %s89, %s91
      %p95 = scmp.eq.s32.totalorder %s20, 0
      %p96 = por %p94, %p95
      %p97 = scmp.ne.s32.totalorder %s89, %s91
      %p98 = scmp.eq.s32.totalorder %s25, 1
      %p99 = por %p97, %p98
      %p100 = scmp.ne.s32.totalorder %s91, %s92
      %p101 = scmp.eq.s32.totalorder %s25, 0
      %p102 = por %p100, %p101
      %p103 = scmp.ne.s32.totalorder %s91, %s92
      %p104 = scmp.eq.s32.totalorder %s26, 1
      %p105 = por %p103, %p104
      %p107 = scmp.ne.s32.totalorder %s92, %s106
      %p108 = scmp.eq.s32.totalorder %s26, 0
      %p109 = por %p107, %p108
      %s111 = sadd.s32 %s110, 1
      %p114 = scmp.eq.s32.totalorder %s20, 1
      %p115 = scmp.ne.s32.totalorder %s110, %s112
      %p116 = scmp.eq.s32.totalorder %s20, 0
      %p117 = por %p115, %p116
      %p118 = scmp.ne.s32.totalorder %s110, %s112
      %p119 = scmp.eq.s32.totalorder %s25, 1
      %p120 = por %p118, %p119
      %p121 = scmp.ne.s32.totalorder %s112, %s113
      %p122 = scmp.eq.s32.totalorder %s25, 0
      %p123 = por %p121, %p122
      %p124 = scmp.ne.s32.totalorder %s112, %s113
      %p125 = scmp.eq.s32.totalorder %s26, 1
      %p126 = por %p124, %p125
      %p128 = scmp.ne.s32.totalorder %s113, %s127
      %p129 = scmp.eq.s32.totalorder %s26, 0
      %p130 = por %p128, %p129
      %s132 = sadd.s32 %s131, 1
      %p135 = scmp.eq.s32.totalorder %s20, 1
      %p136 = scmp.ne.s32.totalorder %s131, %s133
      %p137 = scmp.eq.s32.totalorder %s20, 0
      %p138 = por %p136, %p137
      %p139 = scmp.ne.s32.totalorder %s131, %s133
      %p140 = scmp.eq.s32.totalorder %s25, 1
      %p141 = por %p139, %p140
      %p142 = scmp.ne.s32.totalorder %s133, %s134
      %p143 = scmp.eq.s32.totalorder %s25, 0
      %p144 = por %p142, %p143
      %p145 = scmp.ne.s32.totalorder %s133, %s134
      %p146 = scmp.eq.s32.totalorder %s26, 1
      %p147 = por %p145, %p146
      %p149 = scmp.ne.s32.totalorder %s134, %s148
      %p150 = scmp.eq.s32.totalorder %s26, 0
      %p151 = por %p149, %p150
      %s153 = sadd.s32 %s152, 1
      %p156 = scmp.eq.s32.totalorder %s20, 1
      %p157 = scmp.ne.s32.totalorder %s152, %s154
      %p158 = scmp.eq.s32.totalorder %s20, 0
      %p159 = por %p157, %p158
      %p160 = scmp.ne.s32.totalorder %s152, %s154
      %p161 = scmp.eq.s32.totalorder %s25, 1
      %p162 = por %p160, %p161
      %p163 = scmp.ne.s32.totalorder %s154, %s155
      %p164 = scmp.eq.s32.totalorder %s25, 0
      %p165 = por %p163, %p164
      %p166 = scmp.ne.s32.totalorder %s154, %s155
      %p167 = scmp.eq.s32.totalorder %s26, 1
      %p168 = por %p166, %p167
      %p170 = scmp.ne.s32.totalorder %s155, %s169
      %p171 = scmp.eq.s32.totalorder %s26, 0
      %p172 = por %p170, %p171
      %s174 = sadd.s32 %s173, 1
      %p177 = scmp.eq.s32.totalorder %s20, 1
      %p178 = scmp.ne.s32.totalorder %s173, %s175
      %p179 = scmp.eq.s32.totalorder %s20, 0
      %p180 = por %p178, %p179
      %p181 = scmp.ne.s32.totalorder %s173, %s175
      %p182 = scmp.eq.s32.totalorder %s25, 1
      %p183 = por %p181, %p182
      %p184 = scmp.ne.s32.totalorder %s175, %s176
      %p185 = scmp.eq.s32.totalorder %s25, 0
      %p186 = por %p184, %p185
      %p187 = scmp.ne.s32.totalorder %s175, %s176
      %p188 = scmp.eq.s32.totalorder %s26, 1
      %p189 = por %p187, %p188
      %p191 = scmp.ne.s32.totalorder %s176, %s190
      %p192 = scmp.eq.s32.totalorder %s26, 0
      %p193 = por %p191, %p192
      %s195 = sadd.s32 %s194, 1
      %p198 = scmp.eq.s32.totalorder %s20, 1
      %p199 = scmp.ne.s32.totalorder %s194, %s196
      %p200 = scmp.eq.s32.totalorder %s20, 0
      %p201 = por %p199, %p200
      %p202 = scmp.ne.s32.totalorder %s194, %s196
      %p203 = scmp.eq.s32.totalorder %s25, 1
      %p204 = por %p202, %p203
      %p205 = scmp.ne.s32.totalorder %s196, %s197
      %p206 = scmp.eq.s32.totalorder %s25, 0
      %p207 = por %p205, %p206
      %p208 = scmp.ne.s32.totalorder %s196, %s197
      %p209 = scmp.eq.s32.totalorder %s26, 1
      %p210 = por %p208, %p209
      %p212 = scmp.ne.s32.totalorder %s197, %s211
      %p213 = scmp.eq.s32.totalorder %s26, 0
      %p214 = por %p212, %p213
      %s216 = sadd.s32 %s215, 1
      %p219 = scmp.eq.s32.totalorder %s20, 1
      %p220 = scmp.ne.s32.totalorder %s215, %s217
      %p221 = scmp.eq.s32.totalorder %s20, 0
      %p222 = por %p220, %p221
      %p223 = scmp.ne.s32.totalorder %s215, %s217
      %p224 = scmp.eq.s32.totalorder %s25, 1
      %p225 = por %p223, %p224
      %p226 = scmp.ne.s32.totalorder %s217, %s218
      %p227 = scmp.eq.s32.totalorder %s25, 0
      %p228 = por %p226, %p227
      %p229 = scmp.ne.s32.totalorder %s217, %s218
      %p230 = scmp.eq.s32.totalorder %s26, 1
      %p231 = por %p229, %p230
      %p233 = scmp.ne.s32.totalorder %s218, %s232
      %p234 = scmp.eq.s32.totalorder %s26, 0
      %p235 = por %p233, %p234
      %s237 = sadd.s32 %s236, 1
      %p240 = scmp.eq.s32.totalorder %s20, 1
      %p241 = scmp.ne.s32.totalorder %s236, %s238
      %p242 = scmp.eq.s32.totalorder %s20, 0
      %p243 = por %p241, %p242
      %p244 = scmp.ne.s32.totalorder %s236, %s238
      %p245 = scmp.eq.s32.totalorder %s25, 1
      %p246 = por %p244, %p245
      %p247 = scmp.ne.s32.totalorder %s238, %s239
      %p248 = scmp.eq.s32.totalorder %s25, 0
      %p249 = por %p247, %p248
      %p250 = scmp.ne.s32.totalorder %s238, %s239
      %p251 = scmp.eq.s32.totalorder %s26, 1
      %p252 = por %p250, %p251
      %p254 = scmp.ne.s32.totalorder %s239, %s253
      %p255 = scmp.eq.s32.totalorder %s26, 0
      %p256 = por %p254, %p255
      %s258 = sadd.s32 %s257, 1
      %p261 = scmp.eq.s32.totalorder %s20, 1
      %p262 = scmp.ne.s32.totalorder %s257, %s259
      %p263 = scmp.eq.s32.totalorder %s20, 0
      %p264 = por %p262, %p263
      %p265 = scmp.ne.s32.totalorder %s257, %s259
      %p266 = scmp.eq.s32.totalorder %s25, 1
      %p267 = por %p265, %p266
      %p268 = scmp.ne.s32.totalorder %s259, %s260
      %p269 = scmp.eq.s32.totalorder %s25, 0
      %p270 = por %p268, %p269
      %p271 = scmp.ne.s32.totalorder %s259, %s260
      %p272 = scmp.eq.s32.totalorder %s26, 1
      %p273 = por %p271, %p272
      %p275 = scmp.ne.s32.totalorder %s260, %s274
      %p276 = scmp.eq.s32.totalorder %s26, 0
      %p277 = por %p275, %p276
      %s278 = ssub.s32 %s27, %s39
      %p279 = scmp.eq.s32.totalorder %s278, 0
      %s281 = sadd.s32 %s280, 1
      %s282 = scalar_select %p279, %s280, %s281
      %p285 = pneg %p279
      %p286 = scmp.eq.s32.totalorder %s20, 1
      %p287 = por %p285, %p286
      %p288 = scmp.ne.s32.totalorder %s280, %s283
      %p289 = scmp.eq.s32.totalorder %s20, 0
      %p290 = por %p288, %p289
      %p291 = scmp.ne.s32.totalorder %s280, %s283
      %p292 = scmp.eq.s32.totalorder %s25, 1
      %p293 = por %p291, %p292
      %p294 = scmp.ne.s32.totalorder %s283, %s284
      %p295 = scmp.eq.s32.totalorder %s25, 0
      %p296 = por %p294, %p295
      %p297 = scmp.ne.s32.totalorder %s283, %s284
      %p298 = scmp.eq.s32.totalorder %s26, 1
      %p299 = por %p297, %p298
      %p301 = scmp.ne.s32.totalorder %s284, %s300
      %p302 = scmp.eq.s32.totalorder %s26, 0
      %p303 = por %p301, %p302
      %p304 = scmp.le.s32.totalorder 1, %s20
      %p305 = scmp.lt.s32.totalorder %s20, 3
      %p306 = pnand %p304, %p305
      %p307 = pneg %p306
      // Predicated region
      $region9: #{tpu_custom_call.1} parent=5 // pred_check
        _
      $region10: #{tpu_custom_call.1} parent=5 // pred_check_branch
        %309 = sbr.rel (%p306) target = $region12
      $region11: #{tpu_custom_call.1} parent=5 // pred_region
        %s310 = ssub.s32 %s20, 1
        // Predicated region
        $region13: #{tpu_custom_call.1} parent=11 // pred_check
          %p311 = pneg %p81
        $region14: #{tpu_custom_call.1} parent=11 // pred_check_branch
          %313 = sbr.rel (%p311) target = $region16
        $region15: #{tpu_custom_call.1} parent=11 // pred_region
          _
        $region16: #{tpu_custom_call.1} parent=11 // pred_fallthru
          _
        // Predicated region
        $region17: #{tpu_custom_call.1} parent=11 // pred_check
          %p314 = pneg %p102
        $region18: #{tpu_custom_call.1} parent=11 // pred_check_branch
          %316 = sbr.rel (%p314) target = $region20
        $region19: #{tpu_custom_call.1} parent=11 // pred_region
          _
        $region20: #{tpu_custom_call.1} parent=11 // pred_fallthru
          _
        // Predicated region
        $region21: #{tpu_custom_call.1} parent=11 // pred_check
          %p317 = pneg %p123
        $region22: #{tpu_custom_call.1} parent=11 // pred_check_branch
          %319 = sbr.rel (%p317) target = $region24
        $region23: #{tpu_custom_call.1} parent=11 // pred_region
          _
        $region24: #{tpu_custom_call.1} parent=11 // pred_fallthru
          _
        // Predicated region
        $region25: #{tpu_custom_call.1} parent=11 // pred_check
          %p320 = pneg %p144
        $region26: #{tpu_custom_call.1} parent=11 // pred_check_branch
          %322 = sbr.rel (%p320) target = $region28
        $region27: #{tpu_custom_call.1} parent=11 // pred_region
          _
        $region28: #{tpu_custom_call.1} parent=11 // pred_fallthru
          _
        // Predicated region
        $region29: #{tpu_custom_call.1} parent=11 // pred_check
          %p323 = pneg %p165
        $region30: #{tpu_custom_call.1} parent=11 // pred_check_branch
          %325 = sbr.rel (%p323) target = $region32
        $region31: #{tpu_custom_call.1} parent=11 // pred_region
          _
        $region32: #{tpu_custom_call.1} parent=11 // pred_fallthru
          _
        // Predicated region
        $region33: #{tpu_custom_call.1} parent=11 // pred_check
          %p326 = pneg %p186
        $region34: #{tpu_custom_call.1} parent=11 // pred_check_branch
          %328 = sbr.rel (%p326) target = $region36
        $region35: #{tpu_custom_call.1} parent=11 // pred_region
          _
        $region36: #{tpu_custom_call.1} parent=11 // pred_fallthru
          _
        // Predicated region
        $region37: #{tpu_custom_call.1} parent=11 // pred_check
          %p329 = pneg %p207
        $region38: #{tpu_custom_call.1} parent=11 // pred_check_branch
          %331 = sbr.rel (%p329) target = $region40
        $region39: #{tpu_custom_call.1} parent=11 // pred_region
          _
        $region40: #{tpu_custom_call.1} parent=11 // pred_fallthru
          _
        // Predicated region
        $region41: #{tpu_custom_call.1} parent=11 // pred_check
          %p332 = pneg %p228
        $region42: #{tpu_custom_call.1} parent=11 // pred_check_branch
          %334 = sbr.rel (%p332) target = $region44
        $region43: #{tpu_custom_call.1} parent=11 // pred_region
          _
        $region44: #{tpu_custom_call.1} parent=11 // pred_fallthru
          _
        // Predicated region
        $region45: #{tpu_custom_call.1} parent=11 // pred_check
          %p335 = pneg %p249
        $region46: #{tpu_custom_call.1} parent=11 // pred_check_branch
          %337 = sbr.rel (%p335) target = $region48
        $region47: #{tpu_custom_call.1} parent=11 // pred_region
          _
        $region48: #{tpu_custom_call.1} parent=11 // pred_fallthru
          _
        // Predicated region
        $region49: #{tpu_custom_call.1} parent=11 // pred_check
          %p338 = pneg %p270
        $region50: #{tpu_custom_call.1} parent=11 // pred_check_branch
          %340 = sbr.rel (%p338) target = $region52
        $region51: #{tpu_custom_call.1} parent=11 // pred_region
          _
        $region52: #{tpu_custom_call.1} parent=11 // pred_fallthru
          _
      $region12: #{tpu_custom_call.1} parent=5 // pred_fallthru
        _
      %p341 = scmp.lt.s32.totalorder %s20, 2
      // Predicated region
      $region53: #{tpu_custom_call.1} parent=5 // pred_check
        %p342 = pneg %p341
      $region54: #{tpu_custom_call.1} parent=5 // pred_check_branch
        %344 = sbr.rel (%p342) target = $region56
      $region55: #{tpu_custom_call.1} parent=5 // pred_region
        // Predicated region
        $region57: #{tpu_custom_call.1} parent=55 // pred_check
          %p345 = pneg %p54
        $region58: #{tpu_custom_call.1} parent=55 // pred_check_branch
          %347 = sbr.rel (%p345) target = $region60
        $region59: #{tpu_custom_call.1} parent=55 // pred_region
          %s348 = smul.u32 4, %s27
          %s349 = smul.u32 32, %s28
          %p350 = scmp.lt.s32.totalorder %s348, 7
          %s351 = scalar_select %p350, %s348, 7
          %p352 = scmp.lt.s32.totalorder %s349, 31
          %s353 = scalar_select %p352, %s349, 31
          %s354 = smul.addr %s351, 32
          %s355 = sadd.s32 %s353, %s354
          %s356 = smul.addr %s355, 8
          %s357 = scalar_lea.vmem %s0, %s356
          %s358 = smul.u32 4, %s27
          %s359 = smul.u32 32, %s28
        $region60: #{tpu_custom_call.1} parent=55 // pred_fallthru
          _
      $region56: #{tpu_custom_call.1} parent=5 // pred_fallthru
        _
      %p360 = scmp.le.s32.totalorder 1, %s20
      %p361 = scmp.lt.s32.totalorder %s20, 3
      %p362 = pnand %p360, %p361
      %p363 = pneg %p362
      // Predicated region
      $region61: #{tpu_custom_call.1} parent=5 // pred_check
        _
      $region62: #{tpu_custom_call.1} parent=5 // pred_check_branch
        %365 = sbr.rel (%p362) target = $region64
      $region63: #{tpu_custom_call.1} parent=5 // pred_region
        %s366 = ssub.s32 %s20, 1
        %s367 = smul.u32 4, %s29
        %s368 = smul.u32 32, %s30
        %p369 = scmp.lt.s32.totalorder %s367, 7
        %s370 = scalar_select %p369, %s367, 7
        %p371 = scmp.lt.s32.totalorder %s368, 31
        %s372 = scalar_select %p371, %s368, 31
        %s373 = smul.addr %s370, 32
        %s374 = sadd.s32 %s372, %s373
        %s375 = smul.addr %s374, 8
        %s376 = scalar_lea.vmem %s0, %s375
        %p377 = pneg %p60
        %p378 = pneg %p57
        %p379 = pneg %p81
        %p380 = pneg %p78
        %p381 = pneg %p102
        %p382 = pneg %p99
        %p383 = pneg %p123
        %p384 = pneg %p120
        %p385 = pneg %p144
        %p386 = pneg %p141
        %p387 = pneg %p165
        %p388 = pneg %p162
        %p389 = pneg %p186
        %p390 = pneg %p183
        %p391 = pneg %p207
        %p392 = pneg %p204
        %p393 = pneg %p228
        %p394 = pneg %p225
        %p395 = pneg %p249
        %p396 = pneg %p246
        %p397 = pneg %p270
        %p398 = pneg %p267
        %p399 = pneg %p296
        %p400 = pneg %p293
        %s401 = sand.u32 %s283, 1
        %s402 = scalar_lea.sflag [#allocation3], %s401
        %s403 = sand.u32 %s283, 1
        %s404 = smul.addr %s403, 32
        %s405 = scalar_lea.vmem [#allocation2], %s404
        %s406 = smul.u32 4, %s29
        %s407 = smul.u32 32, %s30
        %p408 = scmp.lt.s32.totalorder %s406, 7
        %s409 = scalar_select %p408, %s406, 7
        %p410 = scmp.lt.s32.totalorder %s407, 31
        %s411 = scalar_select %p410, %s407, 31
        %s412 = smul.addr %s409, 32
        %s413 = sadd.s32 %s411, %s412
        %s414 = smul.addr %s413, 8
        %s415 = scalar_lea.vmem %s0, %s414
        %s416 = smul.u32 4, %s29
        %s417 = smul.u32 32, %s30
        %v419 = vld [vmem:[%s415] sm:$0xff]
        %v420 = vld [vmem:[%s415 + $0x8] sm:$0xff]
        %v421 = vld [vmem:[%s415 + $0x10] sm:$0xff]
        %v422 = vld [vmem:[%s415 + $0x18] sm:$0xff]
        %v423 = vld [vmem:[%s415 + $0x20] sm:$0xff]
        %v424 = vld [vmem:[%s415 + $0x28] sm:$0xff]
        %v425 = vld [vmem:[%s415 + $0x30] sm:$0xff]
        %v426 = vld [vmem:[%s415 + $0x38] sm:$0xff]
        %v427 = vld [vmem:[%s415 + $0x40] sm:$0xff]
        %v428 = vld [vmem:[%s415 + $0x48] sm:$0xff]
        %v429 = vld [vmem:[%s415 + $0x50] sm:$0xff]
        %v430 = vld [vmem:[%s415 + $0x58] sm:$0xff]
        %v431 = vld [vmem:[%s415 + $0x60] sm:$0xff]
        %v432 = vld [vmem:[%s415 + $0x68] sm:$0xff]
        %v433 = vld [vmem:[%s415 + $0x70] sm:$0xff]
        %v434 = vld [vmem:[%s415 + $0x78] sm:$0xff]
        %v435 = vld [vmem:[%s415 + $0x80] sm:$0xff]
        %v436 = vld [vmem:[%s415 + $0x88] sm:$0xff]
        %v437 = vld [vmem:[%s415 + $0x90] sm:$0xff]
        %v438 = vld [vmem:[%s415 + $0x98] sm:$0xff]
        %v439 = vld [vmem:[%s415 + $0xa0] sm:$0xff]
        %v440 = vld [vmem:[%s415 + $0xa8] sm:$0xff]
        %v441 = vld [vmem:[%s415 + $0xb0] sm:$0xff]
        %v442 = vld [vmem:[%s415 + $0xb8] sm:$0xff]
        %v443 = vld [vmem:[%s415 + $0xc0] sm:$0xff]
        %v444 = vld [vmem:[%s415 + $0xc8] sm:$0xff]
        %v445 = vld [vmem:[%s415 + $0xd0] sm:$0xff]
        %v446 = vld [vmem:[%s415 + $0xd8] sm:$0xff]
        %v447 = vld [vmem:[%s415 + $0xe0] sm:$0xff]
        %v448 = vld [vmem:[%s415 + $0xe8] sm:$0xff]
        %v449 = vld [vmem:[%s415 + $0xf0] sm:$0xff]
        %v450 = vld [vmem:[%s415 + $0xf8] sm:$0xff]
        %v451 = vld [vmem:[%s415 + $0x100] sm:$0xff]
        %v452 = vld [vmem:[%s415 + $0x108] sm:$0xff]
        %v453 = vld [vmem:[%s415 + $0x110] sm:$0xff]
        %v454 = vld [vmem:[%s415 + $0x118] sm:$0xff]
        %v455 = vld [vmem:[%s415 + $0x120] sm:$0xff]
        %v456 = vld [vmem:[%s415 + $0x128] sm:$0xff]
        %v457 = vld [vmem:[%s415 + $0x130] sm:$0xff]
        %v458 = vld [vmem:[%s415 + $0x138] sm:$0xff]
        %v459 = vld [vmem:[%s415 + $0x140] sm:$0xff]
        %v460 = vld [vmem:[%s415 + $0x148] sm:$0xff]
        %v461 = vld [vmem:[%s415 + $0x150] sm:$0xff]
        %v462 = vld [vmem:[%s415 + $0x158] sm:$0xff]
        %v463 = vld [vmem:[%s415 + $0x160] sm:$0xff]
        %v464 = vld [vmem:[%s415 + $0x168] sm:$0xff]
        %v465 = vld [vmem:[%s415 + $0x170] sm:$0xff]
        %v466 = vld [vmem:[%s415 + $0x178] sm:$0xff]
        %v467 = vld [vmem:[%s415 + $0x180] sm:$0xff]
        %v468 = vld [vmem:[%s415 + $0x188] sm:$0xff]
        %v469 = vld [vmem:[%s415 + $0x190] sm:$0xff]
        %v470 = vld [vmem:[%s415 + $0x198] sm:$0xff]
        %v471 = vld [vmem:[%s415 + $0x1a0] sm:$0xff]
        %v472 = vld [vmem:[%s415 + $0x1a8] sm:$0xff]
        %v473 = vld [vmem:[%s415 + $0x1b0] sm:$0xff]
        %v474 = vld [vmem:[%s415 + $0x1b8] sm:$0xff]
        %v475 = vld [vmem:[%s415 + $0x1c0] sm:$0xff]
        %v476 = vld [vmem:[%s415 + $0x1c8] sm:$0xff]
        %v477 = vld [vmem:[%s415 + $0x1d0] sm:$0xff]
        %v478 = vld [vmem:[%s415 + $0x1d8] sm:$0xff]
        %v479 = vld [vmem:[%s415 + $0x1e0] sm:$0xff]
        %v480 = vld [vmem:[%s415 + $0x1e8] sm:$0xff]
        %v481 = vld [vmem:[%s415 + $0x1f0] sm:$0xff]
        %v482 = vld [vmem:[%s415 + $0x1f8] sm:$0xff]
        %v483 = vld [vmem:[%s415 + $0x200] sm:$0xff]
        %v484 = vld [vmem:[%s415 + $0x208] sm:$0xff]
        %v485 = vld [vmem:[%s415 + $0x210] sm:$0xff]
        %v486 = vld [vmem:[%s415 + $0x218] sm:$0xff]
        %v487 = vld [vmem:[%s415 + $0x220] sm:$0xff]
        %v488 = vld [vmem:[%s415 + $0x228] sm:$0xff]
        %v489 = vld [vmem:[%s415 + $0x230] sm:$0xff]
        %v490 = vld [vmem:[%s415 + $0x238] sm:$0xff]
        %v491 = vld [vmem:[%s415 + $0x240] sm:$0xff]
        %v492 = vld [vmem:[%s415 + $0x248] sm:$0xff]
        %v493 = vld [vmem:[%s415 + $0x250] sm:$0xff]
        %v494 = vld [vmem:[%s415 + $0x258] sm:$0xff]
        %v495 = vld [vmem:[%s415 + $0x260] sm:$0xff]
        %v496 = vld [vmem:[%s415 + $0x268] sm:$0xff]
        %v497 = vld [vmem:[%s415 + $0x270] sm:$0xff]
        %v498 = vld [vmem:[%s415 + $0x278] sm:$0xff]
        %v499 = vld [vmem:[%s415 + $0x280] sm:$0xff]
        %v500 = vld [vmem:[%s415 + $0x288] sm:$0xff]
        %v501 = vld [vmem:[%s415 + $0x290] sm:$0xff]
        %v502 = vld [vmem:[%s415 + $0x298] sm:$0xff]
        %v503 = vld [vmem:[%s415 + $0x2a0] sm:$0xff]
        %v504 = vld [vmem:[%s415 + $0x2a8] sm:$0xff]
        %v505 = vld [vmem:[%s415 + $0x2b0] sm:$0xff]
        %v506 = vld [vmem:[%s415 + $0x2b8] sm:$0xff]
        %v507 = vld [vmem:[%s415 + $0x2c0] sm:$0xff]
        %v508 = vld [vmem:[%s415 + $0x2c8] sm:$0xff]
        %v509 = vld [vmem:[%s415 + $0x2d0] sm:$0xff]
        %v510 = vld [vmem:[%s415 + $0x2d8] sm:$0xff]
        %v511 = vld [vmem:[%s415 + $0x2e0] sm:$0xff]
        %v512 = vld [vmem:[%s415 + $0x2e8] sm:$0xff]
        %v513 = vld [vmem:[%s415 + $0x2f0] sm:$0xff]
        %v514 = vld [vmem:[%s415 + $0x2f8] sm:$0xff]
        %v515 = vld [vmem:[%s415 + $0x300] sm:$0xff]
        %v516 = vld [vmem:[%s415 + $0x308] sm:$0xff]
        %v517 = vld [vmem:[%s415 + $0x310] sm:$0xff]
        %v518 = vld [vmem:[%s415 + $0x318] sm:$0xff]
        %v519 = vld [vmem:[%s415 + $0x320] sm:$0xff]
        %v520 = vld [vmem:[%s415 + $0x328] sm:$0xff]
        %v521 = vld [vmem:[%s415 + $0x330] sm:$0xff]
        %v522 = vld [vmem:[%s415 + $0x338] sm:$0xff]
        %v523 = vld [vmem:[%s415 + $0x340] sm:$0xff]
        %v524 = vld [vmem:[%s415 + $0x348] sm:$0xff]
        %v525 = vld [vmem:[%s415 + $0x350] sm:$0xff]
        %v526 = vld [vmem:[%s415 + $0x358] sm:$0xff]
        %v527 = vld [vmem:[%s415 + $0x360] sm:$0xff]
        %v528 = vld [vmem:[%s415 + $0x368] sm:$0xff]
        %v529 = vld [vmem:[%s415 + $0x370] sm:$0xff]
        %v530 = vld [vmem:[%s415 + $0x378] sm:$0xff]
        %v531 = vld [vmem:[%s415 + $0x380] sm:$0xff]
        %v532 = vld [vmem:[%s415 + $0x388] sm:$0xff]
        %v533 = vld [vmem:[%s415 + $0x390] sm:$0xff]
        %v534 = vld [vmem:[%s415 + $0x398] sm:$0xff]
        %v535 = vld [vmem:[%s415 + $0x3a0] sm:$0xff]
        %v536 = vld [vmem:[%s415 + $0x3a8] sm:$0xff]
        %v537 = vld [vmem:[%s415 + $0x3b0] sm:$0xff]
        %v538 = vld [vmem:[%s415 + $0x3b8] sm:$0xff]
        %v539 = vld [vmem:[%s415 + $0x3c0] sm:$0xff]
        %v540 = vld [vmem:[%s415 + $0x3c8] sm:$0xff]
        %v541 = vld [vmem:[%s415 + $0x3d0] sm:$0xff]
        %v542 = vld [vmem:[%s415 + $0x3d8] sm:$0xff]
        %v543 = vld [vmem:[%s415 + $0x3e0] sm:$0xff]
        %v544 = vld [vmem:[%s415 + $0x3e8] sm:$0xff]
        %v545 = vld [vmem:[%s415 + $0x3f0] sm:$0xff]
        %v546 = vld [vmem:[%s415 + $0x3f8] sm:$0xff]
        %v547 = vld [vmem:[%s1] sm:$0x7]
        %v548 = vld [vmem:[%s2] sm:$0x1]
        %v550 = vlaneseq
        %v551 = vshrl.u32 %v550, 7
        %v552 = vsub.s32 0, %v551
        %v553 = vrot.slane %v548, %v552
        %vm555 = vcmask 23552
        %v557 = vsel %vm555, %v419, 0
        %v560 = vsel %vm555, %v420, 0
        %v563 = vsel %vm555, %v421, 0
        %v566 = vsel %vm555, %v422, 0
        %v569 = vsel %vm555, %v423, 0
        %v572 = vsel %vm555, %v424, 0
        %v575 = vsel %vm555, %v425, 0
        %v578 = vsel %vm555, %v426, 0
        %v581 = vsel %vm555, %v427, 0
        %v584 = vsel %vm555, %v428, 0
        %v587 = vsel %vm555, %v429, 0
        %v590 = vsel %vm555, %v430, 0
        %v593 = vsel %vm555, %v431, 0
        %v596 = vsel %vm555, %v432, 0
        %v599 = vsel %vm555, %v433, 0
        %v602 = vsel %vm555, %v434, 0
        %v605 = vsel %vm555, %v435, 0
        %v608 = vsel %vm555, %v436, 0
        %v611 = vsel %vm555, %v437, 0
        %v614 = vsel %vm555, %v438, 0
        %v617 = vsel %vm555, %v439, 0
        %v620 = vsel %vm555, %v440, 0
        %v623 = vsel %vm555, %v441, 0
        %v626 = vsel %vm555, %v442, 0
        %v629 = vsel %vm555, %v443, 0
        %v632 = vsel %vm555, %v444, 0
        %v635 = vsel %vm555, %v445, 0
        %v638 = vsel %vm555, %v446, 0
        %v641 = vsel %vm555, %v447, 0
        %v644 = vsel %vm555, %v448, 0
        %v647 = vsel %vm555, %v449, 0
        %v650 = vsel %vm555, %v450, 0
        %v653 = vsel %vm555, %v451, 0
        %v656 = vsel %vm555, %v452, 0
        %v659 = vsel %vm555, %v453, 0
        %v662 = vsel %vm555, %v454, 0
        %v665 = vsel %vm555, %v455, 0
        %v668 = vsel %vm555, %v456, 0
        %v671 = vsel %vm555, %v457, 0
        %v674 = vsel %vm555, %v458, 0
        %v677 = vsel %vm555, %v459, 0
        %v680 = vsel %vm555, %v460, 0
        %v683 = vsel %vm555, %v461, 0
        %v686 = vsel %vm555, %v462, 0
        %v689 = vsel %vm555, %v463, 0
        %v692 = vsel %vm555, %v464, 0
        %v695 = vsel %vm555, %v465, 0
        %v698 = vsel %vm555, %v466, 0
        %v701 = vsel %vm555, %v467, 0
        %v704 = vsel %vm555, %v468, 0
        %v707 = vsel %vm555, %v469, 0
        %v710 = vsel %vm555, %v470, 0
        %v713 = vsel %vm555, %v471, 0
        %v716 = vsel %vm555, %v472, 0
        %v719 = vsel %vm555, %v473, 0
        %v722 = vsel %vm555, %v474, 0
        %v725 = vsel %vm555, %v475, 0
        %v728 = vsel %vm555, %v476, 0
        %v731 = vsel %vm555, %v477, 0
        %v734 = vsel %vm555, %v478, 0
        %v737 = vsel %vm555, %v479, 0
        %v740 = vsel %vm555, %v480, 0
        %v743 = vsel %vm555, %v481, 0
        %v746 = vsel %vm555, %v482, 0
        %v749 = vsel %vm555, %v483, 0
        %v752 = vsel %vm555, %v484, 0
        %v755 = vsel %vm555, %v485, 0
        %v758 = vsel %vm555, %v486, 0
        %v761 = vsel %vm555, %v487, 0
        %v764 = vsel %vm555, %v488, 0
        %v767 = vsel %vm555, %v489, 0
        %v770 = vsel %vm555, %v490, 0
        %v773 = vsel %vm555, %v491, 0
        %v776 = vsel %vm555, %v492, 0
        %v779 = vsel %vm555, %v493, 0
        %v782 = vsel %vm555, %v494, 0
        %v785 = vsel %vm555, %v495, 0
        %v788 = vsel %vm555, %v496, 0
        %v791 = vsel %vm555, %v497, 0
        %v794 = vsel %vm555, %v498, 0
        %v797 = vsel %vm555, %v499, 0
        %v800 = vsel %vm555, %v500, 0
        %v803 = vsel %vm555, %v501, 0
        %v806 = vsel %vm555, %v502, 0
        %v809 = vsel %vm555, %v503, 0
        %v812 = vsel %vm555, %v504, 0
        %v815 = vsel %vm555, %v505, 0
        %v818 = vsel %vm555, %v506, 0
        %v821 = vsel %vm555, %v507, 0
        %v824 = vsel %vm555, %v508, 0
        %v827 = vsel %vm555, %v509, 0
        %v830 = vsel %vm555, %v510, 0
        %v833 = vsel %vm555, %v511, 0
        %v836 = vsel %vm555, %v512, 0
        %v839 = vsel %vm555, %v513, 0
        %v842 = vsel %vm555, %v514, 0
        %v845 = vsel %vm555, %v515, 0
        %v848 = vsel %vm555, %v516, 0
        %v851 = vsel %vm555, %v517, 0
        %v854 = vsel %vm555, %v518, 0
        %v857 = vsel %vm555, %v519, 0
        %v860 = vsel %vm555, %v520, 0
        %v863 = vsel %vm555, %v521, 0
        %v866 = vsel %vm555, %v522, 0
        %v869 = vsel %vm555, %v523, 0
        %v872 = vsel %vm555, %v524, 0
        %v875 = vsel %vm555, %v525, 0
        %v878 = vsel %vm555, %v526, 0
        %v881 = vsel %vm555, %v527, 0
        %v884 = vsel %vm555, %v528, 0
        %v887 = vsel %vm555, %v529, 0
        %v890 = vsel %vm555, %v530, 0
        %v893 = vsel %vm555, %v531, 0
        %v896 = vsel %vm555, %v532, 0
        %v899 = vsel %vm555, %v533, 0
        %v902 = vsel %vm555, %v534, 0
        %v905 = vsel %vm555, %v535, 0
        %v908 = vsel %vm555, %v536, 0
        %v911 = vsel %vm555, %v537, 0
        %v914 = vsel %vm555, %v538, 0
        %v917 = vsel %vm555, %v539, 0
        %v920 = vsel %vm555, %v540, 0
        %v923 = vsel %vm555, %v541, 0
        %v926 = vsel %vm555, %v542, 0
        %v929 = vsel %vm555, %v543, 0
        %v932 = vsel %vm555, %v544, 0
        %v935 = vsel %vm555, %v545, 0
        %v938 = vsel %vm555, %v546, 0
        %vm940 = vcmask 1042432
        %v942 = vsel %vm940, %v547, 0
        %944 = vmatprep.subr.mxu0 0.0
        %945 = vmatpush1.msra.mxu0 %v942
        %946 = vmatprep.subr.mxu0 0.0
        %947 = vmatpush1.msra.mxu0 0.0
        %948 = vmatprep.subr.mxu0 0.0
        %949 = vmatpush1.msra.mxu0 0.0
        %950 = vmatprep.subr.mxu0 0.0
        %951 = vmatpush1.msra.mxu0 0.0
        %952 = vmatprep.subr.mxu0 0.0
        %953 = vmatpush1.msra.mxu0 0.0
        %954 = vmatprep.subr.mxu0 0.0
        %955 = vmatpush1.msra.mxu0 0.0
        %956 = vmatprep.subr.mxu0 0.0
        %957 = vmatpush1.msra.mxu0 0.0
        %958 = vmatprep.subr.mxu0 0.0
        %959 = vmatpush1.msra.mxu0 0.0
        %960 = vmatprep.subr.mxu0 0.0
        %961 = vmatpush1.msra.mxu0 0.0
        %962 = vmatprep.subr.mxu0 0.0
        %963 = vmatpush1.msra.mxu0 0.0
        %964 = vmatprep.subr.mxu0 0.0
        %965 = vmatpush1.msra.mxu0 0.0
        %966 = vmatprep.subr.mxu0 0.0
        %967 = vmatpush1.msra.mxu0 0.0
        %968 = vmatprep.subr.mxu0 0.0
        %969 = vmatpush1.msra.mxu0 0.0
        %970 = vmatprep.subr.mxu0 0.0
        %971 = vmatpush1.msra.mxu0 0.0
        %972 = vmatprep.subr.mxu0 0.0
        %973 = vmatpush1.msra.mxu0 0.0
        %974 = vmatprep.subr.mxu0 0.0
        %975 = vmatpush1.msra.mxu0 0.0
        %976 = vmatprep.subr.mxu0 0.0
        %977 = vmatpush1.msra.mxu0 0.0
        %978 = vmatprep.subr.mxu0 0.0
        %979 = vmatpush1.msra.mxu0 0.0
        %980 = vmatprep.subr.mxu0 0.0
        %981 = vmatpush1.msra.mxu0 0.0
        %982 = vmatprep.subr.mxu0 0.0
        %983 = vmatpush1.msra.mxu0 0.0
        %984 = vmatprep.subr.mxu0 0.0
        %985 = vmatpush1.msra.mxu0 0.0
        %986 = vmatprep.subr.mxu0 0.0
        %987 = vmatpush1.msra.mxu0 0.0
        %988 = vmatprep.subr.mxu0 0.0
        %989 = vmatpush1.msra.mxu0 0.0
        %990 = vmatprep.subr.mxu0 0.0
        %991 = vmatpush1.msra.mxu0 0.0
        %992 = vmatprep.subr.mxu0 0.0
        %993 = vmatpush1.msra.mxu0 0.0
        %994 = vmatprep.subr.mxu0 0.0
        %995 = vmatpush1.msra.mxu0 0.0
        %996 = vmatprep.subr.mxu0 0.0
        %997 = vmatpush1.msra.mxu0 0.0
        %998 = vmatprep.subr.mxu0 0.0
        %999 = vmatpush1.msra.mxu0 0.0
        %1000 = vmatprep.subr.mxu0 0.0
        %1001 = vmatpush1.msra.mxu0 0.0
        %1002 = vmatprep.subr.mxu0 0.0
        %1003 = vmatpush1.msra.mxu0 0.0
        %1004 = vmatprep.subr.mxu0 0.0
        %1005 = vmatpush1.msra.mxu0 0.0
        %1006 = vmatprep.subr.mxu0 0.0
        %1007 = vmatpush1.msra.mxu0 0.0
        %1008 = vmatprep.mubr.f32.mxu0 0.0
        %1009 = vmatmul.mubr.f32.gmra.mrb[0].mxu0 %v557
        %v1010 = vpop.f32.mrb[0].mxu0
        %v1011 = vadd.f32 %v553, %v1010
        %v1012 = vpop.f32.mrb[0].mxu0
        %1013 = vmatprep.mubr.f32.mxu0 0.0
        %1014 = vmatmul.mubr.f32.gmra.mrb[0].mxu0 %v560
        %v1015 = vpop.f32.mrb[0].mxu0
        %v1016 = vadd.f32 %v553, %v1015
        %v1017 = vpop.f32.mrb[0].mxu0
        %1018 = vmatprep.mubr.f32.mxu0 0.0
        %1019 = vmatmul.mubr.f32.gmra.mrb[0].mxu0 %v563
        %v1020 = vpop.f32.mrb[0].mxu0
        %v1021 = vadd.f32 %v553, %v1020
        %v1022 = vpop.f32.mrb[0].mxu0
        %1023 = vmatprep.mubr.f32.mxu0 0.0
        %1024 = vmatmul.mubr.f32.gmra.mrb[0].mxu0 %v566
        %v1025 = vpop.f32.mrb[0].mxu0
        %v1026 = vadd.f32 %v553, %v1025
        %v1027 = vpop.f32.mrb[0].mxu0
        %1028 = vmatprep.mubr.f32.mxu0 0.0
        %1029 = vmatmul.mubr.f32.gmra.mrb[0].mxu0 %v569
        %v1030 = vpop.f32.mrb[0].mxu0
        %v1031 = vadd.f32 %v553, %v1030
        %v1032 = vpop.f32.mrb[0].mxu0
        %1033 = vmatprep.mubr.f32.mxu0 0.0
        %1034 = vmatmul.mubr.f32.gmra.mrb[0].mxu0 %v572
        %v1035 = vpop.f32.mrb[0].mxu0
        %v1036 = vadd.f32 %v553, %v1035
        %v1037 = vpop.f32.mrb[0].mxu0
        %1038 = vmatprep.mubr.f32.mxu0 0.0
        %1039 = vmatmul.mubr.f32.gmra.mrb[0].mxu0 %v575
        %v1040 = vpop.f32.mrb[0].mxu0
        %v1041 = vadd.f32 %v553, %v1040
        %v1042 = vpop.f32.mrb[0].mxu0
        %1043 = vmatprep.mubr.f32.mxu0 0.0
        %1044 = vmatmul.mubr.f32.gmra.mrb[0].mxu0 %v578
        %v1045 = vpop.f32.mrb[0].mxu0
        %v1046 = vadd.f32 %v553, %v1045
        %v1047 = vpop.f32.mrb[0].mxu0
        %1048 = vmatprep.mubr.f32.mxu0 0.0
        %1049 = vmatmul.mubr.f32.gmra.mrb[0].mxu0 %v581
        %v1050 = vpop.f32.mrb[0].mxu0
        %v1051 = vadd.f32 %v553, %v1050
        %v1052 = vpop.f32.mrb[0].mxu0
        %1053 = vmatprep.mubr.f32.mxu0 0.0
        %1054 = vmatmul.mubr.f32.gmra.mrb[0].mxu0 %v584
        %v1055 = vpop.f32.mrb[0].mxu0
        %v1056 = vadd.f32 %v553, %v1055
        %v1057 = vpop.f32.mrb[0].mxu0
        %1058 = vmatprep.mubr.f32.mxu0 0.0
        %1059 = vmatmul.mubr.f32.gmra.mrb[0].mxu0 %v587
        %v1060 = vpop.f32.mrb[0].mxu0
        %v1061 = vadd.f32 %v553, %v1060
        %v1062 = vpop.f32.mrb[0].mxu0
        %1063 = vmatprep.mubr.f32.mxu0 0.0
        %1064 = vmatmul.mubr.f32.gmra.mrb[0].mxu0 %v590
        %v1065 = vpop.f32.mrb[0].mxu0
        %v1066 = vadd.f32 %v553, %v1065
        %v1067 = vpop.f32.mrb[0].mxu0
        %1068 = vmatprep.mubr.f32.mxu0 0.0
        %1069 = vmatmul.mubr.f32.gmra.mrb[0].mxu0 %v593
        %v1070 = vpop.f32.mrb[0].mxu0
        %v1071 = vadd.f32 %v553, %v1070
        %v1072 = vpop.f32.mrb[0].mxu0
        %1073 = vmatprep.mubr.f32.mxu0 0.0
        %1074 = vmatmul.mubr.f32.gmra.mrb[0].mxu0 %v596
        %v1075 = vpop.f32.mrb[0].mxu0
        %v1076 = vadd.f32 %v553, %v1075
        %v1077 = vpop.f32.mrb[0].mxu0
        %1078 = vmatprep.mubr.f32.mxu0 0.0
        %1079 = vmatmul.mubr.f32.gmra.mrb[0].mxu0 %v599
        %v1080 = vpop.f32.mrb[0].mxu0
        %v1081 = vadd.f32 %v553, %v1080
        %v1082 = vpop.f32.mrb[0].mxu0
        %1083 = vmatprep.mubr.f32.mxu0 0.0
        %1084 = vmatmul.mubr.f32.gmra.mrb[0].mxu0 %v602
        %v1085 = vpop.f32.mrb[0].mxu0
        %v1086 = vadd.f32 %v553, %v1085
        %v1087 = vpop.f32.mrb[0].mxu0
        %1088 = vmatprep.mubr.f32.mxu0 0.0
        %1089 = vmatmul.mubr.f32.gmra.mrb[0].mxu0 %v605
        %v1090 = vpop.f32.mrb[0].mxu0
        %v1091 = vadd.f32 %v553, %v1090
        %v1092 = vpop.f32.mrb[0].mxu0
        %1093 = vmatprep.mubr.f32.mxu0 0.0
        %1094 = vmatmul.mubr.f32.gmra.mrb[0].mxu0 %v608
        %v1095 = vpop.f32.mrb[0].mxu0
        %v1096 = vadd.f32 %v553, %v1095
        %v1097 = vpop.f32.mrb[0].mxu0
        %1098 = vmatprep.mubr.f32.mxu0 0.0
        %1099 = vmatmul.mubr.f32.gmra.mrb[0].mxu0 %v611
        %v1100 = vpop.f32.mrb[0].mxu0
        %v1101 = vadd.f32 %v553, %v1100
        %v1102 = vpop.f32.mrb[0].mxu0
        %1103 = vmatprep.mubr.f32.mxu0 0.0
        %1104 = vmatmul.mubr.f32.gmra.mrb[0].mxu0 %v614
        %v1105 = vpop.f32.mrb[0].mxu0
        %v1106 = vadd.f32 %v553, %v1105
        %v1107 = vpop.f32.mrb[0].mxu0
        %1108 = vmatprep.mubr.f32.mxu0 0.0
        %1109 = vmatmul.mubr.f32.gmra.mrb[0].mxu0 %v617
        %v1110 = vpop.f32.mrb[0].mxu0
        %v1111 = vadd.f32 %v553, %v1110
        %v1112 = vpop.f32.mrb[0].mxu0
        %1113 = vmatprep.mubr.f32.mxu0 0.0
        %1114 = vmatmul.mubr.f32.gmra.mrb[0].mxu0 %v620
        %v1115 = vpop.f32.mrb[0].mxu0
        %v1116 = vadd.f32 %v553, %v1115
        %v1117 = vpop.f32.mrb[0].mxu0
        %1118 = vmatprep.mubr.f32.mxu0 0.0
        %1119 = vmatmul.mubr.f32.gmra.mrb[0].mxu0 %v623
        %v1120 = vpop.f32.mrb[0].mxu0
        %v1121 = vadd.f32 %v553, %v1120
        %v1122 = vpop.f32.mrb[0].mxu0
        %1123 = vmatprep.mubr.f32.mxu0 0.0
        %1124 = vmatmul.mubr.f32.gmra.mrb[0].mxu0 %v626
        %v1125 = vpop.f32.mrb[0].mxu0
        %v1126 = vadd.f32 %v553, %v1125
        %v1127 = vpop.f32.mrb[0].mxu0
        %1128 = vmatprep.mubr.f32.mxu0 0.0
        %1129 = vmatmul.mubr.f32.gmra.mrb[0].mxu0 %v629
        %v1130 = vpop.f32.mrb[0].mxu0
        %v1131 = vadd.f32 %v553, %v1130
        %v1132 = vpop.f32.mrb[0].mxu0
        %1133 = vmatprep.mubr.f32.mxu0 0.0
        %1134 = vmatmul.mubr.f32.gmra.mrb[0].mxu0 %v632
        %v1135 = vpop.f32.mrb[0].mxu0
        %v1136 = vadd.f32 %v553, %v1135
        %v1137 = vpop.f32.mrb[0].mxu0
        %1138 = vmatprep.mubr.f32.mxu0 0.0
        %1139 = vmatmul.mubr.f32.gmra.mrb[0].mxu0 %v635
        %v1140 = vpop.f32.mrb[0].mxu0
        %v1141 = vadd.f32 %v553, %v1140
        %v1142 = vpop.f32.mrb[0].mxu0
        %1143 = vmatprep.mubr.f32.mxu0 0.0
        %1144 = vmatmul.mubr.f32.gmra.mrb[0].mxu0 %v638
        %v1145 = vpop.f32.mrb[0].mxu0
        %v1146 = vadd.f32 %v553, %v1145
        %v1147 = vpop.f32.mrb[0].mxu0
        %1148 = vmatprep.mubr.f32.mxu0 0.0
        %1149 = vmatmul.mubr.f32.gmra.mrb[0].mxu0 %v641
        %v1150 = vpop.f32.mrb[0].mxu0
        %v1151 = vadd.f32 %v553, %v1150
        %v1152 = vpop.f32.mrb[0].mxu0
        %1153 = vmatprep.mubr.f32.mxu0 0.0
        %1154 = vmatmul.mubr.f32.gmra.mrb[0].mxu0 %v644
        %v1155 = vpop.f32.mrb[0].mxu0
        %v1156 = vadd.f32 %v553, %v1155
        %v1157 = vpop.f32.mrb[0].mxu0
        %1158 = vmatprep.mubr.f32.mxu0 0.0
        %1159 = vmatmul.mubr.f32.gmra.mrb[0].mxu0 %v647
        %v1160 = vpop.f32.mrb[0].mxu0
        %v1161 = vadd.f32 %v553, %v1160
        %v1162 = vpop.f32.mrb[0].mxu0
        %1163 = vmatprep.mubr.f32.mxu0 0.0
        %1164 = vmatmul.mubr.f32.gmra.mrb[0].mxu0 %v650
        %v1165 = vpop.f32.mrb[0].mxu0
        %v1166 = vadd.f32 %v553, %v1165
        %v1167 = vpop.f32.mrb[0].mxu0
        %1168 = vmatprep.mubr.f32.mxu0 0.0
        %1169 = vmatmul.mubr.f32.gmra.mrb[0].mxu0 %v653
        %v1170 = vpop.f32.mrb[0].mxu0
        %v1171 = vadd.f32 %v553, %v1170
        %v1172 = vpop.f32.mrb[0].mxu0
        %1173 = vmatprep.mubr.f32.mxu0 0.0
        %1174 = vmatmul.mubr.f32.gmra.mrb[0].mxu0 %v656
        %v1175 = vpop.f32.mrb[0].mxu0
        %v1176 = vadd.f32 %v553, %v1175
        %v1177 = vpop.f32.mrb[0].mxu0
        %1178 = vmatprep.mubr.f32.mxu0 0.0
        %1179 = vmatmul.mubr.f32.gmra.mrb[0].mxu0 %v659
        %v1180 = vpop.f32.mrb[0].mxu0
        %v1181 = vadd.f32 %v553, %v1180
        %v1182 = vpop.f32.mrb[0].mxu0
        %1183 = vmatprep.mubr.f32.mxu0 0.0
        %1184 = vmatmul.mubr.f32.gmra.mrb[0].mxu0 %v662
        %v1185 = vpop.f32.mrb[0].mxu0
        %v1186 = vadd.f32 %v553, %v1185
        %v1187 = vpop.f32.mrb[0].mxu0
        %1188 = vmatprep.mubr.f32.mxu0 0.0
        %1189 = vmatmul.mubr.f32.gmra.mrb[0].mxu0 %v665
        %v1190 = vpop.f32.mrb[0].mxu0
        %v1191 = vadd.f32 %v553, %v1190
        %v1192 = vpop.f32.mrb[0].mxu0
        %1193 = vmatprep.mubr.f32.mxu0 0.0
        %1194 = vmatmul.mubr.f32.gmra.mrb[0].mxu0 %v668
        %v1195 = vpop.f32.mrb[0].mxu0
        %v1196 = vadd.f32 %v553, %v1195
        %v1197 = vpop.f32.mrb[0].mxu0
        %1198 = vmatprep.mubr.f32.mxu0 0.0
        %1199 = vmatmul.mubr.f32.gmra.mrb[0].mxu0 %v671
        %v1200 = vpop.f32.mrb[0].mxu0
        %v1201 = vadd.f32 %v553, %v1200
        %v1202 = vpop.f32.mrb[0].mxu0
        %1203 = vmatprep.mubr.f32.mxu0 0.0
        %1204 = vmatmul.mubr.f32.gmra.mrb[0].mxu0 %v674
        %v1205 = vpop.f32.mrb[0].mxu0
        %v1206 = vadd.f32 %v553, %v1205
        %v1207 = vpop.f32.mrb[0].mxu0
        %1208 = vmatprep.mubr.f32.mxu0 0.0
        %1209 = vmatmul.mubr.f32.gmra.mrb[0].mxu0 %v677
        %v1210 = vpop.f32.mrb[0].mxu0
        %v1211 = vadd.f32 %v553, %v1210
        %v1212 = vpop.f32.mrb[0].mxu0
        %1213 = vmatprep.mubr.f32.mxu0 0.0
        %1214 = vmatmul.mubr.f32.gmra.mrb[0].mxu0 %v680
        %v1215 = vpop.f32.mrb[0].mxu0
        %v1216 = vadd.f32 %v553, %v1215
        %v1217 = vpop.f32.mrb[0].mxu0
        %1218 = vmatprep.mubr.f32.mxu0 0.0
        %1219 = vmatmul.mubr.f32.gmra.mrb[0].mxu0 %v683
        %v1220 = vpop.f32.mrb[0].mxu0
        %v1221 = vadd.f32 %v553, %v1220
        %v1222 = vpop.f32.mrb[0].mxu0
        %1223 = vmatprep.mubr.f32.mxu0 0.0
        %1224 = vmatmul.mubr.f32.gmra.mrb[0].mxu0 %v686
        %v1225 = vpop.f32.mrb[0].mxu0
        %v1226 = vadd.f32 %v553, %v1225
        %v1227 = vpop.f32.mrb[0].mxu0
        %1228 = vmatprep.mubr.f32.mxu0 0.0
        %1229 = vmatmul.mubr.f32.gmra.mrb[0].mxu0 %v689
        %v1230 = vpop.f32.mrb[0].mxu0
        %v1231 = vadd.f32 %v553, %v1230
        %v1232 = vpop.f32.mrb[0].mxu0
        %1233 = vmatprep.mubr.f32.mxu0 0.0
        %1234 = vmatmul.mubr.f32.gmra.mrb[0].mxu0 %v692
        %v1235 = vpop.f32.mrb[0].mxu0
        %v1236 = vadd.f32 %v553, %v1235
        %v1237 = vpop.f32.mrb[0].mxu0
        %1238 = vmatprep.mubr.f32.mxu0 0.0
        %1239 = vmatmul.mubr.f32.gmra.mrb[0].mxu0 %v695
        %v1240 = vpop.f32.mrb[0].mxu0
        %v1241 = vadd.f32 %v553, %v1240
        %v1242 = vpop.f32.mrb[0].mxu0
        %1243 = vmatprep.mubr.f32.mxu0 0.0
        %1244 = vmatmul.mubr.f32.gmra.mrb[0].mxu0 %v698
        %v1245 = vpop.f32.mrb[0].mxu0
        %v1246 = vadd.f32 %v553, %v1245
        %v1247 = vpop.f32.mrb[0].mxu0
        %1248 = vmatprep.mubr.f32.mxu0 0.0
        %1249 = vmatmul.mubr.f32.gmra.mrb[0].mxu0 %v701
        %v1250 = vpop.f32.mrb[0].mxu0
        %v1251 = vadd.f32 %v553, %v1250
        %v1252 = vpop.f32.mrb[0].mxu0
        %1253 = vmatprep.mubr.f32.mxu0 0.0
        %1254 = vmatmul.mubr.f32.gmra.mrb[0].mxu0 %v704
        %v1255 = vpop.f32.mrb[0].mxu0
        %v1256 = vadd.f32 %v553, %v1255
        %v1257 = vpop.f32.mrb[0].mxu0
        %1258 = vmatprep.mubr.f32.mxu0 0.0
        %1259 = vmatmul.mubr.f32.gmra.mrb[0].mxu0 %v707
        %v1260 = vpop.f32.mrb[0].mxu0
        %v1261 = vadd.f32 %v553, %v1260
        %v1262 = vpop.f32.mrb[0].mxu0
        %1263 = vmatprep.mubr.f32.mxu0 0.0
        %1264 = vmatmul.mubr.f32.gmra.mrb[0].mxu0 %v710
        %v1265 = vpop.f32.mrb[0].mxu0
        %v1266 = vadd.f32 %v553, %v1265
        %v1267 = vpop.f32.mrb[0].mxu0
        %1268 = vmatprep.mubr.f32.mxu0 0.0
        %1269 = vmatmul.mubr.f32.gmra.mrb[0].mxu0 %v713
        %v1270 = vpop.f32.mrb[0].mxu0
        %v1271 = vadd.f32 %v553, %v1270
        %v1272 = vpop.f32.mrb[0].mxu0
        %1273 = vmatprep.mubr.f32.mxu0 0.0
        %1274 = vmatmul.mubr.f32.gmra.mrb[0].mxu0 %v716
        %v1275 = vpop.f32.mrb[0].mxu0
        %v1276 = vadd.f32 %v553, %v1275
        %v1277 = vpop.f32.mrb[0].mxu0
        %1278 = vmatprep.mubr.f32.mxu0 0.0
        %1279 = vmatmul.mubr.f32.gmra.mrb[0].mxu0 %v719
        %v1280 = vpop.f32.mrb[0].mxu0
        %v1281 = vadd.f32 %v553, %v1280
        %v1282 = vpop.f32.mrb[0].mxu0
        %1283 = vmatprep.mubr.f32.mxu0 0.0
        %1284 = vmatmul.mubr.f32.gmra.mrb[0].mxu0 %v722
        %v1285 = vpop.f32.mrb[0].mxu0
        %v1286 = vadd.f32 %v553, %v1285
        %v1287 = vpop.f32.mrb[0].mxu0
        %1288 = vmatprep.mubr.f32.mxu0 0.0
        %1289 = vmatmul.mubr.f32.gmra.mrb[0].mxu0 %v725
        %v1290 = vpop.f32.mrb[0].mxu0
        %v1291 = vadd.f32 %v553, %v1290
        %v1292 = vpop.f32.mrb[0].mxu0
        %1293 = vmatprep.mubr.f32.mxu0 0.0
        %1294 = vmatmul.mubr.f32.gmra.mrb[0].mxu0 %v728
        %v1295 = vpop.f32.mrb[0].mxu0
        %v1296 = vadd.f32 %v553, %v1295
        %v1297 = vpop.f32.mrb[0].mxu0
        %1298 = vmatprep.mubr.f32.mxu0 0.0
        %1299 = vmatmul.mubr.f32.gmra.mrb[0].mxu0 %v731
        %v1300 = vpop.f32.mrb[0].mxu0
        %v1301 = vadd.f32 %v553, %v1300
        %v1302 = vpop.f32.mrb[0].mxu0
        %1303 = vmatprep.mubr.f32.mxu0 0.0
        %1304 = vmatmul.mubr.f32.gmra.mrb[0].mxu0 %v734
        %v1305 = vpop.f32.mrb[0].mxu0
        %v1306 = vadd.f32 %v553, %v1305
        %v1307 = vpop.f32.mrb[0].mxu0
        %1308 = vmatprep.mubr.f32.mxu0 0.0
        %1309 = vmatmul.mubr.f32.gmra.mrb[0].mxu0 %v737
        %v1310 = vpop.f32.mrb[0].mxu0
        %v1311 = vadd.f32 %v553, %v1310
        %v1312 = vpop.f32.mrb[0].mxu0
        %1313 = vmatprep.mubr.f32.mxu0 0.0
        %1314 = vmatmul.mubr.f32.gmra.mrb[0].mxu0 %v740
        %v1315 = vpop.f32.mrb[0].mxu0
        %v1316 = vadd.f32 %v553, %v1315
        %v1317 = vpop.f32.mrb[0].mxu0
        %1318 = vmatprep.mubr.f32.mxu0 0.0
        %1319 = vmatmul.mubr.f32.gmra.mrb[0].mxu0 %v743
        %v1320 = vpop.f32.mrb[0].mxu0
        %v1321 = vadd.f32 %v553, %v1320
        %v1322 = vpop.f32.mrb[0].mxu0
        %1323 = vmatprep.mubr.f32.mxu0 0.0
        %1324 = vmatmul.mubr.f32.gmra.mrb[0].mxu0 %v746
        %v1325 = vpop.f32.mrb[0].mxu0
        %v1326 = vadd.f32 %v553, %v1325
        %v1327 = vpop.f32.mrb[0].mxu0
        %1328 = vmatprep.mubr.f32.mxu0 0.0
        %1329 = vmatmul.mubr.f32.gmra.mrb[0].mxu0 %v749
        %v1330 = vpop.f32.mrb[0].mxu0
        %v1331 = vadd.f32 %v553, %v1330
        %v1332 = vpop.f32.mrb[0].mxu0
        %1333 = vmatprep.mubr.f32.mxu0 0.0
        %1334 = vmatmul.mubr.f32.gmra.mrb[0].mxu0 %v752
        %v1335 = vpop.f32.mrb[0].mxu0
        %v1336 = vadd.f32 %v553, %v1335
        %v1337 = vpop.f32.mrb[0].mxu0
        %1338 = vmatprep.mubr.f32.mxu0 0.0
        %1339 = vmatmul.mubr.f32.gmra.mrb[0].mxu0 %v755
        %v1340 = vpop.f32.mrb[0].mxu0
        %v1341 = vadd.f32 %v553, %v1340
        %v1342 = vpop.f32.mrb[0].mxu0
        %1343 = vmatprep.mubr.f32.mxu0 0.0
        %1344 = vmatmul.mubr.f32.gmra.mrb[0].mxu0 %v758
        %v1345 = vpop.f32.mrb[0].mxu0
        %v1346 = vadd.f32 %v553, %v1345
        %v1347 = vpop.f32.mrb[0].mxu0
        %1348 = vmatprep.mubr.f32.mxu0 0.0
        %1349 = vmatmul.mubr.f32.gmra.mrb[0].mxu0 %v761
        %v1350 = vpop.f32.mrb[0].mxu0
        %v1351 = vadd.f32 %v553, %v1350
        %v1352 = vpop.f32.mrb[0].mxu0
        %1353 = vmatprep.mubr.f32.mxu0 0.0
        %1354 = vmatmul.mubr.f32.gmra.mrb[0].mxu0 %v764
        %v1355 = vpop.f32.mrb[0].mxu0
        %v1356 = vadd.f32 %v553, %v1355
        %v1357 = vpop.f32.mrb[0].mxu0
        %1358 = vmatprep.mubr.f32.mxu0 0.0
        %1359 = vmatmul.mubr.f32.gmra.mrb[0].mxu0 %v767
        %v1360 = vpop.f32.mrb[0].mxu0
        %v1361 = vadd.f32 %v553, %v1360
        %v1362 = vpop.f32.mrb[0].mxu0
        %1363 = vmatprep.mubr.f32.mxu0 0.0
        %1364 = vmatmul.mubr.f32.gmra.mrb[0].mxu0 %v770
        %v1365 = vpop.f32.mrb[0].mxu0
        %v1366 = vadd.f32 %v553, %v1365
        %v1367 = vpop.f32.mrb[0].mxu0
        %1368 = vmatprep.mubr.f32.mxu0 0.0
        %1369 = vmatmul.mubr.f32.gmra.mrb[0].mxu0 %v773
        %v1370 = vpop.f32.mrb[0].mxu0
        %v1371 = vadd.f32 %v553, %v1370
        %v1372 = vpop.f32.mrb[0].mxu0
        %1373 = vmatprep.mubr.f32.mxu0 0.0
        %1374 = vmatmul.mubr.f32.gmra.mrb[0].mxu0 %v776
        %v1375 = vpop.f32.mrb[0].mxu0
        %v1376 = vadd.f32 %v553, %v1375
        %v1377 = vpop.f32.mrb[0].mxu0
        %1378 = vmatprep.mubr.f32.mxu0 0.0
        %1379 = vmatmul.mubr.f32.gmra.mrb[0].mxu0 %v779
        %v1380 = vpop.f32.mrb[0].mxu0
        %v1381 = vadd.f32 %v553, %v1380
        %v1382 = vpop.f32.mrb[0].mxu0
        %1383 = vmatprep.mubr.f32.mxu0 0.0
        %1384 = vmatmul.mubr.f32.gmra.mrb[0].mxu0 %v782
        %v1385 = vpop.f32.mrb[0].mxu0
        %v1386 = vadd.f32 %v553, %v1385
        %v1387 = vpop.f32.mrb[0].mxu0
        %1388 = vmatprep.mubr.f32.mxu0 0.0
        %1389 = vmatmul.mubr.f32.gmra.mrb[0].mxu0 %v785
        %v1390 = vpop.f32.mrb[0].mxu0
        %v1391 = vadd.f32 %v553, %v1390
        %v1392 = vpop.f32.mrb[0].mxu0
        %1393 = vmatprep.mubr.f32.mxu0 0.0
        %1394 = vmatmul.mubr.f32.gmra.mrb[0].mxu0 %v788
        %v1395 = vpop.f32.mrb[0].mxu0
        %v1396 = vadd.f32 %v553, %v1395
        %v1397 = vpop.f32.mrb[0].mxu0
        %1398 = vmatprep.mubr.f32.mxu0 0.0
        %1399 = vmatmul.mubr.f32.gmra.mrb[0].mxu0 %v791
        %v1400 = vpop.f32.mrb[0].mxu0
        %v1401 = vadd.f32 %v553, %v1400
        %v1402 = vpop.f32.mrb[0].mxu0
        %1403 = vmatprep.mubr.f32.mxu0 0.0
        %1404 = vmatmul.mubr.f32.gmra.mrb[0].mxu0 %v794
        %v1405 = vpop.f32.mrb[0].mxu0
        %v1406 = vadd.f32 %v553, %v1405
        %v1407 = vpop.f32.mrb[0].mxu0
        %1408 = vmatprep.mubr.f32.mxu0 0.0
        %1409 = vmatmul.mubr.f32.gmra.mrb[0].mxu0 %v797
        %v1410 = vpop.f32.mrb[0].mxu0
        %v1411 = vadd.f32 %v553, %v1410
        %v1412 = vpop.f32.mrb[0].mxu0
        %1413 = vmatprep.mubr.f32.mxu0 0.0
        %1414 = vmatmul.mubr.f32.gmra.mrb[0].mxu0 %v800
        %v1415 = vpop.f32.mrb[0].mxu0
        %v1416 = vadd.f32 %v553, %v1415
        %v1417 = vpop.f32.mrb[0].mxu0
        %1418 = vmatprep.mubr.f32.mxu0 0.0
        %1419 = vmatmul.mubr.f32.gmra.mrb[0].mxu0 %v803
        %v1420 = vpop.f32.mrb[0].mxu0
        %v1421 = vadd.f32 %v553, %v1420
        %v1422 = vpop.f32.mrb[0].mxu0
        %1423 = vmatprep.mubr.f32.mxu0 0.0
        %1424 = vmatmul.mubr.f32.gmra.mrb[0].mxu0 %v806
        %v1425 = vpop.f32.mrb[0].mxu0
        %v1426 = vadd.f32 %v553, %v1425
        %v1427 = vpop.f32.mrb[0].mxu0
        %1428 = vmatprep.mubr.f32.mxu0 0.0
        %1429 = vmatmul.mubr.f32.gmra.mrb[0].mxu0 %v809
        %v1430 = vpop.f32.mrb[0].mxu0
        %v1431 = vadd.f32 %v553, %v1430
        %v1432 = vpop.f32.mrb[0].mxu0
        %1433 = vmatprep.mubr.f32.mxu0 0.0
        %1434 = vmatmul.mubr.f32.gmra.mrb[0].mxu0 %v812
        %v1435 = vpop.f32.mrb[0].mxu0
        %v1436 = vadd.f32 %v553, %v1435
        %v1437 = vpop.f32.mrb[0].mxu0
        %1438 = vmatprep.mubr.f32.mxu0 0.0
        %1439 = vmatmul.mubr.f32.gmra.mrb[0].mxu0 %v815
        %v1440 = vpop.f32.mrb[0].mxu0
        %v1441 = vadd.f32 %v553, %v1440
        %v1442 = vpop.f32.mrb[0].mxu0
        %1443 = vmatprep.mubr.f32.mxu0 0.0
        %1444 = vmatmul.mubr.f32.gmra.mrb[0].mxu0 %v818
        %v1445 = vpop.f32.mrb[0].mxu0
        %v1446 = vadd.f32 %v553, %v1445
        %v1447 = vpop.f32.mrb[0].mxu0
        %1448 = vmatprep.mubr.f32.mxu0 0.0
        %1449 = vmatmul.mubr.f32.gmra.mrb[0].mxu0 %v821
        %v1450 = vpop.f32.mrb[0].mxu0
        %v1451 = vadd.f32 %v553, %v1450
        %v1452 = vpop.f32.mrb[0].mxu0
        %1453 = vmatprep.mubr.f32.mxu0 0.0
        %1454 = vmatmul.mubr.f32.gmra.mrb[0].mxu0 %v824
        %v1455 = vpop.f32.mrb[0].mxu0
        %v1456 = vadd.f32 %v553, %v1455
        %v1457 = vpop.f32.mrb[0].mxu0
        %1458 = vmatprep.mubr.f32.mxu0 0.0
        %1459 = vmatmul.mubr.f32.gmra.mrb[0].mxu0 %v827
        %v1460 = vpop.f32.mrb[0].mxu0
        %v1461 = vadd.f32 %v553, %v1460
        %v1462 = vpop.f32.mrb[0].mxu0
        %1463 = vmatprep.mubr.f32.mxu0 0.0
        %1464 = vmatmul.mubr.f32.gmra.mrb[0].mxu0 %v830
        %v1465 = vpop.f32.mrb[0].mxu0
        %v1466 = vadd.f32 %v553, %v1465
        %v1467 = vpop.f32.mrb[0].mxu0
        %1468 = vmatprep.mubr.f32.mxu0 0.0
        %1469 = vmatmul.mubr.f32.gmra.mrb[0].mxu0 %v833
        %v1470 = vpop.f32.mrb[0].mxu0
        %v1471 = vadd.f32 %v553, %v1470
        %v1472 = vpop.f32.mrb[0].mxu0
        %1473 = vmatprep.mubr.f32.mxu0 0.0
        %1474 = vmatmul.mubr.f32.gmra.mrb[0].mxu0 %v836
        %v1475 = vpop.f32.mrb[0].mxu0
        %v1476 = vadd.f32 %v553, %v1475
        %v1477 = vpop.f32.mrb[0].mxu0
        %1478 = vmatprep.mubr.f32.mxu0 0.0
        %1479 = vmatmul.mubr.f32.gmra.mrb[0].mxu0 %v839
        %v1480 = vpop.f32.mrb[0].mxu0
        %v1481 = vadd.f32 %v553, %v1480
        %v1482 = vpop.f32.mrb[0].mxu0
        %1483 = vmatprep.mubr.f32.mxu0 0.0
        %1484 = vmatmul.mubr.f32.gmra.mrb[0].mxu0 %v842
        %v1485 = vpop.f32.mrb[0].mxu0
        %v1486 = vadd.f32 %v553, %v1485
        %v1487 = vpop.f32.mrb[0].mxu0
        %1488 = vmatprep.mubr.f32.mxu0 0.0
        %1489 = vmatmul.mubr.f32.gmra.mrb[0].mxu0 %v845
        %v1490 = vpop.f32.mrb[0].mxu0
        %v1491 = vadd.f32 %v553, %v1490
        %v1492 = vpop.f32.mrb[0].mxu0
        %1493 = vmatprep.mubr.f32.mxu0 0.0
        %1494 = vmatmul.mubr.f32.gmra.mrb[0].mxu0 %v848
        %v1495 = vpop.f32.mrb[0].mxu0
        %v1496 = vadd.f32 %v553, %v1495
        %v1497 = vpop.f32.mrb[0].mxu0
        %1498 = vmatprep.mubr.f32.mxu0 0.0
        %1499 = vmatmul.mubr.f32.gmra.mrb[0].mxu0 %v851
        %v1500 = vpop.f32.mrb[0].mxu0
        %v1501 = vadd.f32 %v553, %v1500
        %v1502 = vpop.f32.mrb[0].mxu0
        %1503 = vmatprep.mubr.f32.mxu0 0.0
        %1504 = vmatmul.mubr.f32.gmra.mrb[0].mxu0 %v854
        %v1505 = vpop.f32.mrb[0].mxu0
        %v1506 = vadd.f32 %v553, %v1505
        %v1507 = vpop.f32.mrb[0].mxu0
        %1508 = vmatprep.mubr.f32.mxu0 0.0
        %1509 = vmatmul.mubr.f32.gmra.mrb[0].mxu0 %v857
        %v1510 = vpop.f32.mrb[0].mxu0
        %v1511 = vadd.f32 %v553, %v1510
        %v1512 = vpop.f32.mrb[0].mxu0
        %1513 = vmatprep.mubr.f32.mxu0 0.0
        %1514 = vmatmul.mubr.f32.gmra.mrb[0].mxu0 %v860
        %v1515 = vpop.f32.mrb[0].mxu0
        %v1516 = vadd.f32 %v553, %v1515
        %v1517 = vpop.f32.mrb[0].mxu0
        %1518 = vmatprep.mubr.f32.mxu0 0.0
        %1519 = vmatmul.mubr.f32.gmra.mrb[0].mxu0 %v863
        %v1520 = vpop.f32.mrb[0].mxu0
        %v1521 = vadd.f32 %v553, %v1520
        %v1522 = vpop.f32.mrb[0].mxu0
        %1523 = vmatprep.mubr.f32.mxu0 0.0
        %1524 = vmatmul.mubr.f32.gmra.mrb[0].mxu0 %v866
        %v1525 = vpop.f32.mrb[0].mxu0
        %v1526 = vadd.f32 %v553, %v1525
        %v1527 = vpop.f32.mrb[0].mxu0
        %1528 = vmatprep.mubr.f32.mxu0 0.0
        %1529 = vmatmul.mubr.f32.gmra.mrb[0].mxu0 %v869
        %v1530 = vpop.f32.mrb[0].mxu0
        %v1531 = vadd.f32 %v553, %v1530
        %v1532 = vpop.f32.mrb[0].mxu0
        %1533 = vmatprep.mubr.f32.mxu0 0.0
        %1534 = vmatmul.mubr.f32.gmra.mrb[0].mxu0 %v872
        %v1535 = vpop.f32.mrb[0].mxu0
        %v1536 = vadd.f32 %v553, %v1535
        %v1537 = vpop.f32.mrb[0].mxu0
        %1538 = vmatprep.mubr.f32.mxu0 0.0
        %1539 = vmatmul.mubr.f32.gmra.mrb[0].mxu0 %v875
        %v1540 = vpop.f32.mrb[0].mxu0
        %v1541 = vadd.f32 %v553, %v1540
        %v1542 = vpop.f32.mrb[0].mxu0
        %1543 = vmatprep.mubr.f32.mxu0 0.0
        %1544 = vmatmul.mubr.f32.gmra.mrb[0].mxu0 %v878
        %v1545 = vpop.f32.mrb[0].mxu0
        %v1546 = vadd.f32 %v553, %v1545
        %v1547 = vpop.f32.mrb[0].mxu0
        %1548 = vmatprep.mubr.f32.mxu0 0.0
        %1549 = vmatmul.mubr.f32.gmra.mrb[0].mxu0 %v881
        %v1550 = vpop.f32.mrb[0].mxu0
        %v1551 = vadd.f32 %v553, %v1550
        %v1552 = vpop.f32.mrb[0].mxu0
        %1553 = vmatprep.mubr.f32.mxu0 0.0
        %1554 = vmatmul.mubr.f32.gmra.mrb[0].mxu0 %v884
        %v1555 = vpop.f32.mrb[0].mxu0
        %v1556 = vadd.f32 %v553, %v1555
        %v1557 = vpop.f32.mrb[0].mxu0
        %1558 = vmatprep.mubr.f32.mxu0 0.0
        %1559 = vmatmul.mubr.f32.gmra.mrb[0].mxu0 %v887
        %v1560 = vpop.f32.mrb[0].mxu0
        %v1561 = vadd.f32 %v553, %v1560
        %v1562 = vpop.f32.mrb[0].mxu0
        %1563 = vmatprep.mubr.f32.mxu0 0.0
        %1564 = vmatmul.mubr.f32.gmra.mrb[0].mxu0 %v890
        %v1565 = vpop.f32.mrb[0].mxu0
        %v1566 = vadd.f32 %v553, %v1565
        %v1567 = vpop.f32.mrb[0].mxu0
        %1568 = vmatprep.mubr.f32.mxu0 0.0
        %1569 = vmatmul.mubr.f32.gmra.mrb[0].mxu0 %v893
        %v1570 = vpop.f32.mrb[0].mxu0
        %v1571 = vadd.f32 %v553, %v1570
        %v1572 = vpop.f32.mrb[0].mxu0
        %1573 = vmatprep.mubr.f32.mxu0 0.0
        %1574 = vmatmul.mubr.f32.gmra.mrb[0].mxu0 %v896
        %v1575 = vpop.f32.mrb[0].mxu0
        %v1576 = vadd.f32 %v553, %v1575
        %v1577 = vpop.f32.mrb[0].mxu0
        %1578 = vmatprep.mubr.f32.mxu0 0.0
        %1579 = vmatmul.mubr.f32.gmra.mrb[0].mxu0 %v899
        %v1580 = vpop.f32.mrb[0].mxu0
        %v1581 = vadd.f32 %v553, %v1580
        %v1582 = vpop.f32.mrb[0].mxu0
        %1583 = vmatprep.mubr.f32.mxu0 0.0
        %1584 = vmatmul.mubr.f32.gmra.mrb[0].mxu0 %v902
        %v1585 = vpop.f32.mrb[0].mxu0
        %v1586 = vadd.f32 %v553, %v1585
        %v1587 = vpop.f32.mrb[0].mxu0
        %1588 = vmatprep.mubr.f32.mxu0 0.0
        %1589 = vmatmul.mubr.f32.gmra.mrb[0].mxu0 %v905
        %v1590 = vpop.f32.mrb[0].mxu0
        %v1591 = vadd.f32 %v553, %v1590
        %v1592 = vpop.f32.mrb[0].mxu0
        %1593 = vmatprep.mubr.f32.mxu0 0.0
        %1594 = vmatmul.mubr.f32.gmra.mrb[0].mxu0 %v908
        %v1595 = vpop.f32.mrb[0].mxu0
        %v1596 = vadd.f32 %v553, %v1595
        %v1597 = vpop.f32.mrb[0].mxu0
        %1598 = vmatprep.mubr.f32.mxu0 0.0
        %1599 = vmatmul.mubr.f32.gmra.mrb[0].mxu0 %v911
        %v1600 = vpop.f32.mrb[0].mxu0
        %v1601 = vadd.f32 %v553, %v1600
        %v1602 = vpop.f32.mrb[0].mxu0
        %1603 = vmatprep.mubr.f32.mxu0 0.0
        %1604 = vmatmul.mubr.f32.gmra.mrb[0].mxu0 %v914
        %v1605 = vpop.f32.mrb[0].mxu0
        %v1606 = vadd.f32 %v553, %v1605
        %v1607 = vpop.f32.mrb[0].mxu0
        %1608 = vmatprep.mubr.f32.mxu0 0.0
        %1609 = vmatmul.mubr.f32.gmra.mrb[0].mxu0 %v917
        %v1610 = vpop.f32.mrb[0].mxu0
        %v1611 = vadd.f32 %v553, %v1610
        %v1612 = vpop.f32.mrb[0].mxu0
        %1613 = vmatprep.mubr.f32.mxu0 0.0
        %1614 = vmatmul.mubr.f32.gmra.mrb[0].mxu0 %v920
        %v1615 = vpop.f32.mrb[0].mxu0
        %v1616 = vadd.f32 %v553, %v1615
        %v1617 = vpop.f32.mrb[0].mxu0
        %1618 = vmatprep.mubr.f32.mxu0 0.0
        %1619 = vmatmul.mubr.f32.gmra.mrb[0].mxu0 %v923
        %v1620 = vpop.f32.mrb[0].mxu0
        %v1621 = vadd.f32 %v553, %v1620
        %v1622 = vpop.f32.mrb[0].mxu0
        %1623 = vmatprep.mubr.f32.mxu0 0.0
        %1624 = vmatmul.mubr.f32.gmra.mrb[0].mxu0 %v926
        %v1625 = vpop.f32.mrb[0].mxu0
        %v1626 = vadd.f32 %v553, %v1625
        %v1627 = vpop.f32.mrb[0].mxu0
        %1628 = vmatprep.mubr.f32.mxu0 0.0
        %1629 = vmatmul.mubr.f32.gmra.mrb[0].mxu0 %v929
        %v1630 = vpop.f32.mrb[0].mxu0
        %v1631 = vadd.f32 %v553, %v1630
        %v1632 = vpop.f32.mrb[0].mxu0
        %1633 = vmatprep.mubr.f32.mxu0 0.0
        %1634 = vmatmul.mubr.f32.gmra.mrb[0].mxu0 %v932
        %v1635 = vpop.f32.mrb[0].mxu0
        %v1636 = vadd.f32 %v553, %v1635
        %v1637 = vpop.f32.mrb[0].mxu0
        %1638 = vmatprep.mubr.f32.mxu0 0.0
        %1639 = vmatmul.mubr.f32.gmra.mrb[0].mxu0 %v935
        %v1640 = vpop.f32.mrb[0].mxu0
        %v1641 = vadd.f32 %v553, %v1640
        %v1642 = vpop.f32.mrb[0].mxu0
        %1643 = vmatprep.mubr.f32.mxu0 0.0
        %1644 = vmatmul.mubr.f32.gmra.mrb[0].mxu0 %v938
        %v1645 = vpop.f32.mrb[0].mxu0
        %v1646 = vadd.f32 %v553, %v1645
        %v1647 = vpop.f32.mrb[0].mxu0
        %1648 = vdwg.mxu0
        %v1649 = vmax.f32 %v1011, 0.0
        %v1650 = vmax.f32 %v1016, 0.0
        %v1651 = vmax.f32 %v1021, 0.0
        %v1652 = vmax.f32 %v1026, 0.0
        %v1653 = vmax.f32 %v1031, 0.0
        %v1654 = vmax.f32 %v1036, 0.0
        %v1655 = vmax.f32 %v1041, 0.0
        %v1656 = vmax.f32 %v1046, 0.0
        %v1657 = vmax.f32 %v1051, 0.0
        %v1658 = vmax.f32 %v1056, 0.0
        %v1659 = vmax.f32 %v1061, 0.0
        %v1660 = vmax.f32 %v1066, 0.0
        %v1661 = vmax.f32 %v1071, 0.0
        %v1662 = vmax.f32 %v1076, 0.0
        %v1663 = vmax.f32 %v1081, 0.0
        %v1664 = vmax.f32 %v1086, 0.0
        %v1665 = vmax.f32 %v1091, 0.0
        %v1666 = vmax.f32 %v1096, 0.0
        %v1667 = vmax.f32 %v1101, 0.0
        %v1668 = vmax.f32 %v1106, 0.0
        %v1669 = vmax.f32 %v1111, 0.0
        %v1670 = vmax.f32 %v1116, 0.0
        %v1671 = vmax.f32 %v1121, 0.0
        %v1672 = vmax.f32 %v1126, 0.0
        %v1673 = vmax.f32 %v1131, 0.0
        %v1674 = vmax.f32 %v1136, 0.0
        %v1675 = vmax.f32 %v1141, 0.0
        %v1676 = vmax.f32 %v1146, 0.0
        %v1677 = vmax.f32 %v1151, 0.0
        %v1678 = vmax.f32 %v1156, 0.0
        %v1679 = vmax.f32 %v1161, 0.0
        %v1680 = vmax.f32 %v1166, 0.0
        %v1681 = vmax.f32 %v1171, 0.0
        %v1682 = vmax.f32 %v1176, 0.0
        %v1683 = vmax.f32 %v1181, 0.0
        %v1684 = vmax.f32 %v1186, 0.0
        %v1685 = vmax.f32 %v1191, 0.0
        %v1686 = vmax.f32 %v1196, 0.0
        %v1687 = vmax.f32 %v1201, 0.0
        %v1688 = vmax.f32 %v1206, 0.0
        %v1689 = vmax.f32 %v1211, 0.0
        %v1690 = vmax.f32 %v1216, 0.0
        %v1691 = vmax.f32 %v1221, 0.0
        %v1692 = vmax.f32 %v1226, 0.0
        %v1693 = vmax.f32 %v1231, 0.0
        %v1694 = vmax.f32 %v1236, 0.0
        %v1695 = vmax.f32 %v1241, 0.0
        %v1696 = vmax.f32 %v1246, 0.0
        %v1697 = vmax.f32 %v1251, 0.0
        %v1698 = vmax.f32 %v1256, 0.0
        %v1699 = vmax.f32 %v1261, 0.0
        %v1700 = vmax.f32 %v1266, 0.0
        %v1701 = vmax.f32 %v1271, 0.0
        %v1702 = vmax.f32 %v1276, 0.0
        %v1703 = vmax.f32 %v1281, 0.0
        %v1704 = vmax.f32 %v1286, 0.0
        %v1705 = vmax.f32 %v1291, 0.0
        %v1706 = vmax.f32 %v1296, 0.0
        %v1707 = vmax.f32 %v1301, 0.0
        %v1708 = vmax.f32 %v1306, 0.0
        %v1709 = vmax.f32 %v1311, 0.0
        %v1710 = vmax.f32 %v1316, 0.0
        %v1711 = vmax.f32 %v1321, 0.0
        %v1712 = vmax.f32 %v1326, 0.0
        %v1713 = vmax.f32 %v1331, 0.0
        %v1714 = vmax.f32 %v1336, 0.0
        %v1715 = vmax.f32 %v1341, 0.0
        %v1716 = vmax.f32 %v1346, 0.0
        %v1717 = vmax.f32 %v1351, 0.0
        %v1718 = vmax.f32 %v1356, 0.0
        %v1719 = vmax.f32 %v1361, 0.0
        %v1720 = vmax.f32 %v1366, 0.0
        %v1721 = vmax.f32 %v1371, 0.0
        %v1722 = vmax.f32 %v1376, 0.0
        %v1723 = vmax.f32 %v1381, 0.0
        %v1724 = vmax.f32 %v1386, 0.0
        %v1725 = vmax.f32 %v1391, 0.0
        %v1726 = vmax.f32 %v1396, 0.0
        %v1727 = vmax.f32 %v1401, 0.0
        %v1728 = vmax.f32 %v1406, 0.0
        %v1729 = vmax.f32 %v1411, 0.0
        %v1730 = vmax.f32 %v1416, 0.0
        %v1731 = vmax.f32 %v1421, 0.0
        %v1732 = vmax.f32 %v1426, 0.0
        %v1733 = vmax.f32 %v1431, 0.0
        %v1734 = vmax.f32 %v1436, 0.0
        %v1735 = vmax.f32 %v1441, 0.0
        %v1736 = vmax.f32 %v1446, 0.0
        %v1737 = vmax.f32 %v1451, 0.0
        %v1738 = vmax.f32 %v1456, 0.0
        %v1739 = vmax.f32 %v1461, 0.0
        %v1740 = vmax.f32 %v1466, 0.0
        %v1741 = vmax.f32 %v1471, 0.0
        %v1742 = vmax.f32 %v1476, 0.0
        %v1743 = vmax.f32 %v1481, 0.0
        %v1744 = vmax.f32 %v1486, 0.0
        %v1745 = vmax.f32 %v1491, 0.0
        %v1746 = vmax.f32 %v1496, 0.0
        %v1747 = vmax.f32 %v1501, 0.0
        %v1748 = vmax.f32 %v1506, 0.0
        %v1749 = vmax.f32 %v1511, 0.0
        %v1750 = vmax.f32 %v1516, 0.0
        %v1751 = vmax.f32 %v1521, 0.0
        %v1752 = vmax.f32 %v1526, 0.0
        %v1753 = vmax.f32 %v1531, 0.0
        %v1754 = vmax.f32 %v1536, 0.0
        %v1755 = vmax.f32 %v1541, 0.0
        %v1756 = vmax.f32 %v1546, 0.0
        %v1757 = vmax.f32 %v1551, 0.0
        %v1758 = vmax.f32 %v1556, 0.0
        %v1759 = vmax.f32 %v1561, 0.0
        %v1760 = vmax.f32 %v1566, 0.0
        %v1761 = vmax.f32 %v1571, 0.0
        %v1762 = vmax.f32 %v1576, 0.0
        %v1763 = vmax.f32 %v1581, 0.0
        %v1764 = vmax.f32 %v1586, 0.0
        %v1765 = vmax.f32 %v1591, 0.0
        %v1766 = vmax.f32 %v1596, 0.0
        %v1767 = vmax.f32 %v1601, 0.0
        %v1768 = vmax.f32 %v1606, 0.0
        %v1769 = vmax.f32 %v1611, 0.0
        %v1770 = vmax.f32 %v1616, 0.0
        %v1771 = vmax.f32 %v1621, 0.0
        %v1772 = vmax.f32 %v1626, 0.0
        %v1773 = vmax.f32 %v1631, 0.0
        %v1774 = vmax.f32 %v1636, 0.0
        %v1775 = vmax.f32 %v1641, 0.0
        %v1776 = vmax.f32 %v1646, 0.0
        %v1777 = vpack.c.bf16 %v1650, %v1649
        %v1778 = vpack.c.bf16 %v1652, %v1651
        %v1779 = vpack.c.bf16 %v1654, %v1653
        %v1780 = vpack.c.bf16 %v1656, %v1655
        %v1781 = vpack.c.bf16 %v1658, %v1657
        %v1782 = vpack.c.bf16 %v1660, %v1659
        %v1783 = vpack.c.bf16 %v1662, %v1661
        %v1784 = vpack.c.bf16 %v1664, %v1663
        %v1785 = vpack.c.bf16 %v1666, %v1665
        %v1786 = vpack.c.bf16 %v1668, %v1667
        %v1787 = vpack.c.bf16 %v1670, %v1669
        %v1788 = vpack.c.bf16 %v1672, %v1671
        %v1789 = vpack.c.bf16 %v1674, %v1673
        %v1790 = vpack.c.bf16 %v1676, %v1675
        %v1791 = vpack.c.bf16 %v1678, %v1677
        %v1792 = vpack.c.bf16 %v1680, %v1679
        %v1793 = vpack.c.bf16 %v1682, %v1681
        %v1794 = vpack.c.bf16 %v1684, %v1683
        %v1795 = vpack.c.bf16 %v1686, %v1685
        %v1796 = vpack.c.bf16 %v1688, %v1687
        %v1797 = vpack.c.bf16 %v1690, %v1689
        %v1798 = vpack.c.bf16 %v1692, %v1691
        %v1799 = vpack.c.bf16 %v1694, %v1693
        %v1800 = vpack.c.bf16 %v1696, %v1695
        %v1801 = vpack.c.bf16 %v1698, %v1697
        %v1802 = vpack.c.bf16 %v1700, %v1699
        %v1803 = vpack.c.bf16 %v1702, %v1701
        %v1804 = vpack.c.bf16 %v1704, %v1703
        %v1805 = vpack.c.bf16 %v1706, %v1705
        %v1806 = vpack.c.bf16 %v1708, %v1707
        %v1807 = vpack.c.bf16 %v1710, %v1709
        %v1808 = vpack.c.bf16 %v1712, %v1711
        %v1809 = vpack.c.bf16 %v1714, %v1713
        %v1810 = vpack.c.bf16 %v1716, %v1715
        %v1811 = vpack.c.bf16 %v1718, %v1717
        %v1812 = vpack.c.bf16 %v1720, %v1719
        %v1813 = vpack.c.bf16 %v1722, %v1721
        %v1814 = vpack.c.bf16 %v1724, %v1723
        %v1815 = vpack.c.bf16 %v1726, %v1725
        %v1816 = vpack.c.bf16 %v1728, %v1727
        %v1817 = vpack.c.bf16 %v1730, %v1729
        %v1818 = vpack.c.bf16 %v1732, %v1731
        %v1819 = vpack.c.bf16 %v1734, %v1733
        %v1820 = vpack.c.bf16 %v1736, %v1735
        %v1821 = vpack.c.bf16 %v1738, %v1737
        %v1822 = vpack.c.bf16 %v1740, %v1739
        %v1823 = vpack.c.bf16 %v1742, %v1741
        %v1824 = vpack.c.bf16 %v1744, %v1743
        %v1825 = vpack.c.bf16 %v1746, %v1745
        %v1826 = vpack.c.bf16 %v1748, %v1747
        %v1827 = vpack.c.bf16 %v1750, %v1749
        %v1828 = vpack.c.bf16 %v1752, %v1751
        %v1829 = vpack.c.bf16 %v1754, %v1753
        %v1830 = vpack.c.bf16 %v1756, %v1755
        %v1831 = vpack.c.bf16 %v1758, %v1757
        %v1832 = vpack.c.bf16 %v1760, %v1759
        %v1833 = vpack.c.bf16 %v1762, %v1761
        %v1834 = vpack.c.bf16 %v1764, %v1763
        %v1835 = vpack.c.bf16 %v1766, %v1765
        %v1836 = vpack.c.bf16 %v1768, %v1767
        %v1837 = vpack.c.bf16 %v1770, %v1769
        %v1838 = vpack.c.bf16 %v1772, %v1771
        %v1839 = vpack.c.bf16 %v1774, %v1773
        %v1840 = vpack.c.bf16 %v1776, %v1775
        %v1841 = vld [vmem:[%s3] sm:$0xf]
        %v1842 = vld [vmem:[%s3 + $0x4] sm:$0xf]
        %v1843 = vld [vmem:[%s3 + $0x8] sm:$0xf]
        %v1844 = vld [vmem:[%s3 + $0xc] sm:$0xf]
        %v1845 = vld [vmem:[%s3 + $0x10] sm:$0xf]
        %v1846 = vld [vmem:[%s3 + $0x14] sm:$0xf]
        %v1847 = vld [vmem:[%s3 + $0x18] sm:$0xf]
        %v1848 = vld [vmem:[%s3 + $0x1c] sm:$0xf]
        %v1849 = vld [vmem:[%s4] sm:$0x1]
        %v1851 = vlaneseq
        %v1852 = vshrl.u32 %v1851, 7
        %v1853 = vsub.s32 0, %v1852
        %v1854 = vrot.slane %v1849, %v1853
        %v1864 = vunpack.c.l.b16 %v1841
        %v1865 = vunpack.c.l.b16 %v1842
        %v1866 = vunpack.c.l.b16 %v1843
        %v1867 = vunpack.c.l.b16 %v1844
        %v1868 = vunpack.c.l.b16 %v1845
        %v1869 = vunpack.c.l.b16 %v1846
        %v1870 = vunpack.c.l.b16 %v1847
        %v1871 = vunpack.c.l.b16 %v1848
        %v1872 = vpack.c.b16 %v1865, %v1864
        %v1873 = vpack.c.b16 %v1867, %v1866
        %v1874 = vpack.c.b16 %v1869, %v1868
        %v1875 = vpack.c.b16 %v1871, %v1870
        %vm1880 = vcmask 523264
        %v1882 = vsel %vm1880, %v1777, 0
        %v1885 = vsel %vm1880, %v1778, 0
        %v1888 = vsel %vm1880, %v1779, 0
        %v1891 = vsel %vm1880, %v1780, 0
        %v1894 = vsel %vm1880, %v1781, 0
        %v1897 = vsel %vm1880, %v1782, 0
        %v1900 = vsel %vm1880, %v1783, 0
        %v1903 = vsel %vm1880, %v1784, 0
        %v1906 = vsel %vm1880, %v1785, 0
        %v1909 = vsel %vm1880, %v1786, 0
        %v1912 = vsel %vm1880, %v1787, 0
        %v1915 = vsel %vm1880, %v1788, 0
        %v1918 = vsel %vm1880, %v1789, 0
        %v1921 = vsel %vm1880, %v1790, 0
        %v1924 = vsel %vm1880, %v1791, 0
        %v1927 = vsel %vm1880, %v1792, 0
        %v1930 = vsel %vm1880, %v1793, 0
        %v1933 = vsel %vm1880, %v1794, 0
        %v1936 = vsel %vm1880, %v1795, 0
        %v1939 = vsel %vm1880, %v1796, 0
        %v1942 = vsel %vm1880, %v1797, 0
        %v1945 = vsel %vm1880, %v1798, 0
        %v1948 = vsel %vm1880, %v1799, 0
        %v1951 = vsel %vm1880, %v1800, 0
        %v1954 = vsel %vm1880, %v1801, 0
        %v1957 = vsel %vm1880, %v1802, 0
        %v1960 = vsel %vm1880, %v1803, 0
        %v1963 = vsel %vm1880, %v1804, 0
        %v1966 = vsel %vm1880, %v1805, 0
        %v1969 = vsel %vm1880, %v1806, 0
        %v1972 = vsel %vm1880, %v1807, 0
        %v1975 = vsel %vm1880, %v1808, 0
        %v1978 = vsel %vm1880, %v1809, 0
        %v1981 = vsel %vm1880, %v1810, 0
        %v1984 = vsel %vm1880, %v1811, 0
        %v1987 = vsel %vm1880, %v1812, 0
        %v1990 = vsel %vm1880, %v1813, 0
        %v1993 = vsel %vm1880, %v1814, 0
        %v1996 = vsel %vm1880, %v1815, 0
        %v1999 = vsel %vm1880, %v1816, 0
        %v2002 = vsel %vm1880, %v1817, 0
        %v2005 = vsel %vm1880, %v1818, 0
        %v2008 = vsel %vm1880, %v1819, 0
        %v2011 = vsel %vm1880, %v1820, 0
        %v2014 = vsel %vm1880, %v1821, 0
        %v2017 = vsel %vm1880, %v1822, 0
        %v2020 = vsel %vm1880, %v1823, 0
        %v2023 = vsel %vm1880, %v1824, 0
        %v2026 = vsel %vm1880, %v1825, 0
        %v2029 = vsel %vm1880, %v1826, 0
        %v2032 = vsel %vm1880, %v1827, 0
        %v2035 = vsel %vm1880, %v1828, 0
        %v2038 = vsel %vm1880, %v1829, 0
        %v2041 = vsel %vm1880, %v1830, 0
        %v2044 = vsel %vm1880, %v1831, 0
        %v2047 = vsel %vm1880, %v1832, 0
        %v2050 = vsel %vm1880, %v1833, 0
        %v2053 = vsel %vm1880, %v1834, 0
        %v2056 = vsel %vm1880, %v1835, 0
        %v2059 = vsel %vm1880, %v1836, 0
        %v2062 = vsel %vm1880, %v1837, 0
        %v2065 = vsel %vm1880, %v1838, 0
        %v2068 = vsel %vm1880, %v1839, 0
        %v2071 = vsel %vm1880, %v1840, 0
        %2073 = vmatprep.subr.bf16.mxu0 0
        %2074 = vmatpush1.bf16.msra.mxu0 %v1872
        %2075 = vmatprep.subr.bf16.mxu0 0
        %2076 = vmatpush1.bf16.msra.mxu0 %v1873
        %2077 = vmatprep.subr.bf16.mxu0 0
        %2078 = vmatpush1.bf16.msra.mxu0 %v1874
        %2079 = vmatprep.subr.bf16.mxu0 0
        %2080 = vmatpush1.bf16.msra.mxu0 %v1875
        %2081 = vmatprep.subr.bf16.mxu0 0
        %2082 = vmatpush1.bf16.msra.mxu0 0
        %2083 = vmatprep.subr.bf16.mxu0 0
        %2084 = vmatpush1.bf16.msra.mxu0 0
        %2085 = vmatprep.subr.bf16.mxu0 0
        %2086 = vmatpush1.bf16.msra.mxu0 0
        %2087 = vmatprep.subr.bf16.mxu0 0
        %2088 = vmatpush1.bf16.msra.mxu0 0
        %2089 = vmatprep.subr.bf16.mxu0 0
        %2090 = vmatpush1.bf16.msra.mxu0 0
        %2091 = vmatprep.subr.bf16.mxu0 0
        %2092 = vmatpush1.bf16.msra.mxu0 0
        %2093 = vmatprep.subr.bf16.mxu0 0
        %2094 = vmatpush1.bf16.msra.mxu0 0
        %2095 = vmatprep.subr.bf16.mxu0 0
        %2096 = vmatpush1.bf16.msra.mxu0 0
        %2097 = vmatprep.subr.bf16.mxu0 0
        %2098 = vmatpush1.bf16.msra.mxu0 0
        %2099 = vmatprep.subr.bf16.mxu0 0
        %2100 = vmatpush1.bf16.msra.mxu0 0
        %2101 = vmatprep.subr.bf16.mxu0 0
        %2102 = vmatpush1.bf16.msra.mxu0 0
        %2103 = vmatprep.subr.bf16.mxu0 0
        %2104 = vmatpush1.bf16.msra.mxu0 0
        %2105 = vmatprep.mubr.bf16.mxu0 0
        %2106 = vmatmul.mubr.bf16.gmra.mrb[0].mxu0 %v1882
        %v2107 = vpop.f32.mrb[0].mxu0
        %v2108 = vadd.f32 %v1854, %v2107
        %v2109 = vpop.f32.mrb[0].mxu0
        %v2110 = vpop.f32.mrb[0].mxu0
        %v2111 = vadd.f32 %v1854, %v2110
        %v2112 = vpop.f32.mrb[0].mxu0
        %2113 = vmatprep.mubr.bf16.mxu0 0
        %2114 = vmatmul.mubr.bf16.gmra.mrb[0].mxu0 %v1885
        %v2115 = vpop.f32.mrb[0].mxu0
        %v2116 = vadd.f32 %v1854, %v2115
        %v2117 = vpop.f32.mrb[0].mxu0
        %v2118 = vpop.f32.mrb[0].mxu0
        %v2119 = vadd.f32 %v1854, %v2118
        %v2120 = vpop.f32.mrb[0].mxu0
        %2121 = vmatprep.mubr.bf16.mxu0 0
        %2122 = vmatmul.mubr.bf16.gmra.mrb[0].mxu0 %v1888
        %v2123 = vpop.f32.mrb[0].mxu0
        %v2124 = vadd.f32 %v1854, %v2123
        %v2125 = vpop.f32.mrb[0].mxu0
        %v2126 = vpop.f32.mrb[0].mxu0
        %v2127 = vadd.f32 %v1854, %v2126
        %v2128 = vpop.f32.mrb[0].mxu0
        %2129 = vmatprep.mubr.bf16.mxu0 0
        %2130 = vmatmul.mubr.bf16.gmra.mrb[0].mxu0 %v1891
        %v2131 = vpop.f32.mrb[0].mxu0
        %v2132 = vadd.f32 %v1854, %v2131
        %v2133 = vpop.f32.mrb[0].mxu0
        %v2134 = vpop.f32.mrb[0].mxu0
        %v2135 = vadd.f32 %v1854, %v2134
        %v2136 = vpop.f32.mrb[0].mxu0
        %2137 = vmatprep.mubr.bf16.mxu0 0
        %2138 = vmatmul.mubr.bf16.gmra.mrb[0].mxu0 %v1894
        %v2139 = vpop.f32.mrb[0].mxu0
        %v2140 = vadd.f32 %v1854, %v2139
        %v2141 = vpop.f32.mrb[0].mxu0
        %v2142 = vpop.f32.mrb[0].mxu0
        %v2143 = vadd.f32 %v1854, %v2142
        %v2144 = vpop.f32.mrb[0].mxu0
        %2145 = vmatprep.mubr.bf16.mxu0 0
        %2146 = vmatmul.mubr.bf16.gmra.mrb[0].mxu0 %v1897
        %v2147 = vpop.f32.mrb[0].mxu0
        %v2148 = vadd.f32 %v1854, %v2147
        %v2149 = vpop.f32.mrb[0].mxu0
        %v2150 = vpop.f32.mrb[0].mxu0
        %v2151 = vadd.f32 %v1854, %v2150
        %v2152 = vpop.f32.mrb[0].mxu0
        %2153 = vmatprep.mubr.bf16.mxu0 0
        %2154 = vmatmul.mubr.bf16.gmra.mrb[0].mxu0 %v1900
        %v2155 = vpop.f32.mrb[0].mxu0
        %v2156 = vadd.f32 %v1854, %v2155
        %v2157 = vpop.f32.mrb[0].mxu0
        %v2158 = vpop.f32.mrb[0].mxu0
        %v2159 = vadd.f32 %v1854, %v2158
        %v2160 = vpop.f32.mrb[0].mxu0
        %2161 = vmatprep.mubr.bf16.mxu0 0
        %2162 = vmatmul.mubr.bf16.gmra.mrb[0].mxu0 %v1903
        %v2163 = vpop.f32.mrb[0].mxu0
        %v2164 = vadd.f32 %v1854, %v2163
        %v2165 = vpop.f32.mrb[0].mxu0
        %v2166 = vpop.f32.mrb[0].mxu0
        %v2167 = vadd.f32 %v1854, %v2166
        %v2168 = vpop.f32.mrb[0].mxu0
        %2169 = vmatprep.mubr.bf16.mxu0 0
        %2170 = vmatmul.mubr.bf16.gmra.mrb[0].mxu0 %v1906
        %v2171 = vpop.f32.mrb[0].mxu0
        %v2172 = vadd.f32 %v1854, %v2171
        %v2173 = vpop.f32.mrb[0].mxu0
        %v2174 = vpop.f32.mrb[0].mxu0
        %v2175 = vadd.f32 %v1854, %v2174
        %v2176 = vpop.f32.mrb[0].mxu0
        %2177 = vmatprep.mubr.bf16.mxu0 0
        %2178 = vmatmul.mubr.bf16.gmra.mrb[0].mxu0 %v1909
        %v2179 = vpop.f32.mrb[0].mxu0
        %v2180 = vadd.f32 %v1854, %v2179
        %v2181 = vpop.f32.mrb[0].mxu0
        %v2182 = vpop.f32.mrb[0].mxu0
        %v2183 = vadd.f32 %v1854, %v2182
        %v2184 = vpop.f32.mrb[0].mxu0
        %2185 = vmatprep.mubr.bf16.mxu0 0
        %2186 = vmatmul.mubr.bf16.gmra.mrb[0].mxu0 %v1912
        %v2187 = vpop.f32.mrb[0].mxu0
        %v2188 = vadd.f32 %v1854, %v2187
        %v2189 = vpop.f32.mrb[0].mxu0
        %v2190 = vpop.f32.mrb[0].mxu0
        %v2191 = vadd.f32 %v1854, %v2190
        %v2192 = vpop.f32.mrb[0].mxu0
        %2193 = vmatprep.mubr.bf16.mxu0 0
        %2194 = vmatmul.mubr.bf16.gmra.mrb[0].mxu0 %v1915
        %v2195 = vpop.f32.mrb[0].mxu0
        %v2196 = vadd.f32 %v1854, %v2195
        %v2197 = vpop.f32.mrb[0].mxu0
        %v2198 = vpop.f32.mrb[0].mxu0
        %v2199 = vadd.f32 %v1854, %v2198
        %v2200 = vpop.f32.mrb[0].mxu0
        %2201 = vmatprep.mubr.bf16.mxu0 0
        %2202 = vmatmul.mubr.bf16.gmra.mrb[0].mxu0 %v1918
        %v2203 = vpop.f32.mrb[0].mxu0
        %v2204 = vadd.f32 %v1854, %v2203
        %v2205 = vpop.f32.mrb[0].mxu0
        %v2206 = vpop.f32.mrb[0].mxu0
        %v2207 = vadd.f32 %v1854, %v2206
        %v2208 = vpop.f32.mrb[0].mxu0
        %2209 = vmatprep.mubr.bf16.mxu0 0
        %2210 = vmatmul.mubr.bf16.gmra.mrb[0].mxu0 %v1921
        %v2211 = vpop.f32.mrb[0].mxu0
        %v2212 = vadd.f32 %v1854, %v2211
        %v2213 = vpop.f32.mrb[0].mxu0
        %v2214 = vpop.f32.mrb[0].mxu0
        %v2215 = vadd.f32 %v1854, %v2214
        %v2216 = vpop.f32.mrb[0].mxu0
        %2217 = vmatprep.mubr.bf16.mxu0 0
        %2218 = vmatmul.mubr.bf16.gmra.mrb[0].mxu0 %v1924
        %v2219 = vpop.f32.mrb[0].mxu0
        %v2220 = vadd.f32 %v1854, %v2219
        %v2221 = vpop.f32.mrb[0].mxu0
        %v2222 = vpop.f32.mrb[0].mxu0
        %v2223 = vadd.f32 %v1854, %v2222
        %v2224 = vpop.f32.mrb[0].mxu0
        %2225 = vmatprep.mubr.bf16.mxu0 0
        %2226 = vmatmul.mubr.bf16.gmra.mrb[0].mxu0 %v1927
        %v2227 = vpop.f32.mrb[0].mxu0
        %v2228 = vadd.f32 %v1854, %v2227
        %v2229 = vpop.f32.mrb[0].mxu0
        %v2230 = vpop.f32.mrb[0].mxu0
        %v2231 = vadd.f32 %v1854, %v2230
        %v2232 = vpop.f32.mrb[0].mxu0
        %2233 = vmatprep.mubr.bf16.mxu0 0
        %2234 = vmatmul.mubr.bf16.gmra.mrb[0].mxu0 %v1930
        %v2235 = vpop.f32.mrb[0].mxu0
        %v2236 = vadd.f32 %v1854, %v2235
        %v2237 = vpop.f32.mrb[0].mxu0
        %v2238 = vpop.f32.mrb[0].mxu0
        %v2239 = vadd.f32 %v1854, %v2238
        %v2240 = vpop.f32.mrb[0].mxu0
        %2241 = vmatprep.mubr.bf16.mxu0 0
        %2242 = vmatmul.mubr.bf16.gmra.mrb[0].mxu0 %v1933
        %v2243 = vpop.f32.mrb[0].mxu0
        %v2244 = vadd.f32 %v1854, %v2243
        %v2245 = vpop.f32.mrb[0].mxu0
        %v2246 = vpop.f32.mrb[0].mxu0
        %v2247 = vadd.f32 %v1854, %v2246
        %v2248 = vpop.f32.mrb[0].mxu0
        %2249 = vmatprep.mubr.bf16.mxu0 0
        %2250 = vmatmul.mubr.bf16.gmra.mrb[0].mxu0 %v1936
        %v2251 = vpop.f32.mrb[0].mxu0
        %v2252 = vadd.f32 %v1854, %v2251
        %v2253 = vpop.f32.mrb[0].mxu0
        %v2254 = vpop.f32.mrb[0].mxu0
        %v2255 = vadd.f32 %v1854, %v2254
        %v2256 = vpop.f32.mrb[0].mxu0
        %2257 = vmatprep.mubr.bf16.mxu0 0
        %2258 = vmatmul.mubr.bf16.gmra.mrb[0].mxu0 %v1939
        %v2259 = vpop.f32.mrb[0].mxu0
        %v2260 = vadd.f32 %v1854, %v2259
        %v2261 = vpop.f32.mrb[0].mxu0
        %v2262 = vpop.f32.mrb[0].mxu0
        %v2263 = vadd.f32 %v1854, %v2262
        %v2264 = vpop.f32.mrb[0].mxu0
        %2265 = vmatprep.mubr.bf16.mxu0 0
        %2266 = vmatmul.mubr.bf16.gmra.mrb[0].mxu0 %v1942
        %v2267 = vpop.f32.mrb[0].mxu0
        %v2268 = vadd.f32 %v1854, %v2267
        %v2269 = vpop.f32.mrb[0].mxu0
        %v2270 = vpop.f32.mrb[0].mxu0
        %v2271 = vadd.f32 %v1854, %v2270
        %v2272 = vpop.f32.mrb[0].mxu0
        %2273 = vmatprep.mubr.bf16.mxu0 0
        %2274 = vmatmul.mubr.bf16.gmra.mrb[0].mxu0 %v1945
        %v2275 = vpop.f32.mrb[0].mxu0
        %v2276 = vadd.f32 %v1854, %v2275
        %v2277 = vpop.f32.mrb[0].mxu0
        %v2278 = vpop.f32.mrb[0].mxu0
        %v2279 = vadd.f32 %v1854, %v2278
        %v2280 = vpop.f32.mrb[0].mxu0
        %2281 = vmatprep.mubr.bf16.mxu0 0
        %2282 = vmatmul.mubr.bf16.gmra.mrb[0].mxu0 %v1948
        %v2283 = vpop.f32.mrb[0].mxu0
        %v2284 = vadd.f32 %v1854, %v2283
        %v2285 = vpop.f32.mrb[0].mxu0
        %v2286 = vpop.f32.mrb[0].mxu0
        %v2287 = vadd.f32 %v1854, %v2286
        %v2288 = vpop.f32.mrb[0].mxu0
        %2289 = vmatprep.mubr.bf16.mxu0 0
        %2290 = vmatmul.mubr.bf16.gmra.mrb[0].mxu0 %v1951
        %v2291 = vpop.f32.mrb[0].mxu0
        %v2292 = vadd.f32 %v1854, %v2291
        %v2293 = vpop.f32.mrb[0].mxu0
        %v2294 = vpop.f32.mrb[0].mxu0
        %v2295 = vadd.f32 %v1854, %v2294
        %v2296 = vpop.f32.mrb[0].mxu0
        %2297 = vmatprep.mubr.bf16.mxu0 0
        %2298 = vmatmul.mubr.bf16.gmra.mrb[0].mxu0 %v1954
        %v2299 = vpop.f32.mrb[0].mxu0
        %v2300 = vadd.f32 %v1854, %v2299
        %v2301 = vpop.f32.mrb[0].mxu0
        %v2302 = vpop.f32.mrb[0].mxu0
        %v2303 = vadd.f32 %v1854, %v2302
        %v2304 = vpop.f32.mrb[0].mxu0
        %2305 = vmatprep.mubr.bf16.mxu0 0
        %2306 = vmatmul.mubr.bf16.gmra.mrb[0].mxu0 %v1957
        %v2307 = vpop.f32.mrb[0].mxu0
        %v2308 = vadd.f32 %v1854, %v2307
        %v2309 = vpop.f32.mrb[0].mxu0
        %v2310 = vpop.f32.mrb[0].mxu0
        %v2311 = vadd.f32 %v1854, %v2310
        %v2312 = vpop.f32.mrb[0].mxu0
        %2313 = vmatprep.mubr.bf16.mxu0 0
        %2314 = vmatmul.mubr.bf16.gmra.mrb[0].mxu0 %v1960
        %v2315 = vpop.f32.mrb[0].mxu0
        %v2316 = vadd.f32 %v1854, %v2315
        %v2317 = vpop.f32.mrb[0].mxu0
        %v2318 = vpop.f32.mrb[0].mxu0
        %v2319 = vadd.f32 %v1854, %v2318
        %v2320 = vpop.f32.mrb[0].mxu0
        %2321 = vmatprep.mubr.bf16.mxu0 0
        %2322 = vmatmul.mubr.bf16.gmra.mrb[0].mxu0 %v1963
        %v2323 = vpop.f32.mrb[0].mxu0
        %v2324 = vadd.f32 %v1854, %v2323
        %v2325 = vpop.f32.mrb[0].mxu0
        %v2326 = vpop.f32.mrb[0].mxu0
        %v2327 = vadd.f32 %v1854, %v2326
        %v2328 = vpop.f32.mrb[0].mxu0
        %2329 = vmatprep.mubr.bf16.mxu0 0
        %2330 = vmatmul.mubr.bf16.gmra.mrb[0].mxu0 %v1966
        %v2331 = vpop.f32.mrb[0].mxu0
        %v2332 = vadd.f32 %v1854, %v2331
        %v2333 = vpop.f32.mrb[0].mxu0
        %v2334 = vpop.f32.mrb[0].mxu0
        %v2335 = vadd.f32 %v1854, %v2334
        %v2336 = vpop.f32.mrb[0].mxu0
        %2337 = vmatprep.mubr.bf16.mxu0 0
        %2338 = vmatmul.mubr.bf16.gmra.mrb[0].mxu0 %v1969
        %v2339 = vpop.f32.mrb[0].mxu0
        %v2340 = vadd.f32 %v1854, %v2339
        %v2341 = vpop.f32.mrb[0].mxu0
        %v2342 = vpop.f32.mrb[0].mxu0
        %v2343 = vadd.f32 %v1854, %v2342
        %v2344 = vpop.f32.mrb[0].mxu0
        %2345 = vmatprep.mubr.bf16.mxu0 0
        %2346 = vmatmul.mubr.bf16.gmra.mrb[0].mxu0 %v1972
        %v2347 = vpop.f32.mrb[0].mxu0
        %v2348 = vadd.f32 %v1854, %v2347
        %v2349 = vpop.f32.mrb[0].mxu0
        %v2350 = vpop.f32.mrb[0].mxu0
        %v2351 = vadd.f32 %v1854, %v2350
        %v2352 = vpop.f32.mrb[0].mxu0
        %2353 = vmatprep.mubr.bf16.mxu0 0
        %2354 = vmatmul.mubr.bf16.gmra.mrb[0].mxu0 %v1975
        %v2355 = vpop.f32.mrb[0].mxu0
        %v2356 = vadd.f32 %v1854, %v2355
        %v2357 = vpop.f32.mrb[0].mxu0
        %v2358 = vpop.f32.mrb[0].mxu0
        %v2359 = vadd.f32 %v1854, %v2358
        %v2360 = vpop.f32.mrb[0].mxu0
        %2361 = vmatprep.mubr.bf16.mxu0 0
        %2362 = vmatmul.mubr.bf16.gmra.mrb[0].mxu0 %v1978
        %v2363 = vpop.f32.mrb[0].mxu0
        %v2364 = vadd.f32 %v1854, %v2363
        %v2365 = vpop.f32.mrb[0].mxu0
        %v2366 = vpop.f32.mrb[0].mxu0
        %v2367 = vadd.f32 %v1854, %v2366
        %v2368 = vpop.f32.mrb[0].mxu0
        %2369 = vmatprep.mubr.bf16.mxu0 0
        %2370 = vmatmul.mubr.bf16.gmra.mrb[0].mxu0 %v1981
        %v2371 = vpop.f32.mrb[0].mxu0
        %v2372 = vadd.f32 %v1854, %v2371
        %v2373 = vpop.f32.mrb[0].mxu0
        %v2374 = vpop.f32.mrb[0].mxu0
        %v2375 = vadd.f32 %v1854, %v2374
        %v2376 = vpop.f32.mrb[0].mxu0
        %2377 = vmatprep.mubr.bf16.mxu0 0
        %2378 = vmatmul.mubr.bf16.gmra.mrb[0].mxu0 %v1984
        %v2379 = vpop.f32.mrb[0].mxu0
        %v2380 = vadd.f32 %v1854, %v2379
        %v2381 = vpop.f32.mrb[0].mxu0
        %v2382 = vpop.f32.mrb[0].mxu0
        %v2383 = vadd.f32 %v1854, %v2382
        %v2384 = vpop.f32.mrb[0].mxu0
        %2385 = vmatprep.mubr.bf16.mxu0 0
        %2386 = vmatmul.mubr.bf16.gmra.mrb[0].mxu0 %v1987
        %v2387 = vpop.f32.mrb[0].mxu0
        %v2388 = vadd.f32 %v1854, %v2387
        %v2389 = vpop.f32.mrb[0].mxu0
        %v2390 = vpop.f32.mrb[0].mxu0
        %v2391 = vadd.f32 %v1854, %v2390
        %v2392 = vpop.f32.mrb[0].mxu0
        %2393 = vmatprep.mubr.bf16.mxu0 0
        %2394 = vmatmul.mubr.bf16.gmra.mrb[0].mxu0 %v1990
        %v2395 = vpop.f32.mrb[0].mxu0
        %v2396 = vadd.f32 %v1854, %v2395
        %v2397 = vpop.f32.mrb[0].mxu0
        %v2398 = vpop.f32.mrb[0].mxu0
        %v2399 = vadd.f32 %v1854, %v2398
        %v2400 = vpop.f32.mrb[0].mxu0
        %2401 = vmatprep.mubr.bf16.mxu0 0
        %2402 = vmatmul.mubr.bf16.gmra.mrb[0].mxu0 %v1993
        %v2403 = vpop.f32.mrb[0].mxu0
        %v2404 = vadd.f32 %v1854, %v2403
        %v2405 = vpop.f32.mrb[0].mxu0
        %v2406 = vpop.f32.mrb[0].mxu0
        %v2407 = vadd.f32 %v1854, %v2406
        %v2408 = vpop.f32.mrb[0].mxu0
        %2409 = vmatprep.mubr.bf16.mxu0 0
        %2410 = vmatmul.mubr.bf16.gmra.mrb[0].mxu0 %v1996
        %v2411 = vpop.f32.mrb[0].mxu0
        %v2412 = vadd.f32 %v1854, %v2411
        %v2413 = vpop.f32.mrb[0].mxu0
        %v2414 = vpop.f32.mrb[0].mxu0
        %v2415 = vadd.f32 %v1854, %v2414
        %v2416 = vpop.f32.mrb[0].mxu0
        %2417 = vmatprep.mubr.bf16.mxu0 0
        %2418 = vmatmul.mubr.bf16.gmra.mrb[0].mxu0 %v1999
        %v2419 = vpop.f32.mrb[0].mxu0
        %v2420 = vadd.f32 %v1854, %v2419
        %v2421 = vpop.f32.mrb[0].mxu0
        %v2422 = vpop.f32.mrb[0].mxu0
        %v2423 = vadd.f32 %v1854, %v2422
        %v2424 = vpop.f32.mrb[0].mxu0
        %2425 = vmatprep.mubr.bf16.mxu0 0
        %2426 = vmatmul.mubr.bf16.gmra.mrb[0].mxu0 %v2002
        %v2427 = vpop.f32.mrb[0].mxu0
        %v2428 = vadd.f32 %v1854, %v2427
        %v2429 = vpop.f32.mrb[0].mxu0
        %v2430 = vpop.f32.mrb[0].mxu0
        %v2431 = vadd.f32 %v1854, %v2430
        %v2432 = vpop.f32.mrb[0].mxu0
        %2433 = vmatprep.mubr.bf16.mxu0 0
        %2434 = vmatmul.mubr.bf16.gmra.mrb[0].mxu0 %v2005
        %v2435 = vpop.f32.mrb[0].mxu0
        %v2436 = vadd.f32 %v1854, %v2435
        %v2437 = vpop.f32.mrb[0].mxu0
        %v2438 = vpop.f32.mrb[0].mxu0
        %v2439 = vadd.f32 %v1854, %v2438
        %v2440 = vpop.f32.mrb[0].mxu0
        %2441 = vmatprep.mubr.bf16.mxu0 0
        %2442 = vmatmul.mubr.bf16.gmra.mrb[0].mxu0 %v2008
        %v2443 = vpop.f32.mrb[0].mxu0
        %v2444 = vadd.f32 %v1854, %v2443
        %v2445 = vpop.f32.mrb[0].mxu0
        %v2446 = vpop.f32.mrb[0].mxu0
        %v2447 = vadd.f32 %v1854, %v2446
        %v2448 = vpop.f32.mrb[0].mxu0
        %2449 = vmatprep.mubr.bf16.mxu0 0
        %2450 = vmatmul.mubr.bf16.gmra.mrb[0].mxu0 %v2011
        %v2451 = vpop.f32.mrb[0].mxu0
        %v2452 = vadd.f32 %v1854, %v2451
        %v2453 = vpop.f32.mrb[0].mxu0
        %v2454 = vpop.f32.mrb[0].mxu0
        %v2455 = vadd.f32 %v1854, %v2454
        %v2456 = vpop.f32.mrb[0].mxu0
        %2457 = vmatprep.mubr.bf16.mxu0 0
        %2458 = vmatmul.mubr.bf16.gmra.mrb[0].mxu0 %v2014
        %v2459 = vpop.f32.mrb[0].mxu0
        %v2460 = vadd.f32 %v1854, %v2459
        %v2461 = vpop.f32.mrb[0].mxu0
        %v2462 = vpop.f32.mrb[0].mxu0
        %v2463 = vadd.f32 %v1854, %v2462
        %v2464 = vpop.f32.mrb[0].mxu0
        %2465 = vmatprep.mubr.bf16.mxu0 0
        %2466 = vmatmul.mubr.bf16.gmra.mrb[0].mxu0 %v2017
        %v2467 = vpop.f32.mrb[0].mxu0
        %v2468 = vadd.f32 %v1854, %v2467
        %v2469 = vpop.f32.mrb[0].mxu0
        %v2470 = vpop.f32.mrb[0].mxu0
        %v2471 = vadd.f32 %v1854, %v2470
        %v2472 = vpop.f32.mrb[0].mxu0
        %2473 = vmatprep.mubr.bf16.mxu0 0
        %2474 = vmatmul.mubr.bf16.gmra.mrb[0].mxu0 %v2020
        %v2475 = vpop.f32.mrb[0].mxu0
        %v2476 = vadd.f32 %v1854, %v2475
        %v2477 = vpop.f32.mrb[0].mxu0
        %v2478 = vpop.f32.mrb[0].mxu0
        %v2479 = vadd.f32 %v1854, %v2478
        %v2480 = vpop.f32.mrb[0].mxu0
        %2481 = vmatprep.mubr.bf16.mxu0 0
        %2482 = vmatmul.mubr.bf16.gmra.mrb[0].mxu0 %v2023
        %v2483 = vpop.f32.mrb[0].mxu0
        %v2484 = vadd.f32 %v1854, %v2483
        %v2485 = vpop.f32.mrb[0].mxu0
        %v2486 = vpop.f32.mrb[0].mxu0
        %v2487 = vadd.f32 %v1854, %v2486
        %v2488 = vpop.f32.mrb[0].mxu0
        %2489 = vmatprep.mubr.bf16.mxu0 0
        %2490 = vmatmul.mubr.bf16.gmra.mrb[0].mxu0 %v2026
        %v2491 = vpop.f32.mrb[0].mxu0
        %v2492 = vadd.f32 %v1854, %v2491
        %v2493 = vpop.f32.mrb[0].mxu0
        %v2494 = vpop.f32.mrb[0].mxu0
        %v2495 = vadd.f32 %v1854, %v2494
        %v2496 = vpop.f32.mrb[0].mxu0
        %2497 = vmatprep.mubr.bf16.mxu0 0
        %2498 = vmatmul.mubr.bf16.gmra.mrb[0].mxu0 %v2029
        %v2499 = vpop.f32.mrb[0].mxu0
        %v2500 = vadd.f32 %v1854, %v2499
        %v2501 = vpop.f32.mrb[0].mxu0
        %v2502 = vpop.f32.mrb[0].mxu0
        %v2503 = vadd.f32 %v1854, %v2502
        %v2504 = vpop.f32.mrb[0].mxu0
        %2505 = vmatprep.mubr.bf16.mxu0 0
        %2506 = vmatmul.mubr.bf16.gmra.mrb[0].mxu0 %v2032
        %v2507 = vpop.f32.mrb[0].mxu0
        %v2508 = vadd.f32 %v1854, %v2507
        %v2509 = vpop.f32.mrb[0].mxu0
        %v2510 = vpop.f32.mrb[0].mxu0
        %v2511 = vadd.f32 %v1854, %v2510
        %v2512 = vpop.f32.mrb[0].mxu0
        %2513 = vmatprep.mubr.bf16.mxu0 0
        %2514 = vmatmul.mubr.bf16.gmra.mrb[0].mxu0 %v2035
        %v2515 = vpop.f32.mrb[0].mxu0
        %v2516 = vadd.f32 %v1854, %v2515
        %v2517 = vpop.f32.mrb[0].mxu0
        %v2518 = vpop.f32.mrb[0].mxu0
        %v2519 = vadd.f32 %v1854, %v2518
        %v2520 = vpop.f32.mrb[0].mxu0
        %2521 = vmatprep.mubr.bf16.mxu0 0
        %2522 = vmatmul.mubr.bf16.gmra.mrb[0].mxu0 %v2038
        %v2523 = vpop.f32.mrb[0].mxu0
        %v2524 = vadd.f32 %v1854, %v2523
        %v2525 = vpop.f32.mrb[0].mxu0
        %v2526 = vpop.f32.mrb[0].mxu0
        %v2527 = vadd.f32 %v1854, %v2526
        %v2528 = vpop.f32.mrb[0].mxu0
        %2529 = vmatprep.mubr.bf16.mxu0 0
        %2530 = vmatmul.mubr.bf16.gmra.mrb[0].mxu0 %v2041
        %v2531 = vpop.f32.mrb[0].mxu0
        %v2532 = vadd.f32 %v1854, %v2531
        %v2533 = vpop.f32.mrb[0].mxu0
        %v2534 = vpop.f32.mrb[0].mxu0
        %v2535 = vadd.f32 %v1854, %v2534
        %v2536 = vpop.f32.mrb[0].mxu0
        %2537 = vmatprep.mubr.bf16.mxu0 0
        %2538 = vmatmul.mubr.bf16.gmra.mrb[0].mxu0 %v2044
        %v2539 = vpop.f32.mrb[0].mxu0
        %v2540 = vadd.f32 %v1854, %v2539
        %v2541 = vpop.f32.mrb[0].mxu0
        %v2542 = vpop.f32.mrb[0].mxu0
        %v2543 = vadd.f32 %v1854, %v2542
        %v2544 = vpop.f32.mrb[0].mxu0
        %2545 = vmatprep.mubr.bf16.mxu0 0
        %2546 = vmatmul.mubr.bf16.gmra.mrb[0].mxu0 %v2047
        %v2547 = vpop.f32.mrb[0].mxu0
        %v2548 = vadd.f32 %v1854, %v2547
        %v2549 = vpop.f32.mrb[0].mxu0
        %v2550 = vpop.f32.mrb[0].mxu0
        %v2551 = vadd.f32 %v1854, %v2550
        %v2552 = vpop.f32.mrb[0].mxu0
        %2553 = vmatprep.mubr.bf16.mxu0 0
        %2554 = vmatmul.mubr.bf16.gmra.mrb[0].mxu0 %v2050
        %v2555 = vpop.f32.mrb[0].mxu0
        %v2556 = vadd.f32 %v1854, %v2555
        %v2557 = vpop.f32.mrb[0].mxu0
        %v2558 = vpop.f32.mrb[0].mxu0
        %v2559 = vadd.f32 %v1854, %v2558
        %v2560 = vpop.f32.mrb[0].mxu0
        %2561 = vmatprep.mubr.bf16.mxu0 0
        %2562 = vmatmul.mubr.bf16.gmra.mrb[0].mxu0 %v2053
        %v2563 = vpop.f32.mrb[0].mxu0
        %v2564 = vadd.f32 %v1854, %v2563
        %v2565 = vpop.f32.mrb[0].mxu0
        %v2566 = vpop.f32.mrb[0].mxu0
        %v2567 = vadd.f32 %v1854, %v2566
        %v2568 = vpop.f32.mrb[0].mxu0
        %2569 = vmatprep.mubr.bf16.mxu0 0
        %2570 = vmatmul.mubr.bf16.gmra.mrb[0].mxu0 %v2056
        %v2571 = vpop.f32.mrb[0].mxu0
        %v2572 = vadd.f32 %v1854, %v2571
        %v2573 = vpop.f32.mrb[0].mxu0
        %v2574 = vpop.f32.mrb[0].mxu0
        %v2575 = vadd.f32 %v1854, %v2574
        %v2576 = vpop.f32.mrb[0].mxu0
        %2577 = vmatprep.mubr.bf16.mxu0 0
        %2578 = vmatmul.mubr.bf16.gmra.mrb[0].mxu0 %v2059
        %v2579 = vpop.f32.mrb[0].mxu0
        %v2580 = vadd.f32 %v1854, %v2579
        %v2581 = vpop.f32.mrb[0].mxu0
        %v2582 = vpop.f32.mrb[0].mxu0
        %v2583 = vadd.f32 %v1854, %v2582
        %v2584 = vpop.f32.mrb[0].mxu0
        %2585 = vmatprep.mubr.bf16.mxu0 0
        %2586 = vmatmul.mubr.bf16.gmra.mrb[0].mxu0 %v2062
        %v2587 = vpop.f32.mrb[0].mxu0
        %v2588 = vadd.f32 %v1854, %v2587
        %v2589 = vpop.f32.mrb[0].mxu0
        %v2590 = vpop.f32.mrb[0].mxu0
        %v2591 = vadd.f32 %v1854, %v2590
        %v2592 = vpop.f32.mrb[0].mxu0
        %2593 = vmatprep.mubr.bf16.mxu0 0
        %2594 = vmatmul.mubr.bf16.gmra.mrb[0].mxu0 %v2065
        %v2595 = vpop.f32.mrb[0].mxu0
        %v2596 = vadd.f32 %v1854, %v2595
        %v2597 = vpop.f32.mrb[0].mxu0
        %v2598 = vpop.f32.mrb[0].mxu0
        %v2599 = vadd.f32 %v1854, %v2598
        %v2600 = vpop.f32.mrb[0].mxu0
        %2601 = vmatprep.mubr.bf16.mxu0 0
        %2602 = vmatmul.mubr.bf16.gmra.mrb[0].mxu0 %v2068
        %v2603 = vpop.f32.mrb[0].mxu0
        %v2604 = vadd.f32 %v1854, %v2603
        %v2605 = vpop.f32.mrb[0].mxu0
        %v2606 = vpop.f32.mrb[0].mxu0
        %v2607 = vadd.f32 %v1854, %v2606
        %v2608 = vpop.f32.mrb[0].mxu0
        %2609 = vmatprep.mubr.bf16.mxu0 0
        %2610 = vmatmul.mubr.bf16.gmra.mrb[0].mxu0 %v2071
        %v2611 = vpop.f32.mrb[0].mxu0
        %v2612 = vadd.f32 %v1854, %v2611
        %v2613 = vpop.f32.mrb[0].mxu0
        %v2614 = vpop.f32.mrb[0].mxu0
        %v2615 = vadd.f32 %v1854, %v2614
        %v2616 = vpop.f32.mrb[0].mxu0
        %2617 = vdwg.mxu0
        %v2618 = vmax.f32 %v2108, 0.0
        %v2619 = vmax.f32 %v2111, 0.0
        %v2620 = vmax.f32 %v2116, 0.0
        %v2621 = vmax.f32 %v2119, 0.0
        %v2622 = vmax.f32 %v2124, 0.0
        %v2623 = vmax.f32 %v2127, 0.0
        %v2624 = vmax.f32 %v2132, 0.0
        %v2625 = vmax.f32 %v2135, 0.0
        %v2626 = vmax.f32 %v2140, 0.0
        %v2627 = vmax.f32 %v2143, 0.0
        %v2628 = vmax.f32 %v2148, 0.0
        %v2629 = vmax.f32 %v2151, 0.0
        %v2630 = vmax.f32 %v2156, 0.0
        %v2631 = vmax.f32 %v2159, 0.0
        %v2632 = vmax.f32 %v2164, 0.0
        %v2633 = vmax.f32 %v2167, 0.0
        %v2634 = vmax.f32 %v2172, 0.0
        %v2635 = vmax.f32 %v2175, 0.0
        %v2636 = vmax.f32 %v2180, 0.0
        %v2637 = vmax.f32 %v2183, 0.0
        %v2638 = vmax.f32 %v2188, 0.0
        %v2639 = vmax.f32 %v2191, 0.0
        %v2640 = vmax.f32 %v2196, 0.0
        %v2641 = vmax.f32 %v2199, 0.0
        %v2642 = vmax.f32 %v2204, 0.0
        %v2643 = vmax.f32 %v2207, 0.0
        %v2644 = vmax.f32 %v2212, 0.0
        %v2645 = vmax.f32 %v2215, 0.0
        %v2646 = vmax.f32 %v2220, 0.0
        %v2647 = vmax.f32 %v2223, 0.0
        %v2648 = vmax.f32 %v2228, 0.0
        %v2649 = vmax.f32 %v2231, 0.0
        %v2650 = vmax.f32 %v2236, 0.0
        %v2651 = vmax.f32 %v2239, 0.0
        %v2652 = vmax.f32 %v2244, 0.0
        %v2653 = vmax.f32 %v2247, 0.0
        %v2654 = vmax.f32 %v2252, 0.0
        %v2655 = vmax.f32 %v2255, 0.0
        %v2656 = vmax.f32 %v2260, 0.0
        %v2657 = vmax.f32 %v2263, 0.0
        %v2658 = vmax.f32 %v2268, 0.0
        %v2659 = vmax.f32 %v2271, 0.0
        %v2660 = vmax.f32 %v2276, 0.0
        %v2661 = vmax.f32 %v2279, 0.0
        %v2662 = vmax.f32 %v2284, 0.0
        %v2663 = vmax.f32 %v2287, 0.0
        %v2664 = vmax.f32 %v2292, 0.0
        %v2665 = vmax.f32 %v2295, 0.0
        %v2666 = vmax.f32 %v2300, 0.0
        %v2667 = vmax.f32 %v2303, 0.0
        %v2668 = vmax.f32 %v2308, 0.0
        %v2669 = vmax.f32 %v2311, 0.0
        %v2670 = vmax.f32 %v2316, 0.0
        %v2671 = vmax.f32 %v2319, 0.0
        %v2672 = vmax.f32 %v2324, 0.0
        %v2673 = vmax.f32 %v2327, 0.0
        %v2674 = vmax.f32 %v2332, 0.0
        %v2675 = vmax.f32 %v2335, 0.0
        %v2676 = vmax.f32 %v2340, 0.0
        %v2677 = vmax.f32 %v2343, 0.0
        %v2678 = vmax.f32 %v2348, 0.0
        %v2679 = vmax.f32 %v2351, 0.0
        %v2680 = vmax.f32 %v2356, 0.0
        %v2681 = vmax.f32 %v2359, 0.0
        %v2682 = vmax.f32 %v2364, 0.0
        %v2683 = vmax.f32 %v2367, 0.0
        %v2684 = vmax.f32 %v2372, 0.0
        %v2685 = vmax.f32 %v2375, 0.0
        %v2686 = vmax.f32 %v2380, 0.0
        %v2687 = vmax.f32 %v2383, 0.0
        %v2688 = vmax.f32 %v2388, 0.0
        %v2689 = vmax.f32 %v2391, 0.0
        %v2690 = vmax.f32 %v2396, 0.0
        %v2691 = vmax.f32 %v2399, 0.0
        %v2692 = vmax.f32 %v2404, 0.0
        %v2693 = vmax.f32 %v2407, 0.0
        %v2694 = vmax.f32 %v2412, 0.0
        %v2695 = vmax.f32 %v2415, 0.0
        %v2696 = vmax.f32 %v2420, 0.0
        %v2697 = vmax.f32 %v2423, 0.0
        %v2698 = vmax.f32 %v2428, 0.0
        %v2699 = vmax.f32 %v2431, 0.0
        %v2700 = vmax.f32 %v2436, 0.0
        %v2701 = vmax.f32 %v2439, 0.0
        %v2702 = vmax.f32 %v2444, 0.0
        %v2703 = vmax.f32 %v2447, 0.0
        %v2704 = vmax.f32 %v2452, 0.0
        %v2705 = vmax.f32 %v2455, 0.0
        %v2706 = vmax.f32 %v2460, 0.0
        %v2707 = vmax.f32 %v2463, 0.0
        %v2708 = vmax.f32 %v2468, 0.0
        %v2709 = vmax.f32 %v2471, 0.0
        %v2710 = vmax.f32 %v2476, 0.0
        %v2711 = vmax.f32 %v2479, 0.0
        %v2712 = vmax.f32 %v2484, 0.0
        %v2713 = vmax.f32 %v2487, 0.0
        %v2714 = vmax.f32 %v2492, 0.0
        %v2715 = vmax.f32 %v2495, 0.0
        %v2716 = vmax.f32 %v2500, 0.0
        %v2717 = vmax.f32 %v2503, 0.0
        %v2718 = vmax.f32 %v2508, 0.0
        %v2719 = vmax.f32 %v2511, 0.0
        %v2720 = vmax.f32 %v2516, 0.0
        %v2721 = vmax.f32 %v2519, 0.0
        %v2722 = vmax.f32 %v2524, 0.0
        %v2723 = vmax.f32 %v2527, 0.0
        %v2724 = vmax.f32 %v2532, 0.0
        %v2725 = vmax.f32 %v2535, 0.0
        %v2726 = vmax.f32 %v2540, 0.0
        %v2727 = vmax.f32 %v2543, 0.0
        %v2728 = vmax.f32 %v2548, 0.0
        %v2729 = vmax.f32 %v2551, 0.0
        %v2730 = vmax.f32 %v2556, 0.0
        %v2731 = vmax.f32 %v2559, 0.0
        %v2732 = vmax.f32 %v2564, 0.0
        %v2733 = vmax.f32 %v2567, 0.0
        %v2734 = vmax.f32 %v2572, 0.0
        %v2735 = vmax.f32 %v2575, 0.0
        %v2736 = vmax.f32 %v2580, 0.0
        %v2737 = vmax.f32 %v2583, 0.0
        %v2738 = vmax.f32 %v2588, 0.0
        %v2739 = vmax.f32 %v2591, 0.0
        %v2740 = vmax.f32 %v2596, 0.0
        %v2741 = vmax.f32 %v2599, 0.0
        %v2742 = vmax.f32 %v2604, 0.0
        %v2743 = vmax.f32 %v2607, 0.0
        %v2744 = vmax.f32 %v2612, 0.0
        %v2745 = vmax.f32 %v2615, 0.0
        %v2746 = vpack.c.bf16 %v2619, %v2618
        %v2747 = vpack.c.bf16 %v2621, %v2620
        %v2748 = vpack.c.bf16 %v2623, %v2622
        %v2749 = vpack.c.bf16 %v2625, %v2624
        %v2750 = vpack.c.bf16 %v2627, %v2626
        %v2751 = vpack.c.bf16 %v2629, %v2628
        %v2752 = vpack.c.bf16 %v2631, %v2630
        %v2753 = vpack.c.bf16 %v2633, %v2632
        %v2754 = vpack.c.bf16 %v2635, %v2634
        %v2755 = vpack.c.bf16 %v2637, %v2636
        %v2756 = vpack.c.bf16 %v2639, %v2638
        %v2757 = vpack.c.bf16 %v2641, %v2640
        %v2758 = vpack.c.bf16 %v2643, %v2642
        %v2759 = vpack.c.bf16 %v2645, %v2644
        %v2760 = vpack.c.bf16 %v2647, %v2646
        %v2761 = vpack.c.bf16 %v2649, %v2648
        %v2762 = vpack.c.bf16 %v2651, %v2650
        %v2763 = vpack.c.bf16 %v2653, %v2652
        %v2764 = vpack.c.bf16 %v2655, %v2654
        %v2765 = vpack.c.bf16 %v2657, %v2656
        %v2766 = vpack.c.bf16 %v2659, %v2658
        %v2767 = vpack.c.bf16 %v2661, %v2660
        %v2768 = vpack.c.bf16 %v2663, %v2662
        %v2769 = vpack.c.bf16 %v2665, %v2664
        %v2770 = vpack.c.bf16 %v2667, %v2666
        %v2771 = vpack.c.bf16 %v2669, %v2668
        %v2772 = vpack.c.bf16 %v2671, %v2670
        %v2773 = vpack.c.bf16 %v2673, %v2672
        %v2774 = vpack.c.bf16 %v2675, %v2674
        %v2775 = vpack.c.bf16 %v2677, %v2676
        %v2776 = vpack.c.bf16 %v2679, %v2678
        %v2777 = vpack.c.bf16 %v2681, %v2680
        %v2778 = vpack.c.bf16 %v2683, %v2682
        %v2779 = vpack.c.bf16 %v2685, %v2684
        %v2780 = vpack.c.bf16 %v2687, %v2686
        %v2781 = vpack.c.bf16 %v2689, %v2688
        %v2782 = vpack.c.bf16 %v2691, %v2690
        %v2783 = vpack.c.bf16 %v2693, %v2692
        %v2784 = vpack.c.bf16 %v2695, %v2694
        %v2785 = vpack.c.bf16 %v2697, %v2696
        %v2786 = vpack.c.bf16 %v2699, %v2698
        %v2787 = vpack.c.bf16 %v2701, %v2700
        %v2788 = vpack.c.bf16 %v2703, %v2702
        %v2789 = vpack.c.bf16 %v2705, %v2704
        %v2790 = vpack.c.bf16 %v2707, %v2706
        %v2791 = vpack.c.bf16 %v2709, %v2708
        %v2792 = vpack.c.bf16 %v2711, %v2710
        %v2793 = vpack.c.bf16 %v2713, %v2712
        %v2794 = vpack.c.bf16 %v2715, %v2714
        %v2795 = vpack.c.bf16 %v2717, %v2716
        %v2796 = vpack.c.bf16 %v2719, %v2718
        %v2797 = vpack.c.bf16 %v2721, %v2720
        %v2798 = vpack.c.bf16 %v2723, %v2722
        %v2799 = vpack.c.bf16 %v2725, %v2724
        %v2800 = vpack.c.bf16 %v2727, %v2726
        %v2801 = vpack.c.bf16 %v2729, %v2728
        %v2802 = vpack.c.bf16 %v2731, %v2730
        %v2803 = vpack.c.bf16 %v2733, %v2732
        %v2804 = vpack.c.bf16 %v2735, %v2734
        %v2805 = vpack.c.bf16 %v2737, %v2736
        %v2806 = vpack.c.bf16 %v2739, %v2738
        %v2807 = vpack.c.bf16 %v2741, %v2740
        %v2808 = vpack.c.bf16 %v2743, %v2742
        %v2809 = vpack.c.bf16 %v2745, %v2744
        %v2810 = vld [vmem:[%s5] sm:$0xf]
        %v2811 = vld [vmem:[%s5 + $0x4] sm:$0xf]
        %v2812 = vld [vmem:[%s5 + $0x8] sm:$0xf]
        %v2813 = vld [vmem:[%s5 + $0xc] sm:$0xf]
        %v2814 = vld [vmem:[%s5 + $0x10] sm:$0xf]
        %v2815 = vld [vmem:[%s5 + $0x14] sm:$0xf]
        %v2816 = vld [vmem:[%s5 + $0x18] sm:$0xf]
        %v2817 = vld [vmem:[%s5 + $0x1c] sm:$0xf]
        %v2818 = vld [vmem:[%s6] sm:$0x1]
        %v2820 = vlaneseq
        %v2821 = vshrl.u32 %v2820, 7
        %v2822 = vsub.s32 0, %v2821
        %v2823 = vrot.slane %v2818, %v2822
        %v2833 = vunpack.c.l.b16 %v2810
        %v2834 = vunpack.c.l.b16 %v2811
        %v2835 = vunpack.c.l.b16 %v2812
        %v2836 = vunpack.c.l.b16 %v2813
        %v2837 = vunpack.c.l.b16 %v2814
        %v2838 = vunpack.c.l.b16 %v2815
        %v2839 = vunpack.c.l.b16 %v2816
        %v2840 = vunpack.c.l.b16 %v2817
        %v2841 = vpack.c.b16 %v2834, %v2833
        %v2842 = vpack.c.b16 %v2836, %v2835
        %v2843 = vpack.c.b16 %v2838, %v2837
        %v2844 = vpack.c.b16 %v2840, %v2839
        %v2850 = vsel %vm1880, %v2746, 0
        %v2853 = vsel %vm1880, %v2747, 0
        %v2856 = vsel %vm1880, %v2748, 0
        %v2859 = vsel %vm1880, %v2749, 0
        %v2862 = vsel %vm1880, %v2750, 0
        %v2865 = vsel %vm1880, %v2751, 0
        %v2868 = vsel %vm1880, %v2752, 0
        %v2871 = vsel %vm1880, %v2753, 0
        %v2874 = vsel %vm1880, %v2754, 0
        %v2877 = vsel %vm1880, %v2755, 0
        %v2880 = vsel %vm1880, %v2756, 0
        %v2883 = vsel %vm1880, %v2757, 0
        %v2886 = vsel %vm1880, %v2758, 0
        %v2889 = vsel %vm1880, %v2759, 0
        %v2892 = vsel %vm1880, %v2760, 0
        %v2895 = vsel %vm1880, %v2761, 0
        %v2898 = vsel %vm1880, %v2762, 0
        %v2901 = vsel %vm1880, %v2763, 0
        %v2904 = vsel %vm1880, %v2764, 0
        %v2907 = vsel %vm1880, %v2765, 0
        %v2910 = vsel %vm1880, %v2766, 0
        %v2913 = vsel %vm1880, %v2767, 0
        %v2916 = vsel %vm1880, %v2768, 0
        %v2919 = vsel %vm1880, %v2769, 0
        %v2922 = vsel %vm1880, %v2770, 0
        %v2925 = vsel %vm1880, %v2771, 0
        %v2928 = vsel %vm1880, %v2772, 0
        %v2931 = vsel %vm1880, %v2773, 0
        %v2934 = vsel %vm1880, %v2774, 0
        %v2937 = vsel %vm1880, %v2775, 0
        %v2940 = vsel %vm1880, %v2776, 0
        %v2943 = vsel %vm1880, %v2777, 0
        %v2946 = vsel %vm1880, %v2778, 0
        %v2949 = vsel %vm1880, %v2779, 0
        %v2952 = vsel %vm1880, %v2780, 0
        %v2955 = vsel %vm1880, %v2781, 0
        %v2958 = vsel %vm1880, %v2782, 0
        %v2961 = vsel %vm1880, %v2783, 0
        %v2964 = vsel %vm1880, %v2784, 0
        %v2967 = vsel %vm1880, %v2785, 0
        %v2970 = vsel %vm1880, %v2786, 0
        %v2973 = vsel %vm1880, %v2787, 0
        %v2976 = vsel %vm1880, %v2788, 0
        %v2979 = vsel %vm1880, %v2789, 0
        %v2982 = vsel %vm1880, %v2790, 0
        %v2985 = vsel %vm1880, %v2791, 0
        %v2988 = vsel %vm1880, %v2792, 0
        %v2991 = vsel %vm1880, %v2793, 0
        %v2994 = vsel %vm1880, %v2794, 0
        %v2997 = vsel %vm1880, %v2795, 0
        %v3000 = vsel %vm1880, %v2796, 0
        %v3003 = vsel %vm1880, %v2797, 0
        %v3006 = vsel %vm1880, %v2798, 0
        %v3009 = vsel %vm1880, %v2799, 0
        %v3012 = vsel %vm1880, %v2800, 0
        %v3015 = vsel %vm1880, %v2801, 0
        %v3018 = vsel %vm1880, %v2802, 0
        %v3021 = vsel %vm1880, %v2803, 0
        %v3024 = vsel %vm1880, %v2804, 0
        %v3027 = vsel %vm1880, %v2805, 0
        %v3030 = vsel %vm1880, %v2806, 0
        %v3033 = vsel %vm1880, %v2807, 0
        %v3036 = vsel %vm1880, %v2808, 0
        %v3039 = vsel %vm1880, %v2809, 0
        %3041 = vmatprep.subr.bf16.mxu0 0
        %3042 = vmatpush1.bf16.msra.mxu0 %v2841
        %3043 = vmatprep.subr.bf16.mxu0 0
        %3044 = vmatpush1.bf16.msra.mxu0 %v2842
        %3045 = vmatprep.subr.bf16.mxu0 0
        %3046 = vmatpush1.bf16.msra.mxu0 %v2843
        %3047 = vmatprep.subr.bf16.mxu0 0
        %3048 = vmatpush1.bf16.msra.mxu0 %v2844
        %3049 = vmatprep.subr.bf16.mxu0 0
        %3050 = vmatpush1.bf16.msra.mxu0 0
        %3051 = vmatprep.subr.bf16.mxu0 0
        %3052 = vmatpush1.bf16.msra.mxu0 0
        %3053 = vmatprep.subr.bf16.mxu0 0
        %3054 = vmatpush1.bf16.msra.mxu0 0
        %3055 = vmatprep.subr.bf16.mxu0 0
        %3056 = vmatpush1.bf16.msra.mxu0 0
        %3057 = vmatprep.subr.bf16.mxu0 0
        %3058 = vmatpush1.bf16.msra.mxu0 0
        %3059 = vmatprep.subr.bf16.mxu0 0
        %3060 = vmatpush1.bf16.msra.mxu0 0
        %3061 = vmatprep.subr.bf16.mxu0 0
        %3062 = vmatpush1.bf16.msra.mxu0 0
        %3063 = vmatprep.subr.bf16.mxu0 0
        %3064 = vmatpush1.bf16.msra.mxu0 0
        %3065 = vmatprep.subr.bf16.mxu0 0
        %3066 = vmatpush1.bf16.msra.mxu0 0
        %3067 = vmatprep.subr.bf16.mxu0 0
        %3068 = vmatpush1.bf16.msra.mxu0 0
        %3069 = vmatprep.subr.bf16.mxu0 0
        %3070 = vmatpush1.bf16.msra.mxu0 0
        %3071 = vmatprep.subr.bf16.mxu0 0
        %3072 = vmatpush1.bf16.msra.mxu0 0
        %3073 = vmatprep.mubr.bf16.mxu0 0
        %3074 = vmatmul.mubr.bf16.gmra.mrb[0].mxu0 %v2850
        %v3075 = vpop.f32.mrb[0].mxu0
        %v3076 = vadd.f32 %v2823, %v3075
        %v3077 = vpop.f32.mrb[0].mxu0
        %v3078 = vpop.f32.mrb[0].mxu0
        %v3079 = vadd.f32 %v2823, %v3078
        %v3080 = vpop.f32.mrb[0].mxu0
        %3081 = vmatprep.mubr.bf16.mxu0 0
        %3082 = vmatmul.mubr.bf16.gmra.mrb[0].mxu0 %v2853
        %v3083 = vpop.f32.mrb[0].mxu0
        %v3084 = vadd.f32 %v2823, %v3083
        %v3085 = vpop.f32.mrb[0].mxu0
        %v3086 = vpop.f32.mrb[0].mxu0
        %v3087 = vadd.f32 %v2823, %v3086
        %v3088 = vpop.f32.mrb[0].mxu0
        %3089 = vmatprep.mubr.bf16.mxu0 0
        %3090 = vmatmul.mubr.bf16.gmra.mrb[0].mxu0 %v2856
        %v3091 = vpop.f32.mrb[0].mxu0
        %v3092 = vadd.f32 %v2823, %v3091
        %v3093 = vpop.f32.mrb[0].mxu0
        %v3094 = vpop.f32.mrb[0].mxu0
        %v3095 = vadd.f32 %v2823, %v3094
        %v3096 = vpop.f32.mrb[0].mxu0
        %3097 = vmatprep.mubr.bf16.mxu0 0
        %3098 = vmatmul.mubr.bf16.gmra.mrb[0].mxu0 %v2859
        %v3099 = vpop.f32.mrb[0].mxu0
        %v3100 = vadd.f32 %v2823, %v3099
        %v3101 = vpop.f32.mrb[0].mxu0
        %v3102 = vpop.f32.mrb[0].mxu0
        %v3103 = vadd.f32 %v2823, %v3102
        %v3104 = vpop.f32.mrb[0].mxu0
        %3105 = vmatprep.mubr.bf16.mxu0 0
        %3106 = vmatmul.mubr.bf16.gmra.mrb[0].mxu0 %v2862
        %v3107 = vpop.f32.mrb[0].mxu0
        %v3108 = vadd.f32 %v2823, %v3107
        %v3109 = vpop.f32.mrb[0].mxu0
        %v3110 = vpop.f32.mrb[0].mxu0
        %v3111 = vadd.f32 %v2823, %v3110
        %v3112 = vpop.f32.mrb[0].mxu0
        %3113 = vmatprep.mubr.bf16.mxu0 0
        %3114 = vmatmul.mubr.bf16.gmra.mrb[0].mxu0 %v2865
        %v3115 = vpop.f32.mrb[0].mxu0
        %v3116 = vadd.f32 %v2823, %v3115
        %v3117 = vpop.f32.mrb[0].mxu0
        %v3118 = vpop.f32.mrb[0].mxu0
        %v3119 = vadd.f32 %v2823, %v3118
        %v3120 = vpop.f32.mrb[0].mxu0
        %3121 = vmatprep.mubr.bf16.mxu0 0
        %3122 = vmatmul.mubr.bf16.gmra.mrb[0].mxu0 %v2868
        %v3123 = vpop.f32.mrb[0].mxu0
        %v3124 = vadd.f32 %v2823, %v3123
        %v3125 = vpop.f32.mrb[0].mxu0
        %v3126 = vpop.f32.mrb[0].mxu0
        %v3127 = vadd.f32 %v2823, %v3126
        %v3128 = vpop.f32.mrb[0].mxu0
        %3129 = vmatprep.mubr.bf16.mxu0 0
        %3130 = vmatmul.mubr.bf16.gmra.mrb[0].mxu0 %v2871
        %v3131 = vpop.f32.mrb[0].mxu0
        %v3132 = vadd.f32 %v2823, %v3131
        %v3133 = vpop.f32.mrb[0].mxu0
        %v3134 = vpop.f32.mrb[0].mxu0
        %v3135 = vadd.f32 %v2823, %v3134
        %v3136 = vpop.f32.mrb[0].mxu0
        %3137 = vmatprep.mubr.bf16.mxu0 0
        %3138 = vmatmul.mubr.bf16.gmra.mrb[0].mxu0 %v2874
        %v3139 = vpop.f32.mrb[0].mxu0
        %v3140 = vadd.f32 %v2823, %v3139
        %v3141 = vpop.f32.mrb[0].mxu0
        %v3142 = vpop.f32.mrb[0].mxu0
        %v3143 = vadd.f32 %v2823, %v3142
        %v3144 = vpop.f32.mrb[0].mxu0
        %3145 = vmatprep.mubr.bf16.mxu0 0
        %3146 = vmatmul.mubr.bf16.gmra.mrb[0].mxu0 %v2877
        %v3147 = vpop.f32.mrb[0].mxu0
        %v3148 = vadd.f32 %v2823, %v3147
        %v3149 = vpop.f32.mrb[0].mxu0
        %v3150 = vpop.f32.mrb[0].mxu0
        %v3151 = vadd.f32 %v2823, %v3150
        %v3152 = vpop.f32.mrb[0].mxu0
        %3153 = vmatprep.mubr.bf16.mxu0 0
        %3154 = vmatmul.mubr.bf16.gmra.mrb[0].mxu0 %v2880
        %v3155 = vpop.f32.mrb[0].mxu0
        %v3156 = vadd.f32 %v2823, %v3155
        %v3157 = vpop.f32.mrb[0].mxu0
        %v3158 = vpop.f32.mrb[0].mxu0
        %v3159 = vadd.f32 %v2823, %v3158
        %v3160 = vpop.f32.mrb[0].mxu0
        %3161 = vmatprep.mubr.bf16.mxu0 0
        %3162 = vmatmul.mubr.bf16.gmra.mrb[0].mxu0 %v2883
        %v3163 = vpop.f32.mrb[0].mxu0
        %v3164 = vadd.f32 %v2823, %v3163
        %v3165 = vpop.f32.mrb[0].mxu0
        %v3166 = vpop.f32.mrb[0].mxu0
        %v3167 = vadd.f32 %v2823, %v3166
        %v3168 = vpop.f32.mrb[0].mxu0
        %3169 = vmatprep.mubr.bf16.mxu0 0
        %3170 = vmatmul.mubr.bf16.gmra.mrb[0].mxu0 %v2886
        %v3171 = vpop.f32.mrb[0].mxu0
        %v3172 = vadd.f32 %v2823, %v3171
        %v3173 = vpop.f32.mrb[0].mxu0
        %v3174 = vpop.f32.mrb[0].mxu0
        %v3175 = vadd.f32 %v2823, %v3174
        %v3176 = vpop.f32.mrb[0].mxu0
        %3177 = vmatprep.mubr.bf16.mxu0 0
        %3178 = vmatmul.mubr.bf16.gmra.mrb[0].mxu0 %v2889
        %v3179 = vpop.f32.mrb[0].mxu0
        %v3180 = vadd.f32 %v2823, %v3179
        %v3181 = vpop.f32.mrb[0].mxu0
        %v3182 = vpop.f32.mrb[0].mxu0
        %v3183 = vadd.f32 %v2823, %v3182
        %v3184 = vpop.f32.mrb[0].mxu0
        %3185 = vmatprep.mubr.bf16.mxu0 0
        %3186 = vmatmul.mubr.bf16.gmra.mrb[0].mxu0 %v2892
        %v3187 = vpop.f32.mrb[0].mxu0
        %v3188 = vadd.f32 %v2823, %v3187
        %v3189 = vpop.f32.mrb[0].mxu0
        %v3190 = vpop.f32.mrb[0].mxu0
        %v3191 = vadd.f32 %v2823, %v3190
        %v3192 = vpop.f32.mrb[0].mxu0
        %3193 = vmatprep.mubr.bf16.mxu0 0
        %3194 = vmatmul.mubr.bf16.gmra.mrb[0].mxu0 %v2895
        %v3195 = vpop.f32.mrb[0].mxu0
        %v3196 = vadd.f32 %v2823, %v3195
        %v3197 = vpop.f32.mrb[0].mxu0
        %v3198 = vpop.f32.mrb[0].mxu0
        %v3199 = vadd.f32 %v2823, %v3198
        %v3200 = vpop.f32.mrb[0].mxu0
        %3201 = vmatprep.mubr.bf16.mxu0 0
        %3202 = vmatmul.mubr.bf16.gmra.mrb[0].mxu0 %v2898
        %v3203 = vpop.f32.mrb[0].mxu0
        %v3204 = vadd.f32 %v2823, %v3203
        %v3205 = vpop.f32.mrb[0].mxu0
        %v3206 = vpop.f32.mrb[0].mxu0
        %v3207 = vadd.f32 %v2823, %v3206
        %v3208 = vpop.f32.mrb[0].mxu0
        %3209 = vmatprep.mubr.bf16.mxu0 0
        %3210 = vmatmul.mubr.bf16.gmra.mrb[0].mxu0 %v2901
        %v3211 = vpop.f32.mrb[0].mxu0
        %v3212 = vadd.f32 %v2823, %v3211
        %v3213 = vpop.f32.mrb[0].mxu0
        %v3214 = vpop.f32.mrb[0].mxu0
        %v3215 = vadd.f32 %v2823, %v3214
        %v3216 = vpop.f32.mrb[0].mxu0
        %3217 = vmatprep.mubr.bf16.mxu0 0
        %3218 = vmatmul.mubr.bf16.gmra.mrb[0].mxu0 %v2904
        %v3219 = vpop.f32.mrb[0].mxu0
        %v3220 = vadd.f32 %v2823, %v3219
        %v3221 = vpop.f32.mrb[0].mxu0
        %v3222 = vpop.f32.mrb[0].mxu0
        %v3223 = vadd.f32 %v2823, %v3222
        %v3224 = vpop.f32.mrb[0].mxu0
        %3225 = vmatprep.mubr.bf16.mxu0 0
        %3226 = vmatmul.mubr.bf16.gmra.mrb[0].mxu0 %v2907
        %v3227 = vpop.f32.mrb[0].mxu0
        %v3228 = vadd.f32 %v2823, %v3227
        %v3229 = vpop.f32.mrb[0].mxu0
        %v3230 = vpop.f32.mrb[0].mxu0
        %v3231 = vadd.f32 %v2823, %v3230
        %v3232 = vpop.f32.mrb[0].mxu0
        %3233 = vmatprep.mubr.bf16.mxu0 0
        %3234 = vmatmul.mubr.bf16.gmra.mrb[0].mxu0 %v2910
        %v3235 = vpop.f32.mrb[0].mxu0
        %v3236 = vadd.f32 %v2823, %v3235
        %v3237 = vpop.f32.mrb[0].mxu0
        %v3238 = vpop.f32.mrb[0].mxu0
        %v3239 = vadd.f32 %v2823, %v3238
        %v3240 = vpop.f32.mrb[0].mxu0
        %3241 = vmatprep.mubr.bf16.mxu0 0
        %3242 = vmatmul.mubr.bf16.gmra.mrb[0].mxu0 %v2913
        %v3243 = vpop.f32.mrb[0].mxu0
        %v3244 = vadd.f32 %v2823, %v3243
        %v3245 = vpop.f32.mrb[0].mxu0
        %v3246 = vpop.f32.mrb[0].mxu0
        %v3247 = vadd.f32 %v2823, %v3246
        %v3248 = vpop.f32.mrb[0].mxu0
        %3249 = vmatprep.mubr.bf16.mxu0 0
        %3250 = vmatmul.mubr.bf16.gmra.mrb[0].mxu0 %v2916
        %v3251 = vpop.f32.mrb[0].mxu0
        %v3252 = vadd.f32 %v2823, %v3251
        %v3253 = vpop.f32.mrb[0].mxu0
        %v3254 = vpop.f32.mrb[0].mxu0
        %v3255 = vadd.f32 %v2823, %v3254
        %v3256 = vpop.f32.mrb[0].mxu0
        %3257 = vmatprep.mubr.bf16.mxu0 0
        %3258 = vmatmul.mubr.bf16.gmra.mrb[0].mxu0 %v2919
        %v3259 = vpop.f32.mrb[0].mxu0
        %v3260 = vadd.f32 %v2823, %v3259
        %v3261 = vpop.f32.mrb[0].mxu0
        %v3262 = vpop.f32.mrb[0].mxu0
        %v3263 = vadd.f32 %v2823, %v3262
        %v3264 = vpop.f32.mrb[0].mxu0
        %3265 = vmatprep.mubr.bf16.mxu0 0
        %3266 = vmatmul.mubr.bf16.gmra.mrb[0].mxu0 %v2922
        %v3267 = vpop.f32.mrb[0].mxu0
        %v3268 = vadd.f32 %v2823, %v3267
        %v3269 = vpop.f32.mrb[0].mxu0
        %v3270 = vpop.f32.mrb[0].mxu0
        %v3271 = vadd.f32 %v2823, %v3270
        %v3272 = vpop.f32.mrb[0].mxu0
        %3273 = vmatprep.mubr.bf16.mxu0 0
        %3274 = vmatmul.mubr.bf16.gmra.mrb[0].mxu0 %v2925
        %v3275 = vpop.f32.mrb[0].mxu0
        %v3276 = vadd.f32 %v2823, %v3275
        %v3277 = vpop.f32.mrb[0].mxu0
        %v3278 = vpop.f32.mrb[0].mxu0
        %v3279 = vadd.f32 %v2823, %v3278
        %v3280 = vpop.f32.mrb[0].mxu0
        %3281 = vmatprep.mubr.bf16.mxu0 0
        %3282 = vmatmul.mubr.bf16.gmra.mrb[0].mxu0 %v2928
        %v3283 = vpop.f32.mrb[0].mxu0
        %v3284 = vadd.f32 %v2823, %v3283
        %v3285 = vpop.f32.mrb[0].mxu0
        %v3286 = vpop.f32.mrb[0].mxu0
        %v3287 = vadd.f32 %v2823, %v3286
        %v3288 = vpop.f32.mrb[0].mxu0
        %3289 = vmatprep.mubr.bf16.mxu0 0
        %3290 = vmatmul.mubr.bf16.gmra.mrb[0].mxu0 %v2931
        %v3291 = vpop.f32.mrb[0].mxu0
        %v3292 = vadd.f32 %v2823, %v3291
        %v3293 = vpop.f32.mrb[0].mxu0
        %v3294 = vpop.f32.mrb[0].mxu0
        %v3295 = vadd.f32 %v2823, %v3294
        %v3296 = vpop.f32.mrb[0].mxu0
        %3297 = vmatprep.mubr.bf16.mxu0 0
        %3298 = vmatmul.mubr.bf16.gmra.mrb[0].mxu0 %v2934
        %v3299 = vpop.f32.mrb[0].mxu0
        %v3300 = vadd.f32 %v2823, %v3299
        %v3301 = vpop.f32.mrb[0].mxu0
        %v3302 = vpop.f32.mrb[0].mxu0
        %v3303 = vadd.f32 %v2823, %v3302
        %v3304 = vpop.f32.mrb[0].mxu0
        %3305 = vmatprep.mubr.bf16.mxu0 0
        %3306 = vmatmul.mubr.bf16.gmra.mrb[0].mxu0 %v2937
        %v3307 = vpop.f32.mrb[0].mxu0
        %v3308 = vadd.f32 %v2823, %v3307
        %v3309 = vpop.f32.mrb[0].mxu0
        %v3310 = vpop.f32.mrb[0].mxu0
        %v3311 = vadd.f32 %v2823, %v3310
        %v3312 = vpop.f32.mrb[0].mxu0
        %3313 = vmatprep.mubr.bf16.mxu0 0
        %3314 = vmatmul.mubr.bf16.gmra.mrb[0].mxu0 %v2940
        %v3315 = vpop.f32.mrb[0].mxu0
        %v3316 = vadd.f32 %v2823, %v3315
        %v3317 = vpop.f32.mrb[0].mxu0
        %v3318 = vpop.f32.mrb[0].mxu0
        %v3319 = vadd.f32 %v2823, %v3318
        %v3320 = vpop.f32.mrb[0].mxu0
        %3321 = vmatprep.mubr.bf16.mxu0 0
        %3322 = vmatmul.mubr.bf16.gmra.mrb[0].mxu0 %v2943
        %v3323 = vpop.f32.mrb[0].mxu0
        %v3324 = vadd.f32 %v2823, %v3323
        %v3325 = vpop.f32.mrb[0].mxu0
        %v3326 = vpop.f32.mrb[0].mxu0
        %v3327 = vadd.f32 %v2823, %v3326
        %v3328 = vpop.f32.mrb[0].mxu0
        %3329 = vmatprep.mubr.bf16.mxu0 0
        %3330 = vmatmul.mubr.bf16.gmra.mrb[0].mxu0 %v2946
        %v3331 = vpop.f32.mrb[0].mxu0
        %v3332 = vadd.f32 %v2823, %v3331
        %v3333 = vpop.f32.mrb[0].mxu0
        %v3334 = vpop.f32.mrb[0].mxu0
        %v3335 = vadd.f32 %v2823, %v3334
        %v3336 = vpop.f32.mrb[0].mxu0
        %3337 = vmatprep.mubr.bf16.mxu0 0
        %3338 = vmatmul.mubr.bf16.gmra.mrb[0].mxu0 %v2949
        %v3339 = vpop.f32.mrb[0].mxu0
        %v3340 = vadd.f32 %v2823, %v3339
        %v3341 = vpop.f32.mrb[0].mxu0
        %v3342 = vpop.f32.mrb[0].mxu0
        %v3343 = vadd.f32 %v2823, %v3342
        %v3344 = vpop.f32.mrb[0].mxu0
        %3345 = vmatprep.mubr.bf16.mxu0 0
        %3346 = vmatmul.mubr.bf16.gmra.mrb[0].mxu0 %v2952
        %v3347 = vpop.f32.mrb[0].mxu0
        %v3348 = vadd.f32 %v2823, %v3347
        %v3349 = vpop.f32.mrb[0].mxu0
        %v3350 = vpop.f32.mrb[0].mxu0
        %v3351 = vadd.f32 %v2823, %v3350
        %v3352 = vpop.f32.mrb[0].mxu0
        %3353 = vmatprep.mubr.bf16.mxu0 0
        %3354 = vmatmul.mubr.bf16.gmra.mrb[0].mxu0 %v2955
        %v3355 = vpop.f32.mrb[0].mxu0
        %v3356 = vadd.f32 %v2823, %v3355
        %v3357 = vpop.f32.mrb[0].mxu0
        %v3358 = vpop.f32.mrb[0].mxu0
        %v3359 = vadd.f32 %v2823, %v3358
        %v3360 = vpop.f32.mrb[0].mxu0
        %3361 = vmatprep.mubr.bf16.mxu0 0
        %3362 = vmatmul.mubr.bf16.gmra.mrb[0].mxu0 %v2958
        %v3363 = vpop.f32.mrb[0].mxu0
        %v3364 = vadd.f32 %v2823, %v3363
        %v3365 = vpop.f32.mrb[0].mxu0
        %v3366 = vpop.f32.mrb[0].mxu0
        %v3367 = vadd.f32 %v2823, %v3366
        %v3368 = vpop.f32.mrb[0].mxu0
        %3369 = vmatprep.mubr.bf16.mxu0 0
        %3370 = vmatmul.mubr.bf16.gmra.mrb[0].mxu0 %v2961
        %v3371 = vpop.f32.mrb[0].mxu0
        %v3372 = vadd.f32 %v2823, %v3371
        %v3373 = vpop.f32.mrb[0].mxu0
        %v3374 = vpop.f32.mrb[0].mxu0
        %v3375 = vadd.f32 %v2823, %v3374
        %v3376 = vpop.f32.mrb[0].mxu0
        %3377 = vmatprep.mubr.bf16.mxu0 0
        %3378 = vmatmul.mubr.bf16.gmra.mrb[0].mxu0 %v2964
        %v3379 = vpop.f32.mrb[0].mxu0
        %v3380 = vadd.f32 %v2823, %v3379
        %v3381 = vpop.f32.mrb[0].mxu0
        %v3382 = vpop.f32.mrb[0].mxu0
        %v3383 = vadd.f32 %v2823, %v3382
        %v3384 = vpop.f32.mrb[0].mxu0
        %3385 = vmatprep.mubr.bf16.mxu0 0
        %3386 = vmatmul.mubr.bf16.gmra.mrb[0].mxu0 %v2967
        %v3387 = vpop.f32.mrb[0].mxu0
        %v3388 = vadd.f32 %v2823, %v3387
        %v3389 = vpop.f32.mrb[0].mxu0
        %v3390 = vpop.f32.mrb[0].mxu0
        %v3391 = vadd.f32 %v2823, %v3390
        %v3392 = vpop.f32.mrb[0].mxu0
        %3393 = vmatprep.mubr.bf16.mxu0 0
        %3394 = vmatmul.mubr.bf16.gmra.mrb[0].mxu0 %v2970
        %v3395 = vpop.f32.mrb[0].mxu0
        %v3396 = vadd.f32 %v2823, %v3395
        %v3397 = vpop.f32.mrb[0].mxu0
        %v3398 = vpop.f32.mrb[0].mxu0
        %v3399 = vadd.f32 %v2823, %v3398
        %v3400 = vpop.f32.mrb[0].mxu0
        %3401 = vmatprep.mubr.bf16.mxu0 0
        %3402 = vmatmul.mubr.bf16.gmra.mrb[0].mxu0 %v2973
        %v3403 = vpop.f32.mrb[0].mxu0
        %v3404 = vadd.f32 %v2823, %v3403
        %v3405 = vpop.f32.mrb[0].mxu0
        %v3406 = vpop.f32.mrb[0].mxu0
        %v3407 = vadd.f32 %v2823, %v3406
        %v3408 = vpop.f32.mrb[0].mxu0
        %3409 = vmatprep.mubr.bf16.mxu0 0
        %3410 = vmatmul.mubr.bf16.gmra.mrb[0].mxu0 %v2976
        %v3411 = vpop.f32.mrb[0].mxu0
        %v3412 = vadd.f32 %v2823, %v3411
        %v3413 = vpop.f32.mrb[0].mxu0
        %v3414 = vpop.f32.mrb[0].mxu0
        %v3415 = vadd.f32 %v2823, %v3414
        %v3416 = vpop.f32.mrb[0].mxu0
        %3417 = vmatprep.mubr.bf16.mxu0 0
        %3418 = vmatmul.mubr.bf16.gmra.mrb[0].mxu0 %v2979
        %v3419 = vpop.f32.mrb[0].mxu0
        %v3420 = vadd.f32 %v2823, %v3419
        %v3421 = vpop.f32.mrb[0].mxu0
        %v3422 = vpop.f32.mrb[0].mxu0
        %v3423 = vadd.f32 %v2823, %v3422
        %v3424 = vpop.f32.mrb[0].mxu0
        %3425 = vmatprep.mubr.bf16.mxu0 0
        %3426 = vmatmul.mubr.bf16.gmra.mrb[0].mxu0 %v2982
        %v3427 = vpop.f32.mrb[0].mxu0
        %v3428 = vadd.f32 %v2823, %v3427
        %v3429 = vpop.f32.mrb[0].mxu0
        %v3430 = vpop.f32.mrb[0].mxu0
        %v3431 = vadd.f32 %v2823, %v3430
        %v3432 = vpop.f32.mrb[0].mxu0
        %3433 = vmatprep.mubr.bf16.mxu0 0
        %3434 = vmatmul.mubr.bf16.gmra.mrb[0].mxu0 %v2985
        %v3435 = vpop.f32.mrb[0].mxu0
        %v3436 = vadd.f32 %v2823, %v3435
        %v3437 = vpop.f32.mrb[0].mxu0
        %v3438 = vpop.f32.mrb[0].mxu0
        %v3439 = vadd.f32 %v2823, %v3438
        %v3440 = vpop.f32.mrb[0].mxu0
        %3441 = vmatprep.mubr.bf16.mxu0 0
        %3442 = vmatmul.mubr.bf16.gmra.mrb[0].mxu0 %v2988
        %v3443 = vpop.f32.mrb[0].mxu0
        %v3444 = vadd.f32 %v2823, %v3443
        %v3445 = vpop.f32.mrb[0].mxu0
        %v3446 = vpop.f32.mrb[0].mxu0
        %v3447 = vadd.f32 %v2823, %v3446
        %v3448 = vpop.f32.mrb[0].mxu0
        %3449 = vmatprep.mubr.bf16.mxu0 0
        %3450 = vmatmul.mubr.bf16.gmra.mrb[0].mxu0 %v2991
        %v3451 = vpop.f32.mrb[0].mxu0
        %v3452 = vadd.f32 %v2823, %v3451
        %v3453 = vpop.f32.mrb[0].mxu0
        %v3454 = vpop.f32.mrb[0].mxu0
        %v3455 = vadd.f32 %v2823, %v3454
        %v3456 = vpop.f32.mrb[0].mxu0
        %3457 = vmatprep.mubr.bf16.mxu0 0
        %3458 = vmatmul.mubr.bf16.gmra.mrb[0].mxu0 %v2994
        %v3459 = vpop.f32.mrb[0].mxu0
        %v3460 = vadd.f32 %v2823, %v3459
        %v3461 = vpop.f32.mrb[0].mxu0
        %v3462 = vpop.f32.mrb[0].mxu0
        %v3463 = vadd.f32 %v2823, %v3462
        %v3464 = vpop.f32.mrb[0].mxu0
        %3465 = vmatprep.mubr.bf16.mxu0 0
        %3466 = vmatmul.mubr.bf16.gmra.mrb[0].mxu0 %v2997
        %v3467 = vpop.f32.mrb[0].mxu0
        %v3468 = vadd.f32 %v2823, %v3467
        %v3469 = vpop.f32.mrb[0].mxu0
        %v3470 = vpop.f32.mrb[0].mxu0
        %v3471 = vadd.f32 %v2823, %v3470
        %v3472 = vpop.f32.mrb[0].mxu0
        %3473 = vmatprep.mubr.bf16.mxu0 0
        %3474 = vmatmul.mubr.bf16.gmra.mrb[0].mxu0 %v3000
        %v3475 = vpop.f32.mrb[0].mxu0
        %v3476 = vadd.f32 %v2823, %v3475
        %v3477 = vpop.f32.mrb[0].mxu0
        %v3478 = vpop.f32.mrb[0].mxu0
        %v3479 = vadd.f32 %v2823, %v3478
        %v3480 = vpop.f32.mrb[0].mxu0
        %3481 = vmatprep.mubr.bf16.mxu0 0
        %3482 = vmatmul.mubr.bf16.gmra.mrb[0].mxu0 %v3003
        %v3483 = vpop.f32.mrb[0].mxu0
        %v3484 = vadd.f32 %v2823, %v3483
        %v3485 = vpop.f32.mrb[0].mxu0
        %v3486 = vpop.f32.mrb[0].mxu0
        %v3487 = vadd.f32 %v2823, %v3486
        %v3488 = vpop.f32.mrb[0].mxu0
        %3489 = vmatprep.mubr.bf16.mxu0 0
        %3490 = vmatmul.mubr.bf16.gmra.mrb[0].mxu0 %v3006
        %v3491 = vpop.f32.mrb[0].mxu0
        %v3492 = vadd.f32 %v2823, %v3491
        %v3493 = vpop.f32.mrb[0].mxu0
        %v3494 = vpop.f32.mrb[0].mxu0
        %v3495 = vadd.f32 %v2823, %v3494
        %v3496 = vpop.f32.mrb[0].mxu0
        %3497 = vmatprep.mubr.bf16.mxu0 0
        %3498 = vmatmul.mubr.bf16.gmra.mrb[0].mxu0 %v3009
        %v3499 = vpop.f32.mrb[0].mxu0
        %v3500 = vadd.f32 %v2823, %v3499
        %v3501 = vpop.f32.mrb[0].mxu0
        %v3502 = vpop.f32.mrb[0].mxu0
        %v3503 = vadd.f32 %v2823, %v3502
        %v3504 = vpop.f32.mrb[0].mxu0
        %3505 = vmatprep.mubr.bf16.mxu0 0
        %3506 = vmatmul.mubr.bf16.gmra.mrb[0].mxu0 %v3012
        %v3507 = vpop.f32.mrb[0].mxu0
        %v3508 = vadd.f32 %v2823, %v3507
        %v3509 = vpop.f32.mrb[0].mxu0
        %v3510 = vpop.f32.mrb[0].mxu0
        %v3511 = vadd.f32 %v2823, %v3510
        %v3512 = vpop.f32.mrb[0].mxu0
        %3513 = vmatprep.mubr.bf16.mxu0 0
        %3514 = vmatmul.mubr.bf16.gmra.mrb[0].mxu0 %v3015
        %v3515 = vpop.f32.mrb[0].mxu0
        %v3516 = vadd.f32 %v2823, %v3515
        %v3517 = vpop.f32.mrb[0].mxu0
        %v3518 = vpop.f32.mrb[0].mxu0
        %v3519 = vadd.f32 %v2823, %v3518
        %v3520 = vpop.f32.mrb[0].mxu0
        %3521 = vmatprep.mubr.bf16.mxu0 0
        %3522 = vmatmul.mubr.bf16.gmra.mrb[0].mxu0 %v3018
        %v3523 = vpop.f32.mrb[0].mxu0
        %v3524 = vadd.f32 %v2823, %v3523
        %v3525 = vpop.f32.mrb[0].mxu0
        %v3526 = vpop.f32.mrb[0].mxu0
        %v3527 = vadd.f32 %v2823, %v3526
        %v3528 = vpop.f32.mrb[0].mxu0
        %3529 = vmatprep.mubr.bf16.mxu0 0
        %3530 = vmatmul.mubr.bf16.gmra.mrb[0].mxu0 %v3021
        %v3531 = vpop.f32.mrb[0].mxu0
        %v3532 = vadd.f32 %v2823, %v3531
        %v3533 = vpop.f32.mrb[0].mxu0
        %v3534 = vpop.f32.mrb[0].mxu0
        %v3535 = vadd.f32 %v2823, %v3534
        %v3536 = vpop.f32.mrb[0].mxu0
        %3537 = vmatprep.mubr.bf16.mxu0 0
        %3538 = vmatmul.mubr.bf16.gmra.mrb[0].mxu0 %v3024
        %v3539 = vpop.f32.mrb[0].mxu0
        %v3540 = vadd.f32 %v2823, %v3539
        %v3541 = vpop.f32.mrb[0].mxu0
        %v3542 = vpop.f32.mrb[0].mxu0
        %v3543 = vadd.f32 %v2823, %v3542
        %v3544 = vpop.f32.mrb[0].mxu0
        %3545 = vmatprep.mubr.bf16.mxu0 0
        %3546 = vmatmul.mubr.bf16.gmra.mrb[0].mxu0 %v3027
        %v3547 = vpop.f32.mrb[0].mxu0
        %v3548 = vadd.f32 %v2823, %v3547
        %v3549 = vpop.f32.mrb[0].mxu0
        %v3550 = vpop.f32.mrb[0].mxu0
        %v3551 = vadd.f32 %v2823, %v3550
        %v3552 = vpop.f32.mrb[0].mxu0
        %3553 = vmatprep.mubr.bf16.mxu0 0
        %3554 = vmatmul.mubr.bf16.gmra.mrb[0].mxu0 %v3030
        %v3555 = vpop.f32.mrb[0].mxu0
        %v3556 = vadd.f32 %v2823, %v3555
        %v3557 = vpop.f32.mrb[0].mxu0
        %v3558 = vpop.f32.mrb[0].mxu0
        %v3559 = vadd.f32 %v2823, %v3558
        %v3560 = vpop.f32.mrb[0].mxu0
        %3561 = vmatprep.mubr.bf16.mxu0 0
        %3562 = vmatmul.mubr.bf16.gmra.mrb[0].mxu0 %v3033
        %v3563 = vpop.f32.mrb[0].mxu0
        %v3564 = vadd.f32 %v2823, %v3563
        %v3565 = vpop.f32.mrb[0].mxu0
        %v3566 = vpop.f32.mrb[0].mxu0
        %v3567 = vadd.f32 %v2823, %v3566
        %v3568 = vpop.f32.mrb[0].mxu0
        %3569 = vmatprep.mubr.bf16.mxu0 0
        %3570 = vmatmul.mubr.bf16.gmra.mrb[0].mxu0 %v3036
        %v3571 = vpop.f32.mrb[0].mxu0
        %v3572 = vadd.f32 %v2823, %v3571
        %v3573 = vpop.f32.mrb[0].mxu0
        %v3574 = vpop.f32.mrb[0].mxu0
        %v3575 = vadd.f32 %v2823, %v3574
        %v3576 = vpop.f32.mrb[0].mxu0
        %3577 = vmatprep.mubr.bf16.mxu0 0
        %3578 = vmatmul.mubr.bf16.gmra.mrb[0].mxu0 %v3039
        %v3579 = vpop.f32.mrb[0].mxu0
        %v3580 = vadd.f32 %v2823, %v3579
        %v3581 = vpop.f32.mrb[0].mxu0
        %v3582 = vpop.f32.mrb[0].mxu0
        %v3583 = vadd.f32 %v2823, %v3582
        %v3584 = vpop.f32.mrb[0].mxu0
        %3585 = vdwg.mxu0
        %v3586 = vmax.f32 %v3076, 0.0
        %v3587 = vmax.f32 %v3079, 0.0
        %v3588 = vmax.f32 %v3084, 0.0
        %v3589 = vmax.f32 %v3087, 0.0
        %v3590 = vmax.f32 %v3092, 0.0
        %v3591 = vmax.f32 %v3095, 0.0
        %v3592 = vmax.f32 %v3100, 0.0
        %v3593 = vmax.f32 %v3103, 0.0
        %v3594 = vmax.f32 %v3108, 0.0
        %v3595 = vmax.f32 %v3111, 0.0
        %v3596 = vmax.f32 %v3116, 0.0
        %v3597 = vmax.f32 %v3119, 0.0
        %v3598 = vmax.f32 %v3124, 0.0
        %v3599 = vmax.f32 %v3127, 0.0
        %v3600 = vmax.f32 %v3132, 0.0
        %v3601 = vmax.f32 %v3135, 0.0
        %v3602 = vmax.f32 %v3140, 0.0
        %v3603 = vmax.f32 %v3143, 0.0
        %v3604 = vmax.f32 %v3148, 0.0
        %v3605 = vmax.f32 %v3151, 0.0
        %v3606 = vmax.f32 %v3156, 0.0
        %v3607 = vmax.f32 %v3159, 0.0
        %v3608 = vmax.f32 %v3164, 0.0
        %v3609 = vmax.f32 %v3167, 0.0
        %v3610 = vmax.f32 %v3172, 0.0
        %v3611 = vmax.f32 %v3175, 0.0
        %v3612 = vmax.f32 %v3180, 0.0
        %v3613 = vmax.f32 %v3183, 0.0
        %v3614 = vmax.f32 %v3188, 0.0
        %v3615 = vmax.f32 %v3191, 0.0
        %v3616 = vmax.f32 %v3196, 0.0
        %v3617 = vmax.f32 %v3199, 0.0
        %v3618 = vmax.f32 %v3204, 0.0
        %v3619 = vmax.f32 %v3207, 0.0
        %v3620 = vmax.f32 %v3212, 0.0
        %v3621 = vmax.f32 %v3215, 0.0
        %v3622 = vmax.f32 %v3220, 0.0
        %v3623 = vmax.f32 %v3223, 0.0
        %v3624 = vmax.f32 %v3228, 0.0
        %v3625 = vmax.f32 %v3231, 0.0
        %v3626 = vmax.f32 %v3236, 0.0
        %v3627 = vmax.f32 %v3239, 0.0
        %v3628 = vmax.f32 %v3244, 0.0
        %v3629 = vmax.f32 %v3247, 0.0
        %v3630 = vmax.f32 %v3252, 0.0
        %v3631 = vmax.f32 %v3255, 0.0
        %v3632 = vmax.f32 %v3260, 0.0
        %v3633 = vmax.f32 %v3263, 0.0
        %v3634 = vmax.f32 %v3268, 0.0
        %v3635 = vmax.f32 %v3271, 0.0
        %v3636 = vmax.f32 %v3276, 0.0
        %v3637 = vmax.f32 %v3279, 0.0
        %v3638 = vmax.f32 %v3284, 0.0
        %v3639 = vmax.f32 %v3287, 0.0
        %v3640 = vmax.f32 %v3292, 0.0
        %v3641 = vmax.f32 %v3295, 0.0
        %v3642 = vmax.f32 %v3300, 0.0
        %v3643 = vmax.f32 %v3303, 0.0
        %v3644 = vmax.f32 %v3308, 0.0
        %v3645 = vmax.f32 %v3311, 0.0
        %v3646 = vmax.f32 %v3316, 0.0
        %v3647 = vmax.f32 %v3319, 0.0
        %v3648 = vmax.f32 %v3324, 0.0
        %v3649 = vmax.f32 %v3327, 0.0
        %v3650 = vmax.f32 %v3332, 0.0
        %v3651 = vmax.f32 %v3335, 0.0
        %v3652 = vmax.f32 %v3340, 0.0
        %v3653 = vmax.f32 %v3343, 0.0
        %v3654 = vmax.f32 %v3348, 0.0
        %v3655 = vmax.f32 %v3351, 0.0
        %v3656 = vmax.f32 %v3356, 0.0
        %v3657 = vmax.f32 %v3359, 0.0
        %v3658 = vmax.f32 %v3364, 0.0
        %v3659 = vmax.f32 %v3367, 0.0
        %v3660 = vmax.f32 %v3372, 0.0
        %v3661 = vmax.f32 %v3375, 0.0
        %v3662 = vmax.f32 %v3380, 0.0
        %v3663 = vmax.f32 %v3383, 0.0
        %v3664 = vmax.f32 %v3388, 0.0
        %v3665 = vmax.f32 %v3391, 0.0
        %v3666 = vmax.f32 %v3396, 0.0
        %v3667 = vmax.f32 %v3399, 0.0
        %v3668 = vmax.f32 %v3404, 0.0
        %v3669 = vmax.f32 %v3407, 0.0
        %v3670 = vmax.f32 %v3412, 0.0
        %v3671 = vmax.f32 %v3415, 0.0
        %v3672 = vmax.f32 %v3420, 0.0
        %v3673 = vmax.f32 %v3423, 0.0
        %v3674 = vmax.f32 %v3428, 0.0
        %v3675 = vmax.f32 %v3431, 0.0
        %v3676 = vmax.f32 %v3436, 0.0
        %v3677 = vmax.f32 %v3439, 0.0
        %v3678 = vmax.f32 %v3444, 0.0
        %v3679 = vmax.f32 %v3447, 0.0
        %v3680 = vmax.f32 %v3452, 0.0
        %v3681 = vmax.f32 %v3455, 0.0
        %v3682 = vmax.f32 %v3460, 0.0
        %v3683 = vmax.f32 %v3463, 0.0
        %v3684 = vmax.f32 %v3468, 0.0
        %v3685 = vmax.f32 %v3471, 0.0
        %v3686 = vmax.f32 %v3476, 0.0
        %v3687 = vmax.f32 %v3479, 0.0
        %v3688 = vmax.f32 %v3484, 0.0
        %v3689 = vmax.f32 %v3487, 0.0
        %v3690 = vmax.f32 %v3492, 0.0
        %v3691 = vmax.f32 %v3495, 0.0
        %v3692 = vmax.f32 %v3500, 0.0
        %v3693 = vmax.f32 %v3503, 0.0
        %v3694 = vmax.f32 %v3508, 0.0
        %v3695 = vmax.f32 %v3511, 0.0
        %v3696 = vmax.f32 %v3516, 0.0
        %v3697 = vmax.f32 %v3519, 0.0
        %v3698 = vmax.f32 %v3524, 0.0
        %v3699 = vmax.f32 %v3527, 0.0
        %v3700 = vmax.f32 %v3532, 0.0
        %v3701 = vmax.f32 %v3535, 0.0
        %v3702 = vmax.f32 %v3540, 0.0
        %v3703 = vmax.f32 %v3543, 0.0
        %v3704 = vmax.f32 %v3548, 0.0
        %v3705 = vmax.f32 %v3551, 0.0
        %v3706 = vmax.f32 %v3556, 0.0
        %v3707 = vmax.f32 %v3559, 0.0
        %v3708 = vmax.f32 %v3564, 0.0
        %v3709 = vmax.f32 %v3567, 0.0
        %v3710 = vmax.f32 %v3572, 0.0
        %v3711 = vmax.f32 %v3575, 0.0
        %v3712 = vmax.f32 %v3580, 0.0
        %v3713 = vmax.f32 %v3583, 0.0
        %v3714 = vpack.c.bf16 %v3587, %v3586
        %v3715 = vpack.c.bf16 %v3589, %v3588
        %v3716 = vpack.c.bf16 %v3591, %v3590
        %v3717 = vpack.c.bf16 %v3593, %v3592
        %v3718 = vpack.c.bf16 %v3595, %v3594
        %v3719 = vpack.c.bf16 %v3597, %v3596
        %v3720 = vpack.c.bf16 %v3599, %v3598
        %v3721 = vpack.c.bf16 %v3601, %v3600
        %v3722 = vpack.c.bf16 %v3603, %v3602
        %v3723 = vpack.c.bf16 %v3605, %v3604
        %v3724 = vpack.c.bf16 %v3607, %v3606
        %v3725 = vpack.c.bf16 %v3609, %v3608
        %v3726 = vpack.c.bf16 %v3611, %v3610
        %v3727 = vpack.c.bf16 %v3613, %v3612
        %v3728 = vpack.c.bf16 %v3615, %v3614
        %v3729 = vpack.c.bf16 %v3617, %v3616
        %v3730 = vpack.c.bf16 %v3619, %v3618
        %v3731 = vpack.c.bf16 %v3621, %v3620
        %v3732 = vpack.c.bf16 %v3623, %v3622
        %v3733 = vpack.c.bf16 %v3625, %v3624
        %v3734 = vpack.c.bf16 %v3627, %v3626
        %v3735 = vpack.c.bf16 %v3629, %v3628
        %v3736 = vpack.c.bf16 %v3631, %v3630
        %v3737 = vpack.c.bf16 %v3633, %v3632
        %v3738 = vpack.c.bf16 %v3635, %v3634
        %v3739 = vpack.c.bf16 %v3637, %v3636
        %v3740 = vpack.c.bf16 %v3639, %v3638
        %v3741 = vpack.c.bf16 %v3641, %v3640
        %v3742 = vpack.c.bf16 %v3643, %v3642
        %v3743 = vpack.c.bf16 %v3645, %v3644
        %v3744 = vpack.c.bf16 %v3647, %v3646
        %v3745 = vpack.c.bf16 %v3649, %v3648
        %v3746 = vpack.c.bf16 %v3651, %v3650
        %v3747 = vpack.c.bf16 %v3653, %v3652
        %v3748 = vpack.c.bf16 %v3655, %v3654
        %v3749 = vpack.c.bf16 %v3657, %v3656
        %v3750 = vpack.c.bf16 %v3659, %v3658
        %v3751 = vpack.c.bf16 %v3661, %v3660
        %v3752 = vpack.c.bf16 %v3663, %v3662
        %v3753 = vpack.c.bf16 %v3665, %v3664
        %v3754 = vpack.c.bf16 %v3667, %v3666
        %v3755 = vpack.c.bf16 %v3669, %v3668
        %v3756 = vpack.c.bf16 %v3671, %v3670
        %v3757 = vpack.c.bf16 %v3673, %v3672
        %v3758 = vpack.c.bf16 %v3675, %v3674
        %v3759 = vpack.c.bf16 %v3677, %v3676
        %v3760 = vpack.c.bf16 %v3679, %v3678
        %v3761 = vpack.c.bf16 %v3681, %v3680
        %v3762 = vpack.c.bf16 %v3683, %v3682
        %v3763 = vpack.c.bf16 %v3685, %v3684
        %v3764 = vpack.c.bf16 %v3687, %v3686
        %v3765 = vpack.c.bf16 %v3689, %v3688
        %v3766 = vpack.c.bf16 %v3691, %v3690
        %v3767 = vpack.c.bf16 %v3693, %v3692
        %v3768 = vpack.c.bf16 %v3695, %v3694
        %v3769 = vpack.c.bf16 %v3697, %v3696
        %v3770 = vpack.c.bf16 %v3699, %v3698
        %v3771 = vpack.c.bf16 %v3701, %v3700
        %v3772 = vpack.c.bf16 %v3703, %v3702
        %v3773 = vpack.c.bf16 %v3705, %v3704
        %v3774 = vpack.c.bf16 %v3707, %v3706
        %v3775 = vpack.c.bf16 %v3709, %v3708
        %v3776 = vpack.c.bf16 %v3711, %v3710
        %v3777 = vpack.c.bf16 %v3713, %v3712
        %v3778 = vld [vmem:[%s7] sm:$0xf]
        %v3779 = vld [vmem:[%s7 + $0x4] sm:$0xf]
        %v3780 = vld [vmem:[%s7 + $0x8] sm:$0xf]
        %v3781 = vld [vmem:[%s7 + $0xc] sm:$0xf]
        %v3782 = vld [vmem:[%s7 + $0x10] sm:$0xf]
        %v3783 = vld [vmem:[%s7 + $0x14] sm:$0xf]
        %v3784 = vld [vmem:[%s7 + $0x18] sm:$0xf]
        %v3785 = vld [vmem:[%s7 + $0x1c] sm:$0xf]
        %v3786 = vld [vmem:[%s8] sm:$0x1]
        %v3788 = vlaneseq
        %v3789 = vshrl.u32 %v3788, 7
        %v3790 = vsub.s32 0, %v3789
        %v3791 = vrot.slane %v3786, %v3790
        %v3801 = vunpack.c.l.b16 %v3778
        %v3802 = vunpack.c.l.b16 %v3779
        %v3803 = vunpack.c.l.b16 %v3780
        %v3804 = vunpack.c.l.b16 %v3781
        %v3805 = vunpack.c.l.b16 %v3782
        %v3806 = vunpack.c.l.b16 %v3783
        %v3807 = vunpack.c.l.b16 %v3784
        %v3808 = vunpack.c.l.b16 %v3785
        %v3809 = vpack.c.b16 %v3802, %v3801
        %v3810 = vpack.c.b16 %v3804, %v3803
        %v3811 = vpack.c.b16 %v3806, %v3805
        %v3812 = vpack.c.b16 %v3808, %v3807
        %v3818 = vsel %vm1880, %v3714, 0
        %v3821 = vsel %vm1880, %v3715, 0
        %v3824 = vsel %vm1880, %v3716, 0
        %v3827 = vsel %vm1880, %v3717, 0
        %v3830 = vsel %vm1880, %v3718, 0
        %v3833 = vsel %vm1880, %v3719, 0
        %v3836 = vsel %vm1880, %v3720, 0
        %v3839 = vsel %vm1880, %v3721, 0
        %v3842 = vsel %vm1880, %v3722, 0
        %v3845 = vsel %vm1880, %v3723, 0
        %v3848 = vsel %vm1880, %v3724, 0
        %v3851 = vsel %vm1880, %v3725, 0
        %v3854 = vsel %vm1880, %v3726, 0
        %v3857 = vsel %vm1880, %v3727, 0
        %v3860 = vsel %vm1880, %v3728, 0
        %v3863 = vsel %vm1880, %v3729, 0
        %v3866 = vsel %vm1880, %v3730, 0
        %v3869 = vsel %vm1880, %v3731, 0
        %v3872 = vsel %vm1880, %v3732, 0
        %v3875 = vsel %vm1880, %v3733, 0
        %v3878 = vsel %vm1880, %v3734, 0
        %v3881 = vsel %vm1880, %v3735, 0
        %v3884 = vsel %vm1880, %v3736, 0
        %v3887 = vsel %vm1880, %v3737, 0
        %v3890 = vsel %vm1880, %v3738, 0
        %v3893 = vsel %vm1880, %v3739, 0
        %v3896 = vsel %vm1880, %v3740, 0
        %v3899 = vsel %vm1880, %v3741, 0
        %v3902 = vsel %vm1880, %v3742, 0
        %v3905 = vsel %vm1880, %v3743, 0
        %v3908 = vsel %vm1880, %v3744, 0
        %v3911 = vsel %vm1880, %v3745, 0
        %v3914 = vsel %vm1880, %v3746, 0
        %v3917 = vsel %vm1880, %v3747, 0
        %v3920 = vsel %vm1880, %v3748, 0
        %v3923 = vsel %vm1880, %v3749, 0
        %v3926 = vsel %vm1880, %v3750, 0
        %v3929 = vsel %vm1880, %v3751, 0
        %v3932 = vsel %vm1880, %v3752, 0
        %v3935 = vsel %vm1880, %v3753, 0
        %v3938 = vsel %vm1880, %v3754, 0
        %v3941 = vsel %vm1880, %v3755, 0
        %v3944 = vsel %vm1880, %v3756, 0
        %v3947 = vsel %vm1880, %v3757, 0
        %v3950 = vsel %vm1880, %v3758, 0
        %v3953 = vsel %vm1880, %v3759, 0
        %v3956 = vsel %vm1880, %v3760, 0
        %v3959 = vsel %vm1880, %v3761, 0
        %v3962 = vsel %vm1880, %v3762, 0
        %v3965 = vsel %vm1880, %v3763, 0
        %v3968 = vsel %vm1880, %v3764, 0
        %v3971 = vsel %vm1880, %v3765, 0
        %v3974 = vsel %vm1880, %v3766, 0
        %v3977 = vsel %vm1880, %v3767, 0
        %v3980 = vsel %vm1880, %v3768, 0
        %v3983 = vsel %vm1880, %v3769, 0
        %v3986 = vsel %vm1880, %v3770, 0
        %v3989 = vsel %vm1880, %v3771, 0
        %v3992 = vsel %vm1880, %v3772, 0
        %v3995 = vsel %vm1880, %v3773, 0
        %v3998 = vsel %vm1880, %v3774, 0
        %v4001 = vsel %vm1880, %v3775, 0
        %v4004 = vsel %vm1880, %v3776, 0
        %v4007 = vsel %vm1880, %v3777, 0
        %4009 = vmatprep.subr.bf16.mxu0 0
        %4010 = vmatpush1.bf16.msra.mxu0 %v3809
        %4011 = vmatprep.subr.bf16.mxu0 0
        %4012 = vmatpush1.bf16.msra.mxu0 %v3810
        %4013 = vmatprep.subr.bf16.mxu0 0
        %4014 = vmatpush1.bf16.msra.mxu0 %v3811
        %4015 = vmatprep.subr.bf16.mxu0 0
        %4016 = vmatpush1.bf16.msra.mxu0 %v3812
        %4017 = vmatprep.subr.bf16.mxu0 0
        %4018 = vmatpush1.bf16.msra.mxu0 0
        %4019 = vmatprep.subr.bf16.mxu0 0
        %4020 = vmatpush1.bf16.msra.mxu0 0
        %4021 = vmatprep.subr.bf16.mxu0 0
        %4022 = vmatpush1.bf16.msra.mxu0 0
        %4023 = vmatprep.subr.bf16.mxu0 0
        %4024 = vmatpush1.bf16.msra.mxu0 0
        %4025 = vmatprep.subr.bf16.mxu0 0
        %4026 = vmatpush1.bf16.msra.mxu0 0
        %4027 = vmatprep.subr.bf16.mxu0 0
        %4028 = vmatpush1.bf16.msra.mxu0 0
        %4029 = vmatprep.subr.bf16.mxu0 0
        %4030 = vmatpush1.bf16.msra.mxu0 0
        %4031 = vmatprep.subr.bf16.mxu0 0
        %4032 = vmatpush1.bf16.msra.mxu0 0
        %4033 = vmatprep.subr.bf16.mxu0 0
        %4034 = vmatpush1.bf16.msra.mxu0 0
        %4035 = vmatprep.subr.bf16.mxu0 0
        %4036 = vmatpush1.bf16.msra.mxu0 0
        %4037 = vmatprep.subr.bf16.mxu0 0
        %4038 = vmatpush1.bf16.msra.mxu0 0
        %4039 = vmatprep.subr.bf16.mxu0 0
        %4040 = vmatpush1.bf16.msra.mxu0 0
        %4041 = vmatprep.mubr.bf16.mxu0 0
        %4042 = vmatmul.mubr.bf16.gmra.mrb[0].mxu0 %v3818
        %v4043 = vpop.f32.mrb[0].mxu0
        %v4044 = vadd.f32 %v3791, %v4043
        %v4045 = vpop.f32.mrb[0].mxu0
        %v4046 = vpop.f32.mrb[0].mxu0
        %v4047 = vadd.f32 %v3791, %v4046
        %v4048 = vpop.f32.mrb[0].mxu0
        %4049 = vmatprep.mubr.bf16.mxu0 0
        %4050 = vmatmul.mubr.bf16.gmra.mrb[0].mxu0 %v3821
        %v4051 = vpop.f32.mrb[0].mxu0
        %v4052 = vadd.f32 %v3791, %v4051
        %v4053 = vpop.f32.mrb[0].mxu0
        %v4054 = vpop.f32.mrb[0].mxu0
        %v4055 = vadd.f32 %v3791, %v4054
        %v4056 = vpop.f32.mrb[0].mxu0
        %4057 = vmatprep.mubr.bf16.mxu0 0
        %4058 = vmatmul.mubr.bf16.gmra.mrb[0].mxu0 %v3824
        %v4059 = vpop.f32.mrb[0].mxu0
        %v4060 = vadd.f32 %v3791, %v4059
        %v4061 = vpop.f32.mrb[0].mxu0
        %v4062 = vpop.f32.mrb[0].mxu0
        %v4063 = vadd.f32 %v3791, %v4062
        %v4064 = vpop.f32.mrb[0].mxu0
        %4065 = vmatprep.mubr.bf16.mxu0 0
        %4066 = vmatmul.mubr.bf16.gmra.mrb[0].mxu0 %v3827
        %v4067 = vpop.f32.mrb[0].mxu0
        %v4068 = vadd.f32 %v3791, %v4067
        %v4069 = vpop.f32.mrb[0].mxu0
        %v4070 = vpop.f32.mrb[0].mxu0
        %v4071 = vadd.f32 %v3791, %v4070
        %v4072 = vpop.f32.mrb[0].mxu0
        %4073 = vmatprep.mubr.bf16.mxu0 0
        %4074 = vmatmul.mubr.bf16.gmra.mrb[0].mxu0 %v3830
        %v4075 = vpop.f32.mrb[0].mxu0
        %v4076 = vadd.f32 %v3791, %v4075
        %v4077 = vpop.f32.mrb[0].mxu0
        %v4078 = vpop.f32.mrb[0].mxu0
        %v4079 = vadd.f32 %v3791, %v4078
        %v4080 = vpop.f32.mrb[0].mxu0
        %4081 = vmatprep.mubr.bf16.mxu0 0
        %4082 = vmatmul.mubr.bf16.gmra.mrb[0].mxu0 %v3833
        %v4083 = vpop.f32.mrb[0].mxu0
        %v4084 = vadd.f32 %v3791, %v4083
        %v4085 = vpop.f32.mrb[0].mxu0
        %v4086 = vpop.f32.mrb[0].mxu0
        %v4087 = vadd.f32 %v3791, %v4086
        %v4088 = vpop.f32.mrb[0].mxu0
        %4089 = vmatprep.mubr.bf16.mxu0 0
        %4090 = vmatmul.mubr.bf16.gmra.mrb[0].mxu0 %v3836
        %v4091 = vpop.f32.mrb[0].mxu0
        %v4092 = vadd.f32 %v3791, %v4091
        %v4093 = vpop.f32.mrb[0].mxu0
        %v4094 = vpop.f32.mrb[0].mxu0
        %v4095 = vadd.f32 %v3791, %v4094
        %v4096 = vpop.f32.mrb[0].mxu0
        %4097 = vmatprep.mubr.bf16.mxu0 0
        %4098 = vmatmul.mubr.bf16.gmra.mrb[0].mxu0 %v3839
        %v4099 = vpop.f32.mrb[0].mxu0
        %v4100 = vadd.f32 %v3791, %v4099
        %v4101 = vpop.f32.mrb[0].mxu0
        %v4102 = vpop.f32.mrb[0].mxu0
        %v4103 = vadd.f32 %v3791, %v4102
        %v4104 = vpop.f32.mrb[0].mxu0
        %4105 = vmatprep.mubr.bf16.mxu0 0
        %4106 = vmatmul.mubr.bf16.gmra.mrb[0].mxu0 %v3842
        %v4107 = vpop.f32.mrb[0].mxu0
        %v4108 = vadd.f32 %v3791, %v4107
        %v4109 = vpop.f32.mrb[0].mxu0
        %v4110 = vpop.f32.mrb[0].mxu0
        %v4111 = vadd.f32 %v3791, %v4110
        %v4112 = vpop.f32.mrb[0].mxu0
        %4113 = vmatprep.mubr.bf16.mxu0 0
        %4114 = vmatmul.mubr.bf16.gmra.mrb[0].mxu0 %v3845
        %v4115 = vpop.f32.mrb[0].mxu0
        %v4116 = vadd.f32 %v3791, %v4115
        %v4117 = vpop.f32.mrb[0].mxu0
        %v4118 = vpop.f32.mrb[0].mxu0
        %v4119 = vadd.f32 %v3791, %v4118
        %v4120 = vpop.f32.mrb[0].mxu0
        %4121 = vmatprep.mubr.bf16.mxu0 0
        %4122 = vmatmul.mubr.bf16.gmra.mrb[0].mxu0 %v3848
        %v4123 = vpop.f32.mrb[0].mxu0
        %v4124 = vadd.f32 %v3791, %v4123
        %v4125 = vpop.f32.mrb[0].mxu0
        %v4126 = vpop.f32.mrb[0].mxu0
        %v4127 = vadd.f32 %v3791, %v4126
        %v4128 = vpop.f32.mrb[0].mxu0
        %4129 = vmatprep.mubr.bf16.mxu0 0
        %4130 = vmatmul.mubr.bf16.gmra.mrb[0].mxu0 %v3851
        %v4131 = vpop.f32.mrb[0].mxu0
        %v4132 = vadd.f32 %v3791, %v4131
        %v4133 = vpop.f32.mrb[0].mxu0
        %v4134 = vpop.f32.mrb[0].mxu0
        %v4135 = vadd.f32 %v3791, %v4134
        %v4136 = vpop.f32.mrb[0].mxu0
        %4137 = vmatprep.mubr.bf16.mxu0 0
        %4138 = vmatmul.mubr.bf16.gmra.mrb[0].mxu0 %v3854
        %v4139 = vpop.f32.mrb[0].mxu0
        %v4140 = vadd.f32 %v3791, %v4139
        %v4141 = vpop.f32.mrb[0].mxu0
        %v4142 = vpop.f32.mrb[0].mxu0
        %v4143 = vadd.f32 %v3791, %v4142
        %v4144 = vpop.f32.mrb[0].mxu0
        %4145 = vmatprep.mubr.bf16.mxu0 0
        %4146 = vmatmul.mubr.bf16.gmra.mrb[0].mxu0 %v3857
        %v4147 = vpop.f32.mrb[0].mxu0
        %v4148 = vadd.f32 %v3791, %v4147
        %v4149 = vpop.f32.mrb[0].mxu0
        %v4150 = vpop.f32.mrb[0].mxu0
        %v4151 = vadd.f32 %v3791, %v4150
        %v4152 = vpop.f32.mrb[0].mxu0
        %4153 = vmatprep.mubr.bf16.mxu0 0
        %4154 = vmatmul.mubr.bf16.gmra.mrb[0].mxu0 %v3860
        %v4155 = vpop.f32.mrb[0].mxu0
        %v4156 = vadd.f32 %v3791, %v4155
        %v4157 = vpop.f32.mrb[0].mxu0
        %v4158 = vpop.f32.mrb[0].mxu0
        %v4159 = vadd.f32 %v3791, %v4158
        %v4160 = vpop.f32.mrb[0].mxu0
        %4161 = vmatprep.mubr.bf16.mxu0 0
        %4162 = vmatmul.mubr.bf16.gmra.mrb[0].mxu0 %v3863
        %v4163 = vpop.f32.mrb[0].mxu0
        %v4164 = vadd.f32 %v3791, %v4163
        %v4165 = vpop.f32.mrb[0].mxu0
        %v4166 = vpop.f32.mrb[0].mxu0
        %v4167 = vadd.f32 %v3791, %v4166
        %v4168 = vpop.f32.mrb[0].mxu0
        %4169 = vmatprep.mubr.bf16.mxu0 0
        %4170 = vmatmul.mubr.bf16.gmra.mrb[0].mxu0 %v3866
        %v4171 = vpop.f32.mrb[0].mxu0
        %v4172 = vadd.f32 %v3791, %v4171
        %v4173 = vpop.f32.mrb[0].mxu0
        %v4174 = vpop.f32.mrb[0].mxu0
        %v4175 = vadd.f32 %v3791, %v4174
        %v4176 = vpop.f32.mrb[0].mxu0
        %4177 = vmatprep.mubr.bf16.mxu0 0
        %4178 = vmatmul.mubr.bf16.gmra.mrb[0].mxu0 %v3869
        %v4179 = vpop.f32.mrb[0].mxu0
        %v4180 = vadd.f32 %v3791, %v4179
        %v4181 = vpop.f32.mrb[0].mxu0
        %v4182 = vpop.f32.mrb[0].mxu0
        %v4183 = vadd.f32 %v3791, %v4182
        %v4184 = vpop.f32.mrb[0].mxu0
        %4185 = vmatprep.mubr.bf16.mxu0 0
        %4186 = vmatmul.mubr.bf16.gmra.mrb[0].mxu0 %v3872
        %v4187 = vpop.f32.mrb[0].mxu0
        %v4188 = vadd.f32 %v3791, %v4187
        %v4189 = vpop.f32.mrb[0].mxu0
        %v4190 = vpop.f32.mrb[0].mxu0
        %v4191 = vadd.f32 %v3791, %v4190
        %v4192 = vpop.f32.mrb[0].mxu0
        %4193 = vmatprep.mubr.bf16.mxu0 0
        %4194 = vmatmul.mubr.bf16.gmra.mrb[0].mxu0 %v3875
        %v4195 = vpop.f32.mrb[0].mxu0
        %v4196 = vadd.f32 %v3791, %v4195
        %v4197 = vpop.f32.mrb[0].mxu0
        %v4198 = vpop.f32.mrb[0].mxu0
        %v4199 = vadd.f32 %v3791, %v4198
        %v4200 = vpop.f32.mrb[0].mxu0
        %4201 = vmatprep.mubr.bf16.mxu0 0
        %4202 = vmatmul.mubr.bf16.gmra.mrb[0].mxu0 %v3878
        %v4203 = vpop.f32.mrb[0].mxu0
        %v4204 = vadd.f32 %v3791, %v4203
        %v4205 = vpop.f32.mrb[0].mxu0
        %v4206 = vpop.f32.mrb[0].mxu0
        %v4207 = vadd.f32 %v3791, %v4206
        %v4208 = vpop.f32.mrb[0].mxu0
        %4209 = vmatprep.mubr.bf16.mxu0 0
        %4210 = vmatmul.mubr.bf16.gmra.mrb[0].mxu0 %v3881
        %v4211 = vpop.f32.mrb[0].mxu0
        %v4212 = vadd.f32 %v3791, %v4211
        %v4213 = vpop.f32.mrb[0].mxu0
        %v4214 = vpop.f32.mrb[0].mxu0
        %v4215 = vadd.f32 %v3791, %v4214
        %v4216 = vpop.f32.mrb[0].mxu0
        %4217 = vmatprep.mubr.bf16.mxu0 0
        %4218 = vmatmul.mubr.bf16.gmra.mrb[0].mxu0 %v3884
        %v4219 = vpop.f32.mrb[0].mxu0
        %v4220 = vadd.f32 %v3791, %v4219
        %v4221 = vpop.f32.mrb[0].mxu0
        %v4222 = vpop.f32.mrb[0].mxu0
        %v4223 = vadd.f32 %v3791, %v4222
        %v4224 = vpop.f32.mrb[0].mxu0
        %4225 = vmatprep.mubr.bf16.mxu0 0
        %4226 = vmatmul.mubr.bf16.gmra.mrb[0].mxu0 %v3887
        %v4227 = vpop.f32.mrb[0].mxu0
        %v4228 = vadd.f32 %v3791, %v4227
        %v4229 = vpop.f32.mrb[0].mxu0
        %v4230 = vpop.f32.mrb[0].mxu0
        %v4231 = vadd.f32 %v3791, %v4230
        %v4232 = vpop.f32.mrb[0].mxu0
        %4233 = vmatprep.mubr.bf16.mxu0 0
        %4234 = vmatmul.mubr.bf16.gmra.mrb[0].mxu0 %v3890
        %v4235 = vpop.f32.mrb[0].mxu0
        %v4236 = vadd.f32 %v3791, %v4235
        %v4237 = vpop.f32.mrb[0].mxu0
        %v4238 = vpop.f32.mrb[0].mxu0
        %v4239 = vadd.f32 %v3791, %v4238
        %v4240 = vpop.f32.mrb[0].mxu0
        %4241 = vmatprep.mubr.bf16.mxu0 0
        %4242 = vmatmul.mubr.bf16.gmra.mrb[0].mxu0 %v3893
        %v4243 = vpop.f32.mrb[0].mxu0
        %v4244 = vadd.f32 %v3791, %v4243
        %v4245 = vpop.f32.mrb[0].mxu0
        %v4246 = vpop.f32.mrb[0].mxu0
        %v4247 = vadd.f32 %v3791, %v4246
        %v4248 = vpop.f32.mrb[0].mxu0
        %4249 = vmatprep.mubr.bf16.mxu0 0
        %4250 = vmatmul.mubr.bf16.gmra.mrb[0].mxu0 %v3896
        %v4251 = vpop.f32.mrb[0].mxu0
        %v4252 = vadd.f32 %v3791, %v4251
        %v4253 = vpop.f32.mrb[0].mxu0
        %v4254 = vpop.f32.mrb[0].mxu0
        %v4255 = vadd.f32 %v3791, %v4254
        %v4256 = vpop.f32.mrb[0].mxu0
        %4257 = vmatprep.mubr.bf16.mxu0 0
        %4258 = vmatmul.mubr.bf16.gmra.mrb[0].mxu0 %v3899
        %v4259 = vpop.f32.mrb[0].mxu0
        %v4260 = vadd.f32 %v3791, %v4259
        %v4261 = vpop.f32.mrb[0].mxu0
        %v4262 = vpop.f32.mrb[0].mxu0
        %v4263 = vadd.f32 %v3791, %v4262
        %v4264 = vpop.f32.mrb[0].mxu0
        %4265 = vmatprep.mubr.bf16.mxu0 0
        %4266 = vmatmul.mubr.bf16.gmra.mrb[0].mxu0 %v3902
        %v4267 = vpop.f32.mrb[0].mxu0
        %v4268 = vadd.f32 %v3791, %v4267
        %v4269 = vpop.f32.mrb[0].mxu0
        %v4270 = vpop.f32.mrb[0].mxu0
        %v4271 = vadd.f32 %v3791, %v4270
        %v4272 = vpop.f32.mrb[0].mxu0
        %4273 = vmatprep.mubr.bf16.mxu0 0
        %4274 = vmatmul.mubr.bf16.gmra.mrb[0].mxu0 %v3905
        %v4275 = vpop.f32.mrb[0].mxu0
        %v4276 = vadd.f32 %v3791, %v4275
        %v4277 = vpop.f32.mrb[0].mxu0
        %v4278 = vpop.f32.mrb[0].mxu0
        %v4279 = vadd.f32 %v3791, %v4278
        %v4280 = vpop.f32.mrb[0].mxu0
        %4281 = vmatprep.mubr.bf16.mxu0 0
        %4282 = vmatmul.mubr.bf16.gmra.mrb[0].mxu0 %v3908
        %v4283 = vpop.f32.mrb[0].mxu0
        %v4284 = vadd.f32 %v3791, %v4283
        %v4285 = vpop.f32.mrb[0].mxu0
        %v4286 = vpop.f32.mrb[0].mxu0
        %v4287 = vadd.f32 %v3791, %v4286
        %v4288 = vpop.f32.mrb[0].mxu0
        %4289 = vmatprep.mubr.bf16.mxu0 0
        %4290 = vmatmul.mubr.bf16.gmra.mrb[0].mxu0 %v3911
        %v4291 = vpop.f32.mrb[0].mxu0
        %v4292 = vadd.f32 %v3791, %v4291
        %v4293 = vpop.f32.mrb[0].mxu0
        %v4294 = vpop.f32.mrb[0].mxu0
        %v4295 = vadd.f32 %v3791, %v4294
        %v4296 = vpop.f32.mrb[0].mxu0
        %4297 = vmatprep.mubr.bf16.mxu0 0
        %4298 = vmatmul.mubr.bf16.gmra.mrb[0].mxu0 %v3914
        %v4299 = vpop.f32.mrb[0].mxu0
        %v4300 = vadd.f32 %v3791, %v4299
        %v4301 = vpop.f32.mrb[0].mxu0
        %v4302 = vpop.f32.mrb[0].mxu0
        %v4303 = vadd.f32 %v3791, %v4302
        %v4304 = vpop.f32.mrb[0].mxu0
        %4305 = vmatprep.mubr.bf16.mxu0 0
        %4306 = vmatmul.mubr.bf16.gmra.mrb[0].mxu0 %v3917
        %v4307 = vpop.f32.mrb[0].mxu0
        %v4308 = vadd.f32 %v3791, %v4307
        %v4309 = vpop.f32.mrb[0].mxu0
        %v4310 = vpop.f32.mrb[0].mxu0
        %v4311 = vadd.f32 %v3791, %v4310
        %v4312 = vpop.f32.mrb[0].mxu0
        %4313 = vmatprep.mubr.bf16.mxu0 0
        %4314 = vmatmul.mubr.bf16.gmra.mrb[0].mxu0 %v3920
        %v4315 = vpop.f32.mrb[0].mxu0
        %v4316 = vadd.f32 %v3791, %v4315
        %v4317 = vpop.f32.mrb[0].mxu0
        %v4318 = vpop.f32.mrb[0].mxu0
        %v4319 = vadd.f32 %v3791, %v4318
        %v4320 = vpop.f32.mrb[0].mxu0
        %4321 = vmatprep.mubr.bf16.mxu0 0
        %4322 = vmatmul.mubr.bf16.gmra.mrb[0].mxu0 %v3923
        %v4323 = vpop.f32.mrb[0].mxu0
        %v4324 = vadd.f32 %v3791, %v4323
        %v4325 = vpop.f32.mrb[0].mxu0
        %v4326 = vpop.f32.mrb[0].mxu0
        %v4327 = vadd.f32 %v3791, %v4326
        %v4328 = vpop.f32.mrb[0].mxu0
        %4329 = vmatprep.mubr.bf16.mxu0 0
        %4330 = vmatmul.mubr.bf16.gmra.mrb[0].mxu0 %v3926
        %v4331 = vpop.f32.mrb[0].mxu0
        %v4332 = vadd.f32 %v3791, %v4331
        %v4333 = vpop.f32.mrb[0].mxu0
        %v4334 = vpop.f32.mrb[0].mxu0
        %v4335 = vadd.f32 %v3791, %v4334
        %v4336 = vpop.f32.mrb[0].mxu0
        %4337 = vmatprep.mubr.bf16.mxu0 0
        %4338 = vmatmul.mubr.bf16.gmra.mrb[0].mxu0 %v3929
        %v4339 = vpop.f32.mrb[0].mxu0
        %v4340 = vadd.f32 %v3791, %v4339
        %v4341 = vpop.f32.mrb[0].mxu0
        %v4342 = vpop.f32.mrb[0].mxu0
        %v4343 = vadd.f32 %v3791, %v4342
        %v4344 = vpop.f32.mrb[0].mxu0
        %4345 = vmatprep.mubr.bf16.mxu0 0
        %4346 = vmatmul.mubr.bf16.gmra.mrb[0].mxu0 %v3932
        %v4347 = vpop.f32.mrb[0].mxu0
        %v4348 = vadd.f32 %v3791, %v4347
        %v4349 = vpop.f32.mrb[0].mxu0
        %v4350 = vpop.f32.mrb[0].mxu0
        %v4351 = vadd.f32 %v3791, %v4350
        %v4352 = vpop.f32.mrb[0].mxu0
        %4353 = vmatprep.mubr.bf16.mxu0 0
        %4354 = vmatmul.mubr.bf16.gmra.mrb[0].mxu0 %v3935
        %v4355 = vpop.f32.mrb[0].mxu0
        %v4356 = vadd.f32 %v3791, %v4355
        %v4357 = vpop.f32.mrb[0].mxu0
        %v4358 = vpop.f32.mrb[0].mxu0
        %v4359 = vadd.f32 %v3791, %v4358
        %v4360 = vpop.f32.mrb[0].mxu0
        %4361 = vmatprep.mubr.bf16.mxu0 0
        %4362 = vmatmul.mubr.bf16.gmra.mrb[0].mxu0 %v3938
        %v4363 = vpop.f32.mrb[0].mxu0
        %v4364 = vadd.f32 %v3791, %v4363
        %v4365 = vpop.f32.mrb[0].mxu0
        %v4366 = vpop.f32.mrb[0].mxu0
        %v4367 = vadd.f32 %v3791, %v4366
        %v4368 = vpop.f32.mrb[0].mxu0
        %4369 = vmatprep.mubr.bf16.mxu0 0
        %4370 = vmatmul.mubr.bf16.gmra.mrb[0].mxu0 %v3941
        %v4371 = vpop.f32.mrb[0].mxu0
        %v4372 = vadd.f32 %v3791, %v4371
        %v4373 = vpop.f32.mrb[0].mxu0
        %v4374 = vpop.f32.mrb[0].mxu0
        %v4375 = vadd.f32 %v3791, %v4374
        %v4376 = vpop.f32.mrb[0].mxu0
        %4377 = vmatprep.mubr.bf16.mxu0 0
        %4378 = vmatmul.mubr.bf16.gmra.mrb[0].mxu0 %v3944
        %v4379 = vpop.f32.mrb[0].mxu0
        %v4380 = vadd.f32 %v3791, %v4379
        %v4381 = vpop.f32.mrb[0].mxu0
        %v4382 = vpop.f32.mrb[0].mxu0
        %v4383 = vadd.f32 %v3791, %v4382
        %v4384 = vpop.f32.mrb[0].mxu0
        %4385 = vmatprep.mubr.bf16.mxu0 0
        %4386 = vmatmul.mubr.bf16.gmra.mrb[0].mxu0 %v3947
        %v4387 = vpop.f32.mrb[0].mxu0
        %v4388 = vadd.f32 %v3791, %v4387
        %v4389 = vpop.f32.mrb[0].mxu0
        %v4390 = vpop.f32.mrb[0].mxu0
        %v4391 = vadd.f32 %v3791, %v4390
        %v4392 = vpop.f32.mrb[0].mxu0
        %4393 = vmatprep.mubr.bf16.mxu0 0
        %4394 = vmatmul.mubr.bf16.gmra.mrb[0].mxu0 %v3950
        %v4395 = vpop.f32.mrb[0].mxu0
        %v4396 = vadd.f32 %v3791, %v4395
        %v4397 = vpop.f32.mrb[0].mxu0
        %v4398 = vpop.f32.mrb[0].mxu0
        %v4399 = vadd.f32 %v3791, %v4398
        %v4400 = vpop.f32.mrb[0].mxu0
        %4401 = vmatprep.mubr.bf16.mxu0 0
        %4402 = vmatmul.mubr.bf16.gmra.mrb[0].mxu0 %v3953
        %v4403 = vpop.f32.mrb[0].mxu0
        %v4404 = vadd.f32 %v3791, %v4403
        %v4405 = vpop.f32.mrb[0].mxu0
        %v4406 = vpop.f32.mrb[0].mxu0
        %v4407 = vadd.f32 %v3791, %v4406
        %v4408 = vpop.f32.mrb[0].mxu0
        %4409 = vmatprep.mubr.bf16.mxu0 0
        %4410 = vmatmul.mubr.bf16.gmra.mrb[0].mxu0 %v3956
        %v4411 = vpop.f32.mrb[0].mxu0
        %v4412 = vadd.f32 %v3791, %v4411
        %v4413 = vpop.f32.mrb[0].mxu0
        %v4414 = vpop.f32.mrb[0].mxu0
        %v4415 = vadd.f32 %v3791, %v4414
        %v4416 = vpop.f32.mrb[0].mxu0
        %4417 = vmatprep.mubr.bf16.mxu0 0
        %4418 = vmatmul.mubr.bf16.gmra.mrb[0].mxu0 %v3959
        %v4419 = vpop.f32.mrb[0].mxu0
        %v4420 = vadd.f32 %v3791, %v4419
        %v4421 = vpop.f32.mrb[0].mxu0
        %v4422 = vpop.f32.mrb[0].mxu0
        %v4423 = vadd.f32 %v3791, %v4422
        %v4424 = vpop.f32.mrb[0].mxu0
        %4425 = vmatprep.mubr.bf16.mxu0 0
        %4426 = vmatmul.mubr.bf16.gmra.mrb[0].mxu0 %v3962
        %v4427 = vpop.f32.mrb[0].mxu0
        %v4428 = vadd.f32 %v3791, %v4427
        %v4429 = vpop.f32.mrb[0].mxu0
        %v4430 = vpop.f32.mrb[0].mxu0
        %v4431 = vadd.f32 %v3791, %v4430
        %v4432 = vpop.f32.mrb[0].mxu0
        %4433 = vmatprep.mubr.bf16.mxu0 0
        %4434 = vmatmul.mubr.bf16.gmra.mrb[0].mxu0 %v3965
        %v4435 = vpop.f32.mrb[0].mxu0
        %v4436 = vadd.f32 %v3791, %v4435
        %v4437 = vpop.f32.mrb[0].mxu0
        %v4438 = vpop.f32.mrb[0].mxu0
        %v4439 = vadd.f32 %v3791, %v4438
        %v4440 = vpop.f32.mrb[0].mxu0
        %4441 = vmatprep.mubr.bf16.mxu0 0
        %4442 = vmatmul.mubr.bf16.gmra.mrb[0].mxu0 %v3968
        %v4443 = vpop.f32.mrb[0].mxu0
        %v4444 = vadd.f32 %v3791, %v4443
        %v4445 = vpop.f32.mrb[0].mxu0
        %v4446 = vpop.f32.mrb[0].mxu0
        %v4447 = vadd.f32 %v3791, %v4446
        %v4448 = vpop.f32.mrb[0].mxu0
        %4449 = vmatprep.mubr.bf16.mxu0 0
        %4450 = vmatmul.mubr.bf16.gmra.mrb[0].mxu0 %v3971
        %v4451 = vpop.f32.mrb[0].mxu0
        %v4452 = vadd.f32 %v3791, %v4451
        %v4453 = vpop.f32.mrb[0].mxu0
        %v4454 = vpop.f32.mrb[0].mxu0
        %v4455 = vadd.f32 %v3791, %v4454
        %v4456 = vpop.f32.mrb[0].mxu0
        %4457 = vmatprep.mubr.bf16.mxu0 0
        %4458 = vmatmul.mubr.bf16.gmra.mrb[0].mxu0 %v3974
        %v4459 = vpop.f32.mrb[0].mxu0
        %v4460 = vadd.f32 %v3791, %v4459
        %v4461 = vpop.f32.mrb[0].mxu0
        %v4462 = vpop.f32.mrb[0].mxu0
        %v4463 = vadd.f32 %v3791, %v4462
        %v4464 = vpop.f32.mrb[0].mxu0
        %4465 = vmatprep.mubr.bf16.mxu0 0
        %4466 = vmatmul.mubr.bf16.gmra.mrb[0].mxu0 %v3977
        %v4467 = vpop.f32.mrb[0].mxu0
        %v4468 = vadd.f32 %v3791, %v4467
        %v4469 = vpop.f32.mrb[0].mxu0
        %v4470 = vpop.f32.mrb[0].mxu0
        %v4471 = vadd.f32 %v3791, %v4470
        %v4472 = vpop.f32.mrb[0].mxu0
        %4473 = vmatprep.mubr.bf16.mxu0 0
        %4474 = vmatmul.mubr.bf16.gmra.mrb[0].mxu0 %v3980
        %v4475 = vpop.f32.mrb[0].mxu0
        %v4476 = vadd.f32 %v3791, %v4475
        %v4477 = vpop.f32.mrb[0].mxu0
        %v4478 = vpop.f32.mrb[0].mxu0
        %v4479 = vadd.f32 %v3791, %v4478
        %v4480 = vpop.f32.mrb[0].mxu0
        %4481 = vmatprep.mubr.bf16.mxu0 0
        %4482 = vmatmul.mubr.bf16.gmra.mrb[0].mxu0 %v3983
        %v4483 = vpop.f32.mrb[0].mxu0
        %v4484 = vadd.f32 %v3791, %v4483
        %v4485 = vpop.f32.mrb[0].mxu0
        %v4486 = vpop.f32.mrb[0].mxu0
        %v4487 = vadd.f32 %v3791, %v4486
        %v4488 = vpop.f32.mrb[0].mxu0
        %4489 = vmatprep.mubr.bf16.mxu0 0
        %4490 = vmatmul.mubr.bf16.gmra.mrb[0].mxu0 %v3986
        %v4491 = vpop.f32.mrb[0].mxu0
        %v4492 = vadd.f32 %v3791, %v4491
        %v4493 = vpop.f32.mrb[0].mxu0
        %v4494 = vpop.f32.mrb[0].mxu0
        %v4495 = vadd.f32 %v3791, %v4494
        %v4496 = vpop.f32.mrb[0].mxu0
        %4497 = vmatprep.mubr.bf16.mxu0 0
        %4498 = vmatmul.mubr.bf16.gmra.mrb[0].mxu0 %v3989
        %v4499 = vpop.f32.mrb[0].mxu0
        %v4500 = vadd.f32 %v3791, %v4499
        %v4501 = vpop.f32.mrb[0].mxu0
        %v4502 = vpop.f32.mrb[0].mxu0
        %v4503 = vadd.f32 %v3791, %v4502
        %v4504 = vpop.f32.mrb[0].mxu0
        %4505 = vmatprep.mubr.bf16.mxu0 0
        %4506 = vmatmul.mubr.bf16.gmra.mrb[0].mxu0 %v3992
        %v4507 = vpop.f32.mrb[0].mxu0
        %v4508 = vadd.f32 %v3791, %v4507
        %v4509 = vpop.f32.mrb[0].mxu0
        %v4510 = vpop.f32.mrb[0].mxu0
        %v4511 = vadd.f32 %v3791, %v4510
        %v4512 = vpop.f32.mrb[0].mxu0
        %4513 = vmatprep.mubr.bf16.mxu0 0
        %4514 = vmatmul.mubr.bf16.gmra.mrb[0].mxu0 %v3995
        %v4515 = vpop.f32.mrb[0].mxu0
        %v4516 = vadd.f32 %v3791, %v4515
        %v4517 = vpop.f32.mrb[0].mxu0
        %v4518 = vpop.f32.mrb[0].mxu0
        %v4519 = vadd.f32 %v3791, %v4518
        %v4520 = vpop.f32.mrb[0].mxu0
        %4521 = vmatprep.mubr.bf16.mxu0 0
        %4522 = vmatmul.mubr.bf16.gmra.mrb[0].mxu0 %v3998
        %v4523 = vpop.f32.mrb[0].mxu0
        %v4524 = vadd.f32 %v3791, %v4523
        %v4525 = vpop.f32.mrb[0].mxu0
        %v4526 = vpop.f32.mrb[0].mxu0
        %v4527 = vadd.f32 %v3791, %v4526
        %v4528 = vpop.f32.mrb[0].mxu0
        %4529 = vmatprep.mubr.bf16.mxu0 0
        %4530 = vmatmul.mubr.bf16.gmra.mrb[0].mxu0 %v4001
        %v4531 = vpop.f32.mrb[0].mxu0
        %v4532 = vadd.f32 %v3791, %v4531
        %v4533 = vpop.f32.mrb[0].mxu0
        %v4534 = vpop.f32.mrb[0].mxu0
        %v4535 = vadd.f32 %v3791, %v4534
        %v4536 = vpop.f32.mrb[0].mxu0
        %4537 = vmatprep.mubr.bf16.mxu0 0
        %4538 = vmatmul.mubr.bf16.gmra.mrb[0].mxu0 %v4004
        %v4539 = vpop.f32.mrb[0].mxu0
        %v4540 = vadd.f32 %v3791, %v4539
        %v4541 = vpop.f32.mrb[0].mxu0
        %v4542 = vpop.f32.mrb[0].mxu0
        %v4543 = vadd.f32 %v3791, %v4542
        %v4544 = vpop.f32.mrb[0].mxu0
        %4545 = vmatprep.mubr.bf16.mxu0 0
        %4546 = vmatmul.mubr.bf16.gmra.mrb[0].mxu0 %v4007
        %v4547 = vpop.f32.mrb[0].mxu0
        %v4548 = vadd.f32 %v3791, %v4547
        %v4549 = vpop.f32.mrb[0].mxu0
        %v4550 = vpop.f32.mrb[0].mxu0
        %v4551 = vadd.f32 %v3791, %v4550
        %v4552 = vpop.f32.mrb[0].mxu0
        %4553 = vdwg.mxu0
        %v4554 = vmax.f32 %v4044, 0.0
        %v4555 = vmax.f32 %v4047, 0.0
        %v4556 = vmax.f32 %v4052, 0.0
        %v4557 = vmax.f32 %v4055, 0.0
        %v4558 = vmax.f32 %v4060, 0.0
        %v4559 = vmax.f32 %v4063, 0.0
        %v4560 = vmax.f32 %v4068, 0.0
        %v4561 = vmax.f32 %v4071, 0.0
        %v4562 = vmax.f32 %v4076, 0.0
        %v4563 = vmax.f32 %v4079, 0.0
        %v4564 = vmax.f32 %v4084, 0.0
        %v4565 = vmax.f32 %v4087, 0.0
        %v4566 = vmax.f32 %v4092, 0.0
        %v4567 = vmax.f32 %v4095, 0.0
        %v4568 = vmax.f32 %v4100, 0.0
        %v4569 = vmax.f32 %v4103, 0.0
        %v4570 = vmax.f32 %v4108, 0.0
        %v4571 = vmax.f32 %v4111, 0.0
        %v4572 = vmax.f32 %v4116, 0.0
        %v4573 = vmax.f32 %v4119, 0.0
        %v4574 = vmax.f32 %v4124, 0.0
        %v4575 = vmax.f32 %v4127, 0.0
        %v4576 = vmax.f32 %v4132, 0.0
        %v4577 = vmax.f32 %v4135, 0.0
        %v4578 = vmax.f32 %v4140, 0.0
        %v4579 = vmax.f32 %v4143, 0.0
        %v4580 = vmax.f32 %v4148, 0.0
        %v4581 = vmax.f32 %v4151, 0.0
        %v4582 = vmax.f32 %v4156, 0.0
        %v4583 = vmax.f32 %v4159, 0.0
        %v4584 = vmax.f32 %v4164, 0.0
        %v4585 = vmax.f32 %v4167, 0.0
        %v4586 = vmax.f32 %v4172, 0.0
        %v4587 = vmax.f32 %v4175, 0.0
        %v4588 = vmax.f32 %v4180, 0.0
        %v4589 = vmax.f32 %v4183, 0.0
        %v4590 = vmax.f32 %v4188, 0.0
        %v4591 = vmax.f32 %v4191, 0.0
        %v4592 = vmax.f32 %v4196, 0.0
        %v4593 = vmax.f32 %v4199, 0.0
        %v4594 = vmax.f32 %v4204, 0.0
        %v4595 = vmax.f32 %v4207, 0.0
        %v4596 = vmax.f32 %v4212, 0.0
        %v4597 = vmax.f32 %v4215, 0.0
        %v4598 = vmax.f32 %v4220, 0.0
        %v4599 = vmax.f32 %v4223, 0.0
        %v4600 = vmax.f32 %v4228, 0.0
        %v4601 = vmax.f32 %v4231, 0.0
        %v4602 = vmax.f32 %v4236, 0.0
        %v4603 = vmax.f32 %v4239, 0.0
        %v4604 = vmax.f32 %v4244, 0.0
        %v4605 = vmax.f32 %v4247, 0.0
        %v4606 = vmax.f32 %v4252, 0.0
        %v4607 = vmax.f32 %v4255, 0.0
        %v4608 = vmax.f32 %v4260, 0.0
        %v4609 = vmax.f32 %v4263, 0.0
        %v4610 = vmax.f32 %v4268, 0.0
        %v4611 = vmax.f32 %v4271, 0.0
        %v4612 = vmax.f32 %v4276, 0.0
        %v4613 = vmax.f32 %v4279, 0.0
        %v4614 = vmax.f32 %v4284, 0.0
        %v4615 = vmax.f32 %v4287, 0.0
        %v4616 = vmax.f32 %v4292, 0.0
        %v4617 = vmax.f32 %v4295, 0.0
        %v4618 = vmax.f32 %v4300, 0.0
        %v4619 = vmax.f32 %v4303, 0.0
        %v4620 = vmax.f32 %v4308, 0.0
        %v4621 = vmax.f32 %v4311, 0.0
        %v4622 = vmax.f32 %v4316, 0.0
        %v4623 = vmax.f32 %v4319, 0.0
        %v4624 = vmax.f32 %v4324, 0.0
        %v4625 = vmax.f32 %v4327, 0.0
        %v4626 = vmax.f32 %v4332, 0.0
        %v4627 = vmax.f32 %v4335, 0.0
        %v4628 = vmax.f32 %v4340, 0.0
        %v4629 = vmax.f32 %v4343, 0.0
        %v4630 = vmax.f32 %v4348, 0.0
        %v4631 = vmax.f32 %v4351, 0.0
        %v4632 = vmax.f32 %v4356, 0.0
        %v4633 = vmax.f32 %v4359, 0.0
        %v4634 = vmax.f32 %v4364, 0.0
        %v4635 = vmax.f32 %v4367, 0.0
        %v4636 = vmax.f32 %v4372, 0.0
        %v4637 = vmax.f32 %v4375, 0.0
        %v4638 = vmax.f32 %v4380, 0.0
        %v4639 = vmax.f32 %v4383, 0.0
        %v4640 = vmax.f32 %v4388, 0.0
        %v4641 = vmax.f32 %v4391, 0.0
        %v4642 = vmax.f32 %v4396, 0.0
        %v4643 = vmax.f32 %v4399, 0.0
        %v4644 = vmax.f32 %v4404, 0.0
        %v4645 = vmax.f32 %v4407, 0.0
        %v4646 = vmax.f32 %v4412, 0.0
        %v4647 = vmax.f32 %v4415, 0.0
        %v4648 = vmax.f32 %v4420, 0.0
        %v4649 = vmax.f32 %v4423, 0.0
        %v4650 = vmax.f32 %v4428, 0.0
        %v4651 = vmax.f32 %v4431, 0.0
        %v4652 = vmax.f32 %v4436, 0.0
        %v4653 = vmax.f32 %v4439, 0.0
        %v4654 = vmax.f32 %v4444, 0.0
        %v4655 = vmax.f32 %v4447, 0.0
        %v4656 = vmax.f32 %v4452, 0.0
        %v4657 = vmax.f32 %v4455, 0.0
        %v4658 = vmax.f32 %v4460, 0.0
        %v4659 = vmax.f32 %v4463, 0.0
        %v4660 = vmax.f32 %v4468, 0.0
        %v4661 = vmax.f32 %v4471, 0.0
        %v4662 = vmax.f32 %v4476, 0.0
        %v4663 = vmax.f32 %v4479, 0.0
        %v4664 = vmax.f32 %v4484, 0.0
        %v4665 = vmax.f32 %v4487, 0.0
        %v4666 = vmax.f32 %v4492, 0.0
        %v4667 = vmax.f32 %v4495, 0.0
        %v4668 = vmax.f32 %v4500, 0.0
        %v4669 = vmax.f32 %v4503, 0.0
        %v4670 = vmax.f32 %v4508, 0.0
        %v4671 = vmax.f32 %v4511, 0.0
        %v4672 = vmax.f32 %v4516, 0.0
        %v4673 = vmax.f32 %v4519, 0.0
        %v4674 = vmax.f32 %v4524, 0.0
        %v4675 = vmax.f32 %v4527, 0.0
        %v4676 = vmax.f32 %v4532, 0.0
        %v4677 = vmax.f32 %v4535, 0.0
        %v4678 = vmax.f32 %v4540, 0.0
        %v4679 = vmax.f32 %v4543, 0.0
        %v4680 = vmax.f32 %v4548, 0.0
        %v4681 = vmax.f32 %v4551, 0.0
        %v4682 = vpack.c.bf16 %v4555, %v4554
        %v4683 = vpack.c.bf16 %v4557, %v4556
        %v4684 = vpack.c.bf16 %v4559, %v4558
        %v4685 = vpack.c.bf16 %v4561, %v4560
        %v4686 = vpack.c.bf16 %v4563, %v4562
        %v4687 = vpack.c.bf16 %v4565, %v4564
        %v4688 = vpack.c.bf16 %v4567, %v4566
        %v4689 = vpack.c.bf16 %v4569, %v4568
        %v4690 = vpack.c.bf16 %v4571, %v4570
        %v4691 = vpack.c.bf16 %v4573, %v4572
        %v4692 = vpack.c.bf16 %v4575, %v4574
        %v4693 = vpack.c.bf16 %v4577, %v4576
        %v4694 = vpack.c.bf16 %v4579, %v4578
        %v4695 = vpack.c.bf16 %v4581, %v4580
        %v4696 = vpack.c.bf16 %v4583, %v4582
        %v4697 = vpack.c.bf16 %v4585, %v4584
        %v4698 = vpack.c.bf16 %v4587, %v4586
        %v4699 = vpack.c.bf16 %v4589, %v4588
        %v4700 = vpack.c.bf16 %v4591, %v4590
        %v4701 = vpack.c.bf16 %v4593, %v4592
        %v4702 = vpack.c.bf16 %v4595, %v4594
        %v4703 = vpack.c.bf16 %v4597, %v4596
        %v4704 = vpack.c.bf16 %v4599, %v4598
        %v4705 = vpack.c.bf16 %v4601, %v4600
        %v4706 = vpack.c.bf16 %v4603, %v4602
        %v4707 = vpack.c.bf16 %v4605, %v4604
        %v4708 = vpack.c.bf16 %v4607, %v4606
        %v4709 = vpack.c.bf16 %v4609, %v4608
        %v4710 = vpack.c.bf16 %v4611, %v4610
        %v4711 = vpack.c.bf16 %v4613, %v4612
        %v4712 = vpack.c.bf16 %v4615, %v4614
        %v4713 = vpack.c.bf16 %v4617, %v4616
        %v4714 = vpack.c.bf16 %v4619, %v4618
        %v4715 = vpack.c.bf16 %v4621, %v4620
        %v4716 = vpack.c.bf16 %v4623, %v4622
        %v4717 = vpack.c.bf16 %v4625, %v4624
        %v4718 = vpack.c.bf16 %v4627, %v4626
        %v4719 = vpack.c.bf16 %v4629, %v4628
        %v4720 = vpack.c.bf16 %v4631, %v4630
        %v4721 = vpack.c.bf16 %v4633, %v4632
        %v4722 = vpack.c.bf16 %v4635, %v4634
        %v4723 = vpack.c.bf16 %v4637, %v4636
        %v4724 = vpack.c.bf16 %v4639, %v4638
        %v4725 = vpack.c.bf16 %v4641, %v4640
        %v4726 = vpack.c.bf16 %v4643, %v4642
        %v4727 = vpack.c.bf16 %v4645, %v4644
        %v4728 = vpack.c.bf16 %v4647, %v4646
        %v4729 = vpack.c.bf16 %v4649, %v4648
        %v4730 = vpack.c.bf16 %v4651, %v4650
        %v4731 = vpack.c.bf16 %v4653, %v4652
        %v4732 = vpack.c.bf16 %v4655, %v4654
        %v4733 = vpack.c.bf16 %v4657, %v4656
        %v4734 = vpack.c.bf16 %v4659, %v4658
        %v4735 = vpack.c.bf16 %v4661, %v4660
        %v4736 = vpack.c.bf16 %v4663, %v4662
        %v4737 = vpack.c.bf16 %v4665, %v4664
        %v4738 = vpack.c.bf16 %v4667, %v4666
        %v4739 = vpack.c.bf16 %v4669, %v4668
        %v4740 = vpack.c.bf16 %v4671, %v4670
        %v4741 = vpack.c.bf16 %v4673, %v4672
        %v4742 = vpack.c.bf16 %v4675, %v4674
        %v4743 = vpack.c.bf16 %v4677, %v4676
        %v4744 = vpack.c.bf16 %v4679, %v4678
        %v4745 = vpack.c.bf16 %v4681, %v4680
        %p4746 = scmp.eq.s32.totalorder %s30, 0
        // Predicated region
        $region65: #{tpu_custom_call.1} parent=63 // pred_check
          %p4747 = pneg %p4746
        $region66: #{tpu_custom_call.1} parent=63 // pred_check_branch
          %4749 = sbr.rel (%p4747) target = $region68
        $region67: #{tpu_custom_call.1} parent=63 // pred_region
          %4750 = vst [vmem:[%s405] sm:$0xff] -inf
          %4751 = vst [vmem:[%s405 + $0x8] sm:$0xff] -inf
          %4752 = vst [vmem:[%s405 + $0x10] sm:$0xff] -inf
          %4753 = vst [vmem:[%s405 + $0x18] sm:$0xff] -inf
        $region68: #{tpu_custom_call.1} parent=63 // pred_fallthru
          _
        %v4754 = vld [vmem:[%s9] sm:$0xff]
        %v4755 = vld [vmem:[%s9 + $0x20] sm:$0xff]
        %v4756 = vld [vmem:[%s9 + $0x40] sm:$0xff]
        %v4757 = vld [vmem:[%s9 + $0x60] sm:$0xff]
        %v4758 = vld [vmem:[%s9 + $0x80] sm:$0xff]
        %v4759 = vld [vmem:[%s9 + $0xa0] sm:$0xff]
        %v4760 = vld [vmem:[%s9 + $0xc0] sm:$0xff]
        %v4761 = vld [vmem:[%s9 + $0xe0] sm:$0xff]
        %v4762 = vld [vmem:[%s9 + $0x100] sm:$0xff]
        %v4763 = vld [vmem:[%s9 + $0x120] sm:$0xff]
        %v4764 = vld [vmem:[%s9 + $0x140] sm:$0xff]
        %v4765 = vld [vmem:[%s9 + $0x160] sm:$0xff]
        %v4766 = vld [vmem:[%s9 + $0x180] sm:$0xff]
        %v4767 = vld [vmem:[%s9 + $0x1a0] sm:$0xff]
        %v4768 = vld [vmem:[%s9 + $0x1c0] sm:$0xff]
        %v4769 = vld [vmem:[%s9 + $0x1e0] sm:$0xff]
        %v4770 = vld [vmem:[%s10] sm:$0x3]
        %v4772 = vlaneseq
        %v4773 = vshrl.u32 %v4772, 7
        %v4774 = vsub.s32 0, %v4773
        %v4775 = vrot.slane %v4770, %v4774
        %v4776 = vlaneseq
        %v4777 = vshrl.u32 %v4776, 7
        %v4778 = vsub.s32 1, %v4777
        %v4779 = vrot.slane %v4770, %v4778
        %v4798 = vunpack.c.l.b16 %v4754
        %v4799 = vunpack.c.h.b16 %v4754
        %v4800 = vunpack.c.l.b16 %v4755
        %v4801 = vunpack.c.h.b16 %v4755
        %v4802 = vunpack.c.l.b16 %v4756
        %v4803 = vunpack.c.h.b16 %v4756
        %v4804 = vunpack.c.l.b16 %v4757
        %v4805 = vunpack.c.h.b16 %v4757
        %v4806 = vunpack.c.l.b16 %v4758
        %v4807 = vunpack.c.h.b16 %v4758
        %v4808 = vunpack.c.l.b16 %v4759
        %v4809 = vunpack.c.h.b16 %v4759
        %v4810 = vunpack.c.l.b16 %v4760
        %v4811 = vunpack.c.h.b16 %v4760
        %v4812 = vunpack.c.l.b16 %v4761
        %v4813 = vunpack.c.h.b16 %v4761
        %v4814 = vunpack.c.l.b16 %v4762
        %v4815 = vunpack.c.h.b16 %v4762
        %v4816 = vunpack.c.l.b16 %v4763
        %v4817 = vunpack.c.h.b16 %v4763
        %v4818 = vunpack.c.l.b16 %v4764
        %v4819 = vunpack.c.h.b16 %v4764
        %v4820 = vunpack.c.l.b16 %v4765
        %v4821 = vunpack.c.h.b16 %v4765
        %v4822 = vunpack.c.l.b16 %v4766
        %v4823 = vunpack.c.h.b16 %v4766
        %v4824 = vunpack.c.l.b16 %v4767
        %v4825 = vunpack.c.h.b16 %v4767
        %v4826 = vunpack.c.l.b16 %v4768
        %v4827 = vunpack.c.h.b16 %v4768
        %v4828 = vunpack.c.l.b16 %v4769
        %v4829 = vunpack.c.h.b16 %v4769
        %v4830 = vpack.c.b16 %v4800, %v4798
        %v4831 = vpack.c.b16 %v4801, %v4799
        %v4832 = vpack.c.b16 %v4804, %v4802
        %v4833 = vpack.c.b16 %v4805, %v4803
        %v4834 = vpack.c.b16 %v4808, %v4806
        %v4835 = vpack.c.b16 %v4809, %v4807
        %v4836 = vpack.c.b16 %v4812, %v4810
        %v4837 = vpack.c.b16 %v4813, %v4811
        %v4838 = vpack.c.b16 %v4816, %v4814
        %v4839 = vpack.c.b16 %v4817, %v4815
        %v4840 = vpack.c.b16 %v4820, %v4818
        %v4841 = vpack.c.b16 %v4821, %v4819
        %v4842 = vpack.c.b16 %v4824, %v4822
        %v4843 = vpack.c.b16 %v4825, %v4823
        %v4844 = vpack.c.b16 %v4828, %v4826
        %v4845 = vpack.c.b16 %v4829, %v4827
        %4862 = vmatprep.subr.bf16.mxu0 %v4831
        %4863 = vmatpush1.bf16.msra.mxu0 %v4830
        %4864 = vmatprep.subr.bf16.mxu0 %v4833
        %4865 = vmatpush1.bf16.msra.mxu0 %v4832
        %4866 = vmatprep.subr.bf16.mxu0 %v4835
        %4867 = vmatpush1.bf16.msra.mxu0 %v4834
        %4868 = vmatprep.subr.bf16.mxu0 %v4837
        %4869 = vmatpush1.bf16.msra.mxu0 %v4836
        %4870 = vmatprep.subr.bf16.mxu0 %v4839
        %4871 = vmatpush1.bf16.msra.mxu0 %v4838
        %4872 = vmatprep.subr.bf16.mxu0 %v4841
        %4873 = vmatpush1.bf16.msra.mxu0 %v4840
        %4874 = vmatprep.subr.bf16.mxu0 %v4843
        %4875 = vmatpush1.bf16.msra.mxu0 %v4842
        %4876 = vmatprep.subr.bf16.mxu0 %v4845
        %4877 = vmatpush1.bf16.msra.mxu0 %v4844
        %4878 = vmatprep.subr.bf16.mxu0 0
        %4879 = vmatpush1.bf16.msra.mxu0 0
        %4880 = vmatprep.subr.bf16.mxu0 0
        %4881 = vmatpush1.bf16.msra.mxu0 0
        %4882 = vmatprep.subr.bf16.mxu0 0
        %4883 = vmatpush1.bf16.msra.mxu0 0
        %4884 = vmatprep.subr.bf16.mxu0 0
        %4885 = vmatpush1.bf16.msra.mxu0 0
        %4886 = vmatprep.subr.bf16.mxu0 0
        %4887 = vmatpush1.bf16.msra.mxu0 0
        %4888 = vmatprep.subr.bf16.mxu0 0
        %4889 = vmatpush1.bf16.msra.mxu0 0
        %4890 = vmatprep.subr.bf16.mxu0 0
        %4891 = vmatpush1.bf16.msra.mxu0 0
        %4892 = vmatprep.subr.bf16.mxu0 0
        %4893 = vmatpush1.bf16.msra.mxu0 0
        %4894 = vmatprep.mubr.bf16.mxu0 0
        %4895 = vmatmul.mubr.bf16.gmra.mrb[0].mxu0 %v4682
        %v4896 = vpop.f32.mrb[0].mxu0
        %v4897 = vadd.f32 %v4775, %v4896
        %v4898 = vpop.f32.mrb[0].mxu0
        %v4899 = vadd.f32 %v4779, %v4898
        %v4900 = vpop.f32.mrb[0].mxu0
        %v4901 = vadd.f32 %v4775, %v4900
        %v4902 = vpop.f32.mrb[0].mxu0
        %v4903 = vadd.f32 %v4779, %v4902
        %4904 = vmatprep.mubr.bf16.mxu0 0
        %4905 = vmatmul.mubr.bf16.gmra.mrb[0].mxu0 %v4683
        %v4906 = vpop.f32.mrb[0].mxu0
        %v4907 = vadd.f32 %v4775, %v4906
        %v4908 = vpop.f32.mrb[0].mxu0
        %v4909 = vadd.f32 %v4779, %v4908
        %v4910 = vpop.f32.mrb[0].mxu0
        %v4911 = vadd.f32 %v4775, %v4910
        %v4912 = vpop.f32.mrb[0].mxu0
        %v4913 = vadd.f32 %v4779, %v4912
        %4914 = vmatprep.mubr.bf16.mxu0 0
        %4915 = vmatmul.mubr.bf16.gmra.mrb[0].mxu0 %v4684
        %v4916 = vpop.f32.mrb[0].mxu0
        %v4917 = vadd.f32 %v4775, %v4916
        %v4918 = vpop.f32.mrb[0].mxu0
        %v4919 = vadd.f32 %v4779, %v4918
        %v4920 = vpop.f32.mrb[0].mxu0
        %v4921 = vadd.f32 %v4775, %v4920
        %v4922 = vpop.f32.mrb[0].mxu0
        %v4923 = vadd.f32 %v4779, %v4922
        %4924 = vmatprep.mubr.bf16.mxu0 0
        %4925 = vmatmul.mubr.bf16.gmra.mrb[0].mxu0 %v4685
        %v4926 = vpop.f32.mrb[0].mxu0
        %v4927 = vadd.f32 %v4775, %v4926
        %v4928 = vpop.f32.mrb[0].mxu0
        %v4929 = vadd.f32 %v4779, %v4928
        %v4930 = vpop.f32.mrb[0].mxu0
        %v4931 = vadd.f32 %v4775, %v4930
        %v4932 = vpop.f32.mrb[0].mxu0
        %v4933 = vadd.f32 %v4779, %v4932
        %4934 = vmatprep.mubr.bf16.mxu0 0
        %4935 = vmatmul.mubr.bf16.gmra.mrb[0].mxu0 %v4686
        %v4936 = vpop.f32.mrb[0].mxu0
        %v4937 = vadd.f32 %v4775, %v4936
        %v4938 = vpop.f32.mrb[0].mxu0
        %v4939 = vadd.f32 %v4779, %v4938
        %v4940 = vpop.f32.mrb[0].mxu0
        %v4941 = vadd.f32 %v4775, %v4940
        %v4942 = vpop.f32.mrb[0].mxu0
        %v4943 = vadd.f32 %v4779, %v4942
        %4944 = vmatprep.mubr.bf16.mxu0 0
        %4945 = vmatmul.mubr.bf16.gmra.mrb[0].mxu0 %v4687
        %v4946 = vpop.f32.mrb[0].mxu0
        %v4947 = vadd.f32 %v4775, %v4946
        %v4948 = vpop.f32.mrb[0].mxu0
        %v4949 = vadd.f32 %v4779, %v4948
        %v4950 = vpop.f32.mrb[0].mxu0
        %v4951 = vadd.f32 %v4775, %v4950
        %v4952 = vpop.f32.mrb[0].mxu0
        %v4953 = vadd.f32 %v4779, %v4952
        %4954 = vmatprep.mubr.bf16.mxu0 0
        %4955 = vmatmul.mubr.bf16.gmra.mrb[0].mxu0 %v4688
        %v4956 = vpop.f32.mrb[0].mxu0
        %v4957 = vadd.f32 %v4775, %v4956
        %v4958 = vpop.f32.mrb[0].mxu0
        %v4959 = vadd.f32 %v4779, %v4958
        %v4960 = vpop.f32.mrb[0].mxu0
        %v4961 = vadd.f32 %v4775, %v4960
        %v4962 = vpop.f32.mrb[0].mxu0
        %v4963 = vadd.f32 %v4779, %v4962
        %4964 = vmatprep.mubr.bf16.mxu0 0
        %4965 = vmatmul.mubr.bf16.gmra.mrb[0].mxu0 %v4689
        %v4966 = vpop.f32.mrb[0].mxu0
        %v4967 = vadd.f32 %v4775, %v4966
        %v4968 = vpop.f32.mrb[0].mxu0
        %v4969 = vadd.f32 %v4779, %v4968
        %v4970 = vpop.f32.mrb[0].mxu0
        %v4971 = vadd.f32 %v4775, %v4970
        %v4972 = vpop.f32.mrb[0].mxu0
        %v4973 = vadd.f32 %v4779, %v4972
        %4974 = vmatprep.mubr.bf16.mxu0 0
        %4975 = vmatmul.mubr.bf16.gmra.mrb[0].mxu0 %v4690
        %v4976 = vpop.f32.mrb[0].mxu0
        %v4977 = vadd.f32 %v4775, %v4976
        %v4978 = vpop.f32.mrb[0].mxu0
        %v4979 = vadd.f32 %v4779, %v4978
        %v4980 = vpop.f32.mrb[0].mxu0
        %v4981 = vadd.f32 %v4775, %v4980
        %v4982 = vpop.f32.mrb[0].mxu0
        %v4983 = vadd.f32 %v4779, %v4982
        %4984 = vmatprep.mubr.bf16.mxu0 0
        %4985 = vmatmul.mubr.bf16.gmra.mrb[0].mxu0 %v4691
        %v4986 = vpop.f32.mrb[0].mxu0
        %v4987 = vadd.f32 %v4775, %v4986
        %v4988 = vpop.f32.mrb[0].mxu0
        %v4989 = vadd.f32 %v4779, %v4988
        %v4990 = vpop.f32.mrb[0].mxu0
        %v4991 = vadd.f32 %v4775, %v4990
        %v4992 = vpop.f32.mrb[0].mxu0
        %v4993 = vadd.f32 %v4779, %v4992
        %4994 = vmatprep.mubr.bf16.mxu0 0
        %4995 = vmatmul.mubr.bf16.gmra.mrb[0].mxu0 %v4692
        %v4996 = vpop.f32.mrb[0].mxu0
        %v4997 = vadd.f32 %v4775, %v4996
        %v4998 = vpop.f32.mrb[0].mxu0
        %v4999 = vadd.f32 %v4779, %v4998
        %v5000 = vpop.f32.mrb[0].mxu0
        %v5001 = vadd.f32 %v4775, %v5000
        %v5002 = vpop.f32.mrb[0].mxu0
        %v5003 = vadd.f32 %v4779, %v5002
        %5004 = vmatprep.mubr.bf16.mxu0 0
        %5005 = vmatmul.mubr.bf16.gmra.mrb[0].mxu0 %v4693
        %v5006 = vpop.f32.mrb[0].mxu0
        %v5007 = vadd.f32 %v4775, %v5006
        %v5008 = vpop.f32.mrb[0].mxu0
        %v5009 = vadd.f32 %v4779, %v5008
        %v5010 = vpop.f32.mrb[0].mxu0
        %v5011 = vadd.f32 %v4775, %v5010
        %v5012 = vpop.f32.mrb[0].mxu0
        %v5013 = vadd.f32 %v4779, %v5012
        %5014 = vmatprep.mubr.bf16.mxu0 0
        %5015 = vmatmul.mubr.bf16.gmra.mrb[0].mxu0 %v4694
        %v5016 = vpop.f32.mrb[0].mxu0
        %v5017 = vadd.f32 %v4775, %v5016
        %v5018 = vpop.f32.mrb[0].mxu0
        %v5019 = vadd.f32 %v4779, %v5018
        %v5020 = vpop.f32.mrb[0].mxu0
        %v5021 = vadd.f32 %v4775, %v5020
        %v5022 = vpop.f32.mrb[0].mxu0
        %v5023 = vadd.f32 %v4779, %v5022
        %5024 = vmatprep.mubr.bf16.mxu0 0
        %5025 = vmatmul.mubr.bf16.gmra.mrb[0].mxu0 %v4695
        %v5026 = vpop.f32.mrb[0].mxu0
        %v5027 = vadd.f32 %v4775, %v5026
        %v5028 = vpop.f32.mrb[0].mxu0
        %v5029 = vadd.f32 %v4779, %v5028
        %v5030 = vpop.f32.mrb[0].mxu0
        %v5031 = vadd.f32 %v4775, %v5030
        %v5032 = vpop.f32.mrb[0].mxu0
        %v5033 = vadd.f32 %v4779, %v5032
        %5034 = vmatprep.mubr.bf16.mxu0 0
        %5035 = vmatmul.mubr.bf16.gmra.mrb[0].mxu0 %v4696
        %v5036 = vpop.f32.mrb[0].mxu0
        %v5037 = vadd.f32 %v4775, %v5036
        %v5038 = vpop.f32.mrb[0].mxu0
        %v5039 = vadd.f32 %v4779, %v5038
        %v5040 = vpop.f32.mrb[0].mxu0
        %v5041 = vadd.f32 %v4775, %v5040
        %v5042 = vpop.f32.mrb[0].mxu0
        %v5043 = vadd.f32 %v4779, %v5042
        %5044 = vmatprep.mubr.bf16.mxu0 0
        %5045 = vmatmul.mubr.bf16.gmra.mrb[0].mxu0 %v4697
        %v5046 = vpop.f32.mrb[0].mxu0
        %v5047 = vadd.f32 %v4775, %v5046
        %v5048 = vpop.f32.mrb[0].mxu0
        %v5049 = vadd.f32 %v4779, %v5048
        %v5050 = vpop.f32.mrb[0].mxu0
        %v5051 = vadd.f32 %v4775, %v5050
        %v5052 = vpop.f32.mrb[0].mxu0
        %v5053 = vadd.f32 %v4779, %v5052
        %5054 = vmatprep.mubr.bf16.mxu0 0
        %5055 = vmatmul.mubr.bf16.gmra.mrb[0].mxu0 %v4698
        %v5056 = vpop.f32.mrb[0].mxu0
        %v5057 = vadd.f32 %v4775, %v5056
        %v5058 = vpop.f32.mrb[0].mxu0
        %v5059 = vadd.f32 %v4779, %v5058
        %v5060 = vpop.f32.mrb[0].mxu0
        %v5061 = vadd.f32 %v4775, %v5060
        %v5062 = vpop.f32.mrb[0].mxu0
        %v5063 = vadd.f32 %v4779, %v5062
        %5064 = vmatprep.mubr.bf16.mxu0 0
        %5065 = vmatmul.mubr.bf16.gmra.mrb[0].mxu0 %v4699
        %v5066 = vpop.f32.mrb[0].mxu0
        %v5067 = vadd.f32 %v4775, %v5066
        %v5068 = vpop.f32.mrb[0].mxu0
        %v5069 = vadd.f32 %v4779, %v5068
        %v5070 = vpop.f32.mrb[0].mxu0
        %v5071 = vadd.f32 %v4775, %v5070
        %v5072 = vpop.f32.mrb[0].mxu0
        %v5073 = vadd.f32 %v4779, %v5072
        %5074 = vmatprep.mubr.bf16.mxu0 0
        %5075 = vmatmul.mubr.bf16.gmra.mrb[0].mxu0 %v4700
        %v5076 = vpop.f32.mrb[0].mxu0
        %v5077 = vadd.f32 %v4775, %v5076
        %v5078 = vpop.f32.mrb[0].mxu0
        %v5079 = vadd.f32 %v4779, %v5078
        %v5080 = vpop.f32.mrb[0].mxu0
        %v5081 = vadd.f32 %v4775, %v5080
        %v5082 = vpop.f32.mrb[0].mxu0
        %v5083 = vadd.f32 %v4779, %v5082
        %5084 = vmatprep.mubr.bf16.mxu0 0
        %5085 = vmatmul.mubr.bf16.gmra.mrb[0].mxu0 %v4701
        %v5086 = vpop.f32.mrb[0].mxu0
        %v5087 = vadd.f32 %v4775, %v5086
        %v5088 = vpop.f32.mrb[0].mxu0
        %v5089 = vadd.f32 %v4779, %v5088
        %v5090 = vpop.f32.mrb[0].mxu0
        %v5091 = vadd.f32 %v4775, %v5090
        %v5092 = vpop.f32.mrb[0].mxu0
        %v5093 = vadd.f32 %v4779, %v5092
        %5094 = vmatprep.mubr.bf16.mxu0 0
        %5095 = vmatmul.mubr.bf16.gmra.mrb[0].mxu0 %v4702
        %v5096 = vpop.f32.mrb[0].mxu0
        %v5097 = vadd.f32 %v4775, %v5096
        %v5098 = vpop.f32.mrb[0].mxu0
        %v5099 = vadd.f32 %v4779, %v5098
        %v5100 = vpop.f32.mrb[0].mxu0
        %v5101 = vadd.f32 %v4775, %v5100
        %v5102 = vpop.f32.mrb[0].mxu0
        %v5103 = vadd.f32 %v4779, %v5102
        %5104 = vmatprep.mubr.bf16.mxu0 0
        %5105 = vmatmul.mubr.bf16.gmra.mrb[0].mxu0 %v4703
        %v5106 = vpop.f32.mrb[0].mxu0
        %v5107 = vadd.f32 %v4775, %v5106
        %v5108 = vpop.f32.mrb[0].mxu0
        %v5109 = vadd.f32 %v4779, %v5108
        %v5110 = vpop.f32.mrb[0].mxu0
        %v5111 = vadd.f32 %v4775, %v5110
        %v5112 = vpop.f32.mrb[0].mxu0
        %v5113 = vadd.f32 %v4779, %v5112
        %5114 = vmatprep.mubr.bf16.mxu0 0
        %5115 = vmatmul.mubr.bf16.gmra.mrb[0].mxu0 %v4704
        %v5116 = vpop.f32.mrb[0].mxu0
        %v5117 = vadd.f32 %v4775, %v5116
        %v5118 = vpop.f32.mrb[0].mxu0
        %v5119 = vadd.f32 %v4779, %v5118
        %v5120 = vpop.f32.mrb[0].mxu0
        %v5121 = vadd.f32 %v4775, %v5120
        %v5122 = vpop.f32.mrb[0].mxu0
        %v5123 = vadd.f32 %v4779, %v5122
        %5124 = vmatprep.mubr.bf16.mxu0 0
        %5125 = vmatmul.mubr.bf16.gmra.mrb[0].mxu0 %v4705
        %v5126 = vpop.f32.mrb[0].mxu0
        %v5127 = vadd.f32 %v4775, %v5126
        %v5128 = vpop.f32.mrb[0].mxu0
        %v5129 = vadd.f32 %v4779, %v5128
        %v5130 = vpop.f32.mrb[0].mxu0
        %v5131 = vadd.f32 %v4775, %v5130
        %v5132 = vpop.f32.mrb[0].mxu0
        %v5133 = vadd.f32 %v4779, %v5132
        %5134 = vmatprep.mubr.bf16.mxu0 0
        %5135 = vmatmul.mubr.bf16.gmra.mrb[0].mxu0 %v4706
        %v5136 = vpop.f32.mrb[0].mxu0
        %v5137 = vadd.f32 %v4775, %v5136
        %v5138 = vpop.f32.mrb[0].mxu0
        %v5139 = vadd.f32 %v4779, %v5138
        %v5140 = vpop.f32.mrb[0].mxu0
        %v5141 = vadd.f32 %v4775, %v5140
        %v5142 = vpop.f32.mrb[0].mxu0
        %v5143 = vadd.f32 %v4779, %v5142
        %5144 = vmatprep.mubr.bf16.mxu0 0
        %5145 = vmatmul.mubr.bf16.gmra.mrb[0].mxu0 %v4707
        %v5146 = vpop.f32.mrb[0].mxu0
        %v5147 = vadd.f32 %v4775, %v5146
        %v5148 = vpop.f32.mrb[0].mxu0
        %v5149 = vadd.f32 %v4779, %v5148
        %v5150 = vpop.f32.mrb[0].mxu0
        %v5151 = vadd.f32 %v4775, %v5150
        %v5152 = vpop.f32.mrb[0].mxu0
        %v5153 = vadd.f32 %v4779, %v5152
        %5154 = vmatprep.mubr.bf16.mxu0 0
        %5155 = vmatmul.mubr.bf16.gmra.mrb[0].mxu0 %v4708
        %v5156 = vpop.f32.mrb[0].mxu0
        %v5157 = vadd.f32 %v4775, %v5156
        %v5158 = vpop.f32.mrb[0].mxu0
        %v5159 = vadd.f32 %v4779, %v5158
        %v5160 = vpop.f32.mrb[0].mxu0
        %v5161 = vadd.f32 %v4775, %v5160
        %v5162 = vpop.f32.mrb[0].mxu0
        %v5163 = vadd.f32 %v4779, %v5162
        %5164 = vmatprep.mubr.bf16.mxu0 0
        %5165 = vmatmul.mubr.bf16.gmra.mrb[0].mxu0 %v4709
        %v5166 = vpop.f32.mrb[0].mxu0
        %v5167 = vadd.f32 %v4775, %v5166
        %v5168 = vpop.f32.mrb[0].mxu0
        %v5169 = vadd.f32 %v4779, %v5168
        %v5170 = vpop.f32.mrb[0].mxu0
        %v5171 = vadd.f32 %v4775, %v5170
        %v5172 = vpop.f32.mrb[0].mxu0
        %v5173 = vadd.f32 %v4779, %v5172
        %5174 = vmatprep.mubr.bf16.mxu0 0
        %5175 = vmatmul.mubr.bf16.gmra.mrb[0].mxu0 %v4710
        %v5176 = vpop.f32.mrb[0].mxu0
        %v5177 = vadd.f32 %v4775, %v5176
        %v5178 = vpop.f32.mrb[0].mxu0
        %v5179 = vadd.f32 %v4779, %v5178
        %v5180 = vpop.f32.mrb[0].mxu0
        %v5181 = vadd.f32 %v4775, %v5180
        %v5182 = vpop.f32.mrb[0].mxu0
        %v5183 = vadd.f32 %v4779, %v5182
        %5184 = vmatprep.mubr.bf16.mxu0 0
        %5185 = vmatmul.mubr.bf16.gmra.mrb[0].mxu0 %v4711
        %v5186 = vpop.f32.mrb[0].mxu0
        %v5187 = vadd.f32 %v4775, %v5186
        %v5188 = vpop.f32.mrb[0].mxu0
        %v5189 = vadd.f32 %v4779, %v5188
        %v5190 = vpop.f32.mrb[0].mxu0
        %v5191 = vadd.f32 %v4775, %v5190
        %v5192 = vpop.f32.mrb[0].mxu0
        %v5193 = vadd.f32 %v4779, %v5192
        %5194 = vmatprep.mubr.bf16.mxu0 0
        %5195 = vmatmul.mubr.bf16.gmra.mrb[0].mxu0 %v4712
        %v5196 = vpop.f32.mrb[0].mxu0
        %v5197 = vadd.f32 %v4775, %v5196
        %v5198 = vpop.f32.mrb[0].mxu0
        %v5199 = vadd.f32 %v4779, %v5198
        %v5200 = vpop.f32.mrb[0].mxu0
        %v5201 = vadd.f32 %v4775, %v5200
        %v5202 = vpop.f32.mrb[0].mxu0
        %v5203 = vadd.f32 %v4779, %v5202
        %5204 = vmatprep.mubr.bf16.mxu0 0
        %5205 = vmatmul.mubr.bf16.gmra.mrb[0].mxu0 %v4713
        %v5206 = vpop.f32.mrb[0].mxu0
        %v5207 = vadd.f32 %v4775, %v5206
        %v5208 = vpop.f32.mrb[0].mxu0
        %v5209 = vadd.f32 %v4779, %v5208
        %v5210 = vpop.f32.mrb[0].mxu0
        %v5211 = vadd.f32 %v4775, %v5210
        %v5212 = vpop.f32.mrb[0].mxu0
        %v5213 = vadd.f32 %v4779, %v5212
        %5214 = vmatprep.mubr.bf16.mxu0 0
        %5215 = vmatmul.mubr.bf16.gmra.mrb[0].mxu0 %v4714
        %v5216 = vpop.f32.mrb[0].mxu0
        %v5217 = vadd.f32 %v4775, %v5216
        %v5218 = vpop.f32.mrb[0].mxu0
        %v5219 = vadd.f32 %v4779, %v5218
        %v5220 = vpop.f32.mrb[0].mxu0
        %v5221 = vadd.f32 %v4775, %v5220
        %v5222 = vpop.f32.mrb[0].mxu0
        %v5223 = vadd.f32 %v4779, %v5222
        %5224 = vmatprep.mubr.bf16.mxu0 0
        %5225 = vmatmul.mubr.bf16.gmra.mrb[0].mxu0 %v4715
        %v5226 = vpop.f32.mrb[0].mxu0
        %v5227 = vadd.f32 %v4775, %v5226
        %v5228 = vpop.f32.mrb[0].mxu0
        %v5229 = vadd.f32 %v4779, %v5228
        %v5230 = vpop.f32.mrb[0].mxu0
        %v5231 = vadd.f32 %v4775, %v5230
        %v5232 = vpop.f32.mrb[0].mxu0
        %v5233 = vadd.f32 %v4779, %v5232
        %5234 = vmatprep.mubr.bf16.mxu0 0
        %5235 = vmatmul.mubr.bf16.gmra.mrb[0].mxu0 %v4716
        %v5236 = vpop.f32.mrb[0].mxu0
        %v5237 = vadd.f32 %v4775, %v5236
        %v5238 = vpop.f32.mrb[0].mxu0
        %v5239 = vadd.f32 %v4779, %v5238
        %v5240 = vpop.f32.mrb[0].mxu0
        %v5241 = vadd.f32 %v4775, %v5240
        %v5242 = vpop.f32.mrb[0].mxu0
        %v5243 = vadd.f32 %v4779, %v5242
        %5244 = vmatprep.mubr.bf16.mxu0 0
        %5245 = vmatmul.mubr.bf16.gmra.mrb[0].mxu0 %v4717
        %v5246 = vpop.f32.mrb[0].mxu0
        %v5247 = vadd.f32 %v4775, %v5246
        %v5248 = vpop.f32.mrb[0].mxu0
        %v5249 = vadd.f32 %v4779, %v5248
        %v5250 = vpop.f32.mrb[0].mxu0
        %v5251 = vadd.f32 %v4775, %v5250
        %v5252 = vpop.f32.mrb[0].mxu0
        %v5253 = vadd.f32 %v4779, %v5252
        %5254 = vmatprep.mubr.bf16.mxu0 0
        %5255 = vmatmul.mubr.bf16.gmra.mrb[0].mxu0 %v4718
        %v5256 = vpop.f32.mrb[0].mxu0
        %v5257 = vadd.f32 %v4775, %v5256
        %v5258 = vpop.f32.mrb[0].mxu0
        %v5259 = vadd.f32 %v4779, %v5258
        %v5260 = vpop.f32.mrb[0].mxu0
        %v5261 = vadd.f32 %v4775, %v5260
        %v5262 = vpop.f32.mrb[0].mxu0
        %v5263 = vadd.f32 %v4779, %v5262
        %5264 = vmatprep.mubr.bf16.mxu0 0
        %5265 = vmatmul.mubr.bf16.gmra.mrb[0].mxu0 %v4719
        %v5266 = vpop.f32.mrb[0].mxu0
        %v5267 = vadd.f32 %v4775, %v5266
        %v5268 = vpop.f32.mrb[0].mxu0
        %v5269 = vadd.f32 %v4779, %v5268
        %v5270 = vpop.f32.mrb[0].mxu0
        %v5271 = vadd.f32 %v4775, %v5270
        %v5272 = vpop.f32.mrb[0].mxu0
        %v5273 = vadd.f32 %v4779, %v5272
        %5274 = vmatprep.mubr.bf16.mxu0 0
        %5275 = vmatmul.mubr.bf16.gmra.mrb[0].mxu0 %v4720
        %v5276 = vpop.f32.mrb[0].mxu0
        %v5277 = vadd.f32 %v4775, %v5276
        %v5278 = vpop.f32.mrb[0].mxu0
        %v5279 = vadd.f32 %v4779, %v5278
        %v5280 = vpop.f32.mrb[0].mxu0
        %v5281 = vadd.f32 %v4775, %v5280
        %v5282 = vpop.f32.mrb[0].mxu0
        %v5283 = vadd.f32 %v4779, %v5282
        %5284 = vmatprep.mubr.bf16.mxu0 0
        %5285 = vmatmul.mubr.bf16.gmra.mrb[0].mxu0 %v4721
        %v5286 = vpop.f32.mrb[0].mxu0
        %v5287 = vadd.f32 %v4775, %v5286
        %v5288 = vpop.f32.mrb[0].mxu0
        %v5289 = vadd.f32 %v4779, %v5288
        %v5290 = vpop.f32.mrb[0].mxu0
        %v5291 = vadd.f32 %v4775, %v5290
        %v5292 = vpop.f32.mrb[0].mxu0
        %v5293 = vadd.f32 %v4779, %v5292
        %5294 = vmatprep.mubr.bf16.mxu0 0
        %5295 = vmatmul.mubr.bf16.gmra.mrb[0].mxu0 %v4722
        %v5296 = vpop.f32.mrb[0].mxu0
        %v5297 = vadd.f32 %v4775, %v5296
        %v5298 = vpop.f32.mrb[0].mxu0
        %v5299 = vadd.f32 %v4779, %v5298
        %v5300 = vpop.f32.mrb[0].mxu0
        %v5301 = vadd.f32 %v4775, %v5300
        %v5302 = vpop.f32.mrb[0].mxu0
        %v5303 = vadd.f32 %v4779, %v5302
        %5304 = vmatprep.mubr.bf16.mxu0 0
        %5305 = vmatmul.mubr.bf16.gmra.mrb[0].mxu0 %v4723
        %v5306 = vpop.f32.mrb[0].mxu0
        %v5307 = vadd.f32 %v4775, %v5306
        %v5308 = vpop.f32.mrb[0].mxu0
        %v5309 = vadd.f32 %v4779, %v5308
        %v5310 = vpop.f32.mrb[0].mxu0
        %v5311 = vadd.f32 %v4775, %v5310
        %v5312 = vpop.f32.mrb[0].mxu0
        %v5313 = vadd.f32 %v4779, %v5312
        %5314 = vmatprep.mubr.bf16.mxu0 0
        %5315 = vmatmul.mubr.bf16.gmra.mrb[0].mxu0 %v4724
        %v5316 = vpop.f32.mrb[0].mxu0
        %v5317 = vadd.f32 %v4775, %v5316
        %v5318 = vpop.f32.mrb[0].mxu0
        %v5319 = vadd.f32 %v4779, %v5318
        %v5320 = vpop.f32.mrb[0].mxu0
        %v5321 = vadd.f32 %v4775, %v5320
        %v5322 = vpop.f32.mrb[0].mxu0
        %v5323 = vadd.f32 %v4779, %v5322
        %5324 = vmatprep.mubr.bf16.mxu0 0
        %5325 = vmatmul.mubr.bf16.gmra.mrb[0].mxu0 %v4725
        %v5326 = vpop.f32.mrb[0].mxu0
        %v5327 = vadd.f32 %v4775, %v5326
        %v5328 = vpop.f32.mrb[0].mxu0
        %v5329 = vadd.f32 %v4779, %v5328
        %v5330 = vpop.f32.mrb[0].mxu0
        %v5331 = vadd.f32 %v4775, %v5330
        %v5332 = vpop.f32.mrb[0].mxu0
        %v5333 = vadd.f32 %v4779, %v5332
        %5334 = vmatprep.mubr.bf16.mxu0 0
        %5335 = vmatmul.mubr.bf16.gmra.mrb[0].mxu0 %v4726
        %v5336 = vpop.f32.mrb[0].mxu0
        %v5337 = vadd.f32 %v4775, %v5336
        %v5338 = vpop.f32.mrb[0].mxu0
        %v5339 = vadd.f32 %v4779, %v5338
        %v5340 = vpop.f32.mrb[0].mxu0
        %v5341 = vadd.f32 %v4775, %v5340
        %v5342 = vpop.f32.mrb[0].mxu0
        %v5343 = vadd.f32 %v4779, %v5342
        %5344 = vmatprep.mubr.bf16.mxu0 0
        %5345 = vmatmul.mubr.bf16.gmra.mrb[0].mxu0 %v4727
        %v5346 = vpop.f32.mrb[0].mxu0
        %v5347 = vadd.f32 %v4775, %v5346
        %v5348 = vpop.f32.mrb[0].mxu0
        %v5349 = vadd.f32 %v4779, %v5348
        %v5350 = vpop.f32.mrb[0].mxu0
        %v5351 = vadd.f32 %v4775, %v5350
        %v5352 = vpop.f32.mrb[0].mxu0
        %v5353 = vadd.f32 %v4779, %v5352
        %5354 = vmatprep.mubr.bf16.mxu0 0
        %5355 = vmatmul.mubr.bf16.gmra.mrb[0].mxu0 %v4728
        %v5356 = vpop.f32.mrb[0].mxu0
        %v5357 = vadd.f32 %v4775, %v5356
        %v5358 = vpop.f32.mrb[0].mxu0
        %v5359 = vadd.f32 %v4779, %v5358
        %v5360 = vpop.f32.mrb[0].mxu0
        %v5361 = vadd.f32 %v4775, %v5360
        %v5362 = vpop.f32.mrb[0].mxu0
        %v5363 = vadd.f32 %v4779, %v5362
        %5364 = vmatprep.mubr.bf16.mxu0 0
        %5365 = vmatmul.mubr.bf16.gmra.mrb[0].mxu0 %v4729
        %v5366 = vpop.f32.mrb[0].mxu0
        %v5367 = vadd.f32 %v4775, %v5366
        %v5368 = vpop.f32.mrb[0].mxu0
        %v5369 = vadd.f32 %v4779, %v5368
        %v5370 = vpop.f32.mrb[0].mxu0
        %v5371 = vadd.f32 %v4775, %v5370
        %v5372 = vpop.f32.mrb[0].mxu0
        %v5373 = vadd.f32 %v4779, %v5372
        %5374 = vmatprep.mubr.bf16.mxu0 0
        %5375 = vmatmul.mubr.bf16.gmra.mrb[0].mxu0 %v4730
        %v5376 = vpop.f32.mrb[0].mxu0
        %v5377 = vadd.f32 %v4775, %v5376
        %v5378 = vpop.f32.mrb[0].mxu0
        %v5379 = vadd.f32 %v4779, %v5378
        %v5380 = vpop.f32.mrb[0].mxu0
        %v5381 = vadd.f32 %v4775, %v5380
        %v5382 = vpop.f32.mrb[0].mxu0
        %v5383 = vadd.f32 %v4779, %v5382
        %5384 = vmatprep.mubr.bf16.mxu0 0
        %5385 = vmatmul.mubr.bf16.gmra.mrb[0].mxu0 %v4731
        %v5386 = vpop.f32.mrb[0].mxu0
        %v5387 = vadd.f32 %v4775, %v5386
        %v5388 = vpop.f32.mrb[0].mxu0
        %v5389 = vadd.f32 %v4779, %v5388
        %v5390 = vpop.f32.mrb[0].mxu0
        %v5391 = vadd.f32 %v4775, %v5390
        %v5392 = vpop.f32.mrb[0].mxu0
        %v5393 = vadd.f32 %v4779, %v5392
        %5394 = vmatprep.mubr.bf16.mxu0 0
        %5395 = vmatmul.mubr.bf16.gmra.mrb[0].mxu0 %v4732
        %v5396 = vpop.f32.mrb[0].mxu0
        %v5397 = vadd.f32 %v4775, %v5396
        %v5398 = vpop.f32.mrb[0].mxu0
        %v5399 = vadd.f32 %v4779, %v5398
        %v5400 = vpop.f32.mrb[0].mxu0
        %v5401 = vadd.f32 %v4775, %v5400
        %v5402 = vpop.f32.mrb[0].mxu0
        %v5403 = vadd.f32 %v4779, %v5402
        %5404 = vmatprep.mubr.bf16.mxu0 0
        %5405 = vmatmul.mubr.bf16.gmra.mrb[0].mxu0 %v4733
        %v5406 = vpop.f32.mrb[0].mxu0
        %v5407 = vadd.f32 %v4775, %v5406
        %v5408 = vpop.f32.mrb[0].mxu0
        %v5409 = vadd.f32 %v4779, %v5408
        %v5410 = vpop.f32.mrb[0].mxu0
        %v5411 = vadd.f32 %v4775, %v5410
        %v5412 = vpop.f32.mrb[0].mxu0
        %v5413 = vadd.f32 %v4779, %v5412
        %5414 = vmatprep.mubr.bf16.mxu0 0
        %5415 = vmatmul.mubr.bf16.gmra.mrb[0].mxu0 %v4734
        %v5416 = vpop.f32.mrb[0].mxu0
        %v5417 = vadd.f32 %v4775, %v5416
        %v5418 = vpop.f32.mrb[0].mxu0
        %v5419 = vadd.f32 %v4779, %v5418
        %v5420 = vpop.f32.mrb[0].mxu0
        %v5421 = vadd.f32 %v4775, %v5420
        %v5422 = vpop.f32.mrb[0].mxu0
        %v5423 = vadd.f32 %v4779, %v5422
        %5424 = vmatprep.mubr.bf16.mxu0 0
        %5425 = vmatmul.mubr.bf16.gmra.mrb[0].mxu0 %v4735
        %v5426 = vpop.f32.mrb[0].mxu0
        %v5427 = vadd.f32 %v4775, %v5426
        %v5428 = vpop.f32.mrb[0].mxu0
        %v5429 = vadd.f32 %v4779, %v5428
        %v5430 = vpop.f32.mrb[0].mxu0
        %v5431 = vadd.f32 %v4775, %v5430
        %v5432 = vpop.f32.mrb[0].mxu0
        %v5433 = vadd.f32 %v4779, %v5432
        %5434 = vmatprep.mubr.bf16.mxu0 0
        %5435 = vmatmul.mubr.bf16.gmra.mrb[0].mxu0 %v4736
        %v5436 = vpop.f32.mrb[0].mxu0
        %v5437 = vadd.f32 %v4775, %v5436
        %v5438 = vpop.f32.mrb[0].mxu0
        %v5439 = vadd.f32 %v4779, %v5438
        %v5440 = vpop.f32.mrb[0].mxu0
        %v5441 = vadd.f32 %v4775, %v5440
        %v5442 = vpop.f32.mrb[0].mxu0
        %v5443 = vadd.f32 %v4779, %v5442
        %5444 = vmatprep.mubr.bf16.mxu0 0
        %5445 = vmatmul.mubr.bf16.gmra.mrb[0].mxu0 %v4737
        %v5446 = vpop.f32.mrb[0].mxu0
        %v5447 = vadd.f32 %v4775, %v5446
        %v5448 = vpop.f32.mrb[0].mxu0
        %v5449 = vadd.f32 %v4779, %v5448
        %v5450 = vpop.f32.mrb[0].mxu0
        %v5451 = vadd.f32 %v4775, %v5450
        %v5452 = vpop.f32.mrb[0].mxu0
        %v5453 = vadd.f32 %v4779, %v5452
        %5454 = vmatprep.mubr.bf16.mxu0 0
        %5455 = vmatmul.mubr.bf16.gmra.mrb[0].mxu0 %v4738
        %v5456 = vpop.f32.mrb[0].mxu0
        %v5457 = vadd.f32 %v4775, %v5456
        %v5458 = vpop.f32.mrb[0].mxu0
        %v5459 = vadd.f32 %v4779, %v5458
        %v5460 = vpop.f32.mrb[0].mxu0
        %v5461 = vadd.f32 %v4775, %v5460
        %v5462 = vpop.f32.mrb[0].mxu0
        %v5463 = vadd.f32 %v4779, %v5462
        %5464 = vmatprep.mubr.bf16.mxu0 0
        %5465 = vmatmul.mubr.bf16.gmra.mrb[0].mxu0 %v4739
        %v5466 = vpop.f32.mrb[0].mxu0
        %v5467 = vadd.f32 %v4775, %v5466
        %v5468 = vpop.f32.mrb[0].mxu0
        %v5469 = vadd.f32 %v4779, %v5468
        %v5470 = vpop.f32.mrb[0].mxu0
        %v5471 = vadd.f32 %v4775, %v5470
        %v5472 = vpop.f32.mrb[0].mxu0
        %v5473 = vadd.f32 %v4779, %v5472
        %5474 = vmatprep.mubr.bf16.mxu0 0
        %5475 = vmatmul.mubr.bf16.gmra.mrb[0].mxu0 %v4740
        %v5476 = vpop.f32.mrb[0].mxu0
        %v5477 = vadd.f32 %v4775, %v5476
        %v5478 = vpop.f32.mrb[0].mxu0
        %v5479 = vadd.f32 %v4779, %v5478
        %v5480 = vpop.f32.mrb[0].mxu0
        %v5481 = vadd.f32 %v4775, %v5480
        %v5482 = vpop.f32.mrb[0].mxu0
        %v5483 = vadd.f32 %v4779, %v5482
        %5484 = vmatprep.mubr.bf16.mxu0 0
        %5485 = vmatmul.mubr.bf16.gmra.mrb[0].mxu0 %v4741
        %v5486 = vpop.f32.mrb[0].mxu0
        %v5487 = vadd.f32 %v4775, %v5486
        %v5488 = vpop.f32.mrb[0].mxu0
        %v5489 = vadd.f32 %v4779, %v5488
        %v5490 = vpop.f32.mrb[0].mxu0
        %v5491 = vadd.f32 %v4775, %v5490
        %v5492 = vpop.f32.mrb[0].mxu0
        %v5493 = vadd.f32 %v4779, %v5492
        %5494 = vmatprep.mubr.bf16.mxu0 0
        %5495 = vmatmul.mubr.bf16.gmra.mrb[0].mxu0 %v4742
        %v5496 = vpop.f32.mrb[0].mxu0
        %v5497 = vadd.f32 %v4775, %v5496
        %v5498 = vpop.f32.mrb[0].mxu0
        %v5499 = vadd.f32 %v4779, %v5498
        %v5500 = vpop.f32.mrb[0].mxu0
        %v5501 = vadd.f32 %v4775, %v5500
        %v5502 = vpop.f32.mrb[0].mxu0
        %v5503 = vadd.f32 %v4779, %v5502
        %5504 = vmatprep.mubr.bf16.mxu0 0
        %5505 = vmatmul.mubr.bf16.gmra.mrb[0].mxu0 %v4743
        %v5506 = vpop.f32.mrb[0].mxu0
        %v5507 = vadd.f32 %v4775, %v5506
        %v5508 = vpop.f32.mrb[0].mxu0
        %v5509 = vadd.f32 %v4779, %v5508
        %v5510 = vpop.f32.mrb[0].mxu0
        %v5511 = vadd.f32 %v4775, %v5510
        %v5512 = vpop.f32.mrb[0].mxu0
        %v5513 = vadd.f32 %v4779, %v5512
        %5514 = vmatprep.mubr.bf16.mxu0 0
        %5515 = vmatmul.mubr.bf16.gmra.mrb[0].mxu0 %v4744
        %v5516 = vpop.f32.mrb[0].mxu0
        %v5517 = vadd.f32 %v4775, %v5516
        %v5518 = vpop.f32.mrb[0].mxu0
        %v5519 = vadd.f32 %v4779, %v5518
        %v5520 = vpop.f32.mrb[0].mxu0
        %v5521 = vadd.f32 %v4775, %v5520
        %v5522 = vpop.f32.mrb[0].mxu0
        %v5523 = vadd.f32 %v4779, %v5522
        %5524 = vmatprep.mubr.bf16.mxu0 0
        %5525 = vmatmul.mubr.bf16.gmra.mrb[0].mxu0 %v4745
        %v5526 = vpop.f32.mrb[0].mxu0
        %v5527 = vadd.f32 %v4775, %v5526
        %v5528 = vpop.f32.mrb[0].mxu0
        %v5529 = vadd.f32 %v4779, %v5528
        %v5530 = vpop.f32.mrb[0].mxu0
        %v5531 = vadd.f32 %v4775, %v5530
        %v5532 = vpop.f32.mrb[0].mxu0
        %v5533 = vadd.f32 %v4779, %v5532
        %5534 = vdwg.mxu0
        %v5535 = vmax.f32 %v4897, 0.0
        %v5536 = vmax.f32 %v4899, 0.0
        %v5537 = vmax.f32 %v4901, 0.0
        %v5538 = vmax.f32 %v4903, 0.0
        %v5539 = vmax.f32 %v4907, 0.0
        %v5540 = vmax.f32 %v4909, 0.0
        %v5541 = vmax.f32 %v4911, 0.0
        %v5542 = vmax.f32 %v4913, 0.0
        %v5543 = vmax.f32 %v4917, 0.0
        %v5544 = vmax.f32 %v4919, 0.0
        %v5545 = vmax.f32 %v4921, 0.0
        %v5546 = vmax.f32 %v4923, 0.0
        %v5547 = vmax.f32 %v4927, 0.0
        %v5548 = vmax.f32 %v4929, 0.0
        %v5549 = vmax.f32 %v4931, 0.0
        %v5550 = vmax.f32 %v4933, 0.0
        %v5551 = vmax.f32 %v4937, 0.0
        %v5552 = vmax.f32 %v4939, 0.0
        %v5553 = vmax.f32 %v4941, 0.0
        %v5554 = vmax.f32 %v4943, 0.0
        %v5555 = vmax.f32 %v4947, 0.0
        %v5556 = vmax.f32 %v4949, 0.0
        %v5557 = vmax.f32 %v4951, 0.0
        %v5558 = vmax.f32 %v4953, 0.0
        %v5559 = vmax.f32 %v4957, 0.0
        %v5560 = vmax.f32 %v4959, 0.0
        %v5561 = vmax.f32 %v4961, 0.0
        %v5562 = vmax.f32 %v4963, 0.0
        %v5563 = vmax.f32 %v4967, 0.0
        %v5564 = vmax.f32 %v4969, 0.0
        %v5565 = vmax.f32 %v4971, 0.0
        %v5566 = vmax.f32 %v4973, 0.0
        %v5567 = vmax.f32 %v4977, 0.0
        %v5568 = vmax.f32 %v4979, 0.0
        %v5569 = vmax.f32 %v4981, 0.0
        %v5570 = vmax.f32 %v4983, 0.0
        %v5571 = vmax.f32 %v4987, 0.0
        %v5572 = vmax.f32 %v4989, 0.0
        %v5573 = vmax.f32 %v4991, 0.0
        %v5574 = vmax.f32 %v4993, 0.0
        %v5575 = vmax.f32 %v4997, 0.0
        %v5576 = vmax.f32 %v4999, 0.0
        %v5577 = vmax.f32 %v5001, 0.0
        %v5578 = vmax.f32 %v5003, 0.0
        %v5579 = vmax.f32 %v5007, 0.0
        %v5580 = vmax.f32 %v5009, 0.0
        %v5581 = vmax.f32 %v5011, 0.0
        %v5582 = vmax.f32 %v5013, 0.0
        %v5583 = vmax.f32 %v5017, 0.0
        %v5584 = vmax.f32 %v5019, 0.0
        %v5585 = vmax.f32 %v5021, 0.0
        %v5586 = vmax.f32 %v5023, 0.0
        %v5587 = vmax.f32 %v5027, 0.0
        %v5588 = vmax.f32 %v5029, 0.0
        %v5589 = vmax.f32 %v5031, 0.0
        %v5590 = vmax.f32 %v5033, 0.0
        %v5591 = vmax.f32 %v5037, 0.0
        %v5592 = vmax.f32 %v5039, 0.0
        %v5593 = vmax.f32 %v5041, 0.0
        %v5594 = vmax.f32 %v5043, 0.0
        %v5595 = vmax.f32 %v5047, 0.0
        %v5596 = vmax.f32 %v5049, 0.0
        %v5597 = vmax.f32 %v5051, 0.0
        %v5598 = vmax.f32 %v5053, 0.0
        %v5599 = vmax.f32 %v5057, 0.0
        %v5600 = vmax.f32 %v5059, 0.0
        %v5601 = vmax.f32 %v5061, 0.0
        %v5602 = vmax.f32 %v5063, 0.0
        %v5603 = vmax.f32 %v5067, 0.0
        %v5604 = vmax.f32 %v5069, 0.0
        %v5605 = vmax.f32 %v5071, 0.0
        %v5606 = vmax.f32 %v5073, 0.0
        %v5607 = vmax.f32 %v5077, 0.0
        %v5608 = vmax.f32 %v5079, 0.0
        %v5609 = vmax.f32 %v5081, 0.0
        %v5610 = vmax.f32 %v5083, 0.0
        %v5611 = vmax.f32 %v5087, 0.0
        %v5612 = vmax.f32 %v5089, 0.0
        %v5613 = vmax.f32 %v5091, 0.0
        %v5614 = vmax.f32 %v5093, 0.0
        %v5615 = vmax.f32 %v5097, 0.0
        %v5616 = vmax.f32 %v5099, 0.0
        %v5617 = vmax.f32 %v5101, 0.0
        %v5618 = vmax.f32 %v5103, 0.0
        %v5619 = vmax.f32 %v5107, 0.0
        %v5620 = vmax.f32 %v5109, 0.0
        %v5621 = vmax.f32 %v5111, 0.0
        %v5622 = vmax.f32 %v5113, 0.0
        %v5623 = vmax.f32 %v5117, 0.0
        %v5624 = vmax.f32 %v5119, 0.0
        %v5625 = vmax.f32 %v5121, 0.0
        %v5626 = vmax.f32 %v5123, 0.0
        %v5627 = vmax.f32 %v5127, 0.0
        %v5628 = vmax.f32 %v5129, 0.0
        %v5629 = vmax.f32 %v5131, 0.0
        %v5630 = vmax.f32 %v5133, 0.0
        %v5631 = vmax.f32 %v5137, 0.0
        %v5632 = vmax.f32 %v5139, 0.0
        %v5633 = vmax.f32 %v5141, 0.0
        %v5634 = vmax.f32 %v5143, 0.0
        %v5635 = vmax.f32 %v5147, 0.0
        %v5636 = vmax.f32 %v5149, 0.0
        %v5637 = vmax.f32 %v5151, 0.0
        %v5638 = vmax.f32 %v5153, 0.0
        %v5639 = vmax.f32 %v5157, 0.0
        %v5640 = vmax.f32 %v5159, 0.0
        %v5641 = vmax.f32 %v5161, 0.0
        %v5642 = vmax.f32 %v5163, 0.0
        %v5643 = vmax.f32 %v5167, 0.0
        %v5644 = vmax.f32 %v5169, 0.0
        %v5645 = vmax.f32 %v5171, 0.0
        %v5646 = vmax.f32 %v5173, 0.0
        %v5647 = vmax.f32 %v5177, 0.0
        %v5648 = vmax.f32 %v5179, 0.0
        %v5649 = vmax.f32 %v5181, 0.0
        %v5650 = vmax.f32 %v5183, 0.0
        %v5651 = vmax.f32 %v5187, 0.0
        %v5652 = vmax.f32 %v5189, 0.0
        %v5653 = vmax.f32 %v5191, 0.0
        %v5654 = vmax.f32 %v5193, 0.0
        %v5655 = vmax.f32 %v5197, 0.0
        %v5656 = vmax.f32 %v5199, 0.0
        %v5657 = vmax.f32 %v5201, 0.0
        %v5658 = vmax.f32 %v5203, 0.0
        %v5659 = vmax.f32 %v5207, 0.0
        %v5660 = vmax.f32 %v5209, 0.0
        %v5661 = vmax.f32 %v5211, 0.0
        %v5662 = vmax.f32 %v5213, 0.0
        %v5663 = vmax.f32 %v5217, 0.0
        %v5664 = vmax.f32 %v5219, 0.0
        %v5665 = vmax.f32 %v5221, 0.0
        %v5666 = vmax.f32 %v5223, 0.0
        %v5667 = vmax.f32 %v5227, 0.0
        %v5668 = vmax.f32 %v5229, 0.0
        %v5669 = vmax.f32 %v5231, 0.0
        %v5670 = vmax.f32 %v5233, 0.0
        %v5671 = vmax.f32 %v5237, 0.0
        %v5672 = vmax.f32 %v5239, 0.0
        %v5673 = vmax.f32 %v5241, 0.0
        %v5674 = vmax.f32 %v5243, 0.0
        %v5675 = vmax.f32 %v5247, 0.0
        %v5676 = vmax.f32 %v5249, 0.0
        %v5677 = vmax.f32 %v5251, 0.0
        %v5678 = vmax.f32 %v5253, 0.0
        %v5679 = vmax.f32 %v5257, 0.0
        %v5680 = vmax.f32 %v5259, 0.0
        %v5681 = vmax.f32 %v5261, 0.0
        %v5682 = vmax.f32 %v5263, 0.0
        %v5683 = vmax.f32 %v5267, 0.0
        %v5684 = vmax.f32 %v5269, 0.0
        %v5685 = vmax.f32 %v5271, 0.0
        %v5686 = vmax.f32 %v5273, 0.0
        %v5687 = vmax.f32 %v5277, 0.0
        %v5688 = vmax.f32 %v5279, 0.0
        %v5689 = vmax.f32 %v5281, 0.0
        %v5690 = vmax.f32 %v5283, 0.0
        %v5691 = vmax.f32 %v5287, 0.0
        %v5692 = vmax.f32 %v5289, 0.0
        %v5693 = vmax.f32 %v5291, 0.0
        %v5694 = vmax.f32 %v5293, 0.0
        %v5695 = vmax.f32 %v5297, 0.0
        %v5696 = vmax.f32 %v5299, 0.0
        %v5697 = vmax.f32 %v5301, 0.0
        %v5698 = vmax.f32 %v5303, 0.0
        %v5699 = vmax.f32 %v5307, 0.0
        %v5700 = vmax.f32 %v5309, 0.0
        %v5701 = vmax.f32 %v5311, 0.0
        %v5702 = vmax.f32 %v5313, 0.0
        %v5703 = vmax.f32 %v5317, 0.0
        %v5704 = vmax.f32 %v5319, 0.0
        %v5705 = vmax.f32 %v5321, 0.0
        %v5706 = vmax.f32 %v5323, 0.0
        %v5707 = vmax.f32 %v5327, 0.0
        %v5708 = vmax.f32 %v5329, 0.0
        %v5709 = vmax.f32 %v5331, 0.0
        %v5710 = vmax.f32 %v5333, 0.0
        %v5711 = vmax.f32 %v5337, 0.0
        %v5712 = vmax.f32 %v5339, 0.0
        %v5713 = vmax.f32 %v5341, 0.0
        %v5714 = vmax.f32 %v5343, 0.0
        %v5715 = vmax.f32 %v5347, 0.0
        %v5716 = vmax.f32 %v5349, 0.0
        %v5717 = vmax.f32 %v5351, 0.0
        %v5718 = vmax.f32 %v5353, 0.0
        %v5719 = vmax.f32 %v5357, 0.0
        %v5720 = vmax.f32 %v5359, 0.0
        %v5721 = vmax.f32 %v5361, 0.0
        %v5722 = vmax.f32 %v5363, 0.0
        %v5723 = vmax.f32 %v5367, 0.0
        %v5724 = vmax.f32 %v5369, 0.0
        %v5725 = vmax.f32 %v5371, 0.0
        %v5726 = vmax.f32 %v5373, 0.0
        %v5727 = vmax.f32 %v5377, 0.0
        %v5728 = vmax.f32 %v5379, 0.0
        %v5729 = vmax.f32 %v5381, 0.0
        %v5730 = vmax.f32 %v5383, 0.0
        %v5731 = vmax.f32 %v5387, 0.0
        %v5732 = vmax.f32 %v5389, 0.0
        %v5733 = vmax.f32 %v5391, 0.0
        %v5734 = vmax.f32 %v5393, 0.0
        %v5735 = vmax.f32 %v5397, 0.0
        %v5736 = vmax.f32 %v5399, 0.0
        %v5737 = vmax.f32 %v5401, 0.0
        %v5738 = vmax.f32 %v5403, 0.0
        %v5739 = vmax.f32 %v5407, 0.0
        %v5740 = vmax.f32 %v5409, 0.0
        %v5741 = vmax.f32 %v5411, 0.0
        %v5742 = vmax.f32 %v5413, 0.0
        %v5743 = vmax.f32 %v5417, 0.0
        %v5744 = vmax.f32 %v5419, 0.0
        %v5745 = vmax.f32 %v5421, 0.0
        %v5746 = vmax.f32 %v5423, 0.0
        %v5747 = vmax.f32 %v5427, 0.0
        %v5748 = vmax.f32 %v5429, 0.0
        %v5749 = vmax.f32 %v5431, 0.0
        %v5750 = vmax.f32 %v5433, 0.0
        %v5751 = vmax.f32 %v5437, 0.0
        %v5752 = vmax.f32 %v5439, 0.0
        %v5753 = vmax.f32 %v5441, 0.0
        %v5754 = vmax.f32 %v5443, 0.0
        %v5755 = vmax.f32 %v5447, 0.0
        %v5756 = vmax.f32 %v5449, 0.0
        %v5757 = vmax.f32 %v5451, 0.0
        %v5758 = vmax.f32 %v5453, 0.0
        %v5759 = vmax.f32 %v5457, 0.0
        %v5760 = vmax.f32 %v5459, 0.0
        %v5761 = vmax.f32 %v5461, 0.0
        %v5762 = vmax.f32 %v5463, 0.0
        %v5763 = vmax.f32 %v5467, 0.0
        %v5764 = vmax.f32 %v5469, 0.0
        %v5765 = vmax.f32 %v5471, 0.0
        %v5766 = vmax.f32 %v5473, 0.0
        %v5767 = vmax.f32 %v5477, 0.0
        %v5768 = vmax.f32 %v5479, 0.0
        %v5769 = vmax.f32 %v5481, 0.0
        %v5770 = vmax.f32 %v5483, 0.0
        %v5771 = vmax.f32 %v5487, 0.0
        %v5772 = vmax.f32 %v5489, 0.0
        %v5773 = vmax.f32 %v5491, 0.0
        %v5774 = vmax.f32 %v5493, 0.0
        %v5775 = vmax.f32 %v5497, 0.0
        %v5776 = vmax.f32 %v5499, 0.0
        %v5777 = vmax.f32 %v5501, 0.0
        %v5778 = vmax.f32 %v5503, 0.0
        %v5779 = vmax.f32 %v5507, 0.0
        %v5780 = vmax.f32 %v5509, 0.0
        %v5781 = vmax.f32 %v5511, 0.0
        %v5782 = vmax.f32 %v5513, 0.0
        %v5783 = vmax.f32 %v5517, 0.0
        %v5784 = vmax.f32 %v5519, 0.0
        %v5785 = vmax.f32 %v5521, 0.0
        %v5786 = vmax.f32 %v5523, 0.0
        %v5787 = vmax.f32 %v5527, 0.0
        %v5788 = vmax.f32 %v5529, 0.0
        %v5789 = vmax.f32 %v5531, 0.0
        %v5790 = vmax.f32 %v5533, 0.0
        %v5791 = vmax.f32 %v5535, %v5537
        %v5792 = vmax.f32 %v5791, %v5539
        %v5793 = vmax.f32 %v5792, %v5541
        %v5794 = vmax.f32 %v5793, %v5543
        %v5795 = vmax.f32 %v5794, %v5545
        %v5796 = vmax.f32 %v5795, %v5547
        %v5797 = vmax.f32 %v5796, %v5549
        %v5798 = vmax.f32 %v5797, %v5551
        %v5799 = vmax.f32 %v5798, %v5553
        %v5800 = vmax.f32 %v5799, %v5555
        %v5801 = vmax.f32 %v5800, %v5557
        %v5802 = vmax.f32 %v5801, %v5559
        %v5803 = vmax.f32 %v5802, %v5561
        %v5804 = vmax.f32 %v5803, %v5563
        %v5805 = vmax.f32 %v5804, %v5565
        %v5806 = vmax.f32 %v5805, %v5567
        %v5807 = vmax.f32 %v5806, %v5569
        %v5808 = vmax.f32 %v5807, %v5571
        %v5809 = vmax.f32 %v5808, %v5573
        %v5810 = vmax.f32 %v5809, %v5575
        %v5811 = vmax.f32 %v5810, %v5577
        %v5812 = vmax.f32 %v5811, %v5579
        %v5813 = vmax.f32 %v5812, %v5581
        %v5814 = vmax.f32 %v5813, %v5583
        %v5815 = vmax.f32 %v5814, %v5585
        %v5816 = vmax.f32 %v5815, %v5587
        %v5817 = vmax.f32 %v5816, %v5589
        %v5818 = vmax.f32 %v5817, %v5591
        %v5819 = vmax.f32 %v5818, %v5593
        %v5820 = vmax.f32 %v5819, %v5595
        %v5821 = vmax.f32 %v5820, %v5597
        %v5822 = vrot.slane %v5821, 4
        %v5823 = vmax.f32 %v5821, %v5822
        %v5824 = vrot.slane %v5823, 2
        %v5825 = vmax.f32 %v5823, %v5824
        %v5826 = vrot.slane %v5825, 1
        %v5827 = vmax.f32 %v5825, %v5826
        %v5828 = vmax.f32 %v5536, %v5538
        %v5829 = vmax.f32 %v5828, %v5540
        %v5830 = vmax.f32 %v5829, %v5542
        %v5831 = vmax.f32 %v5830, %v5544
        %v5832 = vmax.f32 %v5831, %v5546
        %v5833 = vmax.f32 %v5832, %v5548
        %v5834 = vmax.f32 %v5833, %v5550
        %v5835 = vmax.f32 %v5834, %v5552
        %v5836 = vmax.f32 %v5835, %v5554
        %v5837 = vmax.f32 %v5836, %v5556
        %v5838 = vmax.f32 %v5837, %v5558
        %v5839 = vmax.f32 %v5838, %v5560
        %v5840 = vmax.f32 %v5839, %v5562
        %v5841 = vmax.f32 %v5840, %v5564
        %v5842 = vmax.f32 %v5841, %v5566
        %v5843 = vmax.f32 %v5842, %v5568
        %v5844 = vmax.f32 %v5843, %v5570
        %v5845 = vmax.f32 %v5844, %v5572
        %v5846 = vmax.f32 %v5845, %v5574
        %v5847 = vmax.f32 %v5846, %v5576
        %v5848 = vmax.f32 %v5847, %v5578
        %v5849 = vmax.f32 %v5848, %v5580
        %v5850 = vmax.f32 %v5849, %v5582
        %v5851 = vmax.f32 %v5850, %v5584
        %v5852 = vmax.f32 %v5851, %v5586
        %v5853 = vmax.f32 %v5852, %v5588
        %v5854 = vmax.f32 %v5853, %v5590
        %v5855 = vmax.f32 %v5854, %v5592
        %v5856 = vmax.f32 %v5855, %v5594
        %v5857 = vmax.f32 %v5856, %v5596
        %v5858 = vmax.f32 %v5857, %v5598
        %v5859 = vrot.slane %v5858, 4
        %v5860 = vmax.f32 %v5858, %v5859
        %v5861 = vrot.slane %v5860, 2
        %v5862 = vmax.f32 %v5860, %v5861
        %v5863 = vrot.slane %v5862, 1
        %v5864 = vmax.f32 %v5862, %v5863
        %v5865 = vmax.f32 %v5599, %v5601
        %v5866 = vmax.f32 %v5865, %v5603
        %v5867 = vmax.f32 %v5866, %v5605
        %v5868 = vmax.f32 %v5867, %v5607
        %v5869 = vmax.f32 %v5868, %v5609
        %v5870 = vmax.f32 %v5869, %v5611
        %v5871 = vmax.f32 %v5870, %v5613
        %v5872 = vmax.f32 %v5871, %v5615
        %v5873 = vmax.f32 %v5872, %v5617
        %v5874 = vmax.f32 %v5873, %v5619
        %v5875 = vmax.f32 %v5874, %v5621
        %v5876 = vmax.f32 %v5875, %v5623
        %v5877 = vmax.f32 %v5876, %v5625
        %v5878 = vmax.f32 %v5877, %v5627
        %v5879 = vmax.f32 %v5878, %v5629
        %v5880 = vmax.f32 %v5879, %v5631
        %v5881 = vmax.f32 %v5880, %v5633
        %v5882 = vmax.f32 %v5881, %v5635
        %v5883 = vmax.f32 %v5882, %v5637
        %v5884 = vmax.f32 %v5883, %v5639
        %v5885 = vmax.f32 %v5884, %v5641
        %v5886 = vmax.f32 %v5885, %v5643
        %v5887 = vmax.f32 %v5886, %v5645
        %v5888 = vmax.f32 %v5887, %v5647
        %v5889 = vmax.f32 %v5888, %v5649
        %v5890 = vmax.f32 %v5889, %v5651
        %v5891 = vmax.f32 %v5890, %v5653
        %v5892 = vmax.f32 %v5891, %v5655
        %v5893 = vmax.f32 %v5892, %v5657
        %v5894 = vmax.f32 %v5893, %v5659
        %v5895 = vmax.f32 %v5894, %v5661
        %v5896 = vrot.slane %v5895, 4
        %v5897 = vmax.f32 %v5895, %v5896
        %v5898 = vrot.slane %v5897, 2
        %v5899 = vmax.f32 %v5897, %v5898
        %v5900 = vrot.slane %v5899, 1
        %v5901 = vmax.f32 %v5899, %v5900
        %v5902 = vmax.f32 %v5600, %v5602
        %v5903 = vmax.f32 %v5902, %v5604
        %v5904 = vmax.f32 %v5903, %v5606
        %v5905 = vmax.f32 %v5904, %v5608
        %v5906 = vmax.f32 %v5905, %v5610
        %v5907 = vmax.f32 %v5906, %v5612
        %v5908 = vmax.f32 %v5907, %v5614
        %v5909 = vmax.f32 %v5908, %v5616
        %v5910 = vmax.f32 %v5909, %v5618
        %v5911 = vmax.f32 %v5910, %v5620
        %v5912 = vmax.f32 %v5911, %v5622
        %v5913 = vmax.f32 %v5912, %v5624
        %v5914 = vmax.f32 %v5913, %v5626
        %v5915 = vmax.f32 %v5914, %v5628
        %v5916 = vmax.f32 %v5915, %v5630
        %v5917 = vmax.f32 %v5916, %v5632
        %v5918 = vmax.f32 %v5917, %v5634
        %v5919 = vmax.f32 %v5918, %v5636
        %v5920 = vmax.f32 %v5919, %v5638
        %v5921 = vmax.f32 %v5920, %v5640
        %v5922 = vmax.f32 %v5921, %v5642
        %v5923 = vmax.f32 %v5922, %v5644
        %v5924 = vmax.f32 %v5923, %v5646
        %v5925 = vmax.f32 %v5924, %v5648
        %v5926 = vmax.f32 %v5925, %v5650
        %v5927 = vmax.f32 %v5926, %v5652
        %v5928 = vmax.f32 %v5927, %v5654
        %v5929 = vmax.f32 %v5928, %v5656
        %v5930 = vmax.f32 %v5929, %v5658
        %v5931 = vmax.f32 %v5930, %v5660
        %v5932 = vmax.f32 %v5931, %v5662
        %v5933 = vrot.slane %v5932, 4
        %v5934 = vmax.f32 %v5932, %v5933
        %v5935 = vrot.slane %v5934, 2
        %v5936 = vmax.f32 %v5934, %v5935
        %v5937 = vrot.slane %v5936, 1
        %v5938 = vmax.f32 %v5936, %v5937
        %v5939 = vmax.f32 %v5663, %v5665
        %v5940 = vmax.f32 %v5939, %v5667
        %v5941 = vmax.f32 %v5940, %v5669
        %v5942 = vmax.f32 %v5941, %v5671
        %v5943 = vmax.f32 %v5942, %v5673
        %v5944 = vmax.f32 %v5943, %v5675
        %v5945 = vmax.f32 %v5944, %v5677
        %v5946 = vmax.f32 %v5945, %v5679
        %v5947 = vmax.f32 %v5946, %v5681
        %v5948 = vmax.f32 %v5947, %v5683
        %v5949 = vmax.f32 %v5948, %v5685
        %v5950 = vmax.f32 %v5949, %v5687
        %v5951 = vmax.f32 %v5950, %v5689
        %v5952 = vmax.f32 %v5951, %v5691
        %v5953 = vmax.f32 %v5952, %v5693
        %v5954 = vmax.f32 %v5953, %v5695
        %v5955 = vmax.f32 %v5954, %v5697
        %v5956 = vmax.f32 %v5955, %v5699
        %v5957 = vmax.f32 %v5956, %v5701
        %v5958 = vmax.f32 %v5957, %v5703
        %v5959 = vmax.f32 %v5958, %v5705
        %v5960 = vmax.f32 %v5959, %v5707
        %v5961 = vmax.f32 %v5960, %v5709
        %v5962 = vmax.f32 %v5961, %v5711
        %v5963 = vmax.f32 %v5962, %v5713
        %v5964 = vmax.f32 %v5963, %v5715
        %v5965 = vmax.f32 %v5964, %v5717
        %v5966 = vmax.f32 %v5965, %v5719
        %v5967 = vmax.f32 %v5966, %v5721
        %v5968 = vmax.f32 %v5967, %v5723
        %v5969 = vmax.f32 %v5968, %v5725
        %v5970 = vrot.slane %v5969, 4
        %v5971 = vmax.f32 %v5969, %v5970
        %v5972 = vrot.slane %v5971, 2
        %v5973 = vmax.f32 %v5971, %v5972
        %v5974 = vrot.slane %v5973, 1
        %v5975 = vmax.f32 %v5973, %v5974
        %v5976 = vmax.f32 %v5664, %v5666
        %v5977 = vmax.f32 %v5976, %v5668
        %v5978 = vmax.f32 %v5977, %v5670
        %v5979 = vmax.f32 %v5978, %v5672
        %v5980 = vmax.f32 %v5979, %v5674
        %v5981 = vmax.f32 %v5980, %v5676
        %v5982 = vmax.f32 %v5981, %v5678
        %v5983 = vmax.f32 %v5982, %v5680
        %v5984 = vmax.f32 %v5983, %v5682
        %v5985 = vmax.f32 %v5984, %v5684
        %v5986 = vmax.f32 %v5985, %v5686
        %v5987 = vmax.f32 %v5986, %v5688
        %v5988 = vmax.f32 %v5987, %v5690
        %v5989 = vmax.f32 %v5988, %v5692
        %v5990 = vmax.f32 %v5989, %v5694
        %v5991 = vmax.f32 %v5990, %v5696
        %v5992 = vmax.f32 %v5991, %v5698
        %v5993 = vmax.f32 %v5992, %v5700
        %v5994 = vmax.f32 %v5993, %v5702
        %v5995 = vmax.f32 %v5994, %v5704
        %v5996 = vmax.f32 %v5995, %v5706
        %v5997 = vmax.f32 %v5996, %v5708
        %v5998 = vmax.f32 %v5997, %v5710
        %v5999 = vmax.f32 %v5998, %v5712
        %v6000 = vmax.f32 %v5999, %v5714
        %v6001 = vmax.f32 %v6000, %v5716
        %v6002 = vmax.f32 %v6001, %v5718
        %v6003 = vmax.f32 %v6002, %v5720
        %v6004 = vmax.f32 %v6003, %v5722
        %v6005 = vmax.f32 %v6004, %v5724
        %v6006 = vmax.f32 %v6005, %v5726
        %v6007 = vrot.slane %v6006, 4
        %v6008 = vmax.f32 %v6006, %v6007
        %v6009 = vrot.slane %v6008, 2
        %v6010 = vmax.f32 %v6008, %v6009
        %v6011 = vrot.slane %v6010, 1
        %v6012 = vmax.f32 %v6010, %v6011
        %v6013 = vmax.f32 %v5727, %v5729
        %v6014 = vmax.f32 %v6013, %v5731
        %v6015 = vmax.f32 %v6014, %v5733
        %v6016 = vmax.f32 %v6015, %v5735
        %v6017 = vmax.f32 %v6016, %v5737
        %v6018 = vmax.f32 %v6017, %v5739
        %v6019 = vmax.f32 %v6018, %v5741
        %v6020 = vmax.f32 %v6019, %v5743
        %v6021 = vmax.f32 %v6020, %v5745
        %v6022 = vmax.f32 %v6021, %v5747
        %v6023 = vmax.f32 %v6022, %v5749
        %v6024 = vmax.f32 %v6023, %v5751
        %v6025 = vmax.f32 %v6024, %v5753
        %v6026 = vmax.f32 %v6025, %v5755
        %v6027 = vmax.f32 %v6026, %v5757
        %v6028 = vmax.f32 %v6027, %v5759
        %v6029 = vmax.f32 %v6028, %v5761
        %v6030 = vmax.f32 %v6029, %v5763
        %v6031 = vmax.f32 %v6030, %v5765
        %v6032 = vmax.f32 %v6031, %v5767
        %v6033 = vmax.f32 %v6032, %v5769
        %v6034 = vmax.f32 %v6033, %v5771
        %v6035 = vmax.f32 %v6034, %v5773
        %v6036 = vmax.f32 %v6035, %v5775
        %v6037 = vmax.f32 %v6036, %v5777
        %v6038 = vmax.f32 %v6037, %v5779
        %v6039 = vmax.f32 %v6038, %v5781
        %v6040 = vmax.f32 %v6039, %v5783
        %v6041 = vmax.f32 %v6040, %v5785
        %v6042 = vmax.f32 %v6041, %v5787
        %v6043 = vmax.f32 %v6042, %v5789
        %v6044 = vrot.slane %v6043, 4
        %v6045 = vmax.f32 %v6043, %v6044
        %v6046 = vrot.slane %v6045, 2
        %v6047 = vmax.f32 %v6045, %v6046
        %v6048 = vrot.slane %v6047, 1
        %v6049 = vmax.f32 %v6047, %v6048
        %v6050 = vmax.f32 %v5728, %v5730
        %v6051 = vmax.f32 %v6050, %v5732
        %v6052 = vmax.f32 %v6051, %v5734
        %v6053 = vmax.f32 %v6052, %v5736
        %v6054 = vmax.f32 %v6053, %v5738
        %v6055 = vmax.f32 %v6054, %v5740
        %v6056 = vmax.f32 %v6055, %v5742
        %v6057 = vmax.f32 %v6056, %v5744
        %v6058 = vmax.f32 %v6057, %v5746
        %v6059 = vmax.f32 %v6058, %v5748
        %v6060 = vmax.f32 %v6059, %v5750
        %v6061 = vmax.f32 %v6060, %v5752
        %v6062 = vmax.f32 %v6061, %v5754
        %v6063 = vmax.f32 %v6062, %v5756
        %v6064 = vmax.f32 %v6063, %v5758
        %v6065 = vmax.f32 %v6064, %v5760
        %v6066 = vmax.f32 %v6065, %v5762
        %v6067 = vmax.f32 %v6066, %v5764
        %v6068 = vmax.f32 %v6067, %v5766
        %v6069 = vmax.f32 %v6068, %v5768
        %v6070 = vmax.f32 %v6069, %v5770
        %v6071 = vmax.f32 %v6070, %v5772
        %v6072 = vmax.f32 %v6071, %v5774
        %v6073 = vmax.f32 %v6072, %v5776
        %v6074 = vmax.f32 %v6073, %v5778
        %v6075 = vmax.f32 %v6074, %v5780
        %v6076 = vmax.f32 %v6075, %v5782
        %v6077 = vmax.f32 %v6076, %v5784
        %v6078 = vmax.f32 %v6077, %v5786
        %v6079 = vmax.f32 %v6078, %v5788
        %v6080 = vmax.f32 %v6079, %v5790
        %v6081 = vrot.slane %v6080, 4
        %v6082 = vmax.f32 %v6080, %v6081
        %v6083 = vrot.slane %v6082, 2
        %v6084 = vmax.f32 %v6082, %v6083
        %v6085 = vrot.slane %v6084, 1
        %v6086 = vmax.f32 %v6084, %v6085
        %v6087 = vld [vmem:[%s405] sm:$0xff]
        %v6096 = vcombine.low %v5827, %v5864
        %v6097 = vcombine.low %v5901, %v5938
        %v6098 = vcombine.low %v5975, %v6012
        %v6099 = vcombine.low %v6049, %v6086
        %v6100 = vrot.slane %v6097, 7
        %vm6101 = vcmask 1041409
        %v6102 = vsel %vm6101, %v6100, %v6096
        %vm6103 = vcmask 1045509
        %v6104 = vsel %vm6103, %v6100, %v6102
        %v6105 = vrot.slane %v6098, 6
        %vm6106 = vcmask 1042434
        %v6107 = vsel %vm6106, %v6105, %v6104
        %vm6108 = vcmask 1046534
        %v6109 = vsel %vm6108, %v6105, %v6107
        %v6110 = vrot.slane %v6099, 5
        %vm6111 = vcmask 1043459
        %v6112 = vsel %vm6111, %v6110, %v6109
        %vm6113 = vcmask 1047559
        %v6114 = vsel %vm6113, %v6110, %v6112
        %v6116 = vmax.f32 %v6087, %v6114
        %6117 = vst [vmem:[%s405] sm:$0xff] %v6116
        %v6118 = vld [vmem:[%s9 + $0x8] sm:$0xff]
        %v6119 = vld [vmem:[%s9 + $0x28] sm:$0xff]
        %v6120 = vld [vmem:[%s9 + $0x48] sm:$0xff]
        %v6121 = vld [vmem:[%s9 + $0x68] sm:$0xff]
        %v6122 = vld [vmem:[%s9 + $0x88] sm:$0xff]
        %v6123 = vld [vmem:[%s9 + $0xa8] sm:$0xff]
        %v6124 = vld [vmem:[%s9 + $0xc8] sm:$0xff]
        %v6125 = vld [vmem:[%s9 + $0xe8] sm:$0xff]
        %v6126 = vld [vmem:[%s9 + $0x108] sm:$0xff]
        %v6127 = vld [vmem:[%s9 + $0x128] sm:$0xff]
        %v6128 = vld [vmem:[%s9 + $0x148] sm:$0xff]
        %v6129 = vld [vmem:[%s9 + $0x168] sm:$0xff]
        %v6130 = vld [vmem:[%s9 + $0x188] sm:$0xff]
        %v6131 = vld [vmem:[%s9 + $0x1a8] sm:$0xff]
        %v6132 = vld [vmem:[%s9 + $0x1c8] sm:$0xff]
        %v6133 = vld [vmem:[%s9 + $0x1e8] sm:$0xff]
        %v6134 = vld [vmem:[%s10 + $0x2] sm:$0x3]
        %v6136 = vlaneseq
        %v6137 = vshrl.u32 %v6136, 7
        %v6138 = vsub.s32 0, %v6137
        %v6139 = vrot.slane %v6134, %v6138
        %v6140 = vlaneseq
        %v6141 = vshrl.u32 %v6140, 7
        %v6142 = vsub.s32 1, %v6141
        %v6143 = vrot.slane %v6134, %v6142
        %v6162 = vunpack.c.l.b16 %v6118
        %v6163 = vunpack.c.h.b16 %v6118
        %v6164 = vunpack.c.l.b16 %v6119
        %v6165 = vunpack.c.h.b16 %v6119
        %v6166 = vunpack.c.l.b16 %v6120
        %v6167 = vunpack.c.h.b16 %v6120
        %v6168 = vunpack.c.l.b16 %v6121
        %v6169 = vunpack.c.h.b16 %v6121
        %v6170 = vunpack.c.l.b16 %v6122
        %v6171 = vunpack.c.h.b16 %v6122
        %v6172 = vunpack.c.l.b16 %v6123
        %v6173 = vunpack.c.h.b16 %v6123
        %v6174 = vunpack.c.l.b16 %v6124
        %v6175 = vunpack.c.h.b16 %v6124
        %v6176 = vunpack.c.l.b16 %v6125
        %v6177 = vunpack.c.h.b16 %v6125
        %v6178 = vunpack.c.l.b16 %v6126
        %v6179 = vunpack.c.h.b16 %v6126
        %v6180 = vunpack.c.l.b16 %v6127
        %v6181 = vunpack.c.h.b16 %v6127
        %v6182 = vunpack.c.l.b16 %v6128
        %v6183 = vunpack.c.h.b16 %v6128
        %v6184 = vunpack.c.l.b16 %v6129
        %v6185 = vunpack.c.h.b16 %v6129
        %v6186 = vunpack.c.l.b16 %v6130
        %v6187 = vunpack.c.h.b16 %v6130
        %v6188 = vunpack.c.l.b16 %v6131
        %v6189 = vunpack.c.h.b16 %v6131
        %v6190 = vunpack.c.l.b16 %v6132
        %v6191 = vunpack.c.h.b16 %v6132
        %v6192 = vunpack.c.l.b16 %v6133
        %v6193 = vunpack.c.h.b16 %v6133
        %v6194 = vpack.c.b16 %v6164, %v6162
        %v6195 = vpack.c.b16 %v6165, %v6163
        %v6196 = vpack.c.b16 %v6168, %v6166
        %v6197 = vpack.c.b16 %v6169, %v6167
        %v6198 = vpack.c.b16 %v6172, %v6170
        %v6199 = vpack.c.b16 %v6173, %v6171
        %v6200 = vpack.c.b16 %v6176, %v6174
        %v6201 = vpack.c.b16 %v6177, %v6175
        %v6202 = vpack.c.b16 %v6180, %v6178
        %v6203 = vpack.c.b16 %v6181, %v6179
        %v6204 = vpack.c.b16 %v6184, %v6182
        %v6205 = vpack.c.b16 %v6185, %v6183
        %v6206 = vpack.c.b16 %v6188, %v6186
        %v6207 = vpack.c.b16 %v6189, %v6187
        %v6208 = vpack.c.b16 %v6192, %v6190
        %v6209 = vpack.c.b16 %v6193, %v6191
        %6226 = vmatprep.subr.bf16.mxu0 %v6195
        %6227 = vmatpush1.bf16.msra.mxu0 %v6194
        %6228 = vmatprep.subr.bf16.mxu0 %v6197
        %6229 = vmatpush1.bf16.msra.mxu0 %v6196
        %6230 = vmatprep.subr.bf16.mxu0 %v6199
        %6231 = vmatpush1.bf16.msra.mxu0 %v6198
        %6232 = vmatprep.subr.bf16.mxu0 %v6201
        %6233 = vmatpush1.bf16.msra.mxu0 %v6200
        %6234 = vmatprep.subr.bf16.mxu0 %v6203
        %6235 = vmatpush1.bf16.msra.mxu0 %v6202
        %6236 = vmatprep.subr.bf16.mxu0 %v6205
        %6237 = vmatpush1.bf16.msra.mxu0 %v6204
        %6238 = vmatprep.subr.bf16.mxu0 %v6207
        %6239 = vmatpush1.bf16.msra.mxu0 %v6206
        %6240 = vmatprep.subr.bf16.mxu0 %v6209
        %6241 = vmatpush1.bf16.msra.mxu0 %v6208
        %6242 = vmatprep.subr.bf16.mxu0 0
        %6243 = vmatpush1.bf16.msra.mxu0 0
        %6244 = vmatprep.subr.bf16.mxu0 0
        %6245 = vmatpush1.bf16.msra.mxu0 0
        %6246 = vmatprep.subr.bf16.mxu0 0
        %6247 = vmatpush1.bf16.msra.mxu0 0
        %6248 = vmatprep.subr.bf16.mxu0 0
        %6249 = vmatpush1.bf16.msra.mxu0 0
        %6250 = vmatprep.subr.bf16.mxu0 0
        %6251 = vmatpush1.bf16.msra.mxu0 0
        %6252 = vmatprep.subr.bf16.mxu0 0
        %6253 = vmatpush1.bf16.msra.mxu0 0
        %6254 = vmatprep.subr.bf16.mxu0 0
        %6255 = vmatpush1.bf16.msra.mxu0 0
        %6256 = vmatprep.subr.bf16.mxu0 0
        %6257 = vmatpush1.bf16.msra.mxu0 0
        %6258 = vmatprep.mubr.bf16.mxu0 0
        %6259 = vmatmul.mubr.bf16.gmra.mrb[0].mxu0 %v4682
        %v6260 = vpop.f32.mrb[0].mxu0
        %v6261 = vadd.f32 %v6139, %v6260
        %v6262 = vpop.f32.mrb[0].mxu0
        %v6263 = vadd.f32 %v6143, %v6262
        %v6264 = vpop.f32.mrb[0].mxu0
        %v6265 = vadd.f32 %v6139, %v6264
        %v6266 = vpop.f32.mrb[0].mxu0
        %v6267 = vadd.f32 %v6143, %v6266
        %6268 = vmatprep.mubr.bf16.mxu0 0
        %6269 = vmatmul.mubr.bf16.gmra.mrb[0].mxu0 %v4683
        %v6270 = vpop.f32.mrb[0].mxu0
        %v6271 = vadd.f32 %v6139, %v6270
        %v6272 = vpop.f32.mrb[0].mxu0
        %v6273 = vadd.f32 %v6143, %v6272
        %v6274 = vpop.f32.mrb[0].mxu0
        %v6275 = vadd.f32 %v6139, %v6274
        %v6276 = vpop.f32.mrb[0].mxu0
        %v6277 = vadd.f32 %v6143, %v6276
        %6278 = vmatprep.mubr.bf16.mxu0 0
        %6279 = vmatmul.mubr.bf16.gmra.mrb[0].mxu0 %v4684
        %v6280 = vpop.f32.mrb[0].mxu0
        %v6281 = vadd.f32 %v6139, %v6280
        %v6282 = vpop.f32.mrb[0].mxu0
        %v6283 = vadd.f32 %v6143, %v6282
        %v6284 = vpop.f32.mrb[0].mxu0
        %v6285 = vadd.f32 %v6139, %v6284
        %v6286 = vpop.f32.mrb[0].mxu0
        %v6287 = vadd.f32 %v6143, %v6286
        %6288 = vmatprep.mubr.bf16.mxu0 0
        %6289 = vmatmul.mubr.bf16.gmra.mrb[0].mxu0 %v4685
        %v6290 = vpop.f32.mrb[0].mxu0
        %v6291 = vadd.f32 %v6139, %v6290
        %v6292 = vpop.f32.mrb[0].mxu0
        %v6293 = vadd.f32 %v6143, %v6292
        %v6294 = vpop.f32.mrb[0].mxu0
        %v6295 = vadd.f32 %v6139, %v6294
        %v6296 = vpop.f32.mrb[0].mxu0
        %v6297 = vadd.f32 %v6143, %v6296
        %6298 = vmatprep.mubr.bf16.mxu0 0
        %6299 = vmatmul.mubr.bf16.gmra.mrb[0].mxu0 %v4686
        %v6300 = vpop.f32.mrb[0].mxu0
        %v6301 = vadd.f32 %v6139, %v6300
        %v6302 = vpop.f32.mrb[0].mxu0
        %v6303 = vadd.f32 %v6143, %v6302
        %v6304 = vpop.f32.mrb[0].mxu0
        %v6305 = vadd.f32 %v6139, %v6304
        %v6306 = vpop.f32.mrb[0].mxu0
        %v6307 = vadd.f32 %v6143, %v6306
        %6308 = vmatprep.mubr.bf16.mxu0 0
        %6309 = vmatmul.mubr.bf16.gmra.mrb[0].mxu0 %v4687
        %v6310 = vpop.f32.mrb[0].mxu0
        %v6311 = vadd.f32 %v6139, %v6310
        %v6312 = vpop.f32.mrb[0].mxu0
        %v6313 = vadd.f32 %v6143, %v6312
        %v6314 = vpop.f32.mrb[0].mxu0
        %v6315 = vadd.f32 %v6139, %v6314
        %v6316 = vpop.f32.mrb[0].mxu0
        %v6317 = vadd.f32 %v6143, %v6316
        %6318 = vmatprep.mubr.bf16.mxu0 0
        %6319 = vmatmul.mubr.bf16.gmra.mrb[0].mxu0 %v4688
        %v6320 = vpop.f32.mrb[0].mxu0
        %v6321 = vadd.f32 %v6139, %v6320
        %v6322 = vpop.f32.mrb[0].mxu0
        %v6323 = vadd.f32 %v6143, %v6322
        %v6324 = vpop.f32.mrb[0].mxu0
        %v6325 = vadd.f32 %v6139, %v6324
        %v6326 = vpop.f32.mrb[0].mxu0
        %v6327 = vadd.f32 %v6143, %v6326
        %6328 = vmatprep.mubr.bf16.mxu0 0
        %6329 = vmatmul.mubr.bf16.gmra.mrb[0].mxu0 %v4689
        %v6330 = vpop.f32.mrb[0].mxu0
        %v6331 = vadd.f32 %v6139, %v6330
        %v6332 = vpop.f32.mrb[0].mxu0
        %v6333 = vadd.f32 %v6143, %v6332
        %v6334 = vpop.f32.mrb[0].mxu0
        %v6335 = vadd.f32 %v6139, %v6334
        %v6336 = vpop.f32.mrb[0].mxu0
        %v6337 = vadd.f32 %v6143, %v6336
        %6338 = vmatprep.mubr.bf16.mxu0 0
        %6339 = vmatmul.mubr.bf16.gmra.mrb[0].mxu0 %v4690
        %v6340 = vpop.f32.mrb[0].mxu0
        %v6341 = vadd.f32 %v6139, %v6340
        %v6342 = vpop.f32.mrb[0].mxu0
        %v6343 = vadd.f32 %v6143, %v6342
        %v6344 = vpop.f32.mrb[0].mxu0
        %v6345 = vadd.f32 %v6139, %v6344
        %v6346 = vpop.f32.mrb[0].mxu0
        %v6347 = vadd.f32 %v6143, %v6346
        %6348 = vmatprep.mubr.bf16.mxu0 0
        %6349 = vmatmul.mubr.bf16.gmra.mrb[0].mxu0 %v4691
        %v6350 = vpop.f32.mrb[0].mxu0
        %v6351 = vadd.f32 %v6139, %v6350
        %v6352 = vpop.f32.mrb[0].mxu0
        %v6353 = vadd.f32 %v6143, %v6352
        %v6354 = vpop.f32.mrb[0].mxu0
        %v6355 = vadd.f32 %v6139, %v6354
        %v6356 = vpop.f32.mrb[0].mxu0
        %v6357 = vadd.f32 %v6143, %v6356
        %6358 = vmatprep.mubr.bf16.mxu0 0
        %6359 = vmatmul.mubr.bf16.gmra.mrb[0].mxu0 %v4692
        %v6360 = vpop.f32.mrb[0].mxu0
        %v6361 = vadd.f32 %v6139, %v6360
        %v6362 = vpop.f32.mrb[0].mxu0
        %v6363 = vadd.f32 %v6143, %v6362
        %v6364 = vpop.f32.mrb[0].mxu0
        %v6365 = vadd.f32 %v6139, %v6364
        %v6366 = vpop.f32.mrb[0].mxu0
        %v6367 = vadd.f32 %v6143, %v6366
        %6368 = vmatprep.mubr.bf16.mxu0 0
        %6369 = vmatmul.mubr.bf16.gmra.mrb[0].mxu0 %v4693
        %v6370 = vpop.f32.mrb[0].mxu0
        %v6371 = vadd.f32 %v6139, %v6370
        %v6372 = vpop.f32.mrb[0].mxu0
        %v6373 = vadd.f32 %v6143, %v6372
        %v6374 = vpop.f32.mrb[0].mxu0
        %v6375 = vadd.f32 %v6139, %v6374
        %v6376 = vpop.f32.mrb[0].mxu0
        %v6377 = vadd.f32 %v6143, %v6376
        %6378 = vmatprep.mubr.bf16.mxu0 0
        %6379 = vmatmul.mubr.bf16.gmra.mrb[0].mxu0 %v4694
        %v6380 = vpop.f32.mrb[0].mxu0
        %v6381 = vadd.f32 %v6139, %v6380
        %v6382 = vpop.f32.mrb[0].mxu0
        %v6383 = vadd.f32 %v6143, %v6382
        %v6384 = vpop.f32.mrb[0].mxu0
        %v6385 = vadd.f32 %v6139, %v6384
        %v6386 = vpop.f32.mrb[0].mxu0
        %v6387 = vadd.f32 %v6143, %v6386
        %6388 = vmatprep.mubr.bf16.mxu0 0
        %6389 = vmatmul.mubr.bf16.gmra.mrb[0].mxu0 %v4695
        %v6390 = vpop.f32.mrb[0].mxu0
        %v6391 = vadd.f32 %v6139, %v6390
        %v6392 = vpop.f32.mrb[0].mxu0
        %v6393 = vadd.f32 %v6143, %v6392
        %v6394 = vpop.f32.mrb[0].mxu0
        %v6395 = vadd.f32 %v6139, %v6394
        %v6396 = vpop.f32.mrb[0].mxu0
        %v6397 = vadd.f32 %v6143, %v6396
        %6398 = vmatprep.mubr.bf16.mxu0 0
        %6399 = vmatmul.mubr.bf16.gmra.mrb[0].mxu0 %v4696
        %v6400 = vpop.f32.mrb[0].mxu0
        %v6401 = vadd.f32 %v6139, %v6400
        %v6402 = vpop.f32.mrb[0].mxu0
        %v6403 = vadd.f32 %v6143, %v6402
        %v6404 = vpop.f32.mrb[0].mxu0
        %v6405 = vadd.f32 %v6139, %v6404
        %v6406 = vpop.f32.mrb[0].mxu0
        %v6407 = vadd.f32 %v6143, %v6406
        %6408 = vmatprep.mubr.bf16.mxu0 0
        %6409 = vmatmul.mubr.bf16.gmra.mrb[0].mxu0 %v4697
        %v6410 = vpop.f32.mrb[0].mxu0
        %v6411 = vadd.f32 %v6139, %v6410
        %v6412 = vpop.f32.mrb[0].mxu0
        %v6413 = vadd.f32 %v6143, %v6412
        %v6414 = vpop.f32.mrb[0].mxu0
        %v6415 = vadd.f32 %v6139, %v6414
        %v6416 = vpop.f32.mrb[0].mxu0
        %v6417 = vadd.f32 %v6143, %v6416
        %6418 = vmatprep.mubr.bf16.mxu0 0
        %6419 = vmatmul.mubr.bf16.gmra.mrb[0].mxu0 %v4698
        %v6420 = vpop.f32.mrb[0].mxu0
        %v6421 = vadd.f32 %v6139, %v6420
        %v6422 = vpop.f32.mrb[0].mxu0
        %v6423 = vadd.f32 %v6143, %v6422
        %v6424 = vpop.f32.mrb[0].mxu0
        %v6425 = vadd.f32 %v6139, %v6424
        %v6426 = vpop.f32.mrb[0].mxu0
        %v6427 = vadd.f32 %v6143, %v6426
        %6428 = vmatprep.mubr.bf16.mxu0 0
        %6429 = vmatmul.mubr.bf16.gmra.mrb[0].mxu0 %v4699
        %v6430 = vpop.f32.mrb[0].mxu0
        %v6431 = vadd.f32 %v6139, %v6430
        %v6432 = vpop.f32.mrb[0].mxu0
        %v6433 = vadd.f32 %v6143, %v6432
        %v6434 = vpop.f32.mrb[0].mxu0
        %v6435 = vadd.f32 %v6139, %v6434
        %v6436 = vpop.f32.mrb[0].mxu0
        %v6437 = vadd.f32 %v6143, %v6436
        %6438 = vmatprep.mubr.bf16.mxu0 0
        %6439 = vmatmul.mubr.bf16.gmra.mrb[0].mxu0 %v4700
        %v6440 = vpop.f32.mrb[0].mxu0
        %v6441 = vadd.f32 %v6139, %v6440
        %v6442 = vpop.f32.mrb[0].mxu0
        %v6443 = vadd.f32 %v6143, %v6442
        %v6444 = vpop.f32.mrb[0].mxu0
        %v6445 = vadd.f32 %v6139, %v6444
        %v6446 = vpop.f32.mrb[0].mxu0
        %v6447 = vadd.f32 %v6143, %v6446
        %6448 = vmatprep.mubr.bf16.mxu0 0
        %6449 = vmatmul.mubr.bf16.gmra.mrb[0].mxu0 %v4701
        %v6450 = vpop.f32.mrb[0].mxu0
        %v6451 = vadd.f32 %v6139, %v6450
        %v6452 = vpop.f32.mrb[0].mxu0
        %v6453 = vadd.f32 %v6143, %v6452
        %v6454 = vpop.f32.mrb[0].mxu0
        %v6455 = vadd.f32 %v6139, %v6454
        %v6456 = vpop.f32.mrb[0].mxu0
        %v6457 = vadd.f32 %v6143, %v6456
        %6458 = vmatprep.mubr.bf16.mxu0 0
        %6459 = vmatmul.mubr.bf16.gmra.mrb[0].mxu0 %v4702
        %v6460 = vpop.f32.mrb[0].mxu0
        %v6461 = vadd.f32 %v6139, %v6460
        %v6462 = vpop.f32.mrb[0].mxu0
        %v6463 = vadd.f32 %v6143, %v6462
        %v6464 = vpop.f32.mrb[0].mxu0
        %v6465 = vadd.f32 %v6139, %v6464
        %v6466 = vpop.f32.mrb[0].mxu0
        %v6467 = vadd.f32 %v6143, %v6466
        %6468 = vmatprep.mubr.bf16.mxu0 0
        %6469 = vmatmul.mubr.bf16.gmra.mrb[0].mxu0 %v4703
        %v6470 = vpop.f32.mrb[0].mxu0
        %v6471 = vadd.f32 %v6139, %v6470
        %v6472 = vpop.f32.mrb[0].mxu0
        %v6473 = vadd.f32 %v6143, %v6472
        %v6474 = vpop.f32.mrb[0].mxu0
        %v6475 = vadd.f32 %v6139, %v6474
        %v6476 = vpop.f32.mrb[0].mxu0
        %v6477 = vadd.f32 %v6143, %v6476
        %6478 = vmatprep.mubr.bf16.mxu0 0
        %6479 = vmatmul.mubr.bf16.gmra.mrb[0].mxu0 %v4704
        %v6480 = vpop.f32.mrb[0].mxu0
        %v6481 = vadd.f32 %v6139, %v6480
        %v6482 = vpop.f32.mrb[0].mxu0
        %v6483 = vadd.f32 %v6143, %v6482
        %v6484 = vpop.f32.mrb[0].mxu0
        %v6485 = vadd.f32 %v6139, %v6484
        %v6486 = vpop.f32.mrb[0].mxu0
        %v6487 = vadd.f32 %v6143, %v6486
        %6488 = vmatprep.mubr.bf16.mxu0 0
        %6489 = vmatmul.mubr.bf16.gmra.mrb[0].mxu0 %v4705
        %v6490 = vpop.f32.mrb[0].mxu0
        %v6491 = vadd.f32 %v6139, %v6490
        %v6492 = vpop.f32.mrb[0].mxu0
        %v6493 = vadd.f32 %v6143, %v6492
        %v6494 = vpop.f32.mrb[0].mxu0
        %v6495 = vadd.f32 %v6139, %v6494
        %v6496 = vpop.f32.mrb[0].mxu0
        %v6497 = vadd.f32 %v6143, %v6496
        %6498 = vmatprep.mubr.bf16.mxu0 0
        %6499 = vmatmul.mubr.bf16.gmra.mrb[0].mxu0 %v4706
        %v6500 = vpop.f32.mrb[0].mxu0
        %v6501 = vadd.f32 %v6139, %v6500
        %v6502 = vpop.f32.mrb[0].mxu0
        %v6503 = vadd.f32 %v6143, %v6502
        %v6504 = vpop.f32.mrb[0].mxu0
        %v6505 = vadd.f32 %v6139, %v6504
        %v6506 = vpop.f32.mrb[0].mxu0
        %v6507 = vadd.f32 %v6143, %v6506
        %6508 = vmatprep.mubr.bf16.mxu0 0
        %6509 = vmatmul.mubr.bf16.gmra.mrb[0].mxu0 %v4707
        %v6510 = vpop.f32.mrb[0].mxu0
        %v6511 = vadd.f32 %v6139, %v6510
        %v6512 = vpop.f32.mrb[0].mxu0
        %v6513 = vadd.f32 %v6143, %v6512
        %v6514 = vpop.f32.mrb[0].mxu0
        %v6515 = vadd.f32 %v6139, %v6514
        %v6516 = vpop.f32.mrb[0].mxu0
        %v6517 = vadd.f32 %v6143, %v6516
        %6518 = vmatprep.mubr.bf16.mxu0 0
        %6519 = vmatmul.mubr.bf16.gmra.mrb[0].mxu0 %v4708
        %v6520 = vpop.f32.mrb[0].mxu0
        %v6521 = vadd.f32 %v6139, %v6520
        %v6522 = vpop.f32.mrb[0].mxu0
        %v6523 = vadd.f32 %v6143, %v6522
        %v6524 = vpop.f32.mrb[0].mxu0
        %v6525 = vadd.f32 %v6139, %v6524
        %v6526 = vpop.f32.mrb[0].mxu0
        %v6527 = vadd.f32 %v6143, %v6526
        %6528 = vmatprep.mubr.bf16.mxu0 0
        %6529 = vmatmul.mubr.bf16.gmra.mrb[0].mxu0 %v4709
        %v6530 = vpop.f32.mrb[0].mxu0
        %v6531 = vadd.f32 %v6139, %v6530
        %v6532 = vpop.f32.mrb[0].mxu0
        %v6533 = vadd.f32 %v6143, %v6532
        %v6534 = vpop.f32.mrb[0].mxu0
        %v6535 = vadd.f32 %v6139, %v6534
        %v6536 = vpop.f32.mrb[0].mxu0
        %v6537 = vadd.f32 %v6143, %v6536
        %6538 = vmatprep.mubr.bf16.mxu0 0
        %6539 = vmatmul.mubr.bf16.gmra.mrb[0].mxu0 %v4710
        %v6540 = vpop.f32.mrb[0].mxu0
        %v6541 = vadd.f32 %v6139, %v6540
        %v6542 = vpop.f32.mrb[0].mxu0
        %v6543 = vadd.f32 %v6143, %v6542
        %v6544 = vpop.f32.mrb[0].mxu0
        %v6545 = vadd.f32 %v6139, %v6544
        %v6546 = vpop.f32.mrb[0].mxu0
        %v6547 = vadd.f32 %v6143, %v6546
        %6548 = vmatprep.mubr.bf16.mxu0 0
        %6549 = vmatmul.mubr.bf16.gmra.mrb[0].mxu0 %v4711
        %v6550 = vpop.f32.mrb[0].mxu0
        %v6551 = vadd.f32 %v6139, %v6550
        %v6552 = vpop.f32.mrb[0].mxu0
        %v6553 = vadd.f32 %v6143, %v6552
        %v6554 = vpop.f32.mrb[0].mxu0
        %v6555 = vadd.f32 %v6139, %v6554
        %v6556 = vpop.f32.mrb[0].mxu0
        %v6557 = vadd.f32 %v6143, %v6556
        %6558 = vmatprep.mubr.bf16.mxu0 0
        %6559 = vmatmul.mubr.bf16.gmra.mrb[0].mxu0 %v4712
        %v6560 = vpop.f32.mrb[0].mxu0
        %v6561 = vadd.f32 %v6139, %v6560
        %v6562 = vpop.f32.mrb[0].mxu0
        %v6563 = vadd.f32 %v6143, %v6562
        %v6564 = vpop.f32.mrb[0].mxu0
        %v6565 = vadd.f32 %v6139, %v6564
        %v6566 = vpop.f32.mrb[0].mxu0
        %v6567 = vadd.f32 %v6143, %v6566
        %6568 = vmatprep.mubr.bf16.mxu0 0
        %6569 = vmatmul.mubr.bf16.gmra.mrb[0].mxu0 %v4713
        %v6570 = vpop.f32.mrb[0].mxu0
        %v6571 = vadd.f32 %v6139, %v6570
        %v6572 = vpop.f32.mrb[0].mxu0
        %v6573 = vadd.f32 %v6143, %v6572
        %v6574 = vpop.f32.mrb[0].mxu0
        %v6575 = vadd.f32 %v6139, %v6574
        %v6576 = vpop.f32.mrb[0].mxu0
        %v6577 = vadd.f32 %v6143, %v6576
        %6578 = vmatprep.mubr.bf16.mxu0 0
        %6579 = vmatmul.mubr.bf16.gmra.mrb[0].mxu0 %v4714
        %v6580 = vpop.f32.mrb[0].mxu0
        %v6581 = vadd.f32 %v6139, %v6580
        %v6582 = vpop.f32.mrb[0].mxu0
        %v6583 = vadd.f32 %v6143, %v6582
        %v6584 = vpop.f32.mrb[0].mxu0
        %v6585 = vadd.f32 %v6139, %v6584
        %v6586 = vpop.f32.mrb[0].mxu0
        %v6587 = vadd.f32 %v6143, %v6586
        %6588 = vmatprep.mubr.bf16.mxu0 0
        %6589 = vmatmul.mubr.bf16.gmra.mrb[0].mxu0 %v4715
        %v6590 = vpop.f32.mrb[0].mxu0
        %v6591 = vadd.f32 %v6139, %v6590
        %v6592 = vpop.f32.mrb[0].mxu0
        %v6593 = vadd.f32 %v6143, %v6592
        %v6594 = vpop.f32.mrb[0].mxu0
        %v6595 = vadd.f32 %v6139, %v6594
        %v6596 = vpop.f32.mrb[0].mxu0
        %v6597 = vadd.f32 %v6143, %v6596
        %6598 = vmatprep.mubr.bf16.mxu0 0
        %6599 = vmatmul.mubr.bf16.gmra.mrb[0].mxu0 %v4716
        %v6600 = vpop.f32.mrb[0].mxu0
        %v6601 = vadd.f32 %v6139, %v6600
        %v6602 = vpop.f32.mrb[0].mxu0
        %v6603 = vadd.f32 %v6143, %v6602
        %v6604 = vpop.f32.mrb[0].mxu0
        %v6605 = vadd.f32 %v6139, %v6604
        %v6606 = vpop.f32.mrb[0].mxu0
        %v6607 = vadd.f32 %v6143, %v6606
        %6608 = vmatprep.mubr.bf16.mxu0 0
        %6609 = vmatmul.mubr.bf16.gmra.mrb[0].mxu0 %v4717
        %v6610 = vpop.f32.mrb[0].mxu0
        %v6611 = vadd.f32 %v6139, %v6610
        %v6612 = vpop.f32.mrb[0].mxu0
        %v6613 = vadd.f32 %v6143, %v6612
        %v6614 = vpop.f32.mrb[0].mxu0
        %v6615 = vadd.f32 %v6139, %v6614
        %v6616 = vpop.f32.mrb[0].mxu0
        %v6617 = vadd.f32 %v6143, %v6616
        %6618 = vmatprep.mubr.bf16.mxu0 0
        %6619 = vmatmul.mubr.bf16.gmra.mrb[0].mxu0 %v4718
        %v6620 = vpop.f32.mrb[0].mxu0
        %v6621 = vadd.f32 %v6139, %v6620
        %v6622 = vpop.f32.mrb[0].mxu0
        %v6623 = vadd.f32 %v6143, %v6622
        %v6624 = vpop.f32.mrb[0].mxu0
        %v6625 = vadd.f32 %v6139, %v6624
        %v6626 = vpop.f32.mrb[0].mxu0
        %v6627 = vadd.f32 %v6143, %v6626
        %6628 = vmatprep.mubr.bf16.mxu0 0
        %6629 = vmatmul.mubr.bf16.gmra.mrb[0].mxu0 %v4719
        %v6630 = vpop.f32.mrb[0].mxu0
        %v6631 = vadd.f32 %v6139, %v6630
        %v6632 = vpop.f32.mrb[0].mxu0
        %v6633 = vadd.f32 %v6143, %v6632
        %v6634 = vpop.f32.mrb[0].mxu0
        %v6635 = vadd.f32 %v6139, %v6634
        %v6636 = vpop.f32.mrb[0].mxu0
        %v6637 = vadd.f32 %v6143, %v6636
        %6638 = vmatprep.mubr.bf16.mxu0 0
        %6639 = vmatmul.mubr.bf16.gmra.mrb[0].mxu0 %v4720
        %v6640 = vpop.f32.mrb[0].mxu0
        %v6641 = vadd.f32 %v6139, %v6640
        %v6642 = vpop.f32.mrb[0].mxu0
        %v6643 = vadd.f32 %v6143, %v6642
        %v6644 = vpop.f32.mrb[0].mxu0
        %v6645 = vadd.f32 %v6139, %v6644
        %v6646 = vpop.f32.mrb[0].mxu0
        %v6647 = vadd.f32 %v6143, %v6646
        %6648 = vmatprep.mubr.bf16.mxu0 0
        %6649 = vmatmul.mubr.bf16.gmra.mrb[0].mxu0 %v4721
        %v6650 = vpop.f32.mrb[0].mxu0
        %v6651 = vadd.f32 %v6139, %v6650
        %v6652 = vpop.f32.mrb[0].mxu0
        %v6653 = vadd.f32 %v6143, %v6652
        %v6654 = vpop.f32.mrb[0].mxu0
        %v6655 = vadd.f32 %v6139, %v6654
        %v6656 = vpop.f32.mrb[0].mxu0
        %v6657 = vadd.f32 %v6143, %v6656
        %6658 = vmatprep.mubr.bf16.mxu0 0
        %6659 = vmatmul.mubr.bf16.gmra.mrb[0].mxu0 %v4722
        %v6660 = vpop.f32.mrb[0].mxu0
        %v6661 = vadd.f32 %v6139, %v6660
        %v6662 = vpop.f32.mrb[0].mxu0
        %v6663 = vadd.f32 %v6143, %v6662
        %v6664 = vpop.f32.mrb[0].mxu0
        %v6665 = vadd.f32 %v6139, %v6664
        %v6666 = vpop.f32.mrb[0].mxu0
        %v6667 = vadd.f32 %v6143, %v6666
        %6668 = vmatprep.mubr.bf16.mxu0 0
        %6669 = vmatmul.mubr.bf16.gmra.mrb[0].mxu0 %v4723
        %v6670 = vpop.f32.mrb[0].mxu0
        %v6671 = vadd.f32 %v6139, %v6670
        %v6672 = vpop.f32.mrb[0].mxu0
        %v6673 = vadd.f32 %v6143, %v6672
        %v6674 = vpop.f32.mrb[0].mxu0
        %v6675 = vadd.f32 %v6139, %v6674
        %v6676 = vpop.f32.mrb[0].mxu0
        %v6677 = vadd.f32 %v6143, %v6676
        %6678 = vmatprep.mubr.bf16.mxu0 0
        %6679 = vmatmul.mubr.bf16.gmra.mrb[0].mxu0 %v4724
        %v6680 = vpop.f32.mrb[0].mxu0
        %v6681 = vadd.f32 %v6139, %v6680
        %v6682 = vpop.f32.mrb[0].mxu0
        %v6683 = vadd.f32 %v6143, %v6682
        %v6684 = vpop.f32.mrb[0].mxu0
        %v6685 = vadd.f32 %v6139, %v6684
        %v6686 = vpop.f32.mrb[0].mxu0
        %v6687 = vadd.f32 %v6143, %v6686
        %6688 = vmatprep.mubr.bf16.mxu0 0
        %6689 = vmatmul.mubr.bf16.gmra.mrb[0].mxu0 %v4725
        %v6690 = vpop.f32.mrb[0].mxu0
        %v6691 = vadd.f32 %v6139, %v6690
        %v6692 = vpop.f32.mrb[0].mxu0
        %v6693 = vadd.f32 %v6143, %v6692
        %v6694 = vpop.f32.mrb[0].mxu0
        %v6695 = vadd.f32 %v6139, %v6694
        %v6696 = vpop.f32.mrb[0].mxu0
        %v6697 = vadd.f32 %v6143, %v6696
        %6698 = vmatprep.mubr.bf16.mxu0 0
        %6699 = vmatmul.mubr.bf16.gmra.mrb[0].mxu0 %v4726
        %v6700 = vpop.f32.mrb[0].mxu0
        %v6701 = vadd.f32 %v6139, %v6700
        %v6702 = vpop.f32.mrb[0].mxu0
        %v6703 = vadd.f32 %v6143, %v6702
        %v6704 = vpop.f32.mrb[0].mxu0
        %v6705 = vadd.f32 %v6139, %v6704
        %v6706 = vpop.f32.mrb[0].mxu0
        %v6707 = vadd.f32 %v6143, %v6706
        %6708 = vmatprep.mubr.bf16.mxu0 0
        %6709 = vmatmul.mubr.bf16.gmra.mrb[0].mxu0 %v4727
        %v6710 = vpop.f32.mrb[0].mxu0
        %v6711 = vadd.f32 %v6139, %v6710
        %v6712 = vpop.f32.mrb[0].mxu0
        %v6713 = vadd.f32 %v6143, %v6712
        %v6714 = vpop.f32.mrb[0].mxu0
        %v6715 = vadd.f32 %v6139, %v6714
        %v6716 = vpop.f32.mrb[0].mxu0
        %v6717 = vadd.f32 %v6143, %v6716
        %6718 = vmatprep.mubr.bf16.mxu0 0
        %6719 = vmatmul.mubr.bf16.gmra.mrb[0].mxu0 %v4728
        %v6720 = vpop.f32.mrb[0].mxu0
        %v6721 = vadd.f32 %v6139, %v6720
        %v6722 = vpop.f32.mrb[0].mxu0
        %v6723 = vadd.f32 %v6143, %v6722
        %v6724 = vpop.f32.mrb[0].mxu0
        %v6725 = vadd.f32 %v6139, %v6724
        %v6726 = vpop.f32.mrb[0].mxu0
        %v6727 = vadd.f32 %v6143, %v6726
        %6728 = vmatprep.mubr.bf16.mxu0 0
        %6729 = vmatmul.mubr.bf16.gmra.mrb[0].mxu0 %v4729
        %v6730 = vpop.f32.mrb[0].mxu0
        %v6731 = vadd.f32 %v6139, %v6730
        %v6732 = vpop.f32.mrb[0].mxu0
        %v6733 = vadd.f32 %v6143, %v6732
        %v6734 = vpop.f32.mrb[0].mxu0
        %v6735 = vadd.f32 %v6139, %v6734
        %v6736 = vpop.f32.mrb[0].mxu0
        %v6737 = vadd.f32 %v6143, %v6736
        %6738 = vmatprep.mubr.bf16.mxu0 0
        %6739 = vmatmul.mubr.bf16.gmra.mrb[0].mxu0 %v4730
        %v6740 = vpop.f32.mrb[0].mxu0
        %v6741 = vadd.f32 %v6139, %v6740
        %v6742 = vpop.f32.mrb[0].mxu0
        %v6743 = vadd.f32 %v6143, %v6742
        %v6744 = vpop.f32.mrb[0].mxu0
        %v6745 = vadd.f32 %v6139, %v6744
        %v6746 = vpop.f32.mrb[0].mxu0
        %v6747 = vadd.f32 %v6143, %v6746
        %6748 = vmatprep.mubr.bf16.mxu0 0
        %6749 = vmatmul.mubr.bf16.gmra.mrb[0].mxu0 %v4731
        %v6750 = vpop.f32.mrb[0].mxu0
        %v6751 = vadd.f32 %v6139, %v6750
        %v6752 = vpop.f32.mrb[0].mxu0
        %v6753 = vadd.f32 %v6143, %v6752
        %v6754 = vpop.f32.mrb[0].mxu0
        %v6755 = vadd.f32 %v6139, %v6754
        %v6756 = vpop.f32.mrb[0].mxu0
        %v6757 = vadd.f32 %v6143, %v6756
        %6758 = vmatprep.mubr.bf16.mxu0 0
        %6759 = vmatmul.mubr.bf16.gmra.mrb[0].mxu0 %v4732
        %v6760 = vpop.f32.mrb[0].mxu0
        %v6761 = vadd.f32 %v6139, %v6760
        %v6762 = vpop.f32.mrb[0].mxu0
        %v6763 = vadd.f32 %v6143, %v6762
        %v6764 = vpop.f32.mrb[0].mxu0
        %v6765 = vadd.f32 %v6139, %v6764
        %v6766 = vpop.f32.mrb[0].mxu0
        %v6767 = vadd.f32 %v6143, %v6766
        %6768 = vmatprep.mubr.bf16.mxu0 0
        %6769 = vmatmul.mubr.bf16.gmra.mrb[0].mxu0 %v4733
        %v6770 = vpop.f32.mrb[0].mxu0
        %v6771 = vadd.f32 %v6139, %v6770
        %v6772 = vpop.f32.mrb[0].mxu0
        %v6773 = vadd.f32 %v6143, %v6772
        %v6774 = vpop.f32.mrb[0].mxu0
        %v6775 = vadd.f32 %v6139, %v6774
        %v6776 = vpop.f32.mrb[0].mxu0
        %v6777 = vadd.f32 %v6143, %v6776
        %6778 = vmatprep.mubr.bf16.mxu0 0
        %6779 = vmatmul.mubr.bf16.gmra.mrb[0].mxu0 %v4734
        %v6780 = vpop.f32.mrb[0].mxu0
        %v6781 = vadd.f32 %v6139, %v6780
        %v6782 = vpop.f32.mrb[0].mxu0
        %v6783 = vadd.f32 %v6143, %v6782
        %v6784 = vpop.f32.mrb[0].mxu0
        %v6785 = vadd.f32 %v6139, %v6784
        %v6786 = vpop.f32.mrb[0].mxu0
        %v6787 = vadd.f32 %v6143, %v6786
        %6788 = vmatprep.mubr.bf16.mxu0 0
        %6789 = vmatmul.mubr.bf16.gmra.mrb[0].mxu0 %v4735
        %v6790 = vpop.f32.mrb[0].mxu0
        %v6791 = vadd.f32 %v6139, %v6790
        %v6792 = vpop.f32.mrb[0].mxu0
        %v6793 = vadd.f32 %v6143, %v6792
        %v6794 = vpop.f32.mrb[0].mxu0
        %v6795 = vadd.f32 %v6139, %v6794
        %v6796 = vpop.f32.mrb[0].mxu0
        %v6797 = vadd.f32 %v6143, %v6796
        %6798 = vmatprep.mubr.bf16.mxu0 0
        %6799 = vmatmul.mubr.bf16.gmra.mrb[0].mxu0 %v4736
        %v6800 = vpop.f32.mrb[0].mxu0
        %v6801 = vadd.f32 %v6139, %v6800
        %v6802 = vpop.f32.mrb[0].mxu0
        %v6803 = vadd.f32 %v6143, %v6802
        %v6804 = vpop.f32.mrb[0].mxu0
        %v6805 = vadd.f32 %v6139, %v6804
        %v6806 = vpop.f32.mrb[0].mxu0
        %v6807 = vadd.f32 %v6143, %v6806
        %6808 = vmatprep.mubr.bf16.mxu0 0
        %6809 = vmatmul.mubr.bf16.gmra.mrb[0].mxu0 %v4737
        %v6810 = vpop.f32.mrb[0].mxu0
        %v6811 = vadd.f32 %v6139, %v6810
        %v6812 = vpop.f32.mrb[0].mxu0
        %v6813 = vadd.f32 %v6143, %v6812
        %v6814 = vpop.f32.mrb[0].mxu0
        %v6815 = vadd.f32 %v6139, %v6814
        %v6816 = vpop.f32.mrb[0].mxu0
        %v6817 = vadd.f32 %v6143, %v6816
        %6818 = vmatprep.mubr.bf16.mxu0 0
        %6819 = vmatmul.mubr.bf16.gmra.mrb[0].mxu0 %v4738
        %v6820 = vpop.f32.mrb[0].mxu0
        %v6821 = vadd.f32 %v6139, %v6820
        %v6822 = vpop.f32.mrb[0].mxu0
        %v6823 = vadd.f32 %v6143, %v6822
        %v6824 = vpop.f32.mrb[0].mxu0
        %v6825 = vadd.f32 %v6139, %v6824
        %v6826 = vpop.f32.mrb[0].mxu0
        %v6827 = vadd.f32 %v6143, %v6826
        %6828 = vmatprep.mubr.bf16.mxu0 0
        %6829 = vmatmul.mubr.bf16.gmra.mrb[0].mxu0 %v4739
        %v6830 = vpop.f32.mrb[0].mxu0
        %v6831 = vadd.f32 %v6139, %v6830
        %v6832 = vpop.f32.mrb[0].mxu0
        %v6833 = vadd.f32 %v6143, %v6832
        %v6834 = vpop.f32.mrb[0].mxu0
        %v6835 = vadd.f32 %v6139, %v6834
        %v6836 = vpop.f32.mrb[0].mxu0
        %v6837 = vadd.f32 %v6143, %v6836
        %6838 = vmatprep.mubr.bf16.mxu0 0
        %6839 = vmatmul.mubr.bf16.gmra.mrb[0].mxu0 %v4740
        %v6840 = vpop.f32.mrb[0].mxu0
        %v6841 = vadd.f32 %v6139, %v6840
        %v6842 = vpop.f32.mrb[0].mxu0
        %v6843 = vadd.f32 %v6143, %v6842
        %v6844 = vpop.f32.mrb[0].mxu0
        %v6845 = vadd.f32 %v6139, %v6844
        %v6846 = vpop.f32.mrb[0].mxu0
        %v6847 = vadd.f32 %v6143, %v6846
        %6848 = vmatprep.mubr.bf16.mxu0 0
        %6849 = vmatmul.mubr.bf16.gmra.mrb[0].mxu0 %v4741
        %v6850 = vpop.f32.mrb[0].mxu0
        %v6851 = vadd.f32 %v6139, %v6850
        %v6852 = vpop.f32.mrb[0].mxu0
        %v6853 = vadd.f32 %v6143, %v6852
        %v6854 = vpop.f32.mrb[0].mxu0
        %v6855 = vadd.f32 %v6139, %v6854
        %v6856 = vpop.f32.mrb[0].mxu0
        %v6857 = vadd.f32 %v6143, %v6856
        %6858 = vmatprep.mubr.bf16.mxu0 0
        %6859 = vmatmul.mubr.bf16.gmra.mrb[0].mxu0 %v4742
        %v6860 = vpop.f32.mrb[0].mxu0
        %v6861 = vadd.f32 %v6139, %v6860
        %v6862 = vpop.f32.mrb[0].mxu0
        %v6863 = vadd.f32 %v6143, %v6862
        %v6864 = vpop.f32.mrb[0].mxu0
        %v6865 = vadd.f32 %v6139, %v6864
        %v6866 = vpop.f32.mrb[0].mxu0
        %v6867 = vadd.f32 %v6143, %v6866
        %6868 = vmatprep.mubr.bf16.mxu0 0
        %6869 = vmatmul.mubr.bf16.gmra.mrb[0].mxu0 %v4743
        %v6870 = vpop.f32.mrb[0].mxu0
        %v6871 = vadd.f32 %v6139, %v6870
        %v6872 = vpop.f32.mrb[0].mxu0
        %v6873 = vadd.f32 %v6143, %v6872
        %v6874 = vpop.f32.mrb[0].mxu0
        %v6875 = vadd.f32 %v6139, %v6874
        %v6876 = vpop.f32.mrb[0].mxu0
        %v6877 = vadd.f32 %v6143, %v6876
        %6878 = vmatprep.mubr.bf16.mxu0 0
        %6879 = vmatmul.mubr.bf16.gmra.mrb[0].mxu0 %v4744
        %v6880 = vpop.f32.mrb[0].mxu0
        %v6881 = vadd.f32 %v6139, %v6880
        %v6882 = vpop.f32.mrb[0].mxu0
        %v6883 = vadd.f32 %v6143, %v6882
        %v6884 = vpop.f32.mrb[0].mxu0
        %v6885 = vadd.f32 %v6139, %v6884
        %v6886 = vpop.f32.mrb[0].mxu0
        %v6887 = vadd.f32 %v6143, %v6886
        %6888 = vmatprep.mubr.bf16.mxu0 0
        %6889 = vmatmul.mubr.bf16.gmra.mrb[0].mxu0 %v4745
        %v6890 = vpop.f32.mrb[0].mxu0
        %v6891 = vadd.f32 %v6139, %v6890
        %v6892 = vpop.f32.mrb[0].mxu0
        %v6893 = vadd.f32 %v6143, %v6892
        %v6894 = vpop.f32.mrb[0].mxu0
        %v6895 = vadd.f32 %v6139, %v6894
        %v6896 = vpop.f32.mrb[0].mxu0
        %v6897 = vadd.f32 %v6143, %v6896
        %6898 = vdwg.mxu0
        %v6899 = vmax.f32 %v6261, 0.0
        %v6900 = vmax.f32 %v6263, 0.0
        %v6901 = vmax.f32 %v6265, 0.0
        %v6902 = vmax.f32 %v6267, 0.0
        %v6903 = vmax.f32 %v6271, 0.0
        %v6904 = vmax.f32 %v6273, 0.0
        %v6905 = vmax.f32 %v6275, 0.0
        %v6906 = vmax.f32 %v6277, 0.0
        %v6907 = vmax.f32 %v6281, 0.0
        %v6908 = vmax.f32 %v6283, 0.0
        %v6909 = vmax.f32 %v6285, 0.0
        %v6910 = vmax.f32 %v6287, 0.0
        %v6911 = vmax.f32 %v6291, 0.0
        %v6912 = vmax.f32 %v6293, 0.0
        %v6913 = vmax.f32 %v6295, 0.0
        %v6914 = vmax.f32 %v6297, 0.0
        %v6915 = vmax.f32 %v6301, 0.0
        %v6916 = vmax.f32 %v6303, 0.0
        %v6917 = vmax.f32 %v6305, 0.0
        %v6918 = vmax.f32 %v6307, 0.0
        %v6919 = vmax.f32 %v6311, 0.0
        %v6920 = vmax.f32 %v6313, 0.0
        %v6921 = vmax.f32 %v6315, 0.0
        %v6922 = vmax.f32 %v6317, 0.0
        %v6923 = vmax.f32 %v6321, 0.0
        %v6924 = vmax.f32 %v6323, 0.0
        %v6925 = vmax.f32 %v6325, 0.0
        %v6926 = vmax.f32 %v6327, 0.0
        %v6927 = vmax.f32 %v6331, 0.0
        %v6928 = vmax.f32 %v6333, 0.0
        %v6929 = vmax.f32 %v6335, 0.0
        %v6930 = vmax.f32 %v6337, 0.0
        %v6931 = vmax.f32 %v6341, 0.0
        %v6932 = vmax.f32 %v6343, 0.0
        %v6933 = vmax.f32 %v6345, 0.0
        %v6934 = vmax.f32 %v6347, 0.0
        %v6935 = vmax.f32 %v6351, 0.0
        %v6936 = vmax.f32 %v6353, 0.0
        %v6937 = vmax.f32 %v6355, 0.0
        %v6938 = vmax.f32 %v6357, 0.0
        %v6939 = vmax.f32 %v6361, 0.0
        %v6940 = vmax.f32 %v6363, 0.0
        %v6941 = vmax.f32 %v6365, 0.0
        %v6942 = vmax.f32 %v6367, 0.0
        %v6943 = vmax.f32 %v6371, 0.0
        %v6944 = vmax.f32 %v6373, 0.0
        %v6945 = vmax.f32 %v6375, 0.0
        %v6946 = vmax.f32 %v6377, 0.0
        %v6947 = vmax.f32 %v6381, 0.0
        %v6948 = vmax.f32 %v6383, 0.0
        %v6949 = vmax.f32 %v6385, 0.0
        %v6950 = vmax.f32 %v6387, 0.0
        %v6951 = vmax.f32 %v6391, 0.0
        %v6952 = vmax.f32 %v6393, 0.0
        %v6953 = vmax.f32 %v6395, 0.0
        %v6954 = vmax.f32 %v6397, 0.0
        %v6955 = vmax.f32 %v6401, 0.0
        %v6956 = vmax.f32 %v6403, 0.0
        %v6957 = vmax.f32 %v6405, 0.0
        %v6958 = vmax.f32 %v6407, 0.0
        %v6959 = vmax.f32 %v6411, 0.0
        %v6960 = vmax.f32 %v6413, 0.0
        %v6961 = vmax.f32 %v6415, 0.0
        %v6962 = vmax.f32 %v6417, 0.0
        %v6963 = vmax.f32 %v6421, 0.0
        %v6964 = vmax.f32 %v6423, 0.0
        %v6965 = vmax.f32 %v6425, 0.0
        %v6966 = vmax.f32 %v6427, 0.0
        %v6967 = vmax.f32 %v6431, 0.0
        %v6968 = vmax.f32 %v6433, 0.0
        %v6969 = vmax.f32 %v6435, 0.0
        %v6970 = vmax.f32 %v6437, 0.0
        %v6971 = vmax.f32 %v6441, 0.0
        %v6972 = vmax.f32 %v6443, 0.0
        %v6973 = vmax.f32 %v6445, 0.0
        %v6974 = vmax.f32 %v6447, 0.0
        %v6975 = vmax.f32 %v6451, 0.0
        %v6976 = vmax.f32 %v6453, 0.0
        %v6977 = vmax.f32 %v6455, 0.0
        %v6978 = vmax.f32 %v6457, 0.0
        %v6979 = vmax.f32 %v6461, 0.0
        %v6980 = vmax.f32 %v6463, 0.0
        %v6981 = vmax.f32 %v6465, 0.0
        %v6982 = vmax.f32 %v6467, 0.0
        %v6983 = vmax.f32 %v6471, 0.0
        %v6984 = vmax.f32 %v6473, 0.0
        %v6985 = vmax.f32 %v6475, 0.0
        %v6986 = vmax.f32 %v6477, 0.0
        %v6987 = vmax.f32 %v6481, 0.0
        %v6988 = vmax.f32 %v6483, 0.0
        %v6989 = vmax.f32 %v6485, 0.0
        %v6990 = vmax.f32 %v6487, 0.0
        %v6991 = vmax.f32 %v6491, 0.0
        %v6992 = vmax.f32 %v6493, 0.0
        %v6993 = vmax.f32 %v6495, 0.0
        %v6994 = vmax.f32 %v6497, 0.0
        %v6995 = vmax.f32 %v6501, 0.0
        %v6996 = vmax.f32 %v6503, 0.0
        %v6997 = vmax.f32 %v6505, 0.0
        %v6998 = vmax.f32 %v6507, 0.0
        %v6999 = vmax.f32 %v6511, 0.0
        %v7000 = vmax.f32 %v6513, 0.0
        %v7001 = vmax.f32 %v6515, 0.0
        %v7002 = vmax.f32 %v6517, 0.0
        %v7003 = vmax.f32 %v6521, 0.0
        %v7004 = vmax.f32 %v6523, 0.0
        %v7005 = vmax.f32 %v6525, 0.0
        %v7006 = vmax.f32 %v6527, 0.0
        %v7007 = vmax.f32 %v6531, 0.0
        %v7008 = vmax.f32 %v6533, 0.0
        %v7009 = vmax.f32 %v6535, 0.0
        %v7010 = vmax.f32 %v6537, 0.0
        %v7011 = vmax.f32 %v6541, 0.0
        %v7012 = vmax.f32 %v6543, 0.0
        %v7013 = vmax.f32 %v6545, 0.0
        %v7014 = vmax.f32 %v6547, 0.0
        %v7015 = vmax.f32 %v6551, 0.0
        %v7016 = vmax.f32 %v6553, 0.0
        %v7017 = vmax.f32 %v6555, 0.0
        %v7018 = vmax.f32 %v6557, 0.0
        %v7019 = vmax.f32 %v6561, 0.0
        %v7020 = vmax.f32 %v6563, 0.0
        %v7021 = vmax.f32 %v6565, 0.0
        %v7022 = vmax.f32 %v6567, 0.0
        %v7023 = vmax.f32 %v6571, 0.0
        %v7024 = vmax.f32 %v6573, 0.0
        %v7025 = vmax.f32 %v6575, 0.0
        %v7026 = vmax.f32 %v6577, 0.0
        %v7027 = vmax.f32 %v6581, 0.0
        %v7028 = vmax.f32 %v6583, 0.0
        %v7029 = vmax.f32 %v6585, 0.0
        %v7030 = vmax.f32 %v6587, 0.0
        %v7031 = vmax.f32 %v6591, 0.0
        %v7032 = vmax.f32 %v6593, 0.0
        %v7033 = vmax.f32 %v6595, 0.0
        %v7034 = vmax.f32 %v6597, 0.0
        %v7035 = vmax.f32 %v6601, 0.0
        %v7036 = vmax.f32 %v6603, 0.0
        %v7037 = vmax.f32 %v6605, 0.0
        %v7038 = vmax.f32 %v6607, 0.0
        %v7039 = vmax.f32 %v6611, 0.0
        %v7040 = vmax.f32 %v6613, 0.0
        %v7041 = vmax.f32 %v6615, 0.0
        %v7042 = vmax.f32 %v6617, 0.0
        %v7043 = vmax.f32 %v6621, 0.0
        %v7044 = vmax.f32 %v6623, 0.0
        %v7045 = vmax.f32 %v6625, 0.0
        %v7046 = vmax.f32 %v6627, 0.0
        %v7047 = vmax.f32 %v6631, 0.0
        %v7048 = vmax.f32 %v6633, 0.0
        %v7049 = vmax.f32 %v6635, 0.0
        %v7050 = vmax.f32 %v6637, 0.0
        %v7051 = vmax.f32 %v6641, 0.0
        %v7052 = vmax.f32 %v6643, 0.0
        %v7053 = vmax.f32 %v6645, 0.0
        %v7054 = vmax.f32 %v6647, 0.0
        %v7055 = vmax.f32 %v6651, 0.0
        %v7056 = vmax.f32 %v6653, 0.0
        %v7057 = vmax.f32 %v6655, 0.0
        %v7058 = vmax.f32 %v6657, 0.0
        %v7059 = vmax.f32 %v6661, 0.0
        %v7060 = vmax.f32 %v6663, 0.0
        %v7061 = vmax.f32 %v6665, 0.0
        %v7062 = vmax.f32 %v6667, 0.0
        %v7063 = vmax.f32 %v6671, 0.0
        %v7064 = vmax.f32 %v6673, 0.0
        %v7065 = vmax.f32 %v6675, 0.0
        %v7066 = vmax.f32 %v6677, 0.0
        %v7067 = vmax.f32 %v6681, 0.0
        %v7068 = vmax.f32 %v6683, 0.0
        %v7069 = vmax.f32 %v6685, 0.0
        %v7070 = vmax.f32 %v6687, 0.0
        %v7071 = vmax.f32 %v6691, 0.0
        %v7072 = vmax.f32 %v6693, 0.0
        %v7073 = vmax.f32 %v6695, 0.0
        %v7074 = vmax.f32 %v6697, 0.0
        %v7075 = vmax.f32 %v6701, 0.0
        %v7076 = vmax.f32 %v6703, 0.0
        %v7077 = vmax.f32 %v6705, 0.0
        %v7078 = vmax.f32 %v6707, 0.0
        %v7079 = vmax.f32 %v6711, 0.0
        %v7080 = vmax.f32 %v6713, 0.0
        %v7081 = vmax.f32 %v6715, 0.0
        %v7082 = vmax.f32 %v6717, 0.0
        %v7083 = vmax.f32 %v6721, 0.0
        %v7084 = vmax.f32 %v6723, 0.0
        %v7085 = vmax.f32 %v6725, 0.0
        %v7086 = vmax.f32 %v6727, 0.0
        %v7087 = vmax.f32 %v6731, 0.0
        %v7088 = vmax.f32 %v6733, 0.0
        %v7089 = vmax.f32 %v6735, 0.0
        %v7090 = vmax.f32 %v6737, 0.0
        %v7091 = vmax.f32 %v6741, 0.0
        %v7092 = vmax.f32 %v6743, 0.0
        %v7093 = vmax.f32 %v6745, 0.0
        %v7094 = vmax.f32 %v6747, 0.0
        %v7095 = vmax.f32 %v6751, 0.0
        %v7096 = vmax.f32 %v6753, 0.0
        %v7097 = vmax.f32 %v6755, 0.0
        %v7098 = vmax.f32 %v6757, 0.0
        %v7099 = vmax.f32 %v6761, 0.0
        %v7100 = vmax.f32 %v6763, 0.0
        %v7101 = vmax.f32 %v6765, 0.0
        %v7102 = vmax.f32 %v6767, 0.0
        %v7103 = vmax.f32 %v6771, 0.0
        %v7104 = vmax.f32 %v6773, 0.0
        %v7105 = vmax.f32 %v6775, 0.0
        %v7106 = vmax.f32 %v6777, 0.0
        %v7107 = vmax.f32 %v6781, 0.0
        %v7108 = vmax.f32 %v6783, 0.0
        %v7109 = vmax.f32 %v6785, 0.0
        %v7110 = vmax.f32 %v6787, 0.0
        %v7111 = vmax.f32 %v6791, 0.0
        %v7112 = vmax.f32 %v6793, 0.0
        %v7113 = vmax.f32 %v6795, 0.0
        %v7114 = vmax.f32 %v6797, 0.0
        %v7115 = vmax.f32 %v6801, 0.0
        %v7116 = vmax.f32 %v6803, 0.0
        %v7117 = vmax.f32 %v6805, 0.0
        %v7118 = vmax.f32 %v6807, 0.0
        %v7119 = vmax.f32 %v6811, 0.0
        %v7120 = vmax.f32 %v6813, 0.0
        %v7121 = vmax.f32 %v6815, 0.0
        %v7122 = vmax.f32 %v6817, 0.0
        %v7123 = vmax.f32 %v6821, 0.0
        %v7124 = vmax.f32 %v6823, 0.0
        %v7125 = vmax.f32 %v6825, 0.0
        %v7126 = vmax.f32 %v6827, 0.0
        %v7127 = vmax.f32 %v6831, 0.0
        %v7128 = vmax.f32 %v6833, 0.0
        %v7129 = vmax.f32 %v6835, 0.0
        %v7130 = vmax.f32 %v6837, 0.0
        %v7131 = vmax.f32 %v6841, 0.0
        %v7132 = vmax.f32 %v6843, 0.0
        %v7133 = vmax.f32 %v6845, 0.0
        %v7134 = vmax.f32 %v6847, 0.0
        %v7135 = vmax.f32 %v6851, 0.0
        %v7136 = vmax.f32 %v6853, 0.0
        %v7137 = vmax.f32 %v6855, 0.0
        %v7138 = vmax.f32 %v6857, 0.0
        %v7139 = vmax.f32 %v6861, 0.0
        %v7140 = vmax.f32 %v6863, 0.0
        %v7141 = vmax.f32 %v6865, 0.0
        %v7142 = vmax.f32 %v6867, 0.0
        %v7143 = vmax.f32 %v6871, 0.0
        %v7144 = vmax.f32 %v6873, 0.0
        %v7145 = vmax.f32 %v6875, 0.0
        %v7146 = vmax.f32 %v6877, 0.0
        %v7147 = vmax.f32 %v6881, 0.0
        %v7148 = vmax.f32 %v6883, 0.0
        %v7149 = vmax.f32 %v6885, 0.0
        %v7150 = vmax.f32 %v6887, 0.0
        %v7151 = vmax.f32 %v6891, 0.0
        %v7152 = vmax.f32 %v6893, 0.0
        %v7153 = vmax.f32 %v6895, 0.0
        %v7154 = vmax.f32 %v6897, 0.0
        %v7155 = vmax.f32 %v6899, %v6901
        %v7156 = vmax.f32 %v7155, %v6903
        %v7157 = vmax.f32 %v7156, %v6905
        %v7158 = vmax.f32 %v7157, %v6907
        %v7159 = vmax.f32 %v7158, %v6909
        %v7160 = vmax.f32 %v7159, %v6911
        %v7161 = vmax.f32 %v7160, %v6913
        %v7162 = vmax.f32 %v7161, %v6915
        %v7163 = vmax.f32 %v7162, %v6917
        %v7164 = vmax.f32 %v7163, %v6919
        %v7165 = vmax.f32 %v7164, %v6921
        %v7166 = vmax.f32 %v7165, %v6923
        %v7167 = vmax.f32 %v7166, %v6925
        %v7168 = vmax.f32 %v7167, %v6927
        %v7169 = vmax.f32 %v7168, %v6929
        %v7170 = vmax.f32 %v7169, %v6931
        %v7171 = vmax.f32 %v7170, %v6933
        %v7172 = vmax.f32 %v7171, %v6935
        %v7173 = vmax.f32 %v7172, %v6937
        %v7174 = vmax.f32 %v7173, %v6939
        %v7175 = vmax.f32 %v7174, %v6941
        %v7176 = vmax.f32 %v7175, %v6943
        %v7177 = vmax.f32 %v7176, %v6945
        %v7178 = vmax.f32 %v7177, %v6947
        %v7179 = vmax.f32 %v7178, %v6949
        %v7180 = vmax.f32 %v7179, %v6951
        %v7181 = vmax.f32 %v7180, %v6953
        %v7182 = vmax.f32 %v7181, %v6955
        %v7183 = vmax.f32 %v7182, %v6957
        %v7184 = vmax.f32 %v7183, %v6959
        %v7185 = vmax.f32 %v7184, %v6961
        %v7186 = vrot.slane %v7185, 4
        %v7187 = vmax.f32 %v7185, %v7186
        %v7188 = vrot.slane %v7187, 2
        %v7189 = vmax.f32 %v7187, %v7188
        %v7190 = vrot.slane %v7189, 1
        %v7191 = vmax.f32 %v7189, %v7190
        %v7192 = vmax.f32 %v6900, %v6902
        %v7193 = vmax.f32 %v7192, %v6904
        %v7194 = vmax.f32 %v7193, %v6906
        %v7195 = vmax.f32 %v7194, %v6908
        %v7196 = vmax.f32 %v7195, %v6910
        %v7197 = vmax.f32 %v7196, %v6912
        %v7198 = vmax.f32 %v7197, %v6914
        %v7199 = vmax.f32 %v7198, %v6916
        %v7200 = vmax.f32 %v7199, %v6918
        %v7201 = vmax.f32 %v7200, %v6920
        %v7202 = vmax.f32 %v7201, %v6922
        %v7203 = vmax.f32 %v7202, %v6924
        %v7204 = vmax.f32 %v7203, %v6926
        %v7205 = vmax.f32 %v7204, %v6928
        %v7206 = vmax.f32 %v7205, %v6930
        %v7207 = vmax.f32 %v7206, %v6932
        %v7208 = vmax.f32 %v7207, %v6934
        %v7209 = vmax.f32 %v7208, %v6936
        %v7210 = vmax.f32 %v7209, %v6938
        %v7211 = vmax.f32 %v7210, %v6940
        %v7212 = vmax.f32 %v7211, %v6942
        %v7213 = vmax.f32 %v7212, %v6944
        %v7214 = vmax.f32 %v7213, %v6946
        %v7215 = vmax.f32 %v7214, %v6948
        %v7216 = vmax.f32 %v7215, %v6950
        %v7217 = vmax.f32 %v7216, %v6952
        %v7218 = vmax.f32 %v7217, %v6954
        %v7219 = vmax.f32 %v7218, %v6956
        %v7220 = vmax.f32 %v7219, %v6958
        %v7221 = vmax.f32 %v7220, %v6960
        %v7222 = vmax.f32 %v7221, %v6962
        %v7223 = vrot.slane %v7222, 4
        %v7224 = vmax.f32 %v7222, %v7223
        %v7225 = vrot.slane %v7224, 2
        %v7226 = vmax.f32 %v7224, %v7225
        %v7227 = vrot.slane %v7226, 1
        %v7228 = vmax.f32 %v7226, %v7227
        %v7229 = vmax.f32 %v6963, %v6965
        %v7230 = vmax.f32 %v7229, %v6967
        %v7231 = vmax.f32 %v7230, %v6969
        %v7232 = vmax.f32 %v7231, %v6971
        %v7233 = vmax.f32 %v7232, %v6973
        %v7234 = vmax.f32 %v7233, %v6975
        %v7235 = vmax.f32 %v7234, %v6977
        %v7236 = vmax.f32 %v7235, %v6979
        %v7237 = vmax.f32 %v7236, %v6981
        %v7238 = vmax.f32 %v7237, %v6983
        %v7239 = vmax.f32 %v7238, %v6985
        %v7240 = vmax.f32 %v7239, %v6987
        %v7241 = vmax.f32 %v7240, %v6989
        %v7242 = vmax.f32 %v7241, %v6991
        %v7243 = vmax.f32 %v7242, %v6993
        %v7244 = vmax.f32 %v7243, %v6995
        %v7245 = vmax.f32 %v7244, %v6997
        %v7246 = vmax.f32 %v7245, %v6999
        %v7247 = vmax.f32 %v7246, %v7001
        %v7248 = vmax.f32 %v7247, %v7003
        %v7249 = vmax.f32 %v7248, %v7005
        %v7250 = vmax.f32 %v7249, %v7007
        %v7251 = vmax.f32 %v7250, %v7009
        %v7252 = vmax.f32 %v7251, %v7011
        %v7253 = vmax.f32 %v7252, %v7013
        %v7254 = vmax.f32 %v7253, %v7015
        %v7255 = vmax.f32 %v7254, %v7017
        %v7256 = vmax.f32 %v7255, %v7019
        %v7257 = vmax.f32 %v7256, %v7021
        %v7258 = vmax.f32 %v7257, %v7023
        %v7259 = vmax.f32 %v7258, %v7025
        %v7260 = vrot.slane %v7259, 4
        %v7261 = vmax.f32 %v7259, %v7260
        %v7262 = vrot.slane %v7261, 2
        %v7263 = vmax.f32 %v7261, %v7262
        %v7264 = vrot.slane %v7263, 1
        %v7265 = vmax.f32 %v7263, %v7264
        %v7266 = vmax.f32 %v6964, %v6966
        %v7267 = vmax.f32 %v7266, %v6968
        %v7268 = vmax.f32 %v7267, %v6970
        %v7269 = vmax.f32 %v7268, %v6972
        %v7270 = vmax.f32 %v7269, %v6974
        %v7271 = vmax.f32 %v7270, %v6976
        %v7272 = vmax.f32 %v7271, %v6978
        %v7273 = vmax.f32 %v7272, %v6980
        %v7274 = vmax.f32 %v7273, %v6982
        %v7275 = vmax.f32 %v7274, %v6984
        %v7276 = vmax.f32 %v7275, %v6986
        %v7277 = vmax.f32 %v7276, %v6988
        %v7278 = vmax.f32 %v7277, %v6990
        %v7279 = vmax.f32 %v7278, %v6992
        %v7280 = vmax.f32 %v7279, %v6994
        %v7281 = vmax.f32 %v7280, %v6996
        %v7282 = vmax.f32 %v7281, %v6998
        %v7283 = vmax.f32 %v7282, %v7000
        %v7284 = vmax.f32 %v7283, %v7002
        %v7285 = vmax.f32 %v7284, %v7004
        %v7286 = vmax.f32 %v7285, %v7006
        %v7287 = vmax.f32 %v7286, %v7008
        %v7288 = vmax.f32 %v7287, %v7010
        %v7289 = vmax.f32 %v7288, %v7012
        %v7290 = vmax.f32 %v7289, %v7014
        %v7291 = vmax.f32 %v7290, %v7016
        %v7292 = vmax.f32 %v7291, %v7018
        %v7293 = vmax.f32 %v7292, %v7020
        %v7294 = vmax.f32 %v7293, %v7022
        %v7295 = vmax.f32 %v7294, %v7024
        %v7296 = vmax.f32 %v7295, %v7026
        %v7297 = vrot.slane %v7296, 4
        %v7298 = vmax.f32 %v7296, %v7297
        %v7299 = vrot.slane %v7298, 2
        %v7300 = vmax.f32 %v7298, %v7299
        %v7301 = vrot.slane %v7300, 1
        %v7302 = vmax.f32 %v7300, %v7301
        %v7303 = vmax.f32 %v7027, %v7029
        %v7304 = vmax.f32 %v7303, %v7031
        %v7305 = vmax.f32 %v7304, %v7033
        %v7306 = vmax.f32 %v7305, %v7035
        %v7307 = vmax.f32 %v7306, %v7037
        %v7308 = vmax.f32 %v7307, %v7039
        %v7309 = vmax.f32 %v7308, %v7041
        %v7310 = vmax.f32 %v7309, %v7043
        %v7311 = vmax.f32 %v7310, %v7045
        %v7312 = vmax.f32 %v7311, %v7047
        %v7313 = vmax.f32 %v7312, %v7049
        %v7314 = vmax.f32 %v7313, %v7051
        %v7315 = vmax.f32 %v7314, %v7053
        %v7316 = vmax.f32 %v7315, %v7055
        %v7317 = vmax.f32 %v7316, %v7057
        %v7318 = vmax.f32 %v7317, %v7059
        %v7319 = vmax.f32 %v7318, %v7061
        %v7320 = vmax.f32 %v7319, %v7063
        %v7321 = vmax.f32 %v7320, %v7065
        %v7322 = vmax.f32 %v7321, %v7067
        %v7323 = vmax.f32 %v7322, %v7069
        %v7324 = vmax.f32 %v7323, %v7071
        %v7325 = vmax.f32 %v7324, %v7073
        %v7326 = vmax.f32 %v7325, %v7075
        %v7327 = vmax.f32 %v7326, %v7077
        %v7328 = vmax.f32 %v7327, %v7079
        %v7329 = vmax.f32 %v7328, %v7081
        %v7330 = vmax.f32 %v7329, %v7083
        %v7331 = vmax.f32 %v7330, %v7085
        %v7332 = vmax.f32 %v7331, %v7087
        %v7333 = vmax.f32 %v7332, %v7089
        %v7334 = vrot.slane %v7333, 4
        %v7335 = vmax.f32 %v7333, %v7334
        %v7336 = vrot.slane %v7335, 2
        %v7337 = vmax.f32 %v7335, %v7336
        %v7338 = vrot.slane %v7337, 1
        %v7339 = vmax.f32 %v7337, %v7338
        %v7340 = vmax.f32 %v7028, %v7030
        %v7341 = vmax.f32 %v7340, %v7032
        %v7342 = vmax.f32 %v7341, %v7034
        %v7343 = vmax.f32 %v7342, %v7036
        %v7344 = vmax.f32 %v7343, %v7038
        %v7345 = vmax.f32 %v7344, %v7040
        %v7346 = vmax.f32 %v7345, %v7042
        %v7347 = vmax.f32 %v7346, %v7044
        %v7348 = vmax.f32 %v7347, %v7046
        %v7349 = vmax.f32 %v7348, %v7048
        %v7350 = vmax.f32 %v7349, %v7050
        %v7351 = vmax.f32 %v7350, %v7052
        %v7352 = vmax.f32 %v7351, %v7054
        %v7353 = vmax.f32 %v7352, %v7056
        %v7354 = vmax.f32 %v7353, %v7058
        %v7355 = vmax.f32 %v7354, %v7060
        %v7356 = vmax.f32 %v7355, %v7062
        %v7357 = vmax.f32 %v7356, %v7064
        %v7358 = vmax.f32 %v7357, %v7066
        %v7359 = vmax.f32 %v7358, %v7068
        %v7360 = vmax.f32 %v7359, %v7070
        %v7361 = vmax.f32 %v7360, %v7072
        %v7362 = vmax.f32 %v7361, %v7074
        %v7363 = vmax.f32 %v7362, %v7076
        %v7364 = vmax.f32 %v7363, %v7078
        %v7365 = vmax.f32 %v7364, %v7080
        %v7366 = vmax.f32 %v7365, %v7082
        %v7367 = vmax.f32 %v7366, %v7084
        %v7368 = vmax.f32 %v7367, %v7086
        %v7369 = vmax.f32 %v7368, %v7088
        %v7370 = vmax.f32 %v7369, %v7090
        %v7371 = vrot.slane %v7370, 4
        %v7372 = vmax.f32 %v7370, %v7371
        %v7373 = vrot.slane %v7372, 2
        %v7374 = vmax.f32 %v7372, %v7373
        %v7375 = vrot.slane %v7374, 1
        %v7376 = vmax.f32 %v7374, %v7375
        %v7377 = vmax.f32 %v7091, %v7093
        %v7378 = vmax.f32 %v7377, %v7095
        %v7379 = vmax.f32 %v7378, %v7097
        %v7380 = vmax.f32 %v7379, %v7099
        %v7381 = vmax.f32 %v7380, %v7101
        %v7382 = vmax.f32 %v7381, %v7103
        %v7383 = vmax.f32 %v7382, %v7105
        %v7384 = vmax.f32 %v7383, %v7107
        %v7385 = vmax.f32 %v7384, %v7109
        %v7386 = vmax.f32 %v7385, %v7111
        %v7387 = vmax.f32 %v7386, %v7113
        %v7388 = vmax.f32 %v7387, %v7115
        %v7389 = vmax.f32 %v7388, %v7117
        %v7390 = vmax.f32 %v7389, %v7119
        %v7391 = vmax.f32 %v7390, %v7121
        %v7392 = vmax.f32 %v7391, %v7123
        %v7393 = vmax.f32 %v7392, %v7125
        %v7394 = vmax.f32 %v7393, %v7127
        %v7395 = vmax.f32 %v7394, %v7129
        %v7396 = vmax.f32 %v7395, %v7131
        %v7397 = vmax.f32 %v7396, %v7133
        %v7398 = vmax.f32 %v7397, %v7135
        %v7399 = vmax.f32 %v7398, %v7137
        %v7400 = vmax.f32 %v7399, %v7139
        %v7401 = vmax.f32 %v7400, %v7141
        %v7402 = vmax.f32 %v7401, %v7143
        %v7403 = vmax.f32 %v7402, %v7145
        %v7404 = vmax.f32 %v7403, %v7147
        %v7405 = vmax.f32 %v7404, %v7149
        %v7406 = vmax.f32 %v7405, %v7151
        %v7407 = vmax.f32 %v7406, %v7153
        %v7408 = vrot.slane %v7407, 4
        %v7409 = vmax.f32 %v7407, %v7408
        %v7410 = vrot.slane %v7409, 2
        %v7411 = vmax.f32 %v7409, %v7410
        %v7412 = vrot.slane %v7411, 1
        %v7413 = vmax.f32 %v7411, %v7412
        %v7414 = vmax.f32 %v7092, %v7094
        %v7415 = vmax.f32 %v7414, %v7096
        %v7416 = vmax.f32 %v7415, %v7098
        %v7417 = vmax.f32 %v7416, %v7100
        %v7418 = vmax.f32 %v7417, %v7102
        %v7419 = vmax.f32 %v7418, %v7104
        %v7420 = vmax.f32 %v7419, %v7106
        %v7421 = vmax.f32 %v7420, %v7108
        %v7422 = vmax.f32 %v7421, %v7110
        %v7423 = vmax.f32 %v7422, %v7112
        %v7424 = vmax.f32 %v7423, %v7114
        %v7425 = vmax.f32 %v7424, %v7116
        %v7426 = vmax.f32 %v7425, %v7118
        %v7427 = vmax.f32 %v7426, %v7120
        %v7428 = vmax.f32 %v7427, %v7122
        %v7429 = vmax.f32 %v7428, %v7124
        %v7430 = vmax.f32 %v7429, %v7126
        %v7431 = vmax.f32 %v7430, %v7128
        %v7432 = vmax.f32 %v7431, %v7130
        %v7433 = vmax.f32 %v7432, %v7132
        %v7434 = vmax.f32 %v7433, %v7134
        %v7435 = vmax.f32 %v7434, %v7136
        %v7436 = vmax.f32 %v7435, %v7138
        %v7437 = vmax.f32 %v7436, %v7140
        %v7438 = vmax.f32 %v7437, %v7142
        %v7439 = vmax.f32 %v7438, %v7144
        %v7440 = vmax.f32 %v7439, %v7146
        %v7441 = vmax.f32 %v7440, %v7148
        %v7442 = vmax.f32 %v7441, %v7150
        %v7443 = vmax.f32 %v7442, %v7152
        %v7444 = vmax.f32 %v7443, %v7154
        %v7445 = vrot.slane %v7444, 4
        %v7446 = vmax.f32 %v7444, %v7445
        %v7447 = vrot.slane %v7446, 2
        %v7448 = vmax.f32 %v7446, %v7447
        %v7449 = vrot.slane %v7448, 1
        %v7450 = vmax.f32 %v7448, %v7449
        %v7451 = vld [vmem:[%s405 + $0x8] sm:$0xff]
        %v7460 = vcombine.low %v7191, %v7228
        %v7461 = vcombine.low %v7265, %v7302
        %v7462 = vcombine.low %v7339, %v7376
        %v7463 = vcombine.low %v7413, %v7450
        %v7464 = vrot.slane %v7461, 7
        %v7465 = vsel %vm6101, %v7464, %v7460
        %v7466 = vsel %vm6103, %v7464, %v7465
        %v7467 = vrot.slane %v7462, 6
        %v7468 = vsel %vm6106, %v7467, %v7466
        %v7469 = vsel %vm6108, %v7467, %v7468
        %v7470 = vrot.slane %v7463, 5
        %v7471 = vsel %vm6111, %v7470, %v7469
        %v7472 = vsel %vm6113, %v7470, %v7471
        %v7474 = vmax.f32 %v7451, %v7472
        %7475 = vst [vmem:[%s405 + $0x8] sm:$0xff] %v7474
        %v7476 = vld [vmem:[%s9 + $0x10] sm:$0xff]
        %v7477 = vld [vmem:[%s9 + $0x30] sm:$0xff]
        %v7478 = vld [vmem:[%s9 + $0x50] sm:$0xff]
        %v7479 = vld [vmem:[%s9 + $0x70] sm:$0xff]
        %v7480 = vld [vmem:[%s9 + $0x90] sm:$0xff]
        %v7481 = vld [vmem:[%s9 + $0xb0] sm:$0xff]
        %v7482 = vld [vmem:[%s9 + $0xd0] sm:$0xff]
        %v7483 = vld [vmem:[%s9 + $0xf0] sm:$0xff]
        %v7484 = vld [vmem:[%s9 + $0x110] sm:$0xff]
        %v7485 = vld [vmem:[%s9 + $0x130] sm:$0xff]
        %v7486 = vld [vmem:[%s9 + $0x150] sm:$0xff]
        %v7487 = vld [vmem:[%s9 + $0x170] sm:$0xff]
        %v7488 = vld [vmem:[%s9 + $0x190] sm:$0xff]
        %v7489 = vld [vmem:[%s9 + $0x1b0] sm:$0xff]
        %v7490 = vld [vmem:[%s9 + $0x1d0] sm:$0xff]
        %v7491 = vld [vmem:[%s9 + $0x1f0] sm:$0xff]
        %v7492 = vld [vmem:[%s10 + $0x4] sm:$0x3]
        %v7494 = vlaneseq
        %v7495 = vshrl.u32 %v7494, 7
        %v7496 = vsub.s32 0, %v7495
        %v7497 = vrot.slane %v7492, %v7496
        %v7498 = vlaneseq
        %v7499 = vshrl.u32 %v7498, 7
        %v7500 = vsub.s32 1, %v7499
        %v7501 = vrot.slane %v7492, %v7500
        %v7520 = vunpack.c.l.b16 %v7476
        %v7521 = vunpack.c.h.b16 %v7476
        %v7522 = vunpack.c.l.b16 %v7477
        %v7523 = vunpack.c.h.b16 %v7477
        %v7524 = vunpack.c.l.b16 %v7478
        %v7525 = vunpack.c.h.b16 %v7478
        %v7526 = vunpack.c.l.b16 %v7479
        %v7527 = vunpack.c.h.b16 %v7479
        %v7528 = vunpack.c.l.b16 %v7480
        %v7529 = vunpack.c.h.b16 %v7480
        %v7530 = vunpack.c.l.b16 %v7481
        %v7531 = vunpack.c.h.b16 %v7481
        %v7532 = vunpack.c.l.b16 %v7482
        %v7533 = vunpack.c.h.b16 %v7482
        %v7534 = vunpack.c.l.b16 %v7483
        %v7535 = vunpack.c.h.b16 %v7483
        %v7536 = vunpack.c.l.b16 %v7484
        %v7537 = vunpack.c.h.b16 %v7484
        %v7538 = vunpack.c.l.b16 %v7485
        %v7539 = vunpack.c.h.b16 %v7485
        %v7540 = vunpack.c.l.b16 %v7486
        %v7541 = vunpack.c.h.b16 %v7486
        %v7542 = vunpack.c.l.b16 %v7487
        %v7543 = vunpack.c.h.b16 %v7487
        %v7544 = vunpack.c.l.b16 %v7488
        %v7545 = vunpack.c.h.b16 %v7488
        %v7546 = vunpack.c.l.b16 %v7489
        %v7547 = vunpack.c.h.b16 %v7489
        %v7548 = vunpack.c.l.b16 %v7490
        %v7549 = vunpack.c.h.b16 %v7490
        %v7550 = vunpack.c.l.b16 %v7491
        %v7551 = vunpack.c.h.b16 %v7491
        %v7552 = vpack.c.b16 %v7522, %v7520
        %v7553 = vpack.c.b16 %v7523, %v7521
        %v7554 = vpack.c.b16 %v7526, %v7524
        %v7555 = vpack.c.b16 %v7527, %v7525
        %v7556 = vpack.c.b16 %v7530, %v7528
        %v7557 = vpack.c.b16 %v7531, %v7529
        %v7558 = vpack.c.b16 %v7534, %v7532
        %v7559 = vpack.c.b16 %v7535, %v7533
        %v7560 = vpack.c.b16 %v7538, %v7536
        %v7561 = vpack.c.b16 %v7539, %v7537
        %v7562 = vpack.c.b16 %v7542, %v7540
        %v7563 = vpack.c.b16 %v7543, %v7541
        %v7564 = vpack.c.b16 %v7546, %v7544
        %v7565 = vpack.c.b16 %v7547, %v7545
        %v7566 = vpack.c.b16 %v7550, %v7548
        %v7567 = vpack.c.b16 %v7551, %v7549
        %7584 = vmatprep.subr.bf16.mxu0 %v7553
        %7585 = vmatpush1.bf16.msra.mxu0 %v7552
        %7586 = vmatprep.subr.bf16.mxu0 %v7555
        %7587 = vmatpush1.bf16.msra.mxu0 %v7554
        %7588 = vmatprep.subr.bf16.mxu0 %v7557
        %7589 = vmatpush1.bf16.msra.mxu0 %v7556
        %7590 = vmatprep.subr.bf16.mxu0 %v7559
        %7591 = vmatpush1.bf16.msra.mxu0 %v7558
        %7592 = vmatprep.subr.bf16.mxu0 %v7561
        %7593 = vmatpush1.bf16.msra.mxu0 %v7560
        %7594 = vmatprep.subr.bf16.mxu0 %v7563
        %7595 = vmatpush1.bf16.msra.mxu0 %v7562
        %7596 = vmatprep.subr.bf16.mxu0 %v7565
        %7597 = vmatpush1.bf16.msra.mxu0 %v7564
        %7598 = vmatprep.subr.bf16.mxu0 %v7567
        %7599 = vmatpush1.bf16.msra.mxu0 %v7566
        %7600 = vmatprep.subr.bf16.mxu0 0
        %7601 = vmatpush1.bf16.msra.mxu0 0
        %7602 = vmatprep.subr.bf16.mxu0 0
        %7603 = vmatpush1.bf16.msra.mxu0 0
        %7604 = vmatprep.subr.bf16.mxu0 0
        %7605 = vmatpush1.bf16.msra.mxu0 0
        %7606 = vmatprep.subr.bf16.mxu0 0
        %7607 = vmatpush1.bf16.msra.mxu0 0
        %7608 = vmatprep.subr.bf16.mxu0 0
        %7609 = vmatpush1.bf16.msra.mxu0 0
        %7610 = vmatprep.subr.bf16.mxu0 0
        %7611 = vmatpush1.bf16.msra.mxu0 0
        %7612 = vmatprep.subr.bf16.mxu0 0
        %7613 = vmatpush1.bf16.msra.mxu0 0
        %7614 = vmatprep.subr.bf16.mxu0 0
        %7615 = vmatpush1.bf16.msra.mxu0 0
        %7616 = vmatprep.mubr.bf16.mxu0 0
        %7617 = vmatmul.mubr.bf16.gmra.mrb[0].mxu0 %v4682
        %v7618 = vpop.f32.mrb[0].mxu0
        %v7619 = vadd.f32 %v7497, %v7618
        %v7620 = vpop.f32.mrb[0].mxu0
        %v7621 = vadd.f32 %v7501, %v7620
        %v7622 = vpop.f32.mrb[0].mxu0
        %v7623 = vadd.f32 %v7497, %v7622
        %v7624 = vpop.f32.mrb[0].mxu0
        %v7625 = vadd.f32 %v7501, %v7624
        %7626 = vmatprep.mubr.bf16.mxu0 0
        %7627 = vmatmul.mubr.bf16.gmra.mrb[0].mxu0 %v4683
        %v7628 = vpop.f32.mrb[0].mxu0
        %v7629 = vadd.f32 %v7497, %v7628
        %v7630 = vpop.f32.mrb[0].mxu0
        %v7631 = vadd.f32 %v7501, %v7630
        %v7632 = vpop.f32.mrb[0].mxu0
        %v7633 = vadd.f32 %v7497, %v7632
        %v7634 = vpop.f32.mrb[0].mxu0
        %v7635 = vadd.f32 %v7501, %v7634
        %7636 = vmatprep.mubr.bf16.mxu0 0
        %7637 = vmatmul.mubr.bf16.gmra.mrb[0].mxu0 %v4684
        %v7638 = vpop.f32.mrb[0].mxu0
        %v7639 = vadd.f32 %v7497, %v7638
        %v7640 = vpop.f32.mrb[0].mxu0
        %v7641 = vadd.f32 %v7501, %v7640
        %v7642 = vpop.f32.mrb[0].mxu0
        %v7643 = vadd.f32 %v7497, %v7642
        %v7644 = vpop.f32.mrb[0].mxu0
        %v7645 = vadd.f32 %v7501, %v7644
        %7646 = vmatprep.mubr.bf16.mxu0 0
        %7647 = vmatmul.mubr.bf16.gmra.mrb[0].mxu0 %v4685
        %v7648 = vpop.f32.mrb[0].mxu0
        %v7649 = vadd.f32 %v7497, %v7648
        %v7650 = vpop.f32.mrb[0].mxu0
        %v7651 = vadd.f32 %v7501, %v7650
        %v7652 = vpop.f32.mrb[0].mxu0
        %v7653 = vadd.f32 %v7497, %v7652
        %v7654 = vpop.f32.mrb[0].mxu0
        %v7655 = vadd.f32 %v7501, %v7654
        %7656 = vmatprep.mubr.bf16.mxu0 0
        %7657 = vmatmul.mubr.bf16.gmra.mrb[0].mxu0 %v4686
        %v7658 = vpop.f32.mrb[0].mxu0
        %v7659 = vadd.f32 %v7497, %v7658
        %v7660 = vpop.f32.mrb[0].mxu0
        %v7661 = vadd.f32 %v7501, %v7660
        %v7662 = vpop.f32.mrb[0].mxu0
        %v7663 = vadd.f32 %v7497, %v7662
        %v7664 = vpop.f32.mrb[0].mxu0
        %v7665 = vadd.f32 %v7501, %v7664
        %7666 = vmatprep.mubr.bf16.mxu0 0
        %7667 = vmatmul.mubr.bf16.gmra.mrb[0].mxu0 %v4687
        %v7668 = vpop.f32.mrb[0].mxu0
        %v7669 = vadd.f32 %v7497, %v7668
        %v7670 = vpop.f32.mrb[0].mxu0
        %v7671 = vadd.f32 %v7501, %v7670
        %v7672 = vpop.f32.mrb[0].mxu0
        %v7673 = vadd.f32 %v7497, %v7672
        %v7674 = vpop.f32.mrb[0].mxu0
        %v7675 = vadd.f32 %v7501, %v7674
        %7676 = vmatprep.mubr.bf16.mxu0 0
        %7677 = vmatmul.mubr.bf16.gmra.mrb[0].mxu0 %v4688
        %v7678 = vpop.f32.mrb[0].mxu0
        %v7679 = vadd.f32 %v7497, %v7678
        %v7680 = vpop.f32.mrb[0].mxu0
        %v7681 = vadd.f32 %v7501, %v7680
        %v7682 = vpop.f32.mrb[0].mxu0
        %v7683 = vadd.f32 %v7497, %v7682
        %v7684 = vpop.f32.mrb[0].mxu0
        %v7685 = vadd.f32 %v7501, %v7684
        %7686 = vmatprep.mubr.bf16.mxu0 0
        %7687 = vmatmul.mubr.bf16.gmra.mrb[0].mxu0 %v4689
        %v7688 = vpop.f32.mrb[0].mxu0
        %v7689 = vadd.f32 %v7497, %v7688
        %v7690 = vpop.f32.mrb[0].mxu0
        %v7691 = vadd.f32 %v7501, %v7690
        %v7692 = vpop.f32.mrb[0].mxu0
        %v7693 = vadd.f32 %v7497, %v7692
        %v7694 = vpop.f32.mrb[0].mxu0
        %v7695 = vadd.f32 %v7501, %v7694
        %7696 = vmatprep.mubr.bf16.mxu0 0
        %7697 = vmatmul.mubr.bf16.gmra.mrb[0].mxu0 %v4690
        %v7698 = vpop.f32.mrb[0].mxu0
        %v7699 = vadd.f32 %v7497, %v7698
        %v7700 = vpop.f32.mrb[0].mxu0
        %v7701 = vadd.f32 %v7501, %v7700
        %v7702 = vpop.f32.mrb[0].mxu0
        %v7703 = vadd.f32 %v7497, %v7702
        %v7704 = vpop.f32.mrb[0].mxu0
        %v7705 = vadd.f32 %v7501, %v7704
        %7706 = vmatprep.mubr.bf16.mxu0 0
        %7707 = vmatmul.mubr.bf16.gmra.mrb[0].mxu0 %v4691
        %v7708 = vpop.f32.mrb[0].mxu0
        %v7709 = vadd.f32 %v7497, %v7708
        %v7710 = vpop.f32.mrb[0].mxu0
        %v7711 = vadd.f32 %v7501, %v7710
        %v7712 = vpop.f32.mrb[0].mxu0
        %v7713 = vadd.f32 %v7497, %v7712
        %v7714 = vpop.f32.mrb[0].mxu0
        %v7715 = vadd.f32 %v7501, %v7714
        %7716 = vmatprep.mubr.bf16.mxu0 0
        %7717 = vmatmul.mubr.bf16.gmra.mrb[0].mxu0 %v4692
        %v7718 = vpop.f32.mrb[0].mxu0
        %v7719 = vadd.f32 %v7497, %v7718
        %v7720 = vpop.f32.mrb[0].mxu0
        %v7721 = vadd.f32 %v7501, %v7720
        %v7722 = vpop.f32.mrb[0].mxu0
        %v7723 = vadd.f32 %v7497, %v7722
        %v7724 = vpop.f32.mrb[0].mxu0
        %v7725 = vadd.f32 %v7501, %v7724
        %7726 = vmatprep.mubr.bf16.mxu0 0
        %7727 = vmatmul.mubr.bf16.gmra.mrb[0].mxu0 %v4693
        %v7728 = vpop.f32.mrb[0].mxu0
        %v7729 = vadd.f32 %v7497, %v7728
        %v7730 = vpop.f32.mrb[0].mxu0
        %v7731 = vadd.f32 %v7501, %v7730
        %v7732 = vpop.f32.mrb[0].mxu0
        %v7733 = vadd.f32 %v7497, %v7732
        %v7734 = vpop.f32.mrb[0].mxu0
        %v7735 = vadd.f32 %v7501, %v7734
        %7736 = vmatprep.mubr.bf16.mxu0 0
        %7737 = vmatmul.mubr.bf16.gmra.mrb[0].mxu0 %v4694
        %v7738 = vpop.f32.mrb[0].mxu0
        %v7739 = vadd.f32 %v7497, %v7738
        %v7740 = vpop.f32.mrb[0].mxu0
        %v7741 = vadd.f32 %v7501, %v7740
        %v7742 = vpop.f32.mrb[0].mxu0
        %v7743 = vadd.f32 %v7497, %v7742
        %v7744 = vpop.f32.mrb[0].mxu0
        %v7745 = vadd.f32 %v7501, %v7744
        %7746 = vmatprep.mubr.bf16.mxu0 0
        %7747 = vmatmul.mubr.bf16.gmra.mrb[0].mxu0 %v4695
        %v7748 = vpop.f32.mrb[0].mxu0
        %v7749 = vadd.f32 %v7497, %v7748
        %v7750 = vpop.f32.mrb[0].mxu0
        %v7751 = vadd.f32 %v7501, %v7750
        %v7752 = vpop.f32.mrb[0].mxu0
        %v7753 = vadd.f32 %v7497, %v7752
        %v7754 = vpop.f32.mrb[0].mxu0
        %v7755 = vadd.f32 %v7501, %v7754
        %7756 = vmatprep.mubr.bf16.mxu0 0
        %7757 = vmatmul.mubr.bf16.gmra.mrb[0].mxu0 %v4696
        %v7758 = vpop.f32.mrb[0].mxu0
        %v7759 = vadd.f32 %v7497, %v7758
        %v7760 = vpop.f32.mrb[0].mxu0
        %v7761 = vadd.f32 %v7501, %v7760
        %v7762 = vpop.f32.mrb[0].mxu0
        %v7763 = vadd.f32 %v7497, %v7762
        %v7764 = vpop.f32.mrb[0].mxu0
        %v7765 = vadd.f32 %v7501, %v7764
        %7766 = vmatprep.mubr.bf16.mxu0 0
        %7767 = vmatmul.mubr.bf16.gmra.mrb[0].mxu0 %v4697
        %v7768 = vpop.f32.mrb[0].mxu0
        %v7769 = vadd.f32 %v7497, %v7768
        %v7770 = vpop.f32.mrb[0].mxu0
        %v7771 = vadd.f32 %v7501, %v7770
        %v7772 = vpop.f32.mrb[0].mxu0
        %v7773 = vadd.f32 %v7497, %v7772
        %v7774 = vpop.f32.mrb[0].mxu0
        %v7775 = vadd.f32 %v7501, %v7774
        %7776 = vmatprep.mubr.bf16.mxu0 0
        %7777 = vmatmul.mubr.bf16.gmra.mrb[0].mxu0 %v4698
        %v7778 = vpop.f32.mrb[0].mxu0
        %v7779 = vadd.f32 %v7497, %v7778
        %v7780 = vpop.f32.mrb[0].mxu0
        %v7781 = vadd.f32 %v7501, %v7780
        %v7782 = vpop.f32.mrb[0].mxu0
        %v7783 = vadd.f32 %v7497, %v7782
        %v7784 = vpop.f32.mrb[0].mxu0
        %v7785 = vadd.f32 %v7501, %v7784
        %7786 = vmatprep.mubr.bf16.mxu0 0
        %7787 = vmatmul.mubr.bf16.gmra.mrb[0].mxu0 %v4699
        %v7788 = vpop.f32.mrb[0].mxu0
        %v7789 = vadd.f32 %v7497, %v7788
        %v7790 = vpop.f32.mrb[0].mxu0
        %v7791 = vadd.f32 %v7501, %v7790
        %v7792 = vpop.f32.mrb[0].mxu0
        %v7793 = vadd.f32 %v7497, %v7792
        %v7794 = vpop.f32.mrb[0].mxu0
        %v7795 = vadd.f32 %v7501, %v7794
        %7796 = vmatprep.mubr.bf16.mxu0 0
        %7797 = vmatmul.mubr.bf16.gmra.mrb[0].mxu0 %v4700
        %v7798 = vpop.f32.mrb[0].mxu0
        %v7799 = vadd.f32 %v7497, %v7798
        %v7800 = vpop.f32.mrb[0].mxu0
        %v7801 = vadd.f32 %v7501, %v7800
        %v7802 = vpop.f32.mrb[0].mxu0
        %v7803 = vadd.f32 %v7497, %v7802
        %v7804 = vpop.f32.mrb[0].mxu0
        %v7805 = vadd.f32 %v7501, %v7804
        %7806 = vmatprep.mubr.bf16.mxu0 0
        %7807 = vmatmul.mubr.bf16.gmra.mrb[0].mxu0 %v4701
        %v7808 = vpop.f32.mrb[0].mxu0
        %v7809 = vadd.f32 %v7497, %v7808
        %v7810 = vpop.f32.mrb[0].mxu0
        %v7811 = vadd.f32 %v7501, %v7810
        %v7812 = vpop.f32.mrb[0].mxu0
        %v7813 = vadd.f32 %v7497, %v7812
        %v7814 = vpop.f32.mrb[0].mxu0
        %v7815 = vadd.f32 %v7501, %v7814
        %7816 = vmatprep.mubr.bf16.mxu0 0
        %7817 = vmatmul.mubr.bf16.gmra.mrb[0].mxu0 %v4702
        %v7818 = vpop.f32.mrb[0].mxu0
        %v7819 = vadd.f32 %v7497, %v7818
        %v7820 = vpop.f32.mrb[0].mxu0
        %v7821 = vadd.f32 %v7501, %v7820
        %v7822 = vpop.f32.mrb[0].mxu0
        %v7823 = vadd.f32 %v7497, %v7822
        %v7824 = vpop.f32.mrb[0].mxu0
        %v7825 = vadd.f32 %v7501, %v7824
        %7826 = vmatprep.mubr.bf16.mxu0 0
        %7827 = vmatmul.mubr.bf16.gmra.mrb[0].mxu0 %v4703
        %v7828 = vpop.f32.mrb[0].mxu0
        %v7829 = vadd.f32 %v7497, %v7828
        %v7830 = vpop.f32.mrb[0].mxu0
        %v7831 = vadd.f32 %v7501, %v7830
        %v7832 = vpop.f32.mrb[0].mxu0
        %v7833 = vadd.f32 %v7497, %v7832
        %v7834 = vpop.f32.mrb[0].mxu0
        %v7835 = vadd.f32 %v7501, %v7834
        %7836 = vmatprep.mubr.bf16.mxu0 0
        %7837 = vmatmul.mubr.bf16.gmra.mrb[0].mxu0 %v4704
        %v7838 = vpop.f32.mrb[0].mxu0
        %v7839 = vadd.f32 %v7497, %v7838
        %v7840 = vpop.f32.mrb[0].mxu0
        %v7841 = vadd.f32 %v7501, %v7840
        %v7842 = vpop.f32.mrb[0].mxu0
        %v7843 = vadd.f32 %v7497, %v7842
        %v7844 = vpop.f32.mrb[0].mxu0
        %v7845 = vadd.f32 %v7501, %v7844
        %7846 = vmatprep.mubr.bf16.mxu0 0
        %7847 = vmatmul.mubr.bf16.gmra.mrb[0].mxu0 %v4705
        %v7848 = vpop.f32.mrb[0].mxu0
        %v7849 = vadd.f32 %v7497, %v7848
        %v7850 = vpop.f32.mrb[0].mxu0
        %v7851 = vadd.f32 %v7501, %v7850
        %v7852 = vpop.f32.mrb[0].mxu0
        %v7853 = vadd.f32 %v7497, %v7852
        %v7854 = vpop.f32.mrb[0].mxu0
        %v7855 = vadd.f32 %v7501, %v7854
        %7856 = vmatprep.mubr.bf16.mxu0 0
        %7857 = vmatmul.mubr.bf16.gmra.mrb[0].mxu0 %v4706
        %v7858 = vpop.f32.mrb[0].mxu0
        %v7859 = vadd.f32 %v7497, %v7858
        %v7860 = vpop.f32.mrb[0].mxu0
        %v7861 = vadd.f32 %v7501, %v7860
        %v7862 = vpop.f32.mrb[0].mxu0
        %v7863 = vadd.f32 %v7497, %v7862
        %v7864 = vpop.f32.mrb[0].mxu0
        %v7865 = vadd.f32 %v7501, %v7864
        %7866 = vmatprep.mubr.bf16.mxu0 0
        %7867 = vmatmul.mubr.bf16.gmra.mrb[0].mxu0 %v4707
        %v7868 = vpop.f32.mrb[0].mxu0
        %v7869 = vadd.f32 %v7497, %v7868
        %v7870 = vpop.f32.mrb[0].mxu0
        %v7871 = vadd.f32 %v7501, %v7870
        %v7872 = vpop.f32.mrb[0].mxu0
        %v7873 = vadd.f32 %v7497, %v7872
        %v7874 = vpop.f32.mrb[0].mxu0
        %v7875 = vadd.f32 %v7501, %v7874
        %7876 = vmatprep.mubr.bf16.mxu0 0
        %7877 = vmatmul.mubr.bf16.gmra.mrb[0].mxu0 %v4708
        %v7878 = vpop.f32.mrb[0].mxu0
        %v7879 = vadd.f32 %v7497, %v7878
        %v7880 = vpop.f32.mrb[0].mxu0
        %v7881 = vadd.f32 %v7501, %v7880
        %v7882 = vpop.f32.mrb[0].mxu0
        %v7883 = vadd.f32 %v7497, %v7882
        %v7884 = vpop.f32.mrb[0].mxu0
        %v7885 = vadd.f32 %v7501, %v7884
        %7886 = vmatprep.mubr.bf16.mxu0 0
        %7887 = vmatmul.mubr.bf16.gmra.mrb[0].mxu0 %v4709
        %v7888 = vpop.f32.mrb[0].mxu0
        %v7889 = vadd.f32 %v7497, %v7888
        %v7890 = vpop.f32.mrb[0].mxu0
        %v7891 = vadd.f32 %v7501, %v7890
        %v7892 = vpop.f32.mrb[0].mxu0
        %v7893 = vadd.f32 %v7497, %v7892
        %v7894 = vpop.f32.mrb[0].mxu0
        %v7895 = vadd.f32 %v7501, %v7894
        %7896 = vmatprep.mubr.bf16.mxu0 0
        %7897 = vmatmul.mubr.bf16.gmra.mrb[0].mxu0 %v4710
        %v7898 = vpop.f32.mrb[0].mxu0
        %v7899 = vadd.f32 %v7497, %v7898
        %v7900 = vpop.f32.mrb[0].mxu0
        %v7901 = vadd.f32 %v7501, %v7900
        %v7902 = vpop.f32.mrb[0].mxu0
        %v7903 = vadd.f32 %v7497, %v7902
        %v7904 = vpop.f32.mrb[0].mxu0
        %v7905 = vadd.f32 %v7501, %v7904
        %7906 = vmatprep.mubr.bf16.mxu0 0
        %7907 = vmatmul.mubr.bf16.gmra.mrb[0].mxu0 %v4711
        %v7908 = vpop.f32.mrb[0].mxu0
        %v7909 = vadd.f32 %v7497, %v7908
        %v7910 = vpop.f32.mrb[0].mxu0
        %v7911 = vadd.f32 %v7501, %v7910
        %v7912 = vpop.f32.mrb[0].mxu0
        %v7913 = vadd.f32 %v7497, %v7912
        %v7914 = vpop.f32.mrb[0].mxu0
        %v7915 = vadd.f32 %v7501, %v7914
        %7916 = vmatprep.mubr.bf16.mxu0 0
        %7917 = vmatmul.mubr.bf16.gmra.mrb[0].mxu0 %v4712
        %v7918 = vpop.f32.mrb[0].mxu0
        %v7919 = vadd.f32 %v7497, %v7918
        %v7920 = vpop.f32.mrb[0].mxu0
        %v7921 = vadd.f32 %v7501, %v7920
        %v7922 = vpop.f32.mrb[0].mxu0
        %v7923 = vadd.f32 %v7497, %v7922
        %v7924 = vpop.f32.mrb[0].mxu0
        %v7925 = vadd.f32 %v7501, %v7924
        %7926 = vmatprep.mubr.bf16.mxu0 0
        %7927 = vmatmul.mubr.bf16.gmra.mrb[0].mxu0 %v4713
        %v7928 = vpop.f32.mrb[0].mxu0
        %v7929 = vadd.f32 %v7497, %v7928
        %v7930 = vpop.f32.mrb[0].mxu0
        %v7931 = vadd.f32 %v7501, %v7930
        %v7932 = vpop.f32.mrb[0].mxu0
        %v7933 = vadd.f32 %v7497, %v7932
        %v7934 = vpop.f32.mrb[0].mxu0
        %v7935 = vadd.f32 %v7501, %v7934
        %7936 = vmatprep.mubr.bf16.mxu0 0
        %7937 = vmatmul.mubr.bf16.gmra.mrb[0].mxu0 %v4714
        %v7938 = vpop.f32.mrb[0].mxu0
        %v7939 = vadd.f32 %v7497, %v7938
        %v7940 = vpop.f32.mrb[0].mxu0
        %v7941 = vadd.f32 %v7501, %v7940
        %v7942 = vpop.f32.mrb[0].mxu0
        %v7943 = vadd.f32 %v7497, %v7942
        %v7944 = vpop.f32.mrb[0].mxu0
        %v7945 = vadd.f32 %v7501, %v7944
        %7946 = vmatprep.mubr.bf16.mxu0 0
        %7947 = vmatmul.mubr.bf16.gmra.mrb[0].mxu0 %v4715
        %v7948 = vpop.f32.mrb[0].mxu0
        %v7949 = vadd.f32 %v7497, %v7948
        %v7950 = vpop.f32.mrb[0].mxu0
        %v7951 = vadd.f32 %v7501, %v7950
        %v7952 = vpop.f32.mrb[0].mxu0
        %v7953 = vadd.f32 %v7497, %v7952
        %v7954 = vpop.f32.mrb[0].mxu0
        %v7955 = vadd.f32 %v7501, %v7954
        %7956 = vmatprep.mubr.bf16.mxu0 0
        %7957 = vmatmul.mubr.bf16.gmra.mrb[0].mxu0 %v4716
        %v7958 = vpop.f32.mrb[0].mxu0
        %v7959 = vadd.f32 %v7497, %v7958
        %v7960 = vpop.f32.mrb[0].mxu0
        %v7961 = vadd.f32 %v7501, %v7960
        %v7962 = vpop.f32.mrb[0].mxu0
        %v7963 = vadd.f32 %v7497, %v7962
        %v7964 = vpop.f32.mrb[0].mxu0
        %v7965 = vadd.f32 %v7501, %v7964
        %7966 = vmatprep.mubr.bf16.mxu0 0
        %7967 = vmatmul.mubr.bf16.gmra.mrb[0].mxu0 %v4717
        %v7968 = vpop.f32.mrb[0].mxu0
        %v7969 = vadd.f32 %v7497, %v7968
        %v7970 = vpop.f32.mrb[0].mxu0
        %v7971 = vadd.f32 %v7501, %v7970
        %v7972 = vpop.f32.mrb[0].mxu0
        %v7973 = vadd.f32 %v7497, %v7972
        %v7974 = vpop.f32.mrb[0].mxu0
        %v7975 = vadd.f32 %v7501, %v7974
        %7976 = vmatprep.mubr.bf16.mxu0 0
        %7977 = vmatmul.mubr.bf16.gmra.mrb[0].mxu0 %v4718
        %v7978 = vpop.f32.mrb[0].mxu0
        %v7979 = vadd.f32 %v7497, %v7978
        %v7980 = vpop.f32.mrb[0].mxu0
        %v7981 = vadd.f32 %v7501, %v7980
        %v7982 = vpop.f32.mrb[0].mxu0
        %v7983 = vadd.f32 %v7497, %v7982
        %v7984 = vpop.f32.mrb[0].mxu0
        %v7985 = vadd.f32 %v7501, %v7984
        %7986 = vmatprep.mubr.bf16.mxu0 0
        %7987 = vmatmul.mubr.bf16.gmra.mrb[0].mxu0 %v4719
        %v7988 = vpop.f32.mrb[0].mxu0
        %v7989 = vadd.f32 %v7497, %v7988
        %v7990 = vpop.f32.mrb[0].mxu0
        %v7991 = vadd.f32 %v7501, %v7990
        %v7992 = vpop.f32.mrb[0].mxu0
        %v7993 = vadd.f32 %v7497, %v7992
        %v7994 = vpop.f32.mrb[0].mxu0
        %v7995 = vadd.f32 %v7501, %v7994
        %7996 = vmatprep.mubr.bf16.mxu0 0
        %7997 = vmatmul.mubr.bf16.gmra.mrb[0].mxu0 %v4720
        %v7998 = vpop.f32.mrb[0].mxu0
        %v7999 = vadd.f32 %v7497, %v7998
        %v8000 = vpop.f32.mrb[0].mxu0
        %v8001 = vadd.f32 %v7501, %v8000
        %v8002 = vpop.f32.mrb[0].mxu0
        %v8003 = vadd.f32 %v7497, %v8002
        %v8004 = vpop.f32.mrb[0].mxu0
        %v8005 = vadd.f32 %v7501, %v8004
        %8006 = vmatprep.mubr.bf16.mxu0 0
        %8007 = vmatmul.mubr.bf16.gmra.mrb[0].mxu0 %v4721
        %v8008 = vpop.f32.mrb[0].mxu0
        %v8009 = vadd.f32 %v7497, %v8008
        %v8010 = vpop.f32.mrb[0].mxu0
        %v8011 = vadd.f32 %v7501, %v8010
        %v8012 = vpop.f32.mrb[0].mxu0
        %v8013 = vadd.f32 %v7497, %v8012
        %v8014 = vpop.f32.mrb[0].mxu0
        %v8015 = vadd.f32 %v7501, %v8014
        %8016 = vmatprep.mubr.bf16.mxu0 0
        %8017 = vmatmul.mubr.bf16.gmra.mrb[0].mxu0 %v4722
        %v8018 = vpop.f32.mrb[0].mxu0
        %v8019 = vadd.f32 %v7497, %v8018
        %v8020 = vpop.f32.mrb[0].mxu0
        %v8021 = vadd.f32 %v7501, %v8020
        %v8022 = vpop.f32.mrb[0].mxu0
        %v8023 = vadd.f32 %v7497, %v8022
        %v8024 = vpop.f32.mrb[0].mxu0
        %v8025 = vadd.f32 %v7501, %v8024
        %8026 = vmatprep.mubr.bf16.mxu0 0
        %8027 = vmatmul.mubr.bf16.gmra.mrb[0].mxu0 %v4723
        %v8028 = vpop.f32.mrb[0].mxu0
        %v8029 = vadd.f32 %v7497, %v8028
        %v8030 = vpop.f32.mrb[0].mxu0
        %v8031 = vadd.f32 %v7501, %v8030
        %v8032 = vpop.f32.mrb[0].mxu0
        %v8033 = vadd.f32 %v7497, %v8032
        %v8034 = vpop.f32.mrb[0].mxu0
        %v8035 = vadd.f32 %v7501, %v8034
        %8036 = vmatprep.mubr.bf16.mxu0 0
        %8037 = vmatmul.mubr.bf16.gmra.mrb[0].mxu0 %v4724
        %v8038 = vpop.f32.mrb[0].mxu0
        %v8039 = vadd.f32 %v7497, %v8038
        %v8040 = vpop.f32.mrb[0].mxu0
        %v8041 = vadd.f32 %v7501, %v8040
        %v8042 = vpop.f32.mrb[0].mxu0
        %v8043 = vadd.f32 %v7497, %v8042
        %v8044 = vpop.f32.mrb[0].mxu0
        %v8045 = vadd.f32 %v7501, %v8044
        %8046 = vmatprep.mubr.bf16.mxu0 0
        %8047 = vmatmul.mubr.bf16.gmra.mrb[0].mxu0 %v4725
        %v8048 = vpop.f32.mrb[0].mxu0
        %v8049 = vadd.f32 %v7497, %v8048
        %v8050 = vpop.f32.mrb[0].mxu0
        %v8051 = vadd.f32 %v7501, %v8050
        %v8052 = vpop.f32.mrb[0].mxu0
        %v8053 = vadd.f32 %v7497, %v8052
        %v8054 = vpop.f32.mrb[0].mxu0
        %v8055 = vadd.f32 %v7501, %v8054
        %8056 = vmatprep.mubr.bf16.mxu0 0
        %8057 = vmatmul.mubr.bf16.gmra.mrb[0].mxu0 %v4726
        %v8058 = vpop.f32.mrb[0].mxu0
        %v8059 = vadd.f32 %v7497, %v8058
        %v8060 = vpop.f32.mrb[0].mxu0
        %v8061 = vadd.f32 %v7501, %v8060
        %v8062 = vpop.f32.mrb[0].mxu0
        %v8063 = vadd.f32 %v7497, %v8062
        %v8064 = vpop.f32.mrb[0].mxu0
        %v8065 = vadd.f32 %v7501, %v8064
        %8066 = vmatprep.mubr.bf16.mxu0 0
        %8067 = vmatmul.mubr.bf16.gmra.mrb[0].mxu0 %v4727
        %v8068 = vpop.f32.mrb[0].mxu0
        %v8069 = vadd.f32 %v7497, %v8068
        %v8070 = vpop.f32.mrb[0].mxu0
        %v8071 = vadd.f32 %v7501, %v8070
        %v8072 = vpop.f32.mrb[0].mxu0
        %v8073 = vadd.f32 %v7497, %v8072
        %v8074 = vpop.f32.mrb[0].mxu0
        %v8075 = vadd.f32 %v7501, %v8074
        %8076 = vmatprep.mubr.bf16.mxu0 0
        %8077 = vmatmul.mubr.bf16.gmra.mrb[0].mxu0 %v4728
        %v8078 = vpop.f32.mrb[0].mxu0
        %v8079 = vadd.f32 %v7497, %v8078
        %v8080 = vpop.f32.mrb[0].mxu0
        %v8081 = vadd.f32 %v7501, %v8080
        %v8082 = vpop.f32.mrb[0].mxu0
        %v8083 = vadd.f32 %v7497, %v8082
        %v8084 = vpop.f32.mrb[0].mxu0
        %v8085 = vadd.f32 %v7501, %v8084
        %8086 = vmatprep.mubr.bf16.mxu0 0
        %8087 = vmatmul.mubr.bf16.gmra.mrb[0].mxu0 %v4729
        %v8088 = vpop.f32.mrb[0].mxu0
        %v8089 = vadd.f32 %v7497, %v8088
        %v8090 = vpop.f32.mrb[0].mxu0
        %v8091 = vadd.f32 %v7501, %v8090
        %v8092 = vpop.f32.mrb[0].mxu0
        %v8093 = vadd.f32 %v7497, %v8092
        %v8094 = vpop.f32.mrb[0].mxu0
        %v8095 = vadd.f32 %v7501, %v8094
        %8096 = vmatprep.mubr.bf16.mxu0 0
        %8097 = vmatmul.mubr.bf16.gmra.mrb[0].mxu0 %v4730
        %v8098 = vpop.f32.mrb[0].mxu0
        %v8099 = vadd.f32 %v7497, %v8098
        %v8100 = vpop.f32.mrb[0].mxu0
        %v8101 = vadd.f32 %v7501, %v8100
        %v8102 = vpop.f32.mrb[0].mxu0
        %v8103 = vadd.f32 %v7497, %v8102
        %v8104 = vpop.f32.mrb[0].mxu0
        %v8105 = vadd.f32 %v7501, %v8104
        %8106 = vmatprep.mubr.bf16.mxu0 0
        %8107 = vmatmul.mubr.bf16.gmra.mrb[0].mxu0 %v4731
        %v8108 = vpop.f32.mrb[0].mxu0
        %v8109 = vadd.f32 %v7497, %v8108
        %v8110 = vpop.f32.mrb[0].mxu0
        %v8111 = vadd.f32 %v7501, %v8110
        %v8112 = vpop.f32.mrb[0].mxu0
        %v8113 = vadd.f32 %v7497, %v8112
        %v8114 = vpop.f32.mrb[0].mxu0
        %v8115 = vadd.f32 %v7501, %v8114
        %8116 = vmatprep.mubr.bf16.mxu0 0
        %8117 = vmatmul.mubr.bf16.gmra.mrb[0].mxu0 %v4732
        %v8118 = vpop.f32.mrb[0].mxu0
        %v8119 = vadd.f32 %v7497, %v8118
        %v8120 = vpop.f32.mrb[0].mxu0
        %v8121 = vadd.f32 %v7501, %v8120
        %v8122 = vpop.f32.mrb[0].mxu0
        %v8123 = vadd.f32 %v7497, %v8122
        %v8124 = vpop.f32.mrb[0].mxu0
        %v8125 = vadd.f32 %v7501, %v8124
        %8126 = vmatprep.mubr.bf16.mxu0 0
        %8127 = vmatmul.mubr.bf16.gmra.mrb[0].mxu0 %v4733
        %v8128 = vpop.f32.mrb[0].mxu0
        %v8129 = vadd.f32 %v7497, %v8128
        %v8130 = vpop.f32.mrb[0].mxu0
        %v8131 = vadd.f32 %v7501, %v8130
        %v8132 = vpop.f32.mrb[0].mxu0
        %v8133 = vadd.f32 %v7497, %v8132
        %v8134 = vpop.f32.mrb[0].mxu0
        %v8135 = vadd.f32 %v7501, %v8134
        %8136 = vmatprep.mubr.bf16.mxu0 0
        %8137 = vmatmul.mubr.bf16.gmra.mrb[0].mxu0 %v4734
        %v8138 = vpop.f32.mrb[0].mxu0
        %v8139 = vadd.f32 %v7497, %v8138
        %v8140 = vpop.f32.mrb[0].mxu0
        %v8141 = vadd.f32 %v7501, %v8140
        %v8142 = vpop.f32.mrb[0].mxu0
        %v8143 = vadd.f32 %v7497, %v8142
        %v8144 = vpop.f32.mrb[0].mxu0
        %v8145 = vadd.f32 %v7501, %v8144
        %8146 = vmatprep.mubr.bf16.mxu0 0
        %8147 = vmatmul.mubr.bf16.gmra.mrb[0].mxu0 %v4735
        %v8148 = vpop.f32.mrb[0].mxu0
        %v8149 = vadd.f32 %v7497, %v8148
        %v8150 = vpop.f32.mrb[0].mxu0
        %v8151 = vadd.f32 %v7501, %v8150
        %v8152 = vpop.f32.mrb[0].mxu0
        %v8153 = vadd.f32 %v7497, %v8152
        %v8154 = vpop.f32.mrb[0].mxu0
        %v8155 = vadd.f32 %v7501, %v8154
        %8156 = vmatprep.mubr.bf16.mxu0 0
        %8157 = vmatmul.mubr.bf16.gmra.mrb[0].mxu0 %v4736
        %v8158 = vpop.f32.mrb[0].mxu0
        %v8159 = vadd.f32 %v7497, %v8158
        %v8160 = vpop.f32.mrb[0].mxu0
        %v8161 = vadd.f32 %v7501, %v8160
        %v8162 = vpop.f32.mrb[0].mxu0
        %v8163 = vadd.f32 %v7497, %v8162
        %v8164 = vpop.f32.mrb[0].mxu0
        %v8165 = vadd.f32 %v7501, %v8164
        %8166 = vmatprep.mubr.bf16.mxu0 0
        %8167 = vmatmul.mubr.bf16.gmra.mrb[0].mxu0 %v4737
        %v8168 = vpop.f32.mrb[0].mxu0
        %v8169 = vadd.f32 %v7497, %v8168
        %v8170 = vpop.f32.mrb[0].mxu0
        %v8171 = vadd.f32 %v7501, %v8170
        %v8172 = vpop.f32.mrb[0].mxu0
        %v8173 = vadd.f32 %v7497, %v8172
        %v8174 = vpop.f32.mrb[0].mxu0
        %v8175 = vadd.f32 %v7501, %v8174
        %8176 = vmatprep.mubr.bf16.mxu0 0
        %8177 = vmatmul.mubr.bf16.gmra.mrb[0].mxu0 %v4738
        %v8178 = vpop.f32.mrb[0].mxu0
        %v8179 = vadd.f32 %v7497, %v8178
        %v8180 = vpop.f32.mrb[0].mxu0
        %v8181 = vadd.f32 %v7501, %v8180
        %v8182 = vpop.f32.mrb[0].mxu0
        %v8183 = vadd.f32 %v7497, %v8182
        %v8184 = vpop.f32.mrb[0].mxu0
        %v8185 = vadd.f32 %v7501, %v8184
        %8186 = vmatprep.mubr.bf16.mxu0 0
        %8187 = vmatmul.mubr.bf16.gmra.mrb[0].mxu0 %v4739
        %v8188 = vpop.f32.mrb[0].mxu0
        %v8189 = vadd.f32 %v7497, %v8188
        %v8190 = vpop.f32.mrb[0].mxu0
        %v8191 = vadd.f32 %v7501, %v8190
        %v8192 = vpop.f32.mrb[0].mxu0
        %v8193 = vadd.f32 %v7497, %v8192
        %v8194 = vpop.f32.mrb[0].mxu0
        %v8195 = vadd.f32 %v7501, %v8194
        %8196 = vmatprep.mubr.bf16.mxu0 0
        %8197 = vmatmul.mubr.bf16.gmra.mrb[0].mxu0 %v4740
        %v8198 = vpop.f32.mrb[0].mxu0
        %v8199 = vadd.f32 %v7497, %v8198
        %v8200 = vpop.f32.mrb[0].mxu0
        %v8201 = vadd.f32 %v7501, %v8200
        %v8202 = vpop.f32.mrb[0].mxu0
        %v8203 = vadd.f32 %v7497, %v8202
        %v8204 = vpop.f32.mrb[0].mxu0
        %v8205 = vadd.f32 %v7501, %v8204
        %8206 = vmatprep.mubr.bf16.mxu0 0
        %8207 = vmatmul.mubr.bf16.gmra.mrb[0].mxu0 %v4741
        %v8208 = vpop.f32.mrb[0].mxu0
        %v8209 = vadd.f32 %v7497, %v8208
        %v8210 = vpop.f32.mrb[0].mxu0
        %v8211 = vadd.f32 %v7501, %v8210
        %v8212 = vpop.f32.mrb[0].mxu0
        %v8213 = vadd.f32 %v7497, %v8212
        %v8214 = vpop.f32.mrb[0].mxu0
        %v8215 = vadd.f32 %v7501, %v8214
        %8216 = vmatprep.mubr.bf16.mxu0 0
        %8217 = vmatmul.mubr.bf16.gmra.mrb[0].mxu0 %v4742
        %v8218 = vpop.f32.mrb[0].mxu0
        %v8219 = vadd.f32 %v7497, %v8218
        %v8220 = vpop.f32.mrb[0].mxu0
        %v8221 = vadd.f32 %v7501, %v8220
        %v8222 = vpop.f32.mrb[0].mxu0
        %v8223 = vadd.f32 %v7497, %v8222
        %v8224 = vpop.f32.mrb[0].mxu0
        %v8225 = vadd.f32 %v7501, %v8224
        %8226 = vmatprep.mubr.bf16.mxu0 0
        %8227 = vmatmul.mubr.bf16.gmra.mrb[0].mxu0 %v4743
        %v8228 = vpop.f32.mrb[0].mxu0
        %v8229 = vadd.f32 %v7497, %v8228
        %v8230 = vpop.f32.mrb[0].mxu0
        %v8231 = vadd.f32 %v7501, %v8230
        %v8232 = vpop.f32.mrb[0].mxu0
        %v8233 = vadd.f32 %v7497, %v8232
        %v8234 = vpop.f32.mrb[0].mxu0
        %v8235 = vadd.f32 %v7501, %v8234
        %8236 = vmatprep.mubr.bf16.mxu0 0
        %8237 = vmatmul.mubr.bf16.gmra.mrb[0].mxu0 %v4744
        %v8238 = vpop.f32.mrb[0].mxu0
        %v8239 = vadd.f32 %v7497, %v8238
        %v8240 = vpop.f32.mrb[0].mxu0
        %v8241 = vadd.f32 %v7501, %v8240
        %v8242 = vpop.f32.mrb[0].mxu0
        %v8243 = vadd.f32 %v7497, %v8242
        %v8244 = vpop.f32.mrb[0].mxu0
        %v8245 = vadd.f32 %v7501, %v8244
        %8246 = vmatprep.mubr.bf16.mxu0 0
        %8247 = vmatmul.mubr.bf16.gmra.mrb[0].mxu0 %v4745
        %v8248 = vpop.f32.mrb[0].mxu0
        %v8249 = vadd.f32 %v7497, %v8248
        %v8250 = vpop.f32.mrb[0].mxu0
        %v8251 = vadd.f32 %v7501, %v8250
        %v8252 = vpop.f32.mrb[0].mxu0
        %v8253 = vadd.f32 %v7497, %v8252
        %v8254 = vpop.f32.mrb[0].mxu0
        %v8255 = vadd.f32 %v7501, %v8254
        %8256 = vdwg.mxu0
        %v8257 = vmax.f32 %v7619, 0.0
        %v8258 = vmax.f32 %v7621, 0.0
        %v8259 = vmax.f32 %v7623, 0.0
        %v8260 = vmax.f32 %v7625, 0.0
        %v8261 = vmax.f32 %v7629, 0.0
        %v8262 = vmax.f32 %v7631, 0.0
        %v8263 = vmax.f32 %v7633, 0.0
        %v8264 = vmax.f32 %v7635, 0.0
        %v8265 = vmax.f32 %v7639, 0.0
        %v8266 = vmax.f32 %v7641, 0.0
        %v8267 = vmax.f32 %v7643, 0.0
        %v8268 = vmax.f32 %v7645, 0.0
        %v8269 = vmax.f32 %v7649, 0.0
        %v8270 = vmax.f32 %v7651, 0.0
        %v8271 = vmax.f32 %v7653, 0.0
        %v8272 = vmax.f32 %v7655, 0.0
        %v8273 = vmax.f32 %v7659, 0.0
        %v8274 = vmax.f32 %v7661, 0.0
        %v8275 = vmax.f32 %v7663, 0.0
        %v8276 = vmax.f32 %v7665, 0.0
        %v8277 = vmax.f32 %v7669, 0.0
        %v8278 = vmax.f32 %v7671, 0.0
        %v8279 = vmax.f32 %v7673, 0.0
        %v8280 = vmax.f32 %v7675, 0.0
        %v8281 = vmax.f32 %v7679, 0.0
        %v8282 = vmax.f32 %v7681, 0.0
        %v8283 = vmax.f32 %v7683, 0.0
        %v8284 = vmax.f32 %v7685, 0.0
        %v8285 = vmax.f32 %v7689, 0.0
        %v8286 = vmax.f32 %v7691, 0.0
        %v8287 = vmax.f32 %v7693, 0.0
        %v8288 = vmax.f32 %v7695, 0.0
        %v8289 = vmax.f32 %v7699, 0.0
        %v8290 = vmax.f32 %v7701, 0.0
        %v8291 = vmax.f32 %v7703, 0.0
        %v8292 = vmax.f32 %v7705, 0.0
        %v8293 = vmax.f32 %v7709, 0.0
        %v8294 = vmax.f32 %v7711, 0.0
        %v8295 = vmax.f32 %v7713, 0.0
        %v8296 = vmax.f32 %v7715, 0.0
        %v8297 = vmax.f32 %v7719, 0.0
        %v8298 = vmax.f32 %v7721, 0.0
        %v8299 = vmax.f32 %v7723, 0.0
        %v8300 = vmax.f32 %v7725, 0.0
        %v8301 = vmax.f32 %v7729, 0.0
        %v8302 = vmax.f32 %v7731, 0.0
        %v8303 = vmax.f32 %v7733, 0.0
        %v8304 = vmax.f32 %v7735, 0.0
        %v8305 = vmax.f32 %v7739, 0.0
        %v8306 = vmax.f32 %v7741, 0.0
        %v8307 = vmax.f32 %v7743, 0.0
        %v8308 = vmax.f32 %v7745, 0.0
        %v8309 = vmax.f32 %v7749, 0.0
        %v8310 = vmax.f32 %v7751, 0.0
        %v8311 = vmax.f32 %v7753, 0.0
        %v8312 = vmax.f32 %v7755, 0.0
        %v8313 = vmax.f32 %v7759, 0.0
        %v8314 = vmax.f32 %v7761, 0.0
        %v8315 = vmax.f32 %v7763, 0.0
        %v8316 = vmax.f32 %v7765, 0.0
        %v8317 = vmax.f32 %v7769, 0.0
        %v8318 = vmax.f32 %v7771, 0.0
        %v8319 = vmax.f32 %v7773, 0.0
        %v8320 = vmax.f32 %v7775, 0.0
        %v8321 = vmax.f32 %v7779, 0.0
        %v8322 = vmax.f32 %v7781, 0.0
        %v8323 = vmax.f32 %v7783, 0.0
        %v8324 = vmax.f32 %v7785, 0.0
        %v8325 = vmax.f32 %v7789, 0.0
        %v8326 = vmax.f32 %v7791, 0.0
        %v8327 = vmax.f32 %v7793, 0.0
        %v8328 = vmax.f32 %v7795, 0.0
        %v8329 = vmax.f32 %v7799, 0.0
        %v8330 = vmax.f32 %v7801, 0.0
        %v8331 = vmax.f32 %v7803, 0.0
        %v8332 = vmax.f32 %v7805, 0.0
        %v8333 = vmax.f32 %v7809, 0.0
        %v8334 = vmax.f32 %v7811, 0.0
        %v8335 = vmax.f32 %v7813, 0.0
        %v8336 = vmax.f32 %v7815, 0.0
        %v8337 = vmax.f32 %v7819, 0.0
        %v8338 = vmax.f32 %v7821, 0.0
        %v8339 = vmax.f32 %v7823, 0.0
        %v8340 = vmax.f32 %v7825, 0.0
        %v8341 = vmax.f32 %v7829, 0.0
        %v8342 = vmax.f32 %v7831, 0.0
        %v8343 = vmax.f32 %v7833, 0.0
        %v8344 = vmax.f32 %v7835, 0.0
        %v8345 = vmax.f32 %v7839, 0.0
        %v8346 = vmax.f32 %v7841, 0.0
        %v8347 = vmax.f32 %v7843, 0.0
        %v8348 = vmax.f32 %v7845, 0.0
        %v8349 = vmax.f32 %v7849, 0.0
        %v8350 = vmax.f32 %v7851, 0.0
        %v8351 = vmax.f32 %v7853, 0.0
        %v8352 = vmax.f32 %v7855, 0.0
        %v8353 = vmax.f32 %v7859, 0.0
        %v8354 = vmax.f32 %v7861, 0.0
        %v8355 = vmax.f32 %v7863, 0.0
        %v8356 = vmax.f32 %v7865, 0.0
        %v8357 = vmax.f32 %v7869, 0.0
        %v8358 = vmax.f32 %v7871, 0.0
        %v8359 = vmax.f32 %v7873, 0.0
        %v8360 = vmax.f32 %v7875, 0.0
        %v8361 = vmax.f32 %v7879, 0.0
        %v8362 = vmax.f32 %v7881, 0.0
        %v8363 = vmax.f32 %v7883, 0.0
        %v8364 = vmax.f32 %v7885, 0.0
        %v8365 = vmax.f32 %v7889, 0.0
        %v8366 = vmax.f32 %v7891, 0.0
        %v8367 = vmax.f32 %v7893, 0.0
        %v8368 = vmax.f32 %v7895, 0.0
        %v8369 = vmax.f32 %v7899, 0.0
        %v8370 = vmax.f32 %v7901, 0.0
        %v8371 = vmax.f32 %v7903, 0.0
        %v8372 = vmax.f32 %v7905, 0.0
        %v8373 = vmax.f32 %v7909, 0.0
        %v8374 = vmax.f32 %v7911, 0.0
        %v8375 = vmax.f32 %v7913, 0.0
        %v8376 = vmax.f32 %v7915, 0.0
        %v8377 = vmax.f32 %v7919, 0.0
        %v8378 = vmax.f32 %v7921, 0.0
        %v8379 = vmax.f32 %v7923, 0.0
        %v8380 = vmax.f32 %v7925, 0.0
        %v8381 = vmax.f32 %v7929, 0.0
        %v8382 = vmax.f32 %v7931, 0.0
        %v8383 = vmax.f32 %v7933, 0.0
        %v8384 = vmax.f32 %v7935, 0.0
        %v8385 = vmax.f32 %v7939, 0.0
        %v8386 = vmax.f32 %v7941, 0.0
        %v8387 = vmax.f32 %v7943, 0.0
        %v8388 = vmax.f32 %v7945, 0.0
        %v8389 = vmax.f32 %v7949, 0.0
        %v8390 = vmax.f32 %v7951, 0.0
        %v8391 = vmax.f32 %v7953, 0.0
        %v8392 = vmax.f32 %v7955, 0.0
        %v8393 = vmax.f32 %v7959, 0.0
        %v8394 = vmax.f32 %v7961, 0.0
        %v8395 = vmax.f32 %v7963, 0.0
        %v8396 = vmax.f32 %v7965, 0.0
        %v8397 = vmax.f32 %v7969, 0.0
        %v8398 = vmax.f32 %v7971, 0.0
        %v8399 = vmax.f32 %v7973, 0.0
        %v8400 = vmax.f32 %v7975, 0.0
        %v8401 = vmax.f32 %v7979, 0.0
        %v8402 = vmax.f32 %v7981, 0.0
        %v8403 = vmax.f32 %v7983, 0.0
        %v8404 = vmax.f32 %v7985, 0.0
        %v8405 = vmax.f32 %v7989, 0.0
        %v8406 = vmax.f32 %v7991, 0.0
        %v8407 = vmax.f32 %v7993, 0.0
        %v8408 = vmax.f32 %v7995, 0.0
        %v8409 = vmax.f32 %v7999, 0.0
        %v8410 = vmax.f32 %v8001, 0.0
        %v8411 = vmax.f32 %v8003, 0.0
        %v8412 = vmax.f32 %v8005, 0.0
        %v8413 = vmax.f32 %v8009, 0.0
        %v8414 = vmax.f32 %v8011, 0.0
        %v8415 = vmax.f32 %v8013, 0.0
        %v8416 = vmax.f32 %v8015, 0.0
        %v8417 = vmax.f32 %v8019, 0.0
        %v8418 = vmax.f32 %v8021, 0.0
        %v8419 = vmax.f32 %v8023, 0.0
        %v8420 = vmax.f32 %v8025, 0.0
        %v8421 = vmax.f32 %v8029, 0.0
        %v8422 = vmax.f32 %v8031, 0.0
        %v8423 = vmax.f32 %v8033, 0.0
        %v8424 = vmax.f32 %v8035, 0.0
        %v8425 = vmax.f32 %v8039, 0.0
        %v8426 = vmax.f32 %v8041, 0.0
        %v8427 = vmax.f32 %v8043, 0.0
        %v8428 = vmax.f32 %v8045, 0.0
        %v8429 = vmax.f32 %v8049, 0.0
        %v8430 = vmax.f32 %v8051, 0.0
        %v8431 = vmax.f32 %v8053, 0.0
        %v8432 = vmax.f32 %v8055, 0.0
        %v8433 = vmax.f32 %v8059, 0.0
        %v8434 = vmax.f32 %v8061, 0.0
        %v8435 = vmax.f32 %v8063, 0.0
        %v8436 = vmax.f32 %v8065, 0.0
        %v8437 = vmax.f32 %v8069, 0.0
        %v8438 = vmax.f32 %v8071, 0.0
        %v8439 = vmax.f32 %v8073, 0.0
        %v8440 = vmax.f32 %v8075, 0.0
        %v8441 = vmax.f32 %v8079, 0.0
        %v8442 = vmax.f32 %v8081, 0.0
        %v8443 = vmax.f32 %v8083, 0.0
        %v8444 = vmax.f32 %v8085, 0.0
        %v8445 = vmax.f32 %v8089, 0.0
        %v8446 = vmax.f32 %v8091, 0.0
        %v8447 = vmax.f32 %v8093, 0.0
        %v8448 = vmax.f32 %v8095, 0.0
        %v8449 = vmax.f32 %v8099, 0.0
        %v8450 = vmax.f32 %v8101, 0.0
        %v8451 = vmax.f32 %v8103, 0.0
        %v8452 = vmax.f32 %v8105, 0.0
        %v8453 = vmax.f32 %v8109, 0.0
        %v8454 = vmax.f32 %v8111, 0.0
        %v8455 = vmax.f32 %v8113, 0.0
        %v8456 = vmax.f32 %v8115, 0.0
        %v8457 = vmax.f32 %v8119, 0.0
        %v8458 = vmax.f32 %v8121, 0.0
        %v8459 = vmax.f32 %v8123, 0.0
        %v8460 = vmax.f32 %v8125, 0.0
        %v8461 = vmax.f32 %v8129, 0.0
        %v8462 = vmax.f32 %v8131, 0.0
        %v8463 = vmax.f32 %v8133, 0.0
        %v8464 = vmax.f32 %v8135, 0.0
        %v8465 = vmax.f32 %v8139, 0.0
        %v8466 = vmax.f32 %v8141, 0.0
        %v8467 = vmax.f32 %v8143, 0.0
        %v8468 = vmax.f32 %v8145, 0.0
        %v8469 = vmax.f32 %v8149, 0.0
        %v8470 = vmax.f32 %v8151, 0.0
        %v8471 = vmax.f32 %v8153, 0.0
        %v8472 = vmax.f32 %v8155, 0.0
        %v8473 = vmax.f32 %v8159, 0.0
        %v8474 = vmax.f32 %v8161, 0.0
        %v8475 = vmax.f32 %v8163, 0.0
        %v8476 = vmax.f32 %v8165, 0.0
        %v8477 = vmax.f32 %v8169, 0.0
        %v8478 = vmax.f32 %v8171, 0.0
        %v8479 = vmax.f32 %v8173, 0.0
        %v8480 = vmax.f32 %v8175, 0.0
        %v8481 = vmax.f32 %v8179, 0.0
        %v8482 = vmax.f32 %v8181, 0.0
        %v8483 = vmax.f32 %v8183, 0.0
        %v8484 = vmax.f32 %v8185, 0.0
        %v8485 = vmax.f32 %v8189, 0.0
        %v8486 = vmax.f32 %v8191, 0.0
        %v8487 = vmax.f32 %v8193, 0.0
        %v8488 = vmax.f32 %v8195, 0.0
        %v8489 = vmax.f32 %v8199, 0.0
        %v8490 = vmax.f32 %v8201, 0.0
        %v8491 = vmax.f32 %v8203, 0.0
        %v8492 = vmax.f32 %v8205, 0.0
        %v8493 = vmax.f32 %v8209, 0.0
        %v8494 = vmax.f32 %v8211, 0.0
        %v8495 = vmax.f32 %v8213, 0.0
        %v8496 = vmax.f32 %v8215, 0.0
        %v8497 = vmax.f32 %v8219, 0.0
        %v8498 = vmax.f32 %v8221, 0.0
        %v8499 = vmax.f32 %v8223, 0.0
        %v8500 = vmax.f32 %v8225, 0.0
        %v8501 = vmax.f32 %v8229, 0.0
        %v8502 = vmax.f32 %v8231, 0.0
        %v8503 = vmax.f32 %v8233, 0.0
        %v8504 = vmax.f32 %v8235, 0.0
        %v8505 = vmax.f32 %v8239, 0.0
        %v8506 = vmax.f32 %v8241, 0.0
        %v8507 = vmax.f32 %v8243, 0.0
        %v8508 = vmax.f32 %v8245, 0.0
        %v8509 = vmax.f32 %v8249, 0.0
        %v8510 = vmax.f32 %v8251, 0.0
        %v8511 = vmax.f32 %v8253, 0.0
        %v8512 = vmax.f32 %v8255, 0.0
        %v8513 = vmax.f32 %v8257, %v8259
        %v8514 = vmax.f32 %v8513, %v8261
        %v8515 = vmax.f32 %v8514, %v8263
        %v8516 = vmax.f32 %v8515, %v8265
        %v8517 = vmax.f32 %v8516, %v8267
        %v8518 = vmax.f32 %v8517, %v8269
        %v8519 = vmax.f32 %v8518, %v8271
        %v8520 = vmax.f32 %v8519, %v8273
        %v8521 = vmax.f32 %v8520, %v8275
        %v8522 = vmax.f32 %v8521, %v8277
        %v8523 = vmax.f32 %v8522, %v8279
        %v8524 = vmax.f32 %v8523, %v8281
        %v8525 = vmax.f32 %v8524, %v8283
        %v8526 = vmax.f32 %v8525, %v8285
        %v8527 = vmax.f32 %v8526, %v8287
        %v8528 = vmax.f32 %v8527, %v8289
        %v8529 = vmax.f32 %v8528, %v8291
        %v8530 = vmax.f32 %v8529, %v8293
        %v8531 = vmax.f32 %v8530, %v8295
        %v8532 = vmax.f32 %v8531, %v8297
        %v8533 = vmax.f32 %v8532, %v8299
        %v8534 = vmax.f32 %v8533, %v8301
        %v8535 = vmax.f32 %v8534, %v8303
        %v8536 = vmax.f32 %v8535, %v8305
        %v8537 = vmax.f32 %v8536, %v8307
        %v8538 = vmax.f32 %v8537, %v8309
        %v8539 = vmax.f32 %v8538, %v8311
        %v8540 = vmax.f32 %v8539, %v8313
        %v8541 = vmax.f32 %v8540, %v8315
        %v8542 = vmax.f32 %v8541, %v8317
        %v8543 = vmax.f32 %v8542, %v8319
        %v8544 = vrot.slane %v8543, 4
        %v8545 = vmax.f32 %v8543, %v8544
        %v8546 = vrot.slane %v8545, 2
        %v8547 = vmax.f32 %v8545, %v8546
        %v8548 = vrot.slane %v8547, 1
        %v8549 = vmax.f32 %v8547, %v8548
        %v8550 = vmax.f32 %v8258, %v8260
        %v8551 = vmax.f32 %v8550, %v8262
        %v8552 = vmax.f32 %v8551, %v8264
        %v8553 = vmax.f32 %v8552, %v8266
        %v8554 = vmax.f32 %v8553, %v8268
        %v8555 = vmax.f32 %v8554, %v8270
        %v8556 = vmax.f32 %v8555, %v8272
        %v8557 = vmax.f32 %v8556, %v8274
        %v8558 = vmax.f32 %v8557, %v8276
        %v8559 = vmax.f32 %v8558, %v8278
        %v8560 = vmax.f32 %v8559, %v8280
        %v8561 = vmax.f32 %v8560, %v8282
        %v8562 = vmax.f32 %v8561, %v8284
        %v8563 = vmax.f32 %v8562, %v8286
        %v8564 = vmax.f32 %v8563, %v8288
        %v8565 = vmax.f32 %v8564, %v8290
        %v8566 = vmax.f32 %v8565, %v8292
        %v8567 = vmax.f32 %v8566, %v8294
        %v8568 = vmax.f32 %v8567, %v8296
        %v8569 = vmax.f32 %v8568, %v8298
        %v8570 = vmax.f32 %v8569, %v8300
        %v8571 = vmax.f32 %v8570, %v8302
        %v8572 = vmax.f32 %v8571, %v8304
        %v8573 = vmax.f32 %v8572, %v8306
        %v8574 = vmax.f32 %v8573, %v8308
        %v8575 = vmax.f32 %v8574, %v8310
        %v8576 = vmax.f32 %v8575, %v8312
        %v8577 = vmax.f32 %v8576, %v8314
        %v8578 = vmax.f32 %v8577, %v8316
        %v8579 = vmax.f32 %v8578, %v8318
        %v8580 = vmax.f32 %v8579, %v8320
        %v8581 = vrot.slane %v8580, 4
        %v8582 = vmax.f32 %v8580, %v8581
        %v8583 = vrot.slane %v8582, 2
        %v8584 = vmax.f32 %v8582, %v8583
        %v8585 = vrot.slane %v8584, 1
        %v8586 = vmax.f32 %v8584, %v8585
        %v8587 = vmax.f32 %v8321, %v8323
        %v8588 = vmax.f32 %v8587, %v8325
        %v8589 = vmax.f32 %v8588, %v8327
        %v8590 = vmax.f32 %v8589, %v8329
        %v8591 = vmax.f32 %v8590, %v8331
        %v8592 = vmax.f32 %v8591, %v8333
        %v8593 = vmax.f32 %v8592, %v8335
        %v8594 = vmax.f32 %v8593, %v8337
        %v8595 = vmax.f32 %v8594, %v8339
        %v8596 = vmax.f32 %v8595, %v8341
        %v8597 = vmax.f32 %v8596, %v8343
        %v8598 = vmax.f32 %v8597, %v8345
        %v8599 = vmax.f32 %v8598, %v8347
        %v8600 = vmax.f32 %v8599, %v8349
        %v8601 = vmax.f32 %v8600, %v8351
        %v8602 = vmax.f32 %v8601, %v8353
        %v8603 = vmax.f32 %v8602, %v8355
        %v8604 = vmax.f32 %v8603, %v8357
        %v8605 = vmax.f32 %v8604, %v8359
        %v8606 = vmax.f32 %v8605, %v8361
        %v8607 = vmax.f32 %v8606, %v8363
        %v8608 = vmax.f32 %v8607, %v8365
        %v8609 = vmax.f32 %v8608, %v8367
        %v8610 = vmax.f32 %v8609, %v8369
        %v8611 = vmax.f32 %v8610, %v8371
        %v8612 = vmax.f32 %v8611, %v8373
        %v8613 = vmax.f32 %v8612, %v8375
        %v8614 = vmax.f32 %v8613, %v8377
        %v8615 = vmax.f32 %v8614, %v8379
        %v8616 = vmax.f32 %v8615, %v8381
        %v8617 = vmax.f32 %v8616, %v8383
        %v8618 = vrot.slane %v8617, 4
        %v8619 = vmax.f32 %v8617, %v8618
        %v8620 = vrot.slane %v8619, 2
        %v8621 = vmax.f32 %v8619, %v8620
        %v8622 = vrot.slane %v8621, 1
        %v8623 = vmax.f32 %v8621, %v8622
        %v8624 = vmax.f32 %v8322, %v8324
        %v8625 = vmax.f32 %v8624, %v8326
        %v8626 = vmax.f32 %v8625, %v8328
        %v8627 = vmax.f32 %v8626, %v8330
        %v8628 = vmax.f32 %v8627, %v8332
        %v8629 = vmax.f32 %v8628, %v8334
        %v8630 = vmax.f32 %v8629, %v8336
        %v8631 = vmax.f32 %v8630, %v8338
        %v8632 = vmax.f32 %v8631, %v8340
        %v8633 = vmax.f32 %v8632, %v8342
        %v8634 = vmax.f32 %v8633, %v8344
        %v8635 = vmax.f32 %v8634, %v8346
        %v8636 = vmax.f32 %v8635, %v8348
        %v8637 = vmax.f32 %v8636, %v8350
        %v8638 = vmax.f32 %v8637, %v8352
        %v8639 = vmax.f32 %v8638, %v8354
        %v8640 = vmax.f32 %v8639, %v8356
        %v8641 = vmax.f32 %v8640, %v8358
        %v8642 = vmax.f32 %v8641, %v8360
        %v8643 = vmax.f32 %v8642, %v8362
        %v8644 = vmax.f32 %v8643, %v8364
        %v8645 = vmax.f32 %v8644, %v8366
        %v8646 = vmax.f32 %v8645, %v8368
        %v8647 = vmax.f32 %v8646, %v8370
        %v8648 = vmax.f32 %v8647, %v8372
        %v8649 = vmax.f32 %v8648, %v8374
        %v8650 = vmax.f32 %v8649, %v8376
        %v8651 = vmax.f32 %v8650, %v8378
        %v8652 = vmax.f32 %v8651, %v8380
        %v8653 = vmax.f32 %v8652, %v8382
        %v8654 = vmax.f32 %v8653, %v8384
        %v8655 = vrot.slane %v8654, 4
        %v8656 = vmax.f32 %v8654, %v8655
        %v8657 = vrot.slane %v8656, 2
        %v8658 = vmax.f32 %v8656, %v8657
        %v8659 = vrot.slane %v8658, 1
        %v8660 = vmax.f32 %v8658, %v8659
        %v8661 = vmax.f32 %v8385, %v8387
        %v8662 = vmax.f32 %v8661, %v8389
        %v8663 = vmax.f32 %v8662, %v8391
        %v8664 = vmax.f32 %v8663, %v8393
        %v8665 = vmax.f32 %v8664, %v8395
        %v8666 = vmax.f32 %v8665, %v8397
        %v8667 = vmax.f32 %v8666, %v8399
        %v8668 = vmax.f32 %v8667, %v8401
        %v8669 = vmax.f32 %v8668, %v8403
        %v8670 = vmax.f32 %v8669, %v8405
        %v8671 = vmax.f32 %v8670, %v8407
        %v8672 = vmax.f32 %v8671, %v8409
        %v8673 = vmax.f32 %v8672, %v8411
        %v8674 = vmax.f32 %v8673, %v8413
        %v8675 = vmax.f32 %v8674, %v8415
        %v8676 = vmax.f32 %v8675, %v8417
        %v8677 = vmax.f32 %v8676, %v8419
        %v8678 = vmax.f32 %v8677, %v8421
        %v8679 = vmax.f32 %v8678, %v8423
        %v8680 = vmax.f32 %v8679, %v8425
        %v8681 = vmax.f32 %v8680, %v8427
        %v8682 = vmax.f32 %v8681, %v8429
        %v8683 = vmax.f32 %v8682, %v8431
        %v8684 = vmax.f32 %v8683, %v8433
        %v8685 = vmax.f32 %v8684, %v8435
        %v8686 = vmax.f32 %v8685, %v8437
        %v8687 = vmax.f32 %v8686, %v8439
        %v8688 = vmax.f32 %v8687, %v8441
        %v8689 = vmax.f32 %v8688, %v8443
        %v8690 = vmax.f32 %v8689, %v8445
        %v8691 = vmax.f32 %v8690, %v8447
        %v8692 = vrot.slane %v8691, 4
        %v8693 = vmax.f32 %v8691, %v8692
        %v8694 = vrot.slane %v8693, 2
        %v8695 = vmax.f32 %v8693, %v8694
        %v8696 = vrot.slane %v8695, 1
        %v8697 = vmax.f32 %v8695, %v8696
        %v8698 = vmax.f32 %v8386, %v8388
        %v8699 = vmax.f32 %v8698, %v8390
        %v8700 = vmax.f32 %v8699, %v8392
        %v8701 = vmax.f32 %v8700, %v8394
        %v8702 = vmax.f32 %v8701, %v8396
        %v8703 = vmax.f32 %v8702, %v8398
        %v8704 = vmax.f32 %v8703, %v8400
        %v8705 = vmax.f32 %v8704, %v8402
        %v8706 = vmax.f32 %v8705, %v8404
        %v8707 = vmax.f32 %v8706, %v8406
        %v8708 = vmax.f32 %v8707, %v8408
        %v8709 = vmax.f32 %v8708, %v8410
        %v8710 = vmax.f32 %v8709, %v8412
        %v8711 = vmax.f32 %v8710, %v8414
        %v8712 = vmax.f32 %v8711, %v8416
        %v8713 = vmax.f32 %v8712, %v8418
        %v8714 = vmax.f32 %v8713, %v8420
        %v8715 = vmax.f32 %v8714, %v8422
        %v8716 = vmax.f32 %v8715, %v8424
        %v8717 = vmax.f32 %v8716, %v8426
        %v8718 = vmax.f32 %v8717, %v8428
        %v8719 = vmax.f32 %v8718, %v8430
        %v8720 = vmax.f32 %v8719, %v8432
        %v8721 = vmax.f32 %v8720, %v8434
        %v8722 = vmax.f32 %v8721, %v8436
        %v8723 = vmax.f32 %v8722, %v8438
        %v8724 = vmax.f32 %v8723, %v8440
        %v8725 = vmax.f32 %v8724, %v8442
        %v8726 = vmax.f32 %v8725, %v8444
        %v8727 = vmax.f32 %v8726, %v8446
        %v8728 = vmax.f32 %v8727, %v8448
        %v8729 = vrot.slane %v8728, 4
        %v8730 = vmax.f32 %v8728, %v8729
        %v8731 = vrot.slane %v8730, 2
        %v8732 = vmax.f32 %v8730, %v8731
        %v8733 = vrot.slane %v8732, 1
        %v8734 = vmax.f32 %v8732, %v8733
        %v8735 = vmax.f32 %v8449, %v8451
        %v8736 = vmax.f32 %v8735, %v8453
        %v8737 = vmax.f32 %v8736, %v8455
        %v8738 = vmax.f32 %v8737, %v8457
        %v8739 = vmax.f32 %v8738, %v8459
        %v8740 = vmax.f32 %v8739, %v8461
        %v8741 = vmax.f32 %v8740, %v8463
        %v8742 = vmax.f32 %v8741, %v8465
        %v8743 = vmax.f32 %v8742, %v8467
        %v8744 = vmax.f32 %v8743, %v8469
        %v8745 = vmax.f32 %v8744, %v8471
        %v8746 = vmax.f32 %v8745, %v8473
        %v8747 = vmax.f32 %v8746, %v8475
        %v8748 = vmax.f32 %v8747, %v8477
        %v8749 = vmax.f32 %v8748, %v8479
        %v8750 = vmax.f32 %v8749, %v8481
        %v8751 = vmax.f32 %v8750, %v8483
        %v8752 = vmax.f32 %v8751, %v8485
        %v8753 = vmax.f32 %v8752, %v8487
        %v8754 = vmax.f32 %v8753, %v8489
        %v8755 = vmax.f32 %v8754, %v8491
        %v8756 = vmax.f32 %v8755, %v8493
        %v8757 = vmax.f32 %v8756, %v8495
        %v8758 = vmax.f32 %v8757, %v8497
        %v8759 = vmax.f32 %v8758, %v8499
        %v8760 = vmax.f32 %v8759, %v8501
        %v8761 = vmax.f32 %v8760, %v8503
        %v8762 = vmax.f32 %v8761, %v8505
        %v8763 = vmax.f32 %v8762, %v8507
        %v8764 = vmax.f32 %v8763, %v8509
        %v8765 = vmax.f32 %v8764, %v8511
        %v8766 = vrot.slane %v8765, 4
        %v8767 = vmax.f32 %v8765, %v8766
        %v8768 = vrot.slane %v8767, 2
        %v8769 = vmax.f32 %v8767, %v8768
        %v8770 = vrot.slane %v8769, 1
        %v8771 = vmax.f32 %v8769, %v8770
        %v8772 = vmax.f32 %v8450, %v8452
        %v8773 = vmax.f32 %v8772, %v8454
        %v8774 = vmax.f32 %v8773, %v8456
        %v8775 = vmax.f32 %v8774, %v8458
        %v8776 = vmax.f32 %v8775, %v8460
        %v8777 = vmax.f32 %v8776, %v8462
        %v8778 = vmax.f32 %v8777, %v8464
        %v8779 = vmax.f32 %v8778, %v8466
        %v8780 = vmax.f32 %v8779, %v8468
        %v8781 = vmax.f32 %v8780, %v8470
        %v8782 = vmax.f32 %v8781, %v8472
        %v8783 = vmax.f32 %v8782, %v8474
        %v8784 = vmax.f32 %v8783, %v8476
        %v8785 = vmax.f32 %v8784, %v8478
        %v8786 = vmax.f32 %v8785, %v8480
        %v8787 = vmax.f32 %v8786, %v8482
        %v8788 = vmax.f32 %v8787, %v8484
        %v8789 = vmax.f32 %v8788, %v8486
        %v8790 = vmax.f32 %v8789, %v8488
        %v8791 = vmax.f32 %v8790, %v8490
        %v8792 = vmax.f32 %v8791, %v8492
        %v8793 = vmax.f32 %v8792, %v8494
        %v8794 = vmax.f32 %v8793, %v8496
        %v8795 = vmax.f32 %v8794, %v8498
        %v8796 = vmax.f32 %v8795, %v8500
        %v8797 = vmax.f32 %v8796, %v8502
        %v8798 = vmax.f32 %v8797, %v8504
        %v8799 = vmax.f32 %v8798, %v8506
        %v8800 = vmax.f32 %v8799, %v8508
        %v8801 = vmax.f32 %v8800, %v8510
        %v8802 = vmax.f32 %v8801, %v8512
        %v8803 = vrot.slane %v8802, 4
        %v8804 = vmax.f32 %v8802, %v8803
        %v8805 = vrot.slane %v8804, 2
        %v8806 = vmax.f32 %v8804, %v8805
        %v8807 = vrot.slane %v8806, 1
        %v8808 = vmax.f32 %v8806, %v8807
        %v8809 = vld [vmem:[%s405 + $0x10] sm:$0xff]
        %v8818 = vcombine.low %v8549, %v8586
        %v8819 = vcombine.low %v8623, %v8660
        %v8820 = vcombine.low %v8697, %v8734
        %v8821 = vcombine.low %v8771, %v8808
        %v8822 = vrot.slane %v8819, 7
        %v8823 = vsel %vm6101, %v8822, %v8818
        %v8824 = vsel %vm6103, %v8822, %v8823
        %v8825 = vrot.slane %v8820, 6
        %v8826 = vsel %vm6106, %v8825, %v8824
        %v8827 = vsel %vm6108, %v8825, %v8826
        %v8828 = vrot.slane %v8821, 5
        %v8829 = vsel %vm6111, %v8828, %v8827
        %v8830 = vsel %vm6113, %v8828, %v8829
        %v8832 = vmax.f32 %v8809, %v8830
        %8833 = vst [vmem:[%s405 + $0x10] sm:$0xff] %v8832
        %v8834 = vld [vmem:[%s9 + $0x18] sm:$0xff]
        %v8835 = vld [vmem:[%s9 + $0x38] sm:$0xff]
        %v8836 = vld [vmem:[%s9 + $0x58] sm:$0xff]
        %v8837 = vld [vmem:[%s9 + $0x78] sm:$0xff]
        %v8838 = vld [vmem:[%s9 + $0x98] sm:$0xff]
        %v8839 = vld [vmem:[%s9 + $0xb8] sm:$0xff]
        %v8840 = vld [vmem:[%s9 + $0xd8] sm:$0xff]
        %v8841 = vld [vmem:[%s9 + $0xf8] sm:$0xff]
        %v8842 = vld [vmem:[%s9 + $0x118] sm:$0xff]
        %v8843 = vld [vmem:[%s9 + $0x138] sm:$0xff]
        %v8844 = vld [vmem:[%s9 + $0x158] sm:$0xff]
        %v8845 = vld [vmem:[%s9 + $0x178] sm:$0xff]
        %v8846 = vld [vmem:[%s9 + $0x198] sm:$0xff]
        %v8847 = vld [vmem:[%s9 + $0x1b8] sm:$0xff]
        %v8848 = vld [vmem:[%s9 + $0x1d8] sm:$0xff]
        %v8849 = vld [vmem:[%s9 + $0x1f8] sm:$0xff]
        %v8850 = vld [vmem:[%s10 + $0x6] sm:$0x3]
        %v8852 = vlaneseq
        %v8853 = vshrl.u32 %v8852, 7
        %v8854 = vsub.s32 0, %v8853
        %v8855 = vrot.slane %v8850, %v8854
        %v8856 = vlaneseq
        %v8857 = vshrl.u32 %v8856, 7
        %v8858 = vsub.s32 1, %v8857
        %v8859 = vrot.slane %v8850, %v8858
        %v8878 = vunpack.c.l.b16 %v8834
        %v8879 = vunpack.c.h.b16 %v8834
        %v8880 = vunpack.c.l.b16 %v8835
        %v8881 = vunpack.c.h.b16 %v8835
        %v8882 = vunpack.c.l.b16 %v8836
        %v8883 = vunpack.c.h.b16 %v8836
        %v8884 = vunpack.c.l.b16 %v8837
        %v8885 = vunpack.c.h.b16 %v8837
        %v8886 = vunpack.c.l.b16 %v8838
        %v8887 = vunpack.c.h.b16 %v8838
        %v8888 = vunpack.c.l.b16 %v8839
        %v8889 = vunpack.c.h.b16 %v8839
        %v8890 = vunpack.c.l.b16 %v8840
        %v8891 = vunpack.c.h.b16 %v8840
        %v8892 = vunpack.c.l.b16 %v8841
        %v8893 = vunpack.c.h.b16 %v8841
        %v8894 = vunpack.c.l.b16 %v8842
        %v8895 = vunpack.c.h.b16 %v8842
        %v8896 = vunpack.c.l.b16 %v8843
        %v8897 = vunpack.c.h.b16 %v8843
        %v8898 = vunpack.c.l.b16 %v8844
        %v8899 = vunpack.c.h.b16 %v8844
        %v8900 = vunpack.c.l.b16 %v8845
        %v8901 = vunpack.c.h.b16 %v8845
        %v8902 = vunpack.c.l.b16 %v8846
        %v8903 = vunpack.c.h.b16 %v8846
        %v8904 = vunpack.c.l.b16 %v8847
        %v8905 = vunpack.c.h.b16 %v8847
        %v8906 = vunpack.c.l.b16 %v8848
        %v8907 = vunpack.c.h.b16 %v8848
        %v8908 = vunpack.c.l.b16 %v8849
        %v8909 = vunpack.c.h.b16 %v8849
        %v8910 = vpack.c.b16 %v8880, %v8878
        %v8911 = vpack.c.b16 %v8881, %v8879
        %v8912 = vpack.c.b16 %v8884, %v8882
        %v8913 = vpack.c.b16 %v8885, %v8883
        %v8914 = vpack.c.b16 %v8888, %v8886
        %v8915 = vpack.c.b16 %v8889, %v8887
        %v8916 = vpack.c.b16 %v8892, %v8890
        %v8917 = vpack.c.b16 %v8893, %v8891
        %v8918 = vpack.c.b16 %v8896, %v8894
        %v8919 = vpack.c.b16 %v8897, %v8895
        %v8920 = vpack.c.b16 %v8900, %v8898
        %v8921 = vpack.c.b16 %v8901, %v8899
        %v8922 = vpack.c.b16 %v8904, %v8902
        %v8923 = vpack.c.b16 %v8905, %v8903
        %v8924 = vpack.c.b16 %v8908, %v8906
        %v8925 = vpack.c.b16 %v8909, %v8907
        %8942 = vmatprep.subr.bf16.mxu0 %v8911
        %8943 = vmatpush1.bf16.msra.mxu0 %v8910
        %8944 = vmatprep.subr.bf16.mxu0 %v8913
        %8945 = vmatpush1.bf16.msra.mxu0 %v8912
        %8946 = vmatprep.subr.bf16.mxu0 %v8915
        %8947 = vmatpush1.bf16.msra.mxu0 %v8914
        %8948 = vmatprep.subr.bf16.mxu0 %v8917
        %8949 = vmatpush1.bf16.msra.mxu0 %v8916
        %8950 = vmatprep.subr.bf16.mxu0 %v8919
        %8951 = vmatpush1.bf16.msra.mxu0 %v8918
        %8952 = vmatprep.subr.bf16.mxu0 %v8921
        %8953 = vmatpush1.bf16.msra.mxu0 %v8920
        %8954 = vmatprep.subr.bf16.mxu0 %v8923
        %8955 = vmatpush1.bf16.msra.mxu0 %v8922
        %8956 = vmatprep.subr.bf16.mxu0 %v8925
        %8957 = vmatpush1.bf16.msra.mxu0 %v8924
        %8958 = vmatprep.subr.bf16.mxu0 0
        %8959 = vmatpush1.bf16.msra.mxu0 0
        %8960 = vmatprep.subr.bf16.mxu0 0
        %8961 = vmatpush1.bf16.msra.mxu0 0
        %8962 = vmatprep.subr.bf16.mxu0 0
        %8963 = vmatpush1.bf16.msra.mxu0 0
        %8964 = vmatprep.subr.bf16.mxu0 0
        %8965 = vmatpush1.bf16.msra.mxu0 0
        %8966 = vmatprep.subr.bf16.mxu0 0
        %8967 = vmatpush1.bf16.msra.mxu0 0
        %8968 = vmatprep.subr.bf16.mxu0 0
        %8969 = vmatpush1.bf16.msra.mxu0 0
        %8970 = vmatprep.subr.bf16.mxu0 0
        %8971 = vmatpush1.bf16.msra.mxu0 0
        %8972 = vmatprep.subr.bf16.mxu0 0
        %8973 = vmatpush1.bf16.msra.mxu0 0
        %8974 = vmatprep.mubr.bf16.mxu0 0
        %8975 = vmatmul.mubr.bf16.gmra.mrb[0].mxu0 %v4682
        %v8976 = vpop.f32.mrb[0].mxu0
        %v8977 = vadd.f32 %v8855, %v8976
        %v8978 = vpop.f32.mrb[0].mxu0
        %v8979 = vadd.f32 %v8859, %v8978
        %v8980 = vpop.f32.mrb[0].mxu0
        %v8981 = vadd.f32 %v8855, %v8980
        %v8982 = vpop.f32.mrb[0].mxu0
        %v8983 = vadd.f32 %v8859, %v8982
        %8984 = vmatprep.mubr.bf16.mxu0 0
        %8985 = vmatmul.mubr.bf16.gmra.mrb[0].mxu0 %v4683
        %v8986 = vpop.f32.mrb[0].mxu0
        %v8987 = vadd.f32 %v8855, %v8986
        %v8988 = vpop.f32.mrb[0].mxu0
        %v8989 = vadd.f32 %v8859, %v8988
        %v8990 = vpop.f32.mrb[0].mxu0
        %v8991 = vadd.f32 %v8855, %v8990
        %v8992 = vpop.f32.mrb[0].mxu0
        %v8993 = vadd.f32 %v8859, %v8992
        %8994 = vmatprep.mubr.bf16.mxu0 0
        %8995 = vmatmul.mubr.bf16.gmra.mrb[0].mxu0 %v4684
        %v8996 = vpop.f32.mrb[0].mxu0
        %v8997 = vadd.f32 %v8855, %v8996
        %v8998 = vpop.f32.mrb[0].mxu0
        %v8999 = vadd.f32 %v8859, %v8998
        %v9000 = vpop.f32.mrb[0].mxu0
        %v9001 = vadd.f32 %v8855, %v9000
        %v9002 = vpop.f32.mrb[0].mxu0
        %v9003 = vadd.f32 %v8859, %v9002
        %9004 = vmatprep.mubr.bf16.mxu0 0
        %9005 = vmatmul.mubr.bf16.gmra.mrb[0].mxu0 %v4685
        %v9006 = vpop.f32.mrb[0].mxu0
        %v9007 = vadd.f32 %v8855, %v9006
        %v9008 = vpop.f32.mrb[0].mxu0
        %v9009 = vadd.f32 %v8859, %v9008
        %v9010 = vpop.f32.mrb[0].mxu0
        %v9011 = vadd.f32 %v8855, %v9010
        %v9012 = vpop.f32.mrb[0].mxu0
        %v9013 = vadd.f32 %v8859, %v9012
        %9014 = vmatprep.mubr.bf16.mxu0 0
        %9015 = vmatmul.mubr.bf16.gmra.mrb[0].mxu0 %v4686
        %v9016 = vpop.f32.mrb[0].mxu0
        %v9017 = vadd.f32 %v8855, %v9016
        %v9018 = vpop.f32.mrb[0].mxu0
        %v9019 = vadd.f32 %v8859, %v9018
        %v9020 = vpop.f32.mrb[0].mxu0
        %v9021 = vadd.f32 %v8855, %v9020
        %v9022 = vpop.f32.mrb[0].mxu0
        %v9023 = vadd.f32 %v8859, %v9022
        %9024 = vmatprep.mubr.bf16.mxu0 0
        %9025 = vmatmul.mubr.bf16.gmra.mrb[0].mxu0 %v4687
        %v9026 = vpop.f32.mrb[0].mxu0
        %v9027 = vadd.f32 %v8855, %v9026
        %v9028 = vpop.f32.mrb[0].mxu0
        %v9029 = vadd.f32 %v8859, %v9028
        %v9030 = vpop.f32.mrb[0].mxu0
        %v9031 = vadd.f32 %v8855, %v9030
        %v9032 = vpop.f32.mrb[0].mxu0
        %v9033 = vadd.f32 %v8859, %v9032
        %9034 = vmatprep.mubr.bf16.mxu0 0
        %9035 = vmatmul.mubr.bf16.gmra.mrb[0].mxu0 %v4688
        %v9036 = vpop.f32.mrb[0].mxu0
        %v9037 = vadd.f32 %v8855, %v9036
        %v9038 = vpop.f32.mrb[0].mxu0
        %v9039 = vadd.f32 %v8859, %v9038
        %v9040 = vpop.f32.mrb[0].mxu0
        %v9041 = vadd.f32 %v8855, %v9040
        %v9042 = vpop.f32.mrb[0].mxu0
        %v9043 = vadd.f32 %v8859, %v9042
        %9044 = vmatprep.mubr.bf16.mxu0 0
        %9045 = vmatmul.mubr.bf16.gmra.mrb[0].mxu0 %v4689
        %v9046 = vpop.f32.mrb[0].mxu0
        %v9047 = vadd.f32 %v8855, %v9046
        %v9048 = vpop.f32.mrb[0].mxu0
        %v9049 = vadd.f32 %v8859, %v9048
        %v9050 = vpop.f32.mrb[0].mxu0
        %v9051 = vadd.f32 %v8855, %v9050
        %v9052 = vpop.f32.mrb[0].mxu0
        %v9053 = vadd.f32 %v8859, %v9052
        %9054 = vmatprep.mubr.bf16.mxu0 0
        %9055 = vmatmul.mubr.bf16.gmra.mrb[0].mxu0 %v4690
        %v9056 = vpop.f32.mrb[0].mxu0
        %v9057 = vadd.f32 %v8855, %v9056
        %v9058 = vpop.f32.mrb[0].mxu0
        %v9059 = vadd.f32 %v8859, %v9058
        %v9060 = vpop.f32.mrb[0].mxu0
        %v9061 = vadd.f32 %v8855, %v9060
        %v9062 = vpop.f32.mrb[0].mxu0
        %v9063 = vadd.f32 %v8859, %v9062
        %9064 = vmatprep.mubr.bf16.mxu0 0
        %9065 = vmatmul.mubr.bf16.gmra.mrb[0].mxu0 %v4691
        %v9066 = vpop.f32.mrb[0].mxu0
        %v9067 = vadd.f32 %v8855, %v9066
        %v9068 = vpop.f32.mrb[0].mxu0
        %v9069 = vadd.f32 %v8859, %v9068
        %v9070 = vpop.f32.mrb[0].mxu0
        %v9071 = vadd.f32 %v8855, %v9070
        %v9072 = vpop.f32.mrb[0].mxu0
        %v9073 = vadd.f32 %v8859, %v9072
        %9074 = vmatprep.mubr.bf16.mxu0 0
        %9075 = vmatmul.mubr.bf16.gmra.mrb[0].mxu0 %v4692
        %v9076 = vpop.f32.mrb[0].mxu0
        %v9077 = vadd.f32 %v8855, %v9076
        %v9078 = vpop.f32.mrb[0].mxu0
        %v9079 = vadd.f32 %v8859, %v9078
        %v9080 = vpop.f32.mrb[0].mxu0
        %v9081 = vadd.f32 %v8855, %v9080
        %v9082 = vpop.f32.mrb[0].mxu0
        %v9083 = vadd.f32 %v8859, %v9082
        %9084 = vmatprep.mubr.bf16.mxu0 0
        %9085 = vmatmul.mubr.bf16.gmra.mrb[0].mxu0 %v4693
        %v9086 = vpop.f32.mrb[0].mxu0
        %v9087 = vadd.f32 %v8855, %v9086
        %v9088 = vpop.f32.mrb[0].mxu0
        %v9089 = vadd.f32 %v8859, %v9088
        %v9090 = vpop.f32.mrb[0].mxu0
        %v9091 = vadd.f32 %v8855, %v9090
        %v9092 = vpop.f32.mrb[0].mxu0
        %v9093 = vadd.f32 %v8859, %v9092
        %9094 = vmatprep.mubr.bf16.mxu0 0
        %9095 = vmatmul.mubr.bf16.gmra.mrb[0].mxu0 %v4694
        %v9096 = vpop.f32.mrb[0].mxu0
        %v9097 = vadd.f32 %v8855, %v9096
        %v9098 = vpop.f32.mrb[0].mxu0
        %v9099 = vadd.f32 %v8859, %v9098
        %v9100 = vpop.f32.mrb[0].mxu0
        %v9101 = vadd.f32 %v8855, %v9100
        %v9102 = vpop.f32.mrb[0].mxu0
        %v9103 = vadd.f32 %v8859, %v9102
        %9104 = vmatprep.mubr.bf16.mxu0 0
        %9105 = vmatmul.mubr.bf16.gmra.mrb[0].mxu0 %v4695
        %v9106 = vpop.f32.mrb[0].mxu0
        %v9107 = vadd.f32 %v8855, %v9106
        %v9108 = vpop.f32.mrb[0].mxu0
        %v9109 = vadd.f32 %v8859, %v9108
        %v9110 = vpop.f32.mrb[0].mxu0
        %v9111 = vadd.f32 %v8855, %v9110
        %v9112 = vpop.f32.mrb[0].mxu0
        %v9113 = vadd.f32 %v8859, %v9112
        %9114 = vmatprep.mubr.bf16.mxu0 0
        %9115 = vmatmul.mubr.bf16.gmra.mrb[0].mxu0 %v4696
        %v9116 = vpop.f32.mrb[0].mxu0
        %v9117 = vadd.f32 %v8855, %v9116
        %v9118 = vpop.f32.mrb[0].mxu0
        %v9119 = vadd.f32 %v8859, %v9118
        %v9120 = vpop.f32.mrb[0].mxu0
        %v9121 = vadd.f32 %v8855, %v9120
        %v9122 = vpop.f32.mrb[0].mxu0
        %v9123 = vadd.f32 %v8859, %v9122
        %9124 = vmatprep.mubr.bf16.mxu0 0
        %9125 = vmatmul.mubr.bf16.gmra.mrb[0].mxu0 %v4697
        %v9126 = vpop.f32.mrb[0].mxu0
        %v9127 = vadd.f32 %v8855, %v9126
        %v9128 = vpop.f32.mrb[0].mxu0
        %v9129 = vadd.f32 %v8859, %v9128
        %v9130 = vpop.f32.mrb[0].mxu0
        %v9131 = vadd.f32 %v8855, %v9130
        %v9132 = vpop.f32.mrb[0].mxu0
        %v9133 = vadd.f32 %v8859, %v9132
        %9134 = vmatprep.mubr.bf16.mxu0 0
        %9135 = vmatmul.mubr.bf16.gmra.mrb[0].mxu0 %v4698
        %v9136 = vpop.f32.mrb[0].mxu0
        %v9137 = vadd.f32 %v8855, %v9136
        %v9138 = vpop.f32.mrb[0].mxu0
        %v9139 = vadd.f32 %v8859, %v9138
        %v9140 = vpop.f32.mrb[0].mxu0
        %v9141 = vadd.f32 %v8855, %v9140
        %v9142 = vpop.f32.mrb[0].mxu0
        %v9143 = vadd.f32 %v8859, %v9142
        %9144 = vmatprep.mubr.bf16.mxu0 0
        %9145 = vmatmul.mubr.bf16.gmra.mrb[0].mxu0 %v4699
        %v9146 = vpop.f32.mrb[0].mxu0
        %v9147 = vadd.f32 %v8855, %v9146
        %v9148 = vpop.f32.mrb[0].mxu0
        %v9149 = vadd.f32 %v8859, %v9148
        %v9150 = vpop.f32.mrb[0].mxu0
        %v9151 = vadd.f32 %v8855, %v9150
        %v9152 = vpop.f32.mrb[0].mxu0
        %v9153 = vadd.f32 %v8859, %v9152
        %9154 = vmatprep.mubr.bf16.mxu0 0
        %9155 = vmatmul.mubr.bf16.gmra.mrb[0].mxu0 %v4700
        %v9156 = vpop.f32.mrb[0].mxu0
        %v9157 = vadd.f32 %v8855, %v9156
        %v9158 = vpop.f32.mrb[0].mxu0
        %v9159 = vadd.f32 %v8859, %v9158
        %v9160 = vpop.f32.mrb[0].mxu0
        %v9161 = vadd.f32 %v8855, %v9160
        %v9162 = vpop.f32.mrb[0].mxu0
        %v9163 = vadd.f32 %v8859, %v9162
        %9164 = vmatprep.mubr.bf16.mxu0 0
        %9165 = vmatmul.mubr.bf16.gmra.mrb[0].mxu0 %v4701
        %v9166 = vpop.f32.mrb[0].mxu0
        %v9167 = vadd.f32 %v8855, %v9166
        %v9168 = vpop.f32.mrb[0].mxu0
        %v9169 = vadd.f32 %v8859, %v9168
        %v9170 = vpop.f32.mrb[0].mxu0
        %v9171 = vadd.f32 %v8855, %v9170
        %v9172 = vpop.f32.mrb[0].mxu0
        %v9173 = vadd.f32 %v8859, %v9172
        %9174 = vmatprep.mubr.bf16.mxu0 0
        %9175 = vmatmul.mubr.bf16.gmra.mrb[0].mxu0 %v4702
        %v9176 = vpop.f32.mrb[0].mxu0
        %v9177 = vadd.f32 %v8855, %v9176
        %v9178 = vpop.f32.mrb[0].mxu0
        %v9179 = vadd.f32 %v8859, %v9178
        %v9180 = vpop.f32.mrb[0].mxu0
        %v9181 = vadd.f32 %v8855, %v9180
        %v9182 = vpop.f32.mrb[0].mxu0
        %v9183 = vadd.f32 %v8859, %v9182
        %9184 = vmatprep.mubr.bf16.mxu0 0
        %9185 = vmatmul.mubr.bf16.gmra.mrb[0].mxu0 %v4703
        %v9186 = vpop.f32.mrb[0].mxu0
        %v9187 = vadd.f32 %v8855, %v9186
        %v9188 = vpop.f32.mrb[0].mxu0
        %v9189 = vadd.f32 %v8859, %v9188
        %v9190 = vpop.f32.mrb[0].mxu0
        %v9191 = vadd.f32 %v8855, %v9190
        %v9192 = vpop.f32.mrb[0].mxu0
        %v9193 = vadd.f32 %v8859, %v9192
        %9194 = vmatprep.mubr.bf16.mxu0 0
        %9195 = vmatmul.mubr.bf16.gmra.mrb[0].mxu0 %v4704
        %v9196 = vpop.f32.mrb[0].mxu0
        %v9197 = vadd.f32 %v8855, %v9196
        %v9198 = vpop.f32.mrb[0].mxu0
        %v9199 = vadd.f32 %v8859, %v9198
        %v9200 = vpop.f32.mrb[0].mxu0
        %v9201 = vadd.f32 %v8855, %v9200
        %v9202 = vpop.f32.mrb[0].mxu0
        %v9203 = vadd.f32 %v8859, %v9202
        %9204 = vmatprep.mubr.bf16.mxu0 0
        %9205 = vmatmul.mubr.bf16.gmra.mrb[0].mxu0 %v4705
        %v9206 = vpop.f32.mrb[0].mxu0
        %v9207 = vadd.f32 %v8855, %v9206
        %v9208 = vpop.f32.mrb[0].mxu0
        %v9209 = vadd.f32 %v8859, %v9208
        %v9210 = vpop.f32.mrb[0].mxu0
        %v9211 = vadd.f32 %v8855, %v9210
        %v9212 = vpop.f32.mrb[0].mxu0
        %v9213 = vadd.f32 %v8859, %v9212
        %9214 = vmatprep.mubr.bf16.mxu0 0
        %9215 = vmatmul.mubr.bf16.gmra.mrb[0].mxu0 %v4706
        %v9216 = vpop.f32.mrb[0].mxu0
        %v9217 = vadd.f32 %v8855, %v9216
        %v9218 = vpop.f32.mrb[0].mxu0
        %v9219 = vadd.f32 %v8859, %v9218
        %v9220 = vpop.f32.mrb[0].mxu0
        %v9221 = vadd.f32 %v8855, %v9220
        %v9222 = vpop.f32.mrb[0].mxu0
        %v9223 = vadd.f32 %v8859, %v9222
        %9224 = vmatprep.mubr.bf16.mxu0 0
        %9225 = vmatmul.mubr.bf16.gmra.mrb[0].mxu0 %v4707
        %v9226 = vpop.f32.mrb[0].mxu0
        %v9227 = vadd.f32 %v8855, %v9226
        %v9228 = vpop.f32.mrb[0].mxu0
        %v9229 = vadd.f32 %v8859, %v9228
        %v9230 = vpop.f32.mrb[0].mxu0
        %v9231 = vadd.f32 %v8855, %v9230
        %v9232 = vpop.f32.mrb[0].mxu0
        %v9233 = vadd.f32 %v8859, %v9232
        %9234 = vmatprep.mubr.bf16.mxu0 0
        %9235 = vmatmul.mubr.bf16.gmra.mrb[0].mxu0 %v4708
        %v9236 = vpop.f32.mrb[0].mxu0
        %v9237 = vadd.f32 %v8855, %v9236
        %v9238 = vpop.f32.mrb[0].mxu0
        %v9239 = vadd.f32 %v8859, %v9238
        %v9240 = vpop.f32.mrb[0].mxu0
        %v9241 = vadd.f32 %v8855, %v9240
        %v9242 = vpop.f32.mrb[0].mxu0
        %v9243 = vadd.f32 %v8859, %v9242
        %9244 = vmatprep.mubr.bf16.mxu0 0
        %9245 = vmatmul.mubr.bf16.gmra.mrb[0].mxu0 %v4709
        %v9246 = vpop.f32.mrb[0].mxu0
        %v9247 = vadd.f32 %v8855, %v9246
        %v9248 = vpop.f32.mrb[0].mxu0
        %v9249 = vadd.f32 %v8859, %v9248
        %v9250 = vpop.f32.mrb[0].mxu0
        %v9251 = vadd.f32 %v8855, %v9250
        %v9252 = vpop.f32.mrb[0].mxu0
        %v9253 = vadd.f32 %v8859, %v9252
        %9254 = vmatprep.mubr.bf16.mxu0 0
        %9255 = vmatmul.mubr.bf16.gmra.mrb[0].mxu0 %v4710
        %v9256 = vpop.f32.mrb[0].mxu0
        %v9257 = vadd.f32 %v8855, %v9256
        %v9258 = vpop.f32.mrb[0].mxu0
        %v9259 = vadd.f32 %v8859, %v9258
        %v9260 = vpop.f32.mrb[0].mxu0
        %v9261 = vadd.f32 %v8855, %v9260
        %v9262 = vpop.f32.mrb[0].mxu0
        %v9263 = vadd.f32 %v8859, %v9262
        %9264 = vmatprep.mubr.bf16.mxu0 0
        %9265 = vmatmul.mubr.bf16.gmra.mrb[0].mxu0 %v4711
        %v9266 = vpop.f32.mrb[0].mxu0
        %v9267 = vadd.f32 %v8855, %v9266
        %v9268 = vpop.f32.mrb[0].mxu0
        %v9269 = vadd.f32 %v8859, %v9268
        %v9270 = vpop.f32.mrb[0].mxu0
        %v9271 = vadd.f32 %v8855, %v9270
        %v9272 = vpop.f32.mrb[0].mxu0
        %v9273 = vadd.f32 %v8859, %v9272
        %9274 = vmatprep.mubr.bf16.mxu0 0
        %9275 = vmatmul.mubr.bf16.gmra.mrb[0].mxu0 %v4712
        %v9276 = vpop.f32.mrb[0].mxu0
        %v9277 = vadd.f32 %v8855, %v9276
        %v9278 = vpop.f32.mrb[0].mxu0
        %v9279 = vadd.f32 %v8859, %v9278
        %v9280 = vpop.f32.mrb[0].mxu0
        %v9281 = vadd.f32 %v8855, %v9280
        %v9282 = vpop.f32.mrb[0].mxu0
        %v9283 = vadd.f32 %v8859, %v9282
        %9284 = vmatprep.mubr.bf16.mxu0 0
        %9285 = vmatmul.mubr.bf16.gmra.mrb[0].mxu0 %v4713
        %v9286 = vpop.f32.mrb[0].mxu0
        %v9287 = vadd.f32 %v8855, %v9286
        %v9288 = vpop.f32.mrb[0].mxu0
        %v9289 = vadd.f32 %v8859, %v9288
        %v9290 = vpop.f32.mrb[0].mxu0
        %v9291 = vadd.f32 %v8855, %v9290
        %v9292 = vpop.f32.mrb[0].mxu0
        %v9293 = vadd.f32 %v8859, %v9292
        %9294 = vmatprep.mubr.bf16.mxu0 0
        %9295 = vmatmul.mubr.bf16.gmra.mrb[0].mxu0 %v4714
        %v9296 = vpop.f32.mrb[0].mxu0
        %v9297 = vadd.f32 %v8855, %v9296
        %v9298 = vpop.f32.mrb[0].mxu0
        %v9299 = vadd.f32 %v8859, %v9298
        %v9300 = vpop.f32.mrb[0].mxu0
        %v9301 = vadd.f32 %v8855, %v9300
        %v9302 = vpop.f32.mrb[0].mxu0
        %v9303 = vadd.f32 %v8859, %v9302
        %9304 = vmatprep.mubr.bf16.mxu0 0
        %9305 = vmatmul.mubr.bf16.gmra.mrb[0].mxu0 %v4715
        %v9306 = vpop.f32.mrb[0].mxu0
        %v9307 = vadd.f32 %v8855, %v9306
        %v9308 = vpop.f32.mrb[0].mxu0
        %v9309 = vadd.f32 %v8859, %v9308
        %v9310 = vpop.f32.mrb[0].mxu0
        %v9311 = vadd.f32 %v8855, %v9310
        %v9312 = vpop.f32.mrb[0].mxu0
        %v9313 = vadd.f32 %v8859, %v9312
        %9314 = vmatprep.mubr.bf16.mxu0 0
        %9315 = vmatmul.mubr.bf16.gmra.mrb[0].mxu0 %v4716
        %v9316 = vpop.f32.mrb[0].mxu0
        %v9317 = vadd.f32 %v8855, %v9316
        %v9318 = vpop.f32.mrb[0].mxu0
        %v9319 = vadd.f32 %v8859, %v9318
        %v9320 = vpop.f32.mrb[0].mxu0
        %v9321 = vadd.f32 %v8855, %v9320
        %v9322 = vpop.f32.mrb[0].mxu0
        %v9323 = vadd.f32 %v8859, %v9322
        %9324 = vmatprep.mubr.bf16.mxu0 0
        %9325 = vmatmul.mubr.bf16.gmra.mrb[0].mxu0 %v4717
        %v9326 = vpop.f32.mrb[0].mxu0
        %v9327 = vadd.f32 %v8855, %v9326
        %v9328 = vpop.f32.mrb[0].mxu0
        %v9329 = vadd.f32 %v8859, %v9328
        %v9330 = vpop.f32.mrb[0].mxu0
        %v9331 = vadd.f32 %v8855, %v9330
        %v9332 = vpop.f32.mrb[0].mxu0
        %v9333 = vadd.f32 %v8859, %v9332
        %9334 = vmatprep.mubr.bf16.mxu0 0
        %9335 = vmatmul.mubr.bf16.gmra.mrb[0].mxu0 %v4718
        %v9336 = vpop.f32.mrb[0].mxu0
        %v9337 = vadd.f32 %v8855, %v9336
        %v9338 = vpop.f32.mrb[0].mxu0
        %v9339 = vadd.f32 %v8859, %v9338
        %v9340 = vpop.f32.mrb[0].mxu0
        %v9341 = vadd.f32 %v8855, %v9340
        %v9342 = vpop.f32.mrb[0].mxu0
        %v9343 = vadd.f32 %v8859, %v9342
        %9344 = vmatprep.mubr.bf16.mxu0 0
        %9345 = vmatmul.mubr.bf16.gmra.mrb[0].mxu0 %v4719
        %v9346 = vpop.f32.mrb[0].mxu0
        %v9347 = vadd.f32 %v8855, %v9346
        %v9348 = vpop.f32.mrb[0].mxu0
        %v9349 = vadd.f32 %v8859, %v9348
        %v9350 = vpop.f32.mrb[0].mxu0
        %v9351 = vadd.f32 %v8855, %v9350
        %v9352 = vpop.f32.mrb[0].mxu0
        %v9353 = vadd.f32 %v8859, %v9352
        %9354 = vmatprep.mubr.bf16.mxu0 0
        %9355 = vmatmul.mubr.bf16.gmra.mrb[0].mxu0 %v4720
        %v9356 = vpop.f32.mrb[0].mxu0
        %v9357 = vadd.f32 %v8855, %v9356
        %v9358 = vpop.f32.mrb[0].mxu0
        %v9359 = vadd.f32 %v8859, %v9358
        %v9360 = vpop.f32.mrb[0].mxu0
        %v9361 = vadd.f32 %v8855, %v9360
        %v9362 = vpop.f32.mrb[0].mxu0
        %v9363 = vadd.f32 %v8859, %v9362
        %9364 = vmatprep.mubr.bf16.mxu0 0
        %9365 = vmatmul.mubr.bf16.gmra.mrb[0].mxu0 %v4721
        %v9366 = vpop.f32.mrb[0].mxu0
        %v9367 = vadd.f32 %v8855, %v9366
        %v9368 = vpop.f32.mrb[0].mxu0
        %v9369 = vadd.f32 %v8859, %v9368
        %v9370 = vpop.f32.mrb[0].mxu0
        %v9371 = vadd.f32 %v8855, %v9370
        %v9372 = vpop.f32.mrb[0].mxu0
        %v9373 = vadd.f32 %v8859, %v9372
        %9374 = vmatprep.mubr.bf16.mxu0 0
        %9375 = vmatmul.mubr.bf16.gmra.mrb[0].mxu0 %v4722
        %v9376 = vpop.f32.mrb[0].mxu0
        %v9377 = vadd.f32 %v8855, %v9376
        %v9378 = vpop.f32.mrb[0].mxu0
        %v9379 = vadd.f32 %v8859, %v9378
        %v9380 = vpop.f32.mrb[0].mxu0
        %v9381 = vadd.f32 %v8855, %v9380
        %v9382 = vpop.f32.mrb[0].mxu0
        %v9383 = vadd.f32 %v8859, %v9382
        %9384 = vmatprep.mubr.bf16.mxu0 0
        %9385 = vmatmul.mubr.bf16.gmra.mrb[0].mxu0 %v4723
        %v9386 = vpop.f32.mrb[0].mxu0
        %v9387 = vadd.f32 %v8855, %v9386
        %v9388 = vpop.f32.mrb[0].mxu0
        %v9389 = vadd.f32 %v8859, %v9388
        %v9390 = vpop.f32.mrb[0].mxu0
        %v9391 = vadd.f32 %v8855, %v9390
        %v9392 = vpop.f32.mrb[0].mxu0
        %v9393 = vadd.f32 %v8859, %v9392
        %9394 = vmatprep.mubr.bf16.mxu0 0
        %9395 = vmatmul.mubr.bf16.gmra.mrb[0].mxu0 %v4724
        %v9396 = vpop.f32.mrb[0].mxu0
        %v9397 = vadd.f32 %v8855, %v9396
        %v9398 = vpop.f32.mrb[0].mxu0
        %v9399 = vadd.f32 %v8859, %v9398
        %v9400 = vpop.f32.mrb[0].mxu0
        %v9401 = vadd.f32 %v8855, %v9400
        %v9402 = vpop.f32.mrb[0].mxu0
        %v9403 = vadd.f32 %v8859, %v9402
        %9404 = vmatprep.mubr.bf16.mxu0 0
        %9405 = vmatmul.mubr.bf16.gmra.mrb[0].mxu0 %v4725
        %v9406 = vpop.f32.mrb[0].mxu0
        %v9407 = vadd.f32 %v8855, %v9406
        %v9408 = vpop.f32.mrb[0].mxu0
        %v9409 = vadd.f32 %v8859, %v9408
        %v9410 = vpop.f32.mrb[0].mxu0
        %v9411 = vadd.f32 %v8855, %v9410
        %v9412 = vpop.f32.mrb[0].mxu0
        %v9413 = vadd.f32 %v8859, %v9412
        %9414 = vmatprep.mubr.bf16.mxu0 0
        %9415 = vmatmul.mubr.bf16.gmra.mrb[0].mxu0 %v4726
        %v9416 = vpop.f32.mrb[0].mxu0
        %v9417 = vadd.f32 %v8855, %v9416
        %v9418 = vpop.f32.mrb[0].mxu0
        %v9419 = vadd.f32 %v8859, %v9418
        %v9420 = vpop.f32.mrb[0].mxu0
        %v9421 = vadd.f32 %v8855, %v9420
        %v9422 = vpop.f32.mrb[0].mxu0
        %v9423 = vadd.f32 %v8859, %v9422
        %9424 = vmatprep.mubr.bf16.mxu0 0
        %9425 = vmatmul.mubr.bf16.gmra.mrb[0].mxu0 %v4727
        %v9426 = vpop.f32.mrb[0].mxu0
        %v9427 = vadd.f32 %v8855, %v9426
        %v9428 = vpop.f32.mrb[0].mxu0
        %v9429 = vadd.f32 %v8859, %v9428
        %v9430 = vpop.f32.mrb[0].mxu0
        %v9431 = vadd.f32 %v8855, %v9430
        %v9432 = vpop.f32.mrb[0].mxu0
        %v9433 = vadd.f32 %v8859, %v9432
        %9434 = vmatprep.mubr.bf16.mxu0 0
        %9435 = vmatmul.mubr.bf16.gmra.mrb[0].mxu0 %v4728
        %v9436 = vpop.f32.mrb[0].mxu0
        %v9437 = vadd.f32 %v8855, %v9436
        %v9438 = vpop.f32.mrb[0].mxu0
        %v9439 = vadd.f32 %v8859, %v9438
        %v9440 = vpop.f32.mrb[0].mxu0
        %v9441 = vadd.f32 %v8855, %v9440
        %v9442 = vpop.f32.mrb[0].mxu0
        %v9443 = vadd.f32 %v8859, %v9442
        %9444 = vmatprep.mubr.bf16.mxu0 0
        %9445 = vmatmul.mubr.bf16.gmra.mrb[0].mxu0 %v4729
        %v9446 = vpop.f32.mrb[0].mxu0
        %v9447 = vadd.f32 %v8855, %v9446
        %v9448 = vpop.f32.mrb[0].mxu0
        %v9449 = vadd.f32 %v8859, %v9448
        %v9450 = vpop.f32.mrb[0].mxu0
        %v9451 = vadd.f32 %v8855, %v9450
        %v9452 = vpop.f32.mrb[0].mxu0
        %v9453 = vadd.f32 %v8859, %v9452
        %9454 = vmatprep.mubr.bf16.mxu0 0
        %9455 = vmatmul.mubr.bf16.gmra.mrb[0].mxu0 %v4730
        %v9456 = vpop.f32.mrb[0].mxu0
        %v9457 = vadd.f32 %v8855, %v9456
        %v9458 = vpop.f32.mrb[0].mxu0
        %v9459 = vadd.f32 %v8859, %v9458
        %v9460 = vpop.f32.mrb[0].mxu0
        %v9461 = vadd.f32 %v8855, %v9460
        %v9462 = vpop.f32.mrb[0].mxu0
        %v9463 = vadd.f32 %v8859, %v9462
        %9464 = vmatprep.mubr.bf16.mxu0 0
        %9465 = vmatmul.mubr.bf16.gmra.mrb[0].mxu0 %v4731
        %v9466 = vpop.f32.mrb[0].mxu0
        %v9467 = vadd.f32 %v8855, %v9466
        %v9468 = vpop.f32.mrb[0].mxu0
        %v9469 = vadd.f32 %v8859, %v9468
        %v9470 = vpop.f32.mrb[0].mxu0
        %v9471 = vadd.f32 %v8855, %v9470
        %v9472 = vpop.f32.mrb[0].mxu0
        %v9473 = vadd.f32 %v8859, %v9472
        %9474 = vmatprep.mubr.bf16.mxu0 0
        %9475 = vmatmul.mubr.bf16.gmra.mrb[0].mxu0 %v4732
        %v9476 = vpop.f32.mrb[0].mxu0
        %v9477 = vadd.f32 %v8855, %v9476
        %v9478 = vpop.f32.mrb[0].mxu0
        %v9479 = vadd.f32 %v8859, %v9478
        %v9480 = vpop.f32.mrb[0].mxu0
        %v9481 = vadd.f32 %v8855, %v9480
        %v9482 = vpop.f32.mrb[0].mxu0
        %v9483 = vadd.f32 %v8859, %v9482
        %9484 = vmatprep.mubr.bf16.mxu0 0
        %9485 = vmatmul.mubr.bf16.gmra.mrb[0].mxu0 %v4733
        %v9486 = vpop.f32.mrb[0].mxu0
        %v9487 = vadd.f32 %v8855, %v9486
        %v9488 = vpop.f32.mrb[0].mxu0
        %v9489 = vadd.f32 %v8859, %v9488
        %v9490 = vpop.f32.mrb[0].mxu0
        %v9491 = vadd.f32 %v8855, %v9490
        %v9492 = vpop.f32.mrb[0].mxu0
        %v9493 = vadd.f32 %v8859, %v9492
        %9494 = vmatprep.mubr.bf16.mxu0 0
        %9495 = vmatmul.mubr.bf16.gmra.mrb[0].mxu0 %v4734
        %v9496 = vpop.f32.mrb[0].mxu0
        %v9497 = vadd.f32 %v8855, %v9496
        %v9498 = vpop.f32.mrb[0].mxu0
        %v9499 = vadd.f32 %v8859, %v9498
        %v9500 = vpop.f32.mrb[0].mxu0
        %v9501 = vadd.f32 %v8855, %v9500
        %v9502 = vpop.f32.mrb[0].mxu0
        %v9503 = vadd.f32 %v8859, %v9502
        %9504 = vmatprep.mubr.bf16.mxu0 0
        %9505 = vmatmul.mubr.bf16.gmra.mrb[0].mxu0 %v4735
        %v9506 = vpop.f32.mrb[0].mxu0
        %v9507 = vadd.f32 %v8855, %v9506
        %v9508 = vpop.f32.mrb[0].mxu0
        %v9509 = vadd.f32 %v8859, %v9508
        %v9510 = vpop.f32.mrb[0].mxu0
        %v9511 = vadd.f32 %v8855, %v9510
        %v9512 = vpop.f32.mrb[0].mxu0
        %v9513 = vadd.f32 %v8859, %v9512
        %9514 = vmatprep.mubr.bf16.mxu0 0
        %9515 = vmatmul.mubr.bf16.gmra.mrb[0].mxu0 %v4736
        %v9516 = vpop.f32.mrb[0].mxu0
        %v9517 = vadd.f32 %v8855, %v9516
        %v9518 = vpop.f32.mrb[0].mxu0
        %v9519 = vadd.f32 %v8859, %v9518
        %v9520 = vpop.f32.mrb[0].mxu0
        %v9521 = vadd.f32 %v8855, %v9520
        %v9522 = vpop.f32.mrb[0].mxu0
        %v9523 = vadd.f32 %v8859, %v9522
        %9524 = vmatprep.mubr.bf16.mxu0 0
        %9525 = vmatmul.mubr.bf16.gmra.mrb[0].mxu0 %v4737
        %v9526 = vpop.f32.mrb[0].mxu0
        %v9527 = vadd.f32 %v8855, %v9526
        %v9528 = vpop.f32.mrb[0].mxu0
        %v9529 = vadd.f32 %v8859, %v9528
        %v9530 = vpop.f32.mrb[0].mxu0
        %v9531 = vadd.f32 %v8855, %v9530
        %v9532 = vpop.f32.mrb[0].mxu0
        %v9533 = vadd.f32 %v8859, %v9532
        %9534 = vmatprep.mubr.bf16.mxu0 0
        %9535 = vmatmul.mubr.bf16.gmra.mrb[0].mxu0 %v4738
        %v9536 = vpop.f32.mrb[0].mxu0
        %v9537 = vadd.f32 %v8855, %v9536
        %v9538 = vpop.f32.mrb[0].mxu0
        %v9539 = vadd.f32 %v8859, %v9538
        %v9540 = vpop.f32.mrb[0].mxu0
        %v9541 = vadd.f32 %v8855, %v9540
        %v9542 = vpop.f32.mrb[0].mxu0
        %v9543 = vadd.f32 %v8859, %v9542
        %9544 = vmatprep.mubr.bf16.mxu0 0
        %9545 = vmatmul.mubr.bf16.gmra.mrb[0].mxu0 %v4739
        %v9546 = vpop.f32.mrb[0].mxu0
        %v9547 = vadd.f32 %v8855, %v9546
        %v9548 = vpop.f32.mrb[0].mxu0
        %v9549 = vadd.f32 %v8859, %v9548
        %v9550 = vpop.f32.mrb[0].mxu0
        %v9551 = vadd.f32 %v8855, %v9550
        %v9552 = vpop.f32.mrb[0].mxu0
        %v9553 = vadd.f32 %v8859, %v9552
        %9554 = vmatprep.mubr.bf16.mxu0 0
        %9555 = vmatmul.mubr.bf16.gmra.mrb[0].mxu0 %v4740
        %v9556 = vpop.f32.mrb[0].mxu0
        %v9557 = vadd.f32 %v8855, %v9556
        %v9558 = vpop.f32.mrb[0].mxu0
        %v9559 = vadd.f32 %v8859, %v9558
        %v9560 = vpop.f32.mrb[0].mxu0
        %v9561 = vadd.f32 %v8855, %v9560
        %v9562 = vpop.f32.mrb[0].mxu0
        %v9563 = vadd.f32 %v8859, %v9562
        %9564 = vmatprep.mubr.bf16.mxu0 0
        %9565 = vmatmul.mubr.bf16.gmra.mrb[0].mxu0 %v4741
        %v9566 = vpop.f32.mrb[0].mxu0
        %v9567 = vadd.f32 %v8855, %v9566
        %v9568 = vpop.f32.mrb[0].mxu0
        %v9569 = vadd.f32 %v8859, %v9568
        %v9570 = vpop.f32.mrb[0].mxu0
        %v9571 = vadd.f32 %v8855, %v9570
        %v9572 = vpop.f32.mrb[0].mxu0
        %v9573 = vadd.f32 %v8859, %v9572
        %9574 = vmatprep.mubr.bf16.mxu0 0
        %9575 = vmatmul.mubr.bf16.gmra.mrb[0].mxu0 %v4742
        %v9576 = vpop.f32.mrb[0].mxu0
        %v9577 = vadd.f32 %v8855, %v9576
        %v9578 = vpop.f32.mrb[0].mxu0
        %v9579 = vadd.f32 %v8859, %v9578
        %v9580 = vpop.f32.mrb[0].mxu0
        %v9581 = vadd.f32 %v8855, %v9580
        %v9582 = vpop.f32.mrb[0].mxu0
        %v9583 = vadd.f32 %v8859, %v9582
        %9584 = vmatprep.mubr.bf16.mxu0 0
        %9585 = vmatmul.mubr.bf16.gmra.mrb[0].mxu0 %v4743
        %v9586 = vpop.f32.mrb[0].mxu0
        %v9587 = vadd.f32 %v8855, %v9586
        %v9588 = vpop.f32.mrb[0].mxu0
        %v9589 = vadd.f32 %v8859, %v9588
        %v9590 = vpop.f32.mrb[0].mxu0
        %v9591 = vadd.f32 %v8855, %v9590
        %v9592 = vpop.f32.mrb[0].mxu0
        %v9593 = vadd.f32 %v8859, %v9592
        %9594 = vmatprep.mubr.bf16.mxu0 0
        %9595 = vmatmul.mubr.bf16.gmra.mrb[0].mxu0 %v4744
        %v9596 = vpop.f32.mrb[0].mxu0
        %v9597 = vadd.f32 %v8855, %v9596
        %v9598 = vpop.f32.mrb[0].mxu0
        %v9599 = vadd.f32 %v8859, %v9598
        %v9600 = vpop.f32.mrb[0].mxu0
        %v9601 = vadd.f32 %v8855, %v9600
        %v9602 = vpop.f32.mrb[0].mxu0
        %v9603 = vadd.f32 %v8859, %v9602
        %9604 = vmatprep.mubr.bf16.mxu0 0
        %9605 = vmatmul.mubr.bf16.gmra.mrb[0].mxu0 %v4745
        %v9606 = vpop.f32.mrb[0].mxu0
        %v9607 = vadd.f32 %v8855, %v9606
        %v9608 = vpop.f32.mrb[0].mxu0
        %v9609 = vadd.f32 %v8859, %v9608
        %v9610 = vpop.f32.mrb[0].mxu0
        %v9611 = vadd.f32 %v8855, %v9610
        %v9612 = vpop.f32.mrb[0].mxu0
        %v9613 = vadd.f32 %v8859, %v9612
        %9614 = vdwg.mxu0
        %v9615 = vmax.f32 %v8977, 0.0
        %v9616 = vmax.f32 %v8979, 0.0
        %v9617 = vmax.f32 %v8981, 0.0
        %v9618 = vmax.f32 %v8983, 0.0
        %v9619 = vmax.f32 %v8987, 0.0
        %v9620 = vmax.f32 %v8989, 0.0
        %v9621 = vmax.f32 %v8991, 0.0
        %v9622 = vmax.f32 %v8993, 0.0
        %v9623 = vmax.f32 %v8997, 0.0
        %v9624 = vmax.f32 %v8999, 0.0
        %v9625 = vmax.f32 %v9001, 0.0
        %v9626 = vmax.f32 %v9003, 0.0
        %v9627 = vmax.f32 %v9007, 0.0
        %v9628 = vmax.f32 %v9009, 0.0
        %v9629 = vmax.f32 %v9011, 0.0
        %v9630 = vmax.f32 %v9013, 0.0
        %v9631 = vmax.f32 %v9017, 0.0
        %v9632 = vmax.f32 %v9019, 0.0
        %v9633 = vmax.f32 %v9021, 0.0
        %v9634 = vmax.f32 %v9023, 0.0
        %v9635 = vmax.f32 %v9027, 0.0
        %v9636 = vmax.f32 %v9029, 0.0
        %v9637 = vmax.f32 %v9031, 0.0
        %v9638 = vmax.f32 %v9033, 0.0
        %v9639 = vmax.f32 %v9037, 0.0
        %v9640 = vmax.f32 %v9039, 0.0
        %v9641 = vmax.f32 %v9041, 0.0
        %v9642 = vmax.f32 %v9043, 0.0
        %v9643 = vmax.f32 %v9047, 0.0
        %v9644 = vmax.f32 %v9049, 0.0
        %v9645 = vmax.f32 %v9051, 0.0
        %v9646 = vmax.f32 %v9053, 0.0
        %v9647 = vmax.f32 %v9057, 0.0
        %v9648 = vmax.f32 %v9059, 0.0
        %v9649 = vmax.f32 %v9061, 0.0
        %v9650 = vmax.f32 %v9063, 0.0
        %v9651 = vmax.f32 %v9067, 0.0
        %v9652 = vmax.f32 %v9069, 0.0
        %v9653 = vmax.f32 %v9071, 0.0
        %v9654 = vmax.f32 %v9073, 0.0
        %v9655 = vmax.f32 %v9077, 0.0
        %v9656 = vmax.f32 %v9079, 0.0
        %v9657 = vmax.f32 %v9081, 0.0
        %v9658 = vmax.f32 %v9083, 0.0
        %v9659 = vmax.f32 %v9087, 0.0
        %v9660 = vmax.f32 %v9089, 0.0
        %v9661 = vmax.f32 %v9091, 0.0
        %v9662 = vmax.f32 %v9093, 0.0
        %v9663 = vmax.f32 %v9097, 0.0
        %v9664 = vmax.f32 %v9099, 0.0
        %v9665 = vmax.f32 %v9101, 0.0
        %v9666 = vmax.f32 %v9103, 0.0
        %v9667 = vmax.f32 %v9107, 0.0
        %v9668 = vmax.f32 %v9109, 0.0
        %v9669 = vmax.f32 %v9111, 0.0
        %v9670 = vmax.f32 %v9113, 0.0
        %v9671 = vmax.f32 %v9117, 0.0
        %v9672 = vmax.f32 %v9119, 0.0
        %v9673 = vmax.f32 %v9121, 0.0
        %v9674 = vmax.f32 %v9123, 0.0
        %v9675 = vmax.f32 %v9127, 0.0
        %v9676 = vmax.f32 %v9129, 0.0
        %v9677 = vmax.f32 %v9131, 0.0
        %v9678 = vmax.f32 %v9133, 0.0
        %v9679 = vmax.f32 %v9137, 0.0
        %v9680 = vmax.f32 %v9139, 0.0
        %v9681 = vmax.f32 %v9141, 0.0
        %v9682 = vmax.f32 %v9143, 0.0
        %v9683 = vmax.f32 %v9147, 0.0
        %v9684 = vmax.f32 %v9149, 0.0
        %v9685 = vmax.f32 %v9151, 0.0
        %v9686 = vmax.f32 %v9153, 0.0
        %v9687 = vmax.f32 %v9157, 0.0
        %v9688 = vmax.f32 %v9159, 0.0
        %v9689 = vmax.f32 %v9161, 0.0
        %v9690 = vmax.f32 %v9163, 0.0
        %v9691 = vmax.f32 %v9167, 0.0
        %v9692 = vmax.f32 %v9169, 0.0
        %v9693 = vmax.f32 %v9171, 0.0
        %v9694 = vmax.f32 %v9173, 0.0
        %v9695 = vmax.f32 %v9177, 0.0
        %v9696 = vmax.f32 %v9179, 0.0
        %v9697 = vmax.f32 %v9181, 0.0
        %v9698 = vmax.f32 %v9183, 0.0
        %v9699 = vmax.f32 %v9187, 0.0
        %v9700 = vmax.f32 %v9189, 0.0
        %v9701 = vmax.f32 %v9191, 0.0
        %v9702 = vmax.f32 %v9193, 0.0
        %v9703 = vmax.f32 %v9197, 0.0
        %v9704 = vmax.f32 %v9199, 0.0
        %v9705 = vmax.f32 %v9201, 0.0
        %v9706 = vmax.f32 %v9203, 0.0
        %v9707 = vmax.f32 %v9207, 0.0
        %v9708 = vmax.f32 %v9209, 0.0
        %v9709 = vmax.f32 %v9211, 0.0
        %v9710 = vmax.f32 %v9213, 0.0
        %v9711 = vmax.f32 %v9217, 0.0
        %v9712 = vmax.f32 %v9219, 0.0
        %v9713 = vmax.f32 %v9221, 0.0
        %v9714 = vmax.f32 %v9223, 0.0
        %v9715 = vmax.f32 %v9227, 0.0
        %v9716 = vmax.f32 %v9229, 0.0
        %v9717 = vmax.f32 %v9231, 0.0
        %v9718 = vmax.f32 %v9233, 0.0
        %v9719 = vmax.f32 %v9237, 0.0
        %v9720 = vmax.f32 %v9239, 0.0
        %v9721 = vmax.f32 %v9241, 0.0
        %v9722 = vmax.f32 %v9243, 0.0
        %v9723 = vmax.f32 %v9247, 0.0
        %v9724 = vmax.f32 %v9249, 0.0
        %v9725 = vmax.f32 %v9251, 0.0
        %v9726 = vmax.f32 %v9253, 0.0
        %v9727 = vmax.f32 %v9257, 0.0
        %v9728 = vmax.f32 %v9259, 0.0
        %v9729 = vmax.f32 %v9261, 0.0
        %v9730 = vmax.f32 %v9263, 0.0
        %v9731 = vmax.f32 %v9267, 0.0
        %v9732 = vmax.f32 %v9269, 0.0
        %v9733 = vmax.f32 %v9271, 0.0
        %v9734 = vmax.f32 %v9273, 0.0
        %v9735 = vmax.f32 %v9277, 0.0
        %v9736 = vmax.f32 %v9279, 0.0
        %v9737 = vmax.f32 %v9281, 0.0
        %v9738 = vmax.f32 %v9283, 0.0
        %v9739 = vmax.f32 %v9287, 0.0
        %v9740 = vmax.f32 %v9289, 0.0
        %v9741 = vmax.f32 %v9291, 0.0
        %v9742 = vmax.f32 %v9293, 0.0
        %v9743 = vmax.f32 %v9297, 0.0
        %v9744 = vmax.f32 %v9299, 0.0
        %v9745 = vmax.f32 %v9301, 0.0
        %v9746 = vmax.f32 %v9303, 0.0
        %v9747 = vmax.f32 %v9307, 0.0
        %v9748 = vmax.f32 %v9309, 0.0
        %v9749 = vmax.f32 %v9311, 0.0
        %v9750 = vmax.f32 %v9313, 0.0
        %v9751 = vmax.f32 %v9317, 0.0
        %v9752 = vmax.f32 %v9319, 0.0
        %v9753 = vmax.f32 %v9321, 0.0
        %v9754 = vmax.f32 %v9323, 0.0
        %v9755 = vmax.f32 %v9327, 0.0
        %v9756 = vmax.f32 %v9329, 0.0
        %v9757 = vmax.f32 %v9331, 0.0
        %v9758 = vmax.f32 %v9333, 0.0
        %v9759 = vmax.f32 %v9337, 0.0
        %v9760 = vmax.f32 %v9339, 0.0
        %v9761 = vmax.f32 %v9341, 0.0
        %v9762 = vmax.f32 %v9343, 0.0
        %v9763 = vmax.f32 %v9347, 0.0
        %v9764 = vmax.f32 %v9349, 0.0
        %v9765 = vmax.f32 %v9351, 0.0
        %v9766 = vmax.f32 %v9353, 0.0
        %v9767 = vmax.f32 %v9357, 0.0
        %v9768 = vmax.f32 %v9359, 0.0
        %v9769 = vmax.f32 %v9361, 0.0
        %v9770 = vmax.f32 %v9363, 0.0
        %v9771 = vmax.f32 %v9367, 0.0
        %v9772 = vmax.f32 %v9369, 0.0
        %v9773 = vmax.f32 %v9371, 0.0
        %v9774 = vmax.f32 %v9373, 0.0
        %v9775 = vmax.f32 %v9377, 0.0
        %v9776 = vmax.f32 %v9379, 0.0
        %v9777 = vmax.f32 %v9381, 0.0
        %v9778 = vmax.f32 %v9383, 0.0
        %v9779 = vmax.f32 %v9387, 0.0
        %v9780 = vmax.f32 %v9389, 0.0
        %v9781 = vmax.f32 %v9391, 0.0
        %v9782 = vmax.f32 %v9393, 0.0
        %v9783 = vmax.f32 %v9397, 0.0
        %v9784 = vmax.f32 %v9399, 0.0
        %v9785 = vmax.f32 %v9401, 0.0
        %v9786 = vmax.f32 %v9403, 0.0
        %v9787 = vmax.f32 %v9407, 0.0
        %v9788 = vmax.f32 %v9409, 0.0
        %v9789 = vmax.f32 %v9411, 0.0
        %v9790 = vmax.f32 %v9413, 0.0
        %v9791 = vmax.f32 %v9417, 0.0
        %v9792 = vmax.f32 %v9419, 0.0
        %v9793 = vmax.f32 %v9421, 0.0
        %v9794 = vmax.f32 %v9423, 0.0
        %v9795 = vmax.f32 %v9427, 0.0
        %v9796 = vmax.f32 %v9429, 0.0
        %v9797 = vmax.f32 %v9431, 0.0
        %v9798 = vmax.f32 %v9433, 0.0
        %v9799 = vmax.f32 %v9437, 0.0
        %v9800 = vmax.f32 %v9439, 0.0
        %v9801 = vmax.f32 %v9441, 0.0
        %v9802 = vmax.f32 %v9443, 0.0
        %v9803 = vmax.f32 %v9447, 0.0
        %v9804 = vmax.f32 %v9449, 0.0
        %v9805 = vmax.f32 %v9451, 0.0
        %v9806 = vmax.f32 %v9453, 0.0
        %v9807 = vmax.f32 %v9457, 0.0
        %v9808 = vmax.f32 %v9459, 0.0
        %v9809 = vmax.f32 %v9461, 0.0
        %v9810 = vmax.f32 %v9463, 0.0
        %v9811 = vmax.f32 %v9467, 0.0
        %v9812 = vmax.f32 %v9469, 0.0
        %v9813 = vmax.f32 %v9471, 0.0
        %v9814 = vmax.f32 %v9473, 0.0
        %v9815 = vmax.f32 %v9477, 0.0
        %v9816 = vmax.f32 %v9479, 0.0
        %v9817 = vmax.f32 %v9481, 0.0
        %v9818 = vmax.f32 %v9483, 0.0
        %v9819 = vmax.f32 %v9487, 0.0
        %v9820 = vmax.f32 %v9489, 0.0
        %v9821 = vmax.f32 %v9491, 0.0
        %v9822 = vmax.f32 %v9493, 0.0
        %v9823 = vmax.f32 %v9497, 0.0
        %v9824 = vmax.f32 %v9499, 0.0
        %v9825 = vmax.f32 %v9501, 0.0
        %v9826 = vmax.f32 %v9503, 0.0
        %v9827 = vmax.f32 %v9507, 0.0
        %v9828 = vmax.f32 %v9509, 0.0
        %v9829 = vmax.f32 %v9511, 0.0
        %v9830 = vmax.f32 %v9513, 0.0
        %v9831 = vmax.f32 %v9517, 0.0
        %v9832 = vmax.f32 %v9519, 0.0
        %v9833 = vmax.f32 %v9521, 0.0
        %v9834 = vmax.f32 %v9523, 0.0
        %v9835 = vmax.f32 %v9527, 0.0
        %v9836 = vmax.f32 %v9529, 0.0
        %v9837 = vmax.f32 %v9531, 0.0
        %v9838 = vmax.f32 %v9533, 0.0
        %v9839 = vmax.f32 %v9537, 0.0
        %v9840 = vmax.f32 %v9539, 0.0
        %v9841 = vmax.f32 %v9541, 0.0
        %v9842 = vmax.f32 %v9543, 0.0
        %v9843 = vmax.f32 %v9547, 0.0
        %v9844 = vmax.f32 %v9549, 0.0
        %v9845 = vmax.f32 %v9551, 0.0
        %v9846 = vmax.f32 %v9553, 0.0
        %v9847 = vmax.f32 %v9557, 0.0
        %v9848 = vmax.f32 %v9559, 0.0
        %v9849 = vmax.f32 %v9561, 0.0
        %v9850 = vmax.f32 %v9563, 0.0
        %v9851 = vmax.f32 %v9567, 0.0
        %v9852 = vmax.f32 %v9569, 0.0
        %v9853 = vmax.f32 %v9571, 0.0
        %v9854 = vmax.f32 %v9573, 0.0
        %v9855 = vmax.f32 %v9577, 0.0
        %v9856 = vmax.f32 %v9579, 0.0
        %v9857 = vmax.f32 %v9581, 0.0
        %v9858 = vmax.f32 %v9583, 0.0
        %v9859 = vmax.f32 %v9587, 0.0
        %v9860 = vmax.f32 %v9589, 0.0
        %v9861 = vmax.f32 %v9591, 0.0
        %v9862 = vmax.f32 %v9593, 0.0
        %v9863 = vmax.f32 %v9597, 0.0
        %v9864 = vmax.f32 %v9599, 0.0
        %v9865 = vmax.f32 %v9601, 0.0
        %v9866 = vmax.f32 %v9603, 0.0
        %v9867 = vmax.f32 %v9607, 0.0
        %v9868 = vmax.f32 %v9609, 0.0
        %v9869 = vmax.f32 %v9611, 0.0
        %v9870 = vmax.f32 %v9613, 0.0
        %v9871 = vmax.f32 %v9615, %v9617
        %v9872 = vmax.f32 %v9871, %v9619
        %v9873 = vmax.f32 %v9872, %v9621
        %v9874 = vmax.f32 %v9873, %v9623
        %v9875 = vmax.f32 %v9874, %v9625
        %v9876 = vmax.f32 %v9875, %v9627
        %v9877 = vmax.f32 %v9876, %v9629
        %v9878 = vmax.f32 %v9877, %v9631
        %v9879 = vmax.f32 %v9878, %v9633
        %v9880 = vmax.f32 %v9879, %v9635
        %v9881 = vmax.f32 %v9880, %v9637
        %v9882 = vmax.f32 %v9881, %v9639
        %v9883 = vmax.f32 %v9882, %v9641
        %v9884 = vmax.f32 %v9883, %v9643
        %v9885 = vmax.f32 %v9884, %v9645
        %v9886 = vmax.f32 %v9885, %v9647
        %v9887 = vmax.f32 %v9886, %v9649
        %v9888 = vmax.f32 %v9887, %v9651
        %v9889 = vmax.f32 %v9888, %v9653
        %v9890 = vmax.f32 %v9889, %v9655
        %v9891 = vmax.f32 %v9890, %v9657
        %v9892 = vmax.f32 %v9891, %v9659
        %v9893 = vmax.f32 %v9892, %v9661
        %v9894 = vmax.f32 %v9893, %v9663
        %v9895 = vmax.f32 %v9894, %v9665
        %v9896 = vmax.f32 %v9895, %v9667
        %v9897 = vmax.f32 %v9896, %v9669
        %v9898 = vmax.f32 %v9897, %v9671
        %v9899 = vmax.f32 %v9898, %v9673
        %v9900 = vmax.f32 %v9899, %v9675
        %v9901 = vmax.f32 %v9900, %v9677
        %v9902 = vrot.slane %v9901, 4
        %v9903 = vmax.f32 %v9901, %v9902
        %v9904 = vrot.slane %v9903, 2
        %v9905 = vmax.f32 %v9903, %v9904
        %v9906 = vrot.slane %v9905, 1
        %v9907 = vmax.f32 %v9905, %v9906
        %v9908 = vmax.f32 %v9616, %v9618
        %v9909 = vmax.f32 %v9908, %v9620
        %v9910 = vmax.f32 %v9909, %v9622
        %v9911 = vmax.f32 %v9910, %v9624
        %v9912 = vmax.f32 %v9911, %v9626
        %v9913 = vmax.f32 %v9912, %v9628
        %v9914 = vmax.f32 %v9913, %v9630
        %v9915 = vmax.f32 %v9914, %v9632
        %v9916 = vmax.f32 %v9915, %v9634
        %v9917 = vmax.f32 %v9916, %v9636
        %v9918 = vmax.f32 %v9917, %v9638
        %v9919 = vmax.f32 %v9918, %v9640
        %v9920 = vmax.f32 %v9919, %v9642
        %v9921 = vmax.f32 %v9920, %v9644
        %v9922 = vmax.f32 %v9921, %v9646
        %v9923 = vmax.f32 %v9922, %v9648
        %v9924 = vmax.f32 %v9923, %v9650
        %v9925 = vmax.f32 %v9924, %v9652
        %v9926 = vmax.f32 %v9925, %v9654
        %v9927 = vmax.f32 %v9926, %v9656
        %v9928 = vmax.f32 %v9927, %v9658
        %v9929 = vmax.f32 %v9928, %v9660
        %v9930 = vmax.f32 %v9929, %v9662
        %v9931 = vmax.f32 %v9930, %v9664
        %v9932 = vmax.f32 %v9931, %v9666
        %v9933 = vmax.f32 %v9932, %v9668
        %v9934 = vmax.f32 %v9933, %v9670
        %v9935 = vmax.f32 %v9934, %v9672
        %v9936 = vmax.f32 %v9935, %v9674
        %v9937 = vmax.f32 %v9936, %v9676
        %v9938 = vmax.f32 %v9937, %v9678
        %v9939 = vrot.slane %v9938, 4
        %v9940 = vmax.f32 %v9938, %v9939
        %v9941 = vrot.slane %v9940, 2
        %v9942 = vmax.f32 %v9940, %v9941
        %v9943 = vrot.slane %v9942, 1
        %v9944 = vmax.f32 %v9942, %v9943
        %v9945 = vmax.f32 %v9679, %v9681
        %v9946 = vmax.f32 %v9945, %v9683
        %v9947 = vmax.f32 %v9946, %v9685
        %v9948 = vmax.f32 %v9947, %v9687
        %v9949 = vmax.f32 %v9948, %v9689
        %v9950 = vmax.f32 %v9949, %v9691
        %v9951 = vmax.f32 %v9950, %v9693
        %v9952 = vmax.f32 %v9951, %v9695
        %v9953 = vmax.f32 %v9952, %v9697
        %v9954 = vmax.f32 %v9953, %v9699
        %v9955 = vmax.f32 %v9954, %v9701
        %v9956 = vmax.f32 %v9955, %v9703
        %v9957 = vmax.f32 %v9956, %v9705
        %v9958 = vmax.f32 %v9957, %v9707
        %v9959 = vmax.f32 %v9958, %v9709
        %v9960 = vmax.f32 %v9959, %v9711
        %v9961 = vmax.f32 %v9960, %v9713
        %v9962 = vmax.f32 %v9961, %v9715
        %v9963 = vmax.f32 %v9962, %v9717
        %v9964 = vmax.f32 %v9963, %v9719
        %v9965 = vmax.f32 %v9964, %v9721
        %v9966 = vmax.f32 %v9965, %v9723
        %v9967 = vmax.f32 %v9966, %v9725
        %v9968 = vmax.f32 %v9967, %v9727
        %v9969 = vmax.f32 %v9968, %v9729
        %v9970 = vmax.f32 %v9969, %v9731
        %v9971 = vmax.f32 %v9970, %v9733
        %v9972 = vmax.f32 %v9971, %v9735
        %v9973 = vmax.f32 %v9972, %v9737
        %v9974 = vmax.f32 %v9973, %v9739
        %v9975 = vmax.f32 %v9974, %v9741
        %v9976 = vrot.slane %v9975, 4
        %v9977 = vmax.f32 %v9975, %v9976
        %v9978 = vrot.slane %v9977, 2
        %v9979 = vmax.f32 %v9977, %v9978
        %v9980 = vrot.slane %v9979, 1
        %v9981 = vmax.f32 %v9979, %v9980
        %v9982 = vmax.f32 %v9680, %v9682
        %v9983 = vmax.f32 %v9982, %v9684
        %v9984 = vmax.f32 %v9983, %v9686
        %v9985 = vmax.f32 %v9984, %v9688
        %v9986 = vmax.f32 %v9985, %v9690
        %v9987 = vmax.f32 %v9986, %v9692
        %v9988 = vmax.f32 %v9987, %v9694
        %v9989 = vmax.f32 %v9988, %v9696
        %v9990 = vmax.f32 %v9989, %v9698
        %v9991 = vmax.f32 %v9990, %v9700
        %v9992 = vmax.f32 %v9991, %v9702
        %v9993 = vmax.f32 %v9992, %v9704
        %v9994 = vmax.f32 %v9993, %v9706
        %v9995 = vmax.f32 %v9994, %v9708
        %v9996 = vmax.f32 %v9995, %v9710
        %v9997 = vmax.f32 %v9996, %v9712
        %v9998 = vmax.f32 %v9997, %v9714
        %v9999 = vmax.f32 %v9998, %v9716
        %v10000 = vmax.f32 %v9999, %v9718
        %v10001 = vmax.f32 %v10000, %v9720
        %v10002 = vmax.f32 %v10001, %v9722
        %v10003 = vmax.f32 %v10002, %v9724
        %v10004 = vmax.f32 %v10003, %v9726
        %v10005 = vmax.f32 %v10004, %v9728
        %v10006 = vmax.f32 %v10005, %v9730
        %v10007 = vmax.f32 %v10006, %v9732
        %v10008 = vmax.f32 %v10007, %v9734
        %v10009 = vmax.f32 %v10008, %v9736
        %v10010 = vmax.f32 %v10009, %v9738
        %v10011 = vmax.f32 %v10010, %v9740
        %v10012 = vmax.f32 %v10011, %v9742
        %v10013 = vrot.slane %v10012, 4
        %v10014 = vmax.f32 %v10012, %v10013
        %v10015 = vrot.slane %v10014, 2
        %v10016 = vmax.f32 %v10014, %v10015
        %v10017 = vrot.slane %v10016, 1
        %v10018 = vmax.f32 %v10016, %v10017
        %v10019 = vmax.f32 %v9743, %v9745
        %v10020 = vmax.f32 %v10019, %v9747
        %v10021 = vmax.f32 %v10020, %v9749
        %v10022 = vmax.f32 %v10021, %v9751
        %v10023 = vmax.f32 %v10022, %v9753
        %v10024 = vmax.f32 %v10023, %v9755
        %v10025 = vmax.f32 %v10024, %v9757
        %v10026 = vmax.f32 %v10025, %v9759
        %v10027 = vmax.f32 %v10026, %v9761
        %v10028 = vmax.f32 %v10027, %v9763
        %v10029 = vmax.f32 %v10028, %v9765
        %v10030 = vmax.f32 %v10029, %v9767
        %v10031 = vmax.f32 %v10030, %v9769
        %v10032 = vmax.f32 %v10031, %v9771
        %v10033 = vmax.f32 %v10032, %v9773
        %v10034 = vmax.f32 %v10033, %v9775
        %v10035 = vmax.f32 %v10034, %v9777
        %v10036 = vmax.f32 %v10035, %v9779
        %v10037 = vmax.f32 %v10036, %v9781
        %v10038 = vmax.f32 %v10037, %v9783
        %v10039 = vmax.f32 %v10038, %v9785
        %v10040 = vmax.f32 %v10039, %v9787
        %v10041 = vmax.f32 %v10040, %v9789
        %v10042 = vmax.f32 %v10041, %v9791
        %v10043 = vmax.f32 %v10042, %v9793
        %v10044 = vmax.f32 %v10043, %v9795
        %v10045 = vmax.f32 %v10044, %v9797
        %v10046 = vmax.f32 %v10045, %v9799
        %v10047 = vmax.f32 %v10046, %v9801
        %v10048 = vmax.f32 %v10047, %v9803
        %v10049 = vmax.f32 %v10048, %v9805
        %v10050 = vrot.slane %v10049, 4
        %v10051 = vmax.f32 %v10049, %v10050
        %v10052 = vrot.slane %v10051, 2
        %v10053 = vmax.f32 %v10051, %v10052
        %v10054 = vrot.slane %v10053, 1
        %v10055 = vmax.f32 %v10053, %v10054
        %v10056 = vmax.f32 %v9744, %v9746
        %v10057 = vmax.f32 %v10056, %v9748
        %v10058 = vmax.f32 %v10057, %v9750
        %v10059 = vmax.f32 %v10058, %v9752
        %v10060 = vmax.f32 %v10059, %v9754
        %v10061 = vmax.f32 %v10060, %v9756
        %v10062 = vmax.f32 %v10061, %v9758
        %v10063 = vmax.f32 %v10062, %v9760
        %v10064 = vmax.f32 %v10063, %v9762
        %v10065 = vmax.f32 %v10064, %v9764
        %v10066 = vmax.f32 %v10065, %v9766
        %v10067 = vmax.f32 %v10066, %v9768
        %v10068 = vmax.f32 %v10067, %v9770
        %v10069 = vmax.f32 %v10068, %v9772
        %v10070 = vmax.f32 %v10069, %v9774
        %v10071 = vmax.f32 %v10070, %v9776
        %v10072 = vmax.f32 %v10071, %v9778
        %v10073 = vmax.f32 %v10072, %v9780
        %v10074 = vmax.f32 %v10073, %v9782
        %v10075 = vmax.f32 %v10074, %v9784
        %v10076 = vmax.f32 %v10075, %v9786
        %v10077 = vmax.f32 %v10076, %v9788
        %v10078 = vmax.f32 %v10077, %v9790
        %v10079 = vmax.f32 %v10078, %v9792
        %v10080 = vmax.f32 %v10079, %v9794
        %v10081 = vmax.f32 %v10080, %v9796
        %v10082 = vmax.f32 %v10081, %v9798
        %v10083 = vmax.f32 %v10082, %v9800
        %v10084 = vmax.f32 %v10083, %v9802
        %v10085 = vmax.f32 %v10084, %v9804
        %v10086 = vmax.f32 %v10085, %v9806
        %v10087 = vrot.slane %v10086, 4
        %v10088 = vmax.f32 %v10086, %v10087
        %v10089 = vrot.slane %v10088, 2
        %v10090 = vmax.f32 %v10088, %v10089
        %v10091 = vrot.slane %v10090, 1
        %v10092 = vmax.f32 %v10090, %v10091
        %v10093 = vmax.f32 %v9807, %v9809
        %v10094 = vmax.f32 %v10093, %v9811
        %v10095 = vmax.f32 %v10094, %v9813
        %v10096 = vmax.f32 %v10095, %v9815
        %v10097 = vmax.f32 %v10096, %v9817
        %v10098 = vmax.f32 %v10097, %v9819
        %v10099 = vmax.f32 %v10098, %v9821
        %v10100 = vmax.f32 %v10099, %v9823
        %v10101 = vmax.f32 %v10100, %v9825
        %v10102 = vmax.f32 %v10101, %v9827
        %v10103 = vmax.f32 %v10102, %v9829
        %v10104 = vmax.f32 %v10103, %v9831
        %v10105 = vmax.f32 %v10104, %v9833
        %v10106 = vmax.f32 %v10105, %v9835
        %v10107 = vmax.f32 %v10106, %v9837
        %v10108 = vmax.f32 %v10107, %v9839
        %v10109 = vmax.f32 %v10108, %v9841
        %v10110 = vmax.f32 %v10109, %v9843
        %v10111 = vmax.f32 %v10110, %v9845
        %v10112 = vmax.f32 %v10111, %v9847
        %v10113 = vmax.f32 %v10112, %v9849
        %v10114 = vmax.f32 %v10113, %v9851
        %v10115 = vmax.f32 %v10114, %v9853
        %v10116 = vmax.f32 %v10115, %v9855
        %v10117 = vmax.f32 %v10116, %v9857
        %v10118 = vmax.f32 %v10117, %v9859
        %v10119 = vmax.f32 %v10118, %v9861
        %v10120 = vmax.f32 %v10119, %v9863
        %v10121 = vmax.f32 %v10120, %v9865
        %v10122 = vmax.f32 %v10121, %v9867
        %v10123 = vmax.f32 %v10122, %v9869
        %v10124 = vrot.slane %v10123, 4
        %v10125 = vmax.f32 %v10123, %v10124
        %v10126 = vrot.slane %v10125, 2
        %v10127 = vmax.f32 %v10125, %v10126
        %v10128 = vrot.slane %v10127, 1
        %v10129 = vmax.f32 %v10127, %v10128
        %v10130 = vmax.f32 %v9808, %v9810
        %v10131 = vmax.f32 %v10130, %v9812
        %v10132 = vmax.f32 %v10131, %v9814
        %v10133 = vmax.f32 %v10132, %v9816
        %v10134 = vmax.f32 %v10133, %v9818
        %v10135 = vmax.f32 %v10134, %v9820
        %v10136 = vmax.f32 %v10135, %v9822
        %v10137 = vmax.f32 %v10136, %v9824
        %v10138 = vmax.f32 %v10137, %v9826
        %v10139 = vmax.f32 %v10138, %v9828
        %v10140 = vmax.f32 %v10139, %v9830
        %v10141 = vmax.f32 %v10140, %v9832
        %v10142 = vmax.f32 %v10141, %v9834
        %v10143 = vmax.f32 %v10142, %v9836
        %v10144 = vmax.f32 %v10143, %v9838
        %v10145 = vmax.f32 %v10144, %v9840
        %v10146 = vmax.f32 %v10145, %v9842
        %v10147 = vmax.f32 %v10146, %v9844
        %v10148 = vmax.f32 %v10147, %v9846
        %v10149 = vmax.f32 %v10148, %v9848
        %v10150 = vmax.f32 %v10149, %v9850
        %v10151 = vmax.f32 %v10150, %v9852
        %v10152 = vmax.f32 %v10151, %v9854
        %v10153 = vmax.f32 %v10152, %v9856
        %v10154 = vmax.f32 %v10153, %v9858
        %v10155 = vmax.f32 %v10154, %v9860
        %v10156 = vmax.f32 %v10155, %v9862
        %v10157 = vmax.f32 %v10156, %v9864
        %v10158 = vmax.f32 %v10157, %v9866
        %v10159 = vmax.f32 %v10158, %v9868
        %v10160 = vmax.f32 %v10159, %v9870
        %v10161 = vrot.slane %v10160, 4
        %v10162 = vmax.f32 %v10160, %v10161
        %v10163 = vrot.slane %v10162, 2
        %v10164 = vmax.f32 %v10162, %v10163
        %v10165 = vrot.slane %v10164, 1
        %v10166 = vmax.f32 %v10164, %v10165
        %v10167 = vld [vmem:[%s405 + $0x18] sm:$0xff]
        %v10176 = vcombine.low %v9907, %v9944
        %v10177 = vcombine.low %v9981, %v10018
        %v10178 = vcombine.low %v10055, %v10092
        %v10179 = vcombine.low %v10129, %v10166
        %v10180 = vrot.slane %v10177, 7
        %v10181 = vsel %vm6101, %v10180, %v10176
        %v10182 = vsel %vm6103, %v10180, %v10181
        %v10183 = vrot.slane %v10178, 6
        %v10184 = vsel %vm6106, %v10183, %v10182
        %v10185 = vsel %vm6108, %v10183, %v10184
        %v10186 = vrot.slane %v10179, 5
        %v10187 = vsel %vm6111, %v10186, %v10185
        %v10188 = vsel %vm6113, %v10186, %v10187
        %v10190 = vmax.f32 %v10167, %v10188
        %10191 = vst [vmem:[%s405 + $0x18] sm:$0xff] %v10190
        %s10192 = sand.u32 %s283, 1
        %s10193 = scalar_lea.sflag [#allocation3], %s10192
        %s10194 = sand.u32 %s283, 1
        %s10195 = smul.addr %s10194, 32
        %s10196 = scalar_lea.vmem [#allocation2], %s10195
        // Predicated region
        $region69: #{tpu_custom_call.1} parent=63 // pred_check
          %p10197 = pneg %p293
        $region70: #{tpu_custom_call.1} parent=63 // pred_check_branch
          %10199 = sbr.rel (%p10197) target = $region72
        $region71: #{tpu_custom_call.1} parent=63 // pred_region
          %s10201 = ssub.s32 512, 512
          %10202 = vsyncadd %s10193, %s10201
          %s10203 = smul.addr %s29, 8
          %s10204 = smul.addr %s10203, 64
          %s10205 = scalar_lea.hbm %s11, %s10204
          %s10207 = sshll.u32 %s10196, 4
          %s10208 = int_to_ptr.vmem [resolvable:$true] %s10207
          %10210 = dma.vmem_to_hbm [thread:$0]  %s10208, 512, %s10205, %s10193
        $region72: #{tpu_custom_call.1} parent=63 // pred_fallthru
          _
      $region64: #{tpu_custom_call.1} parent=5 // pred_fallthru
        _
      %p10211 = scmp.le.s32.totalorder 2, %s20
      // Predicated region
      $region73: #{tpu_custom_call.1} parent=5 // pred_check
        %p10212 = pneg %p10211
      $region74: #{tpu_custom_call.1} parent=5 // pred_check_branch
        %10214 = sbr.rel (%p10212) target = $region76
      $region75: #{tpu_custom_call.1} parent=5 // pred_region
        %s10215 = ssub.s32 %s20, 2
        // Predicated region
        $region77: #{tpu_custom_call.1} parent=75 // pred_check
          %p10216 = pneg %p299
        $region78: #{tpu_custom_call.1} parent=75 // pred_check_branch
          %10218 = sbr.rel (%p10216) target = $region80
        $region79: #{tpu_custom_call.1} parent=75 // pred_region
          %s10219 = sand.u32 %s284, 1
          %s10220 = scalar_lea.sflag [#allocation3], %s10219
          %s10221 = sand.u32 %s284, 1
          %s10222 = smul.addr %s10221, 32
          %s10223 = scalar_lea.vmem [#allocation2], %s10222
          %10224 = dma.done %s10220, 512
        $region80: #{tpu_custom_call.1} parent=75 // pred_fallthru
          _
      $region76: #{tpu_custom_call.1} parent=5 // pred_fallthru
        _
    $region6: #{tpu_custom_call.1} parent=1 // loop_footer
      %s24 = sadd.s32 1, %s20
    $region7: #{tpu_custom_call.1} parent=1 // loop_footer_branch
      %19 = sbr.rel target = $region3
    $region8: #{tpu_custom_call.1} parent=1 // loop_exit
      _
    %10225 = vsyncpa [#allocation3], 1
    %s10226 = scalar_lea.sflag [#allocation3], 1
    %10227 = vsyncpa %s10226, 1

</llo_original>
